<compile_context>
chip_gen: v7x
topology: tpu7x:2x2x1
jax: 0.10.0
libtpu: 0.0.40
codegen_flags: <defaults>
</compile_context>

<pallas_src>
import functools

import jax
import jax.numpy as jnp
from jax.experimental import pallas as pl
from jax.experimental.pallas import tpu as pltpu

NUM_EMBEDDINGS = 512
EMB_DIM = 64
COND_DIM = 3
N_LAYERS = 2
N_HEADS = 4
FF_HIDDEN = 128
MAX_LEN = 30
LN_EPS = 1e-5

# Canonical per-layer parameter order (shared by wrapper flattening and kernel).
LAYER_KEYS = (
    "sa_wqkv", "sa_bqkv", "sa_wo", "sa_bo",
    "ca_wq", "ca_bq", "ca_wkv", "ca_bkv", "ca_wo", "ca_bo",
    "ln1_g", "ln1_b", "ln2_g", "ln2_b", "ln3_g", "ln3_b",
    "ff_w1", "ff_b1", "ff_w2", "ff_b2",
)


# ------------------------------ fused kernel --------------------------------

def _layer_norm(v, g, b):
    mu = jnp.mean(v, axis=-1, keepdims=True)
    var = jnp.mean((v - mu) ** 2, axis=-1, keepdims=True)
    return (v - mu) * jax.lax.rsqrt(var + LN_EPS) * g + b


def fused_prior_kernel(x0_ref, *rest, n_heads, n_layers):
    """2 TransformerDecoder layers + fc_out for one block of Bb sequences."""
    nper = len(LAYER_KEYS)
    layer_refs = rest[:n_layers * nper]
    fc_w_ref, fc_b_ref, out_ref = rest[n_layers * nper:]

    x0_3d = x0_ref[...]                       # [Bb, T, D] f32 (embedding sum)
    Bb, T, D = x0_3d.shape
    M = Bb * T
    dh = D // n_heads

    x0_2d = x0_3d.reshape(M, D)               # layout no-op when T % 8 == 0
    x0_bf = x0_2d.astype(jnp.bfloat16)        # reused by both cross-attn KV projections

    # ---- hoisted constants (built once per grid step, reused by both layers) ----
    lane = jax.lax.broadcasted_iota(jnp.int32, (1, 1, D), 2)
    head_masks = [((lane >= h * dh) & (lane < (h + 1) * dh)).astype(jnp.float32)
                  for h in range(n_heads)]
    row = jax.lax.broadcasted_iota(jnp.int32, (1, T, T), 1)
    col = jax.lax.broadcasted_iota(jnp.int32, (1, T, T), 2)
    causal = col > row                         # [1, T, T] bool

    def attention(q2d, k2d, v2d, wo_ref, bo_ref, mask):
        """Multi-head attention without head split/merge relayouts.

        Per head h:  s_h = (q * m_h) @ k^T  (lane mask zeroes other heads'
        contraction lanes), softmax, then ctx accumulates P_h @ (v * m_h) so
        head h's context lands directly in lanes [h*dh, (h+1)*dh).  The merged
        [M, D] context then takes ONE K=64 output-projection matmul.
        q/k/v: [M, D] f32; wo: [D, D] bf16; bo: [1, D] f32.  Scale is already
        folded into the q-projection weights.
        """
        q3 = q2d.reshape(Bb, T, D)
        k3 = k2d.reshape(Bb, T, D).astype(jnp.bfloat16)
        v3 = v2d.reshape(Bb, T, D)
        ctx = jnp.zeros((Bb, T, D), jnp.float32)
        for hm in head_masks:
            qh = (q3 * hm).astype(jnp.bfloat16)
            s = jnp.einsum("bqd,bkd->bqk", qh, k3,
                           preferred_element_type=jnp.float32)   # [Bb, T, T] f32
            if mask is not None:
                s = jnp.where(mask, -1e30, s)
            s = s - jnp.max(s, axis=-1, keepdims=True)
            p = jnp.exp(s)
            p = p * pl.reciprocal(jnp.sum(p, axis=-1, keepdims=True), approx=True)
            vh = (v3 * hm).astype(jnp.bfloat16)
            ctx = ctx + jnp.einsum("bqk,bkd->bqd", p.astype(jnp.bfloat16), vh,
                                   preferred_element_type=jnp.float32)
        out = jnp.dot(ctx.reshape(M, D).astype(jnp.bfloat16), wo_ref[...],
                      preferred_element_type=jnp.float32) + bo_ref[...]
        return out                              # [M, D] f32

    x = x0_2d
    for l in range(n_layers):
        p = dict(zip(LAYER_KEYS, layer_refs[l * nper:(l + 1) * nper]))

        # 1) causal self-attention: one fused [M,D]x[D,3D] QKV matmul.
        qkv = (jnp.dot(x.astype(jnp.bfloat16), p["sa_wqkv"][...],
                       preferred_element_type=jnp.float32) + p["sa_bqkv"][...])
        sa = attention(qkv[:, 0:D], qkv[:, D:2 * D], qkv[:, 2 * D:3 * D],
                       p["sa_wo"], p["sa_bo"], causal)
        h1 = _layer_norm(x + sa, p["ln1_g"][...], p["ln1_b"][...])

        # 2) cross-attention against memory = embedding sum x0 (no mask).
        q = (jnp.dot(h1.astype(jnp.bfloat16), p["ca_wq"][...],
                     preferred_element_type=jnp.float32) + p["ca_bq"][...])
        kv = (jnp.dot(x0_bf, p["ca_wkv"][...],
                      preferred_element_type=jnp.float32) + p["ca_bkv"][...])
        ca = attention(q, kv[:, 0:D], kv[:, D:2 * D],
                       p["ca_wo"], p["ca_bo"], None)
        h2 = _layer_norm(h1 + ca, p["ln2_g"][...], p["ln2_b"][...])

        # 3) feed-forward (Linear -> ReLU -> Linear).
        hid = jnp.maximum(
            jnp.dot(h2.astype(jnp.bfloat16), p["ff_w1"][...],
                    preferred_element_type=jnp.float32) + p["ff_b1"][...], 0.0)
        ff = (jnp.dot(hid.astype(jnp.bfloat16), p["ff_w2"][...],
                      preferred_element_type=jnp.float32) + p["ff_b2"][...])
        x = _layer_norm(h2 + ff, p["ln3_g"][...], p["ln3_b"][...])

    # fc_out -> lane-dense [Bb, T, 512] output block.
    logits = (jnp.dot(x.astype(jnp.bfloat16), fc_w_ref[...],
                      preferred_element_type=jnp.float32) + fc_b_ref[...])
    out_ref[...] = logits.reshape(Bb, T, logits.shape[-1]).astype(out_ref.dtype)


# ------------------------------ host wrapper --------------------------------

def _pick_block_b(B, T, target_rows=256, max_rows=1024):
    """Largest divisor of B with Bb*T <= max_rows, stopping once Bb*T >= target."""
    best = 1
    for bb in range(1, B + 1):
        if B % bb != 0:
            continue
        if bb * T > max_rows:
            break
        best = bb
        if bb * T >= target_rows:
            break
    return best


def _const_map(ndim):
    zeros = (0,) * ndim
    return lambda i: zeros


def forward(params, idx_seq, cond):
    B, T = idx_seq.shape
    assert T <= MAX_LEN
    idx_seq = idx_seq.astype(jnp.int32)
    cond = cond.astype(jnp.int32)

    # Embedding sum on the host (plain XLA gathers): x0 = tok + pos + cond.
    x0 = (jnp.take(params["token_emb"], idx_seq, axis=0)
          + params["pos_emb"][None, :T, :]
          + jnp.take(params["cond_emb"], cond, axis=0)[:, None, :])   # [B, T, D] f32

    Bb = _pick_block_b(B, T)
    grid = (B // Bb,)

    flat_weights = []
    for lp in params["layers"]:
        flat_weights += [lp[k] for k in LAYER_KEYS]
    flat_weights += [params["fc_w"], params["fc_b"]]

    in_specs = [pl.BlockSpec((Bb, T, EMB_DIM), lambda i: (i, 0, 0))]
    in_specs += [pl.BlockSpec(w.shape, _const_map(w.ndim)) for w in flat_weights]

    kernel = functools.partial(fused_prior_kernel, n_heads=N_HEADS,
                               n_layers=N_LAYERS)

    return pl.pallas_call(
        kernel,
        out_shape=jax.ShapeDtypeStruct((B, T, NUM_EMBEDDINGS), jnp.float32),
        grid_spec=pltpu.PrefetchScalarGridSpec(
            num_scalar_prefetch=0,
            grid=grid,
            in_specs=in_specs,
            out_specs=pl.BlockSpec((Bb, T, NUM_EMBEDDINGS), lambda i: (i, 0, 0)),
        ),
        compiler_params=pltpu.CompilerParams(
            dimension_semantics=("parallel",)),   # batch blocks split across v7x TCs
    )(x0, *flat_weights)


# --------------------------- parameter construction -------------------------

def init_params(key):
    D, F, K = EMB_DIM, FF_HIDDEN, NUM_EMBEDDINGS
    Dh = D // N_HEADS
    scale = 1.0 / (Dh ** 0.5)
    keys = iter(jax.random.split(key, 64))
    bf16 = jnp.bfloat16

    def nrm(shape, s=0.02):
        return s * jax.random.normal(next(keys), shape, dtype=jnp.float32)

    params = {
        # embedding tables stay f32 (consumed by the host-side gather/sum).
        "token_emb": nrm((K, D)),
        "pos_emb": nrm((MAX_LEN, D)),
        "cond_emb": nrm((COND_DIM, D)),
        # matmul weights bf16 (MXU operands); biases f32.
        "fc_w": nrm((D, K)).astype(bf16),
        "fc_b": nrm((1, K)),
        "layers": [],
    }
    for _ in range(N_LAYERS):
        # Fold the 1/sqrt(Dh) attention scale into the query projection
        # (weight AND bias) once, host-side.  (When converting real PyTorch
        # weights, apply the same fold to in_proj q-columns / q-bias.)
        sa_wqkv = nrm((D, 3 * D)).at[:, :D].multiply(scale)
        sa_bqkv = nrm((1, 3 * D)).at[:, :D].multiply(scale)
        ca_wq = nrm((D, D)) * scale
        ca_bq = nrm((1, D)) * scale
        params["layers"].append({
            "sa_wqkv": sa_wqkv.astype(bf16), "sa_bqkv": sa_bqkv,
            "sa_wo": nrm((D, D)).astype(bf16), "sa_bo": nrm((1, D)),
            "ca_wq": ca_wq.astype(bf16), "ca_bq": ca_bq,
            "ca_wkv": nrm((D, 2 * D)).astype(bf16), "ca_bkv": nrm((1, 2 * D)),
            "ca_wo": nrm((D, D)).astype(bf16), "ca_bo": nrm((1, D)),
            "ln1_g": jnp.ones((1, D), jnp.float32), "ln1_b": jnp.zeros((1, D), jnp.float32),
            "ln2_g": jnp.ones((1, D), jnp.float32), "ln2_b": jnp.zeros((1, D), jnp.float32),
            "ln3_g": jnp.ones((1, D), jnp.float32), "ln3_b": jnp.zeros((1, D), jnp.float32),
            "ff_w1": nrm((D, F)).astype(bf16), "ff_b1": nrm((1, F)),
            "ff_w2": nrm((F, D)).astype(bf16), "ff_b2": nrm((1, D)),
        })
    return params


# ------------------------------ pure-JAX reference ---------------------------

def forward_reference(params, idx_seq, cond):
    D = EMB_DIM
    B, T = idx_seq.shape
    x0 = (jnp.take(params["token_emb"], idx_seq, axis=0)
          + params["pos_emb"][None, :T, :]
          + jnp.take(params["cond_emb"], cond, axis=0)[:, None, :])
    causal = jnp.triu(jnp.ones((T, T), bool), k=1)

    def attn(q, k, v, wo, bo, mask):
        H, Dh = N_HEADS, D // N_HEADS
        qh = q.reshape(B, T, H, Dh).transpose(0, 2, 1, 3)
        kh = k.reshape(B, T, H, Dh).transpose(0, 2, 1, 3)
        vh = v.reshape(B, T, H, Dh).transpose(0, 2, 1, 3)
        s = jnp.einsum("bhqd,bhkd->bhqk", qh, kh)   # scale already folded into q-proj
        if mask is not None:
            s = jnp.where(mask[None, None], -1e30, s)
        p = jax.nn.softmax(s, axis=-1)
        ctx = jnp.einsum("bhqk,bhkd->bhqd", p, vh)
        ctx = ctx.transpose(0, 2, 1, 3).reshape(B, T, D)
        return ctx @ wo.astype(jnp.float32) + bo

    def ln(v, g, b):
        mu = v.mean(-1, keepdims=True)
        var = ((v - mu) ** 2).mean(-1, keepdims=True)
        return (v - mu) * jax.lax.rsqrt(var + LN_EPS) * g + b

    x = x0
    for lp in params["layers"]:
        qkv = x @ lp["sa_wqkv"].astype(jnp.float32) + lp["sa_bqkv"]
        sa = attn(qkv[..., :D], qkv[..., D:2 * D], qkv[..., 2 * D:],
                  lp["sa_wo"], lp["sa_bo"], causal)
        h1 = ln(x + sa, lp["ln1_g"], lp["ln1_b"])
        q = h1 @ lp["ca_wq"].astype(jnp.float32) + lp["ca_bq"]
        kv = x0 @ lp["ca_wkv"].astype(jnp.float32) + lp["ca_bkv"]
        ca = attn(q, kv[..., :D], kv[..., D:], lp["ca_wo"], lp["ca_bo"], None)
        h2 = ln(h1 + ca, lp["ln2_g"], lp["ln2_b"])
        hid = jnp.maximum(h2 @ lp["ff_w1"].astype(jnp.float32) + lp["ff_b1"], 0.0)
        ff = hid @ lp["ff_w2"].astype(jnp.float32) + lp["ff_b2"]
        x = ln(h2 + ff, lp["ln3_g"], lp["ln3_b"])
    return x @ params["fc_w"].astype(jnp.float32) + params["fc_b"]


if __name__ == "__main__":
    key = jax.random.PRNGKey(0)
    pkey, ikey, ckey = jax.random.split(key, 3)
    params = init_params(pkey)

    B, T = 4, 8
    idx_seq = jax.random.randint(ikey, (B, T), 0, NUM_EMBEDDINGS, dtype=jnp.int32)
    cond = jax.random.randint(ckey, (B,), 0, COND_DIM, dtype=jnp.int32)

    logits = forward(params, idx_seq, cond)
    jax.block_until_ready(logits)
    assert logits.shape == (B, T, NUM_EMBEDDINGS)
    assert bool(jnp.all(jnp.isfinite(logits)))

    # Loose tolerance: bf16 MXU operands + approx reciprocal in the kernel.
    ref = forward_reference(params, idx_seq, cond)
    max_err = float(jnp.max(jnp.abs(logits - ref)))
    assert max_err < 1e-1, f"kernel/reference mismatch: max_abs_err={max_err}"

    print("KERNEL_OK")
</pallas_src>

<mosaic_0001>
module attributes {stable_mosaic.version = 11 : i64} {
  func.func @fused_prior_kernel(%arg0: i32, %arg1: memref<4x8x64xf32, #tpu.memory_space<vmem>>, %arg2: memref<64x192xbf16, #tpu.memory_space<vmem>>, %arg3: memref<1x192xf32, #tpu.memory_space<vmem>>, %arg4: memref<64x64xbf16, #tpu.memory_space<vmem>>, %arg5: memref<1x64xf32, #tpu.memory_space<vmem>>, %arg6: memref<64x64xbf16, #tpu.memory_space<vmem>>, %arg7: memref<1x64xf32, #tpu.memory_space<vmem>>, %arg8: memref<64x128xbf16, #tpu.memory_space<vmem>>, %arg9: memref<1x128xf32, #tpu.memory_space<vmem>>, %arg10: memref<64x64xbf16, #tpu.memory_space<vmem>>, %arg11: memref<1x64xf32, #tpu.memory_space<vmem>>, %arg12: memref<1x64xf32, #tpu.memory_space<vmem>>, %arg13: memref<1x64xf32, #tpu.memory_space<vmem>>, %arg14: memref<1x64xf32, #tpu.memory_space<vmem>>, %arg15: memref<1x64xf32, #tpu.memory_space<vmem>>, %arg16: memref<1x64xf32, #tpu.memory_space<vmem>>, %arg17: memref<1x64xf32, #tpu.memory_space<vmem>>, %arg18: memref<64x128xbf16, #tpu.memory_space<vmem>>, %arg19: memref<1x128xf32, #tpu.memory_space<vmem>>, %arg20: memref<128x64xbf16, #tpu.memory_space<vmem>>, %arg21: memref<1x64xf32, #tpu.memory_space<vmem>>, %arg22: memref<64x192xbf16, #tpu.memory_space<vmem>>, %arg23: memref<1x192xf32, #tpu.memory_space<vmem>>, %arg24: memref<64x64xbf16, #tpu.memory_space<vmem>>, %arg25: memref<1x64xf32, #tpu.memory_space<vmem>>, %arg26: memref<64x64xbf16, #tpu.memory_space<vmem>>, %arg27: memref<1x64xf32, #tpu.memory_space<vmem>>, %arg28: memref<64x128xbf16, #tpu.memory_space<vmem>>, %arg29: memref<1x128xf32, #tpu.memory_space<vmem>>, %arg30: memref<64x64xbf16, #tpu.memory_space<vmem>>, %arg31: memref<1x64xf32, #tpu.memory_space<vmem>>, %arg32: memref<1x64xf32, #tpu.memory_space<vmem>>, %arg33: memref<1x64xf32, #tpu.memory_space<vmem>>, %arg34: memref<1x64xf32, #tpu.memory_space<vmem>>, %arg35: memref<1x64xf32, #tpu.memory_space<vmem>>, %arg36: memref<1x64xf32, #tpu.memory_space<vmem>>, %arg37: memref<1x64xf32, #tpu.memory_space<vmem>>, %arg38: memref<64x128xbf16, #tpu.memory_space<vmem>>, %arg39: memref<1x128xf32, #tpu.memory_space<vmem>>, %arg40: memref<128x64xbf16, #tpu.memory_space<vmem>>, %arg41: memref<1x64xf32, #tpu.memory_space<vmem>>, %arg42: memref<64x512xbf16, #tpu.memory_space<vmem>>, %arg43: memref<1x512xf32, #tpu.memory_space<vmem>>, %arg44: memref<4x8x512xf32, #tpu.memory_space<vmem>>) attributes {dimension_semantics = [#tpu.dimension_semantics<parallel>], iteration_bounds = array<i64: 1>, scalar_prefetch = 0 : i64, scratch_operands = 0 : i64, tpu.core_type = #tpu.core_type<tc>, window_params = [{transform_indices = @transform_0, window_bounds = array<i64: 4, 8, 64>}, {pipeline_mode = #tpu.pipeline_mode<synchronous>, transform_indices = @transform_1, window_bounds = array<i64: 64, 192>}, {pipeline_mode = #tpu.pipeline_mode<synchronous>, transform_indices = @transform_2, window_bounds = array<i64: 1, 192>}, {pipeline_mode = #tpu.pipeline_mode<synchronous>, transform_indices = @transform_3, window_bounds = array<i64: 64, 64>}, {pipeline_mode = #tpu.pipeline_mode<synchronous>, transform_indices = @transform_4, window_bounds = array<i64: 1, 64>}, {pipeline_mode = #tpu.pipeline_mode<synchronous>, transform_indices = @transform_5, window_bounds = array<i64: 64, 64>}, {pipeline_mode = #tpu.pipeline_mode<synchronous>, transform_indices = @transform_6, window_bounds = array<i64: 1, 64>}, {pipeline_mode = #tpu.pipeline_mode<synchronous>, transform_indices = @transform_7, window_bounds = array<i64: 64, 128>}, {pipeline_mode = #tpu.pipeline_mode<synchronous>, transform_indices = @transform_8, window_bounds = array<i64: 1, 128>}, {pipeline_mode = #tpu.pipeline_mode<synchronous>, transform_indices = @transform_9, window_bounds = array<i64: 64, 64>}, {pipeline_mode = #tpu.pipeline_mode<synchronous>, transform_indices = @transform_10, window_bounds = array<i64: 1, 64>}, {pipeline_mode = #tpu.pipeline_mode<synchronous>, transform_indices = @transform_11, window_bounds = array<i64: 1, 64>}, {pipeline_mode = #tpu.pipeline_mode<synchronous>, transform_indices = @transform_12, window_bounds = array<i64: 1, 64>}, {pipeline_mode = #tpu.pipeline_mode<synchronous>, transform_indices = @transform_13, window_bounds = array<i64: 1, 64>}, {pipeline_mode = #tpu.pipeline_mode<synchronous>, transform_indices = @transform_14, window_bounds = array<i64: 1, 64>}, {pipeline_mode = #tpu.pipeline_mode<synchronous>, transform_indices = @transform_15, window_bounds = array<i64: 1, 64>}, {pipeline_mode = #tpu.pipeline_mode<synchronous>, transform_indices = @transform_16, window_bounds = array<i64: 1, 64>}, {pipeline_mode = #tpu.pipeline_mode<synchronous>, transform_indices = @transform_17, window_bounds = array<i64: 64, 128>}, {pipeline_mode = #tpu.pipeline_mode<synchronous>, transform_indices = @transform_18, window_bounds = array<i64: 1, 128>}, {pipeline_mode = #tpu.pipeline_mode<synchronous>, transform_indices = @transform_19, window_bounds = array<i64: 128, 64>}, {pipeline_mode = #tpu.pipeline_mode<synchronous>, transform_indices = @transform_20, window_bounds = array<i64: 1, 64>}, {pipeline_mode = #tpu.pipeline_mode<synchronous>, transform_indices = @transform_21, window_bounds = array<i64: 64, 192>}, {pipeline_mode = #tpu.pipeline_mode<synchronous>, transform_indices = @transform_22, window_bounds = array<i64: 1, 192>}, {pipeline_mode = #tpu.pipeline_mode<synchronous>, transform_indices = @transform_23, window_bounds = array<i64: 64, 64>}, {pipeline_mode = #tpu.pipeline_mode<synchronous>, transform_indices = @transform_24, window_bounds = array<i64: 1, 64>}, {pipeline_mode = #tpu.pipeline_mode<synchronous>, transform_indices = @transform_25, window_bounds = array<i64: 64, 64>}, {pipeline_mode = #tpu.pipeline_mode<synchronous>, transform_indices = @transform_26, window_bounds = array<i64: 1, 64>}, {pipeline_mode = #tpu.pipeline_mode<synchronous>, transform_indices = @transform_27, window_bounds = array<i64: 64, 128>}, {pipeline_mode = #tpu.pipeline_mode<synchronous>, transform_indices = @transform_28, window_bounds = array<i64: 1, 128>}, {pipeline_mode = #tpu.pipeline_mode<synchronous>, transform_indices = @transform_29, window_bounds = array<i64: 64, 64>}, {pipeline_mode = #tpu.pipeline_mode<synchronous>, transform_indices = @transform_30, window_bounds = array<i64: 1, 64>}, {pipeline_mode = #tpu.pipeline_mode<synchronous>, transform_indices = @transform_31, window_bounds = array<i64: 1, 64>}, {pipeline_mode = #tpu.pipeline_mode<synchronous>, transform_indices = @transform_32, window_bounds = array<i64: 1, 64>}, {pipeline_mode = #tpu.pipeline_mode<synchronous>, transform_indices = @transform_33, window_bounds = array<i64: 1, 64>}, {pipeline_mode = #tpu.pipeline_mode<synchronous>, transform_indices = @transform_34, window_bounds = array<i64: 1, 64>}, {pipeline_mode = #tpu.pipeline_mode<synchronous>, transform_indices = @transform_35, window_bounds = array<i64: 1, 64>}, {pipeline_mode = #tpu.pipeline_mode<synchronous>, transform_indices = @transform_36, window_bounds = array<i64: 1, 64>}, {pipeline_mode = #tpu.pipeline_mode<synchronous>, transform_indices = @transform_37, window_bounds = array<i64: 64, 128>}, {pipeline_mode = #tpu.pipeline_mode<synchronous>, transform_indices = @transform_38, window_bounds = array<i64: 1, 128>}, {pipeline_mode = #tpu.pipeline_mode<synchronous>, transform_indices = @transform_39, window_bounds = array<i64: 128, 64>}, {pipeline_mode = #tpu.pipeline_mode<synchronous>, transform_indices = @transform_40, window_bounds = array<i64: 1, 64>}, {pipeline_mode = #tpu.pipeline_mode<synchronous>, transform_indices = @transform_41, window_bounds = array<i64: 64, 512>}, {pipeline_mode = #tpu.pipeline_mode<synchronous>, transform_indices = @transform_42, window_bounds = array<i64: 1, 512>}, {transform_indices = @transform_43, window_bounds = array<i64: 4, 8, 512>}]} {
    %c0 = arith.constant 0 : index
    %c0_0 = arith.constant 0 : index
    %c0_1 = arith.constant 0 : index
    %0 = vector.load %arg1[%c0, %c0_0, %c0_1] : memref<4x8x64xf32, #tpu.memory_space<vmem>>, vector<4x8x64xf32>
    %1 = vector.shape_cast %0 : vector<4x8x64xf32> to vector<32x64xf32>
    %2 = arith.truncf %1 : vector<32x64xf32> to vector<32x64xbf16>
    %3 = tpu.iota {dimensions = array<i32: 2>} : vector<1x1x64xi32>
    %c0_i32 = arith.constant 0 : i32
    %4 = vector.broadcast %c0_i32 : i32 to vector<1x1x64xi32>
    %5 = arith.cmpi sge, %3, %4 : vector<1x1x64xi32>
    %c16_i32 = arith.constant 16 : i32
    %6 = vector.broadcast %c16_i32 : i32 to vector<1x1x64xi32>
    %7 = arith.cmpi slt, %3, %6 : vector<1x1x64xi32>
    %8 = arith.andi %5, %7 : vector<1x1x64xi1>
    %9 = arith.extui %8 : vector<1x1x64xi1> to vector<1x1x64xi32>
    %10 = arith.sitofp %9 : vector<1x1x64xi32> to vector<1x1x64xf32>
    %c16_i32_2 = arith.constant 16 : i32
    %11 = vector.broadcast %c16_i32_2 : i32 to vector<1x1x64xi32>
    %12 = arith.cmpi sge, %3, %11 : vector<1x1x64xi32>
    %c32_i32 = arith.constant 32 : i32
    %13 = vector.broadcast %c32_i32 : i32 to vector<1x1x64xi32>
    %14 = arith.cmpi slt, %3, %13 : vector<1x1x64xi32>
    %15 = arith.andi %12, %14 : vector<1x1x64xi1>
    %16 = arith.extui %15 : vector<1x1x64xi1> to vector<1x1x64xi32>
    %17 = arith.sitofp %16 : vector<1x1x64xi32> to vector<1x1x64xf32>
    %c32_i32_3 = arith.constant 32 : i32
    %18 = vector.broadcast %c32_i32_3 : i32 to vector<1x1x64xi32>
    %19 = arith.cmpi sge, %3, %18 : vector<1x1x64xi32>
    %c48_i32 = arith.constant 48 : i32
    %20 = vector.broadcast %c48_i32 : i32 to vector<1x1x64xi32>
    %21 = arith.cmpi slt, %3, %20 : vector<1x1x64xi32>
    %22 = arith.andi %19, %21 : vector<1x1x64xi1>
    %23 = arith.extui %22 : vector<1x1x64xi1> to vector<1x1x64xi32>
    %24 = arith.sitofp %23 : vector<1x1x64xi32> to vector<1x1x64xf32>
    %c48_i32_4 = arith.constant 48 : i32
    %25 = vector.broadcast %c48_i32_4 : i32 to vector<1x1x64xi32>
    %26 = arith.cmpi sge, %3, %25 : vector<1x1x64xi32>
    %c64_i32 = arith.constant 64 : i32
    %27 = vector.broadcast %c64_i32 : i32 to vector<1x1x64xi32>
    %28 = arith.cmpi slt, %3, %27 : vector<1x1x64xi32>
    %29 = arith.andi %26, %28 : vector<1x1x64xi1>
    %30 = arith.extui %29 : vector<1x1x64xi1> to vector<1x1x64xi32>
    %31 = arith.sitofp %30 : vector<1x1x64xi32> to vector<1x1x64xf32>
    %32 = tpu.iota {dimensions = array<i32: 1>} : vector<1x8x8xi32>
    %33 = tpu.iota {dimensions = array<i32: 2>} : vector<1x8x8xi32>
    %34 = arith.cmpi sgt, %33, %32 : vector<1x8x8xi32>
    %35 = arith.truncf %1 : vector<32x64xf32> to vector<32x64xbf16>
    %c0_5 = arith.constant 0 : index
    %c0_6 = arith.constant 0 : index
    %36 = vector.load %arg2[%c0_5, %c0_6] : memref<64x192xbf16, #tpu.memory_space<vmem>>, vector<64x192xbf16>
    %cst = arith.constant dense<0.000000e+00> : vector<32x192xf32>
    %37 = tpu.matmul %35, %36, %cst {dimension_numbers = #tpu.dot_dimension_numbers<[1], [0], [0], [1], [0, 0, 1, 1], [], []>} : vector<32x64xbf16>, vector<64x192xbf16>, vector<32x192xf32> -> vector<32x192xf32>
    %c0_7 = arith.constant 0 : index
    %c0_8 = arith.constant 0 : index
    %38 = vector.load %arg3[%c0_7, %c0_8] : memref<1x192xf32, #tpu.memory_space<vmem>>, vector<1x192xf32>
    %39 = vector.broadcast %38 : vector<1x192xf32> to vector<32x192xf32>
    %40 = arith.addf %37, %39 : vector<32x192xf32>
    %41 = vector.extract_strided_slice %40 {offsets = [0, 0], sizes = [32, 64], strides = [1, 1]} : vector<32x192xf32> to vector<32x64xf32>
    %42 = vector.extract_strided_slice %40 {offsets = [0, 64], sizes = [32, 64], strides = [1, 1]} : vector<32x192xf32> to vector<32x64xf32>
    %43 = vector.extract_strided_slice %40 {offsets = [0, 128], sizes = [32, 64], strides = [1, 1]} : vector<32x192xf32> to vector<32x64xf32>
    %44 = vector.shape_cast %41 : vector<32x64xf32> to vector<4x8x64xf32>
    %45 = vector.shape_cast %42 : vector<32x64xf32> to vector<4x8x64xf32>
    %46 = arith.truncf %45 : vector<4x8x64xf32> to vector<4x8x64xbf16>
    %47 = vector.shape_cast %43 : vector<32x64xf32> to vector<4x8x64xf32>
    %cst_9 = arith.constant 0.000000e+00 : f32
    %48 = vector.broadcast %cst_9 : f32 to vector<4x8x64xf32>
    %49 = vector.broadcast %10 : vector<1x1x64xf32> to vector<4x8x64xf32>
    %50 = arith.mulf %44, %49 : vector<4x8x64xf32>
    %51 = arith.truncf %50 : vector<4x8x64xf32> to vector<4x8x64xbf16>
    "tpu.trace_start"() <{level = 10 : i32, message = "bqd,bkd->bqk"}> : () -> ()
    %cst_10 = arith.constant dense<0.000000e+00> : vector<4x8x8xf32>
    %52 = tpu.matmul %51, %46, %cst_10 {dimension_numbers = #tpu.dot_dimension_numbers<[2], [2], [1], [1], [0, 0, 0, 1, 1, 1], [0], [0]>} : vector<4x8x64xbf16>, vector<4x8x64xbf16>, vector<4x8x8xf32> -> vector<4x8x8xf32>
    %cst_11 = arith.constant -1.000000e+30 : f32
    "tpu.trace_stop"() : () -> ()
    %53 = vector.shape_cast %34 : vector<1x8x8xi1> to vector<1x8x8xi1>
    %54 = vector.broadcast %53 : vector<1x8x8xi1> to vector<4x8x8xi1>
    %55 = vector.broadcast %cst_11 : f32 to vector<4x8x8xf32>
    %56 = arith.select %54, %55, %52 : vector<4x8x8xi1>, vector<4x8x8xf32>
    %cst_12 = arith.constant dense<0xFF800000> : vector<4x8xf32>
    %57 = vector.multi_reduction <maximumf>, %56, %cst_12 [2] : vector<4x8x8xf32> to vector<4x8xf32>
    %58 = vector.shape_cast %57 : vector<4x8xf32> to vector<4x8x1xf32>
    %59 = vector.broadcast %58 : vector<4x8x1xf32> to vector<4x8x8xf32>
    %60 = arith.subf %56, %59 : vector<4x8x8xf32>
    %61 = math.exp %60 : vector<4x8x8xf32>
    %cst_13 = arith.constant dense<0.000000e+00> : vector<4x8xf32>
    %62 = vector.multi_reduction <add>, %61, %cst_13 [2] : vector<4x8x8xf32> to vector<4x8xf32>
    %63 = vector.shape_cast %62 : vector<4x8xf32> to vector<4x8x1xf32>
    %64 = tpu.reciprocal %63 {approx = true} : vector<4x8x1xf32> -> vector<4x8x1xf32>
    %65 = vector.broadcast %64 : vector<4x8x1xf32> to vector<4x8x8xf32>
    %66 = arith.mulf %61, %65 : vector<4x8x8xf32>
    %67 = vector.broadcast %10 : vector<1x1x64xf32> to vector<4x8x64xf32>
    %68 = arith.mulf %47, %67 : vector<4x8x64xf32>
    %69 = arith.truncf %68 : vector<4x8x64xf32> to vector<4x8x64xbf16>
    %70 = arith.truncf %66 : vector<4x8x8xf32> to vector<4x8x8xbf16>
    "tpu.trace_start"() <{level = 10 : i32, message = "bqk,bkd->bqd"}> : () -> ()
    %cst_14 = arith.constant dense<0.000000e+00> : vector<4x8x64xf32>
    %71 = tpu.matmul %70, %69, %cst_14 {dimension_numbers = #tpu.dot_dimension_numbers<[2], [1], [1], [2], [0, 0, 0, 1, 1, 2], [0], [0]>} : vector<4x8x8xbf16>, vector<4x8x64xbf16>, vector<4x8x64xf32> -> vector<4x8x64xf32>
    "tpu.trace_stop"() : () -> ()
    %72 = arith.addf %48, %71 : vector<4x8x64xf32>
    %73 = vector.broadcast %17 : vector<1x1x64xf32> to vector<4x8x64xf32>
    %74 = arith.mulf %44, %73 : vector<4x8x64xf32>
    %75 = arith.truncf %74 : vector<4x8x64xf32> to vector<4x8x64xbf16>
    "tpu.trace_start"() <{level = 10 : i32, message = "bqd,bkd->bqk"}> : () -> ()
    %cst_15 = arith.constant dense<0.000000e+00> : vector<4x8x8xf32>
    %76 = tpu.matmul %75, %46, %cst_15 {dimension_numbers = #tpu.dot_dimension_numbers<[2], [2], [1], [1], [0, 0, 0, 1, 1, 1], [0], [0]>} : vector<4x8x64xbf16>, vector<4x8x64xbf16>, vector<4x8x8xf32> -> vector<4x8x8xf32>
    %cst_16 = arith.constant -1.000000e+30 : f32
    "tpu.trace_stop"() : () -> ()
    %77 = vector.shape_cast %34 : vector<1x8x8xi1> to vector<1x8x8xi1>
    %78 = vector.broadcast %77 : vector<1x8x8xi1> to vector<4x8x8xi1>
    %79 = vector.broadcast %cst_16 : f32 to vector<4x8x8xf32>
    %80 = arith.select %78, %79, %76 : vector<4x8x8xi1>, vector<4x8x8xf32>
    %cst_17 = arith.constant dense<0xFF800000> : vector<4x8xf32>
    %81 = vector.multi_reduction <maximumf>, %80, %cst_17 [2] : vector<4x8x8xf32> to vector<4x8xf32>
    %82 = vector.shape_cast %81 : vector<4x8xf32> to vector<4x8x1xf32>
    %83 = vector.broadcast %82 : vector<4x8x1xf32> to vector<4x8x8xf32>
    %84 = arith.subf %80, %83 : vector<4x8x8xf32>
    %85 = math.exp %84 : vector<4x8x8xf32>
    %cst_18 = arith.constant dense<0.000000e+00> : vector<4x8xf32>
    %86 = vector.multi_reduction <add>, %85, %cst_18 [2] : vector<4x8x8xf32> to vector<4x8xf32>
    %87 = vector.shape_cast %86 : vector<4x8xf32> to vector<4x8x1xf32>
    %88 = tpu.reciprocal %87 {approx = true} : vector<4x8x1xf32> -> vector<4x8x1xf32>
    %89 = vector.broadcast %88 : vector<4x8x1xf32> to vector<4x8x8xf32>
    %90 = arith.mulf %85, %89 : vector<4x8x8xf32>
    %91 = vector.broadcast %17 : vector<1x1x64xf32> to vector<4x8x64xf32>
    %92 = arith.mulf %47, %91 : vector<4x8x64xf32>
    %93 = arith.truncf %92 : vector<4x8x64xf32> to vector<4x8x64xbf16>
    %94 = arith.truncf %90 : vector<4x8x8xf32> to vector<4x8x8xbf16>
    "tpu.trace_start"() <{level = 10 : i32, message = "bqk,bkd->bqd"}> : () -> ()
    %cst_19 = arith.constant dense<0.000000e+00> : vector<4x8x64xf32>
    %95 = tpu.matmul %94, %93, %cst_19 {dimension_numbers = #tpu.dot_dimension_numbers<[2], [1], [1], [2], [0, 0, 0, 1, 1, 2], [0], [0]>} : vector<4x8x8xbf16>, vector<4x8x64xbf16>, vector<4x8x64xf32> -> vector<4x8x64xf32>
    "tpu.trace_stop"() : () -> ()
    %96 = arith.addf %72, %95 : vector<4x8x64xf32>
    %97 = vector.broadcast %24 : vector<1x1x64xf32> to vector<4x8x64xf32>
    %98 = arith.mulf %44, %97 : vector<4x8x64xf32>
    %99 = arith.truncf %98 : vector<4x8x64xf32> to vector<4x8x64xbf16>
    "tpu.trace_start"() <{level = 10 : i32, message = "bqd,bkd->bqk"}> : () -> ()
    %cst_20 = arith.constant dense<0.000000e+00> : vector<4x8x8xf32>
    %100 = tpu.matmul %99, %46, %cst_20 {dimension_numbers = #tpu.dot_dimension_numbers<[2], [2], [1], [1], [0, 0, 0, 1, 1, 1], [0], [0]>} : vector<4x8x64xbf16>, vector<4x8x64xbf16>, vector<4x8x8xf32> -> vector<4x8x8xf32>
    %cst_21 = arith.constant -1.000000e+30 : f32
    "tpu.trace_stop"() : () -> ()
    %101 = vector.shape_cast %34 : vector<1x8x8xi1> to vector<1x8x8xi1>
    %102 = vector.broadcast %101 : vector<1x8x8xi1> to vector<4x8x8xi1>
    %103 = vector.broadcast %cst_21 : f32 to vector<4x8x8xf32>
    %104 = arith.select %102, %103, %100 : vector<4x8x8xi1>, vector<4x8x8xf32>
    %cst_22 = arith.constant dense<0xFF800000> : vector<4x8xf32>
    %105 = vector.multi_reduction <maximumf>, %104, %cst_22 [2] : vector<4x8x8xf32> to vector<4x8xf32>
    %106 = vector.shape_cast %105 : vector<4x8xf32> to vector<4x8x1xf32>
    %107 = vector.broadcast %106 : vector<4x8x1xf32> to vector<4x8x8xf32>
    %108 = arith.subf %104, %107 : vector<4x8x8xf32>
    %109 = math.exp %108 : vector<4x8x8xf32>
    %cst_23 = arith.constant dense<0.000000e+00> : vector<4x8xf32>
    %110 = vector.multi_reduction <add>, %109, %cst_23 [2] : vector<4x8x8xf32> to vector<4x8xf32>
    %111 = vector.shape_cast %110 : vector<4x8xf32> to vector<4x8x1xf32>
    %112 = tpu.reciprocal %111 {approx = true} : vector<4x8x1xf32> -> vector<4x8x1xf32>
    %113 = vector.broadcast %112 : vector<4x8x1xf32> to vector<4x8x8xf32>
    %114 = arith.mulf %109, %113 : vector<4x8x8xf32>
    %115 = vector.broadcast %24 : vector<1x1x64xf32> to vector<4x8x64xf32>
    %116 = arith.mulf %47, %115 : vector<4x8x64xf32>
    %117 = arith.truncf %116 : vector<4x8x64xf32> to vector<4x8x64xbf16>
    %118 = arith.truncf %114 : vector<4x8x8xf32> to vector<4x8x8xbf16>
    "tpu.trace_start"() <{level = 10 : i32, message = "bqk,bkd->bqd"}> : () -> ()
    %cst_24 = arith.constant dense<0.000000e+00> : vector<4x8x64xf32>
    %119 = tpu.matmul %118, %117, %cst_24 {dimension_numbers = #tpu.dot_dimension_numbers<[2], [1], [1], [2], [0, 0, 0, 1, 1, 2], [0], [0]>} : vector<4x8x8xbf16>, vector<4x8x64xbf16>, vector<4x8x64xf32> -> vector<4x8x64xf32>
    "tpu.trace_stop"() : () -> ()
    %120 = arith.addf %96, %119 : vector<4x8x64xf32>
    %121 = vector.broadcast %31 : vector<1x1x64xf32> to vector<4x8x64xf32>
    %122 = arith.mulf %44, %121 : vector<4x8x64xf32>
    %123 = arith.truncf %122 : vector<4x8x64xf32> to vector<4x8x64xbf16>
    "tpu.trace_start"() <{level = 10 : i32, message = "bqd,bkd->bqk"}> : () -> ()
    %cst_25 = arith.constant dense<0.000000e+00> : vector<4x8x8xf32>
    %124 = tpu.matmul %123, %46, %cst_25 {dimension_numbers = #tpu.dot_dimension_numbers<[2], [2], [1], [1], [0, 0, 0, 1, 1, 1], [0], [0]>} : vector<4x8x64xbf16>, vector<4x8x64xbf16>, vector<4x8x8xf32> -> vector<4x8x8xf32>
    %cst_26 = arith.constant -1.000000e+30 : f32
    "tpu.trace_stop"() : () -> ()
    %125 = vector.shape_cast %34 : vector<1x8x8xi1> to vector<1x8x8xi1>
    %126 = vector.broadcast %125 : vector<1x8x8xi1> to vector<4x8x8xi1>
    %127 = vector.broadcast %cst_26 : f32 to vector<4x8x8xf32>
    %128 = arith.select %126, %127, %124 : vector<4x8x8xi1>, vector<4x8x8xf32>
    %cst_27 = arith.constant dense<0xFF800000> : vector<4x8xf32>
    %129 = vector.multi_reduction <maximumf>, %128, %cst_27 [2] : vector<4x8x8xf32> to vector<4x8xf32>
    %130 = vector.shape_cast %129 : vector<4x8xf32> to vector<4x8x1xf32>
    %131 = vector.broadcast %130 : vector<4x8x1xf32> to vector<4x8x8xf32>
    %132 = arith.subf %128, %131 : vector<4x8x8xf32>
    %133 = math.exp %132 : vector<4x8x8xf32>
    %cst_28 = arith.constant dense<0.000000e+00> : vector<4x8xf32>
    %134 = vector.multi_reduction <add>, %133, %cst_28 [2] : vector<4x8x8xf32> to vector<4x8xf32>
    %135 = vector.shape_cast %134 : vector<4x8xf32> to vector<4x8x1xf32>
    %136 = tpu.reciprocal %135 {approx = true} : vector<4x8x1xf32> -> vector<4x8x1xf32>
    %137 = vector.broadcast %136 : vector<4x8x1xf32> to vector<4x8x8xf32>
    %138 = arith.mulf %133, %137 : vector<4x8x8xf32>
    %139 = vector.broadcast %31 : vector<1x1x64xf32> to vector<4x8x64xf32>
    %140 = arith.mulf %47, %139 : vector<4x8x64xf32>
    %141 = arith.truncf %140 : vector<4x8x64xf32> to vector<4x8x64xbf16>
    %142 = arith.truncf %138 : vector<4x8x8xf32> to vector<4x8x8xbf16>
    "tpu.trace_start"() <{level = 10 : i32, message = "bqk,bkd->bqd"}> : () -> ()
    %cst_29 = arith.constant dense<0.000000e+00> : vector<4x8x64xf32>
    %143 = tpu.matmul %142, %141, %cst_29 {dimension_numbers = #tpu.dot_dimension_numbers<[2], [1], [1], [2], [0, 0, 0, 1, 1, 2], [0], [0]>} : vector<4x8x8xbf16>, vector<4x8x64xbf16>, vector<4x8x64xf32> -> vector<4x8x64xf32>
    "tpu.trace_stop"() : () -> ()
    %144 = arith.addf %120, %143 : vector<4x8x64xf32>
    %145 = vector.shape_cast %144 : vector<4x8x64xf32> to vector<32x64xf32>
    %146 = arith.truncf %145 : vector<32x64xf32> to vector<32x64xbf16>
    %c0_30 = arith.constant 0 : index
    %c0_31 = arith.constant 0 : index
    %147 = vector.load %arg4[%c0_30, %c0_31] : memref<64x64xbf16, #tpu.memory_space<vmem>>, vector<64x64xbf16>
    %cst_32 = arith.constant dense<0.000000e+00> : vector<32x64xf32>
    %148 = tpu.matmul %146, %147, %cst_32 {dimension_numbers = #tpu.dot_dimension_numbers<[1], [0], [0], [1], [0, 0, 1, 1], [], []>} : vector<32x64xbf16>, vector<64x64xbf16>, vector<32x64xf32> -> vector<32x64xf32>
    %c0_33 = arith.constant 0 : index
    %c0_34 = arith.constant 0 : index
    %149 = vector.load %arg5[%c0_33, %c0_34] : memref<1x64xf32, #tpu.memory_space<vmem>>, vector<1x64xf32>
    %150 = vector.broadcast %149 : vector<1x64xf32> to vector<32x64xf32>
    %151 = arith.addf %148, %150 : vector<32x64xf32>
    %152 = arith.addf %1, %151 : vector<32x64xf32>
    %c0_35 = arith.constant 0 : index
    %c0_36 = arith.constant 0 : index
    %153 = vector.load %arg12[%c0_35, %c0_36] : memref<1x64xf32, #tpu.memory_space<vmem>>, vector<1x64xf32>
    %c0_37 = arith.constant 0 : index
    %c0_38 = arith.constant 0 : index
    %154 = vector.load %arg13[%c0_37, %c0_38] : memref<1x64xf32, #tpu.memory_space<vmem>>, vector<1x64xf32>
    %cst_39 = arith.constant dense<0.000000e+00> : vector<32xf32>
    %155 = vector.multi_reduction <add>, %152, %cst_39 [1] : vector<32x64xf32> to vector<32xf32>
    %156 = vector.shape_cast %155 : vector<32xf32> to vector<32x1xf32>
    %cst_40 = arith.constant 6.400000e+01 : f32
    %157 = vector.broadcast %cst_40 : f32 to vector<32x1xf32>
    %158 = arith.divf %156, %157 : vector<32x1xf32>
    %159 = vector.broadcast %158 : vector<32x1xf32> to vector<32x64xf32>
    %160 = arith.subf %152, %159 : vector<32x64xf32>
    %161 = arith.mulf %160, %160 : vector<32x64xf32>
    %cst_41 = arith.constant dense<0.000000e+00> : vector<32xf32>
    %162 = vector.multi_reduction <add>, %161, %cst_41 [1] : vector<32x64xf32> to vector<32xf32>
    %163 = vector.shape_cast %162 : vector<32xf32> to vector<32x1xf32>
    %cst_42 = arith.constant 6.400000e+01 : f32
    %164 = vector.broadcast %cst_42 : f32 to vector<32x1xf32>
    %165 = arith.divf %163, %164 : vector<32x1xf32>
    %166 = vector.broadcast %158 : vector<32x1xf32> to vector<32x64xf32>
    %167 = arith.subf %152, %166 : vector<32x64xf32>
    %cst_43 = arith.constant 9.99999974E-6 : f32
    %168 = vector.broadcast %cst_43 : f32 to vector<32x1xf32>
    %169 = arith.addf %165, %168 : vector<32x1xf32>
    %170 = math.rsqrt %169 : vector<32x1xf32>
    %171 = vector.broadcast %170 : vector<32x1xf32> to vector<32x64xf32>
    %172 = arith.mulf %167, %171 : vector<32x64xf32>
    %173 = vector.broadcast %153 : vector<1x64xf32> to vector<32x64xf32>
    %174 = arith.mulf %172, %173 : vector<32x64xf32>
    %175 = vector.broadcast %154 : vector<1x64xf32> to vector<32x64xf32>
    %176 = arith.addf %174, %175 : vector<32x64xf32>
    %177 = arith.truncf %176 : vector<32x64xf32> to vector<32x64xbf16>
    %c0_44 = arith.constant 0 : index
    %c0_45 = arith.constant 0 : index
    %178 = vector.load %arg6[%c0_44, %c0_45] : memref<64x64xbf16, #tpu.memory_space<vmem>>, vector<64x64xbf16>
    %cst_46 = arith.constant dense<0.000000e+00> : vector<32x64xf32>
    %179 = tpu.matmul %177, %178, %cst_46 {dimension_numbers = #tpu.dot_dimension_numbers<[1], [0], [0], [1], [0, 0, 1, 1], [], []>} : vector<32x64xbf16>, vector<64x64xbf16>, vector<32x64xf32> -> vector<32x64xf32>
    %c0_47 = arith.constant 0 : index
    %c0_48 = arith.constant 0 : index
    %180 = vector.load %arg7[%c0_47, %c0_48] : memref<1x64xf32, #tpu.memory_space<vmem>>, vector<1x64xf32>
    %181 = vector.broadcast %180 : vector<1x64xf32> to vector<32x64xf32>
    %182 = arith.addf %179, %181 : vector<32x64xf32>
    %c0_49 = arith.constant 0 : index
    %c0_50 = arith.constant 0 : index
    %183 = vector.load %arg8[%c0_49, %c0_50] : memref<64x128xbf16, #tpu.memory_space<vmem>>, vector<64x128xbf16>
    %cst_51 = arith.constant dense<0.000000e+00> : vector<32x128xf32>
    %184 = tpu.matmul %2, %183, %cst_51 {dimension_numbers = #tpu.dot_dimension_numbers<[1], [0], [0], [1], [0, 0, 1, 1], [], []>} : vector<32x64xbf16>, vector<64x128xbf16>, vector<32x128xf32> -> vector<32x128xf32>
    %c0_52 = arith.constant 0 : index
    %c0_53 = arith.constant 0 : index
    %185 = vector.load %arg9[%c0_52, %c0_53] : memref<1x128xf32, #tpu.memory_space<vmem>>, vector<1x128xf32>
    %186 = vector.broadcast %185 : vector<1x128xf32> to vector<32x128xf32>
    %187 = arith.addf %184, %186 : vector<32x128xf32>
    %188 = vector.extract_strided_slice %187 {offsets = [0, 0], sizes = [32, 64], strides = [1, 1]} : vector<32x128xf32> to vector<32x64xf32>
    %189 = vector.extract_strided_slice %187 {offsets = [0, 64], sizes = [32, 64], strides = [1, 1]} : vector<32x128xf32> to vector<32x64xf32>
    %190 = vector.shape_cast %182 : vector<32x64xf32> to vector<4x8x64xf32>
    %191 = vector.shape_cast %188 : vector<32x64xf32> to vector<4x8x64xf32>
    %192 = arith.truncf %191 : vector<4x8x64xf32> to vector<4x8x64xbf16>
    %193 = vector.shape_cast %189 : vector<32x64xf32> to vector<4x8x64xf32>
    %cst_54 = arith.constant 0.000000e+00 : f32
    %194 = vector.broadcast %cst_54 : f32 to vector<4x8x64xf32>
    %195 = vector.broadcast %10 : vector<1x1x64xf32> to vector<4x8x64xf32>
    %196 = arith.mulf %190, %195 : vector<4x8x64xf32>
    %197 = arith.truncf %196 : vector<4x8x64xf32> to vector<4x8x64xbf16>
    "tpu.trace_start"() <{level = 10 : i32, message = "bqd,bkd->bqk"}> : () -> ()
    %cst_55 = arith.constant dense<0.000000e+00> : vector<4x8x8xf32>
    %198 = tpu.matmul %197, %192, %cst_55 {dimension_numbers = #tpu.dot_dimension_numbers<[2], [2], [1], [1], [0, 0, 0, 1, 1, 1], [0], [0]>} : vector<4x8x64xbf16>, vector<4x8x64xbf16>, vector<4x8x8xf32> -> vector<4x8x8xf32>
    "tpu.trace_stop"() : () -> ()
    %cst_56 = arith.constant dense<0xFF800000> : vector<4x8xf32>
    %199 = vector.multi_reduction <maximumf>, %198, %cst_56 [2] : vector<4x8x8xf32> to vector<4x8xf32>
    %200 = vector.shape_cast %199 : vector<4x8xf32> to vector<4x8x1xf32>
    %201 = vector.broadcast %200 : vector<4x8x1xf32> to vector<4x8x8xf32>
    %202 = arith.subf %198, %201 : vector<4x8x8xf32>
    %203 = math.exp %202 : vector<4x8x8xf32>
    %cst_57 = arith.constant dense<0.000000e+00> : vector<4x8xf32>
    %204 = vector.multi_reduction <add>, %203, %cst_57 [2] : vector<4x8x8xf32> to vector<4x8xf32>
    %205 = vector.shape_cast %204 : vector<4x8xf32> to vector<4x8x1xf32>
    %206 = tpu.reciprocal %205 {approx = true} : vector<4x8x1xf32> -> vector<4x8x1xf32>
    %207 = vector.broadcast %206 : vector<4x8x1xf32> to vector<4x8x8xf32>
    %208 = arith.mulf %203, %207 : vector<4x8x8xf32>
    %209 = vector.broadcast %10 : vector<1x1x64xf32> to vector<4x8x64xf32>
    %210 = arith.mulf %193, %209 : vector<4x8x64xf32>
    %211 = arith.truncf %210 : vector<4x8x64xf32> to vector<4x8x64xbf16>
    %212 = arith.truncf %208 : vector<4x8x8xf32> to vector<4x8x8xbf16>
    "tpu.trace_start"() <{level = 10 : i32, message = "bqk,bkd->bqd"}> : () -> ()
    %cst_58 = arith.constant dense<0.000000e+00> : vector<4x8x64xf32>
    %213 = tpu.matmul %212, %211, %cst_58 {dimension_numbers = #tpu.dot_dimension_numbers<[2], [1], [1], [2], [0, 0, 0, 1, 1, 2], [0], [0]>} : vector<4x8x8xbf16>, vector<4x8x64xbf16>, vector<4x8x64xf32> -> vector<4x8x64xf32>
    "tpu.trace_stop"() : () -> ()
    %214 = arith.addf %194, %213 : vector<4x8x64xf32>
    %215 = vector.broadcast %17 : vector<1x1x64xf32> to vector<4x8x64xf32>
    %216 = arith.mulf %190, %215 : vector<4x8x64xf32>
    %217 = arith.truncf %216 : vector<4x8x64xf32> to vector<4x8x64xbf16>
    "tpu.trace_start"() <{level = 10 : i32, message = "bqd,bkd->bqk"}> : () -> ()
    %cst_59 = arith.constant dense<0.000000e+00> : vector<4x8x8xf32>
    %218 = tpu.matmul %217, %192, %cst_59 {dimension_numbers = #tpu.dot_dimension_numbers<[2], [2], [1], [1], [0, 0, 0, 1, 1, 1], [0], [0]>} : vector<4x8x64xbf16>, vector<4x8x64xbf16>, vector<4x8x8xf32> -> vector<4x8x8xf32>
    "tpu.trace_stop"() : () -> ()
    %cst_60 = arith.constant dense<0xFF800000> : vector<4x8xf32>
    %219 = vector.multi_reduction <maximumf>, %218, %cst_60 [2] : vector<4x8x8xf32> to vector<4x8xf32>
    %220 = vector.shape_cast %219 : vector<4x8xf32> to vector<4x8x1xf32>
    %221 = vector.broadcast %220 : vector<4x8x1xf32> to vector<4x8x8xf32>
    %222 = arith.subf %218, %221 : vector<4x8x8xf32>
    %223 = math.exp %222 : vector<4x8x8xf32>
    %cst_61 = arith.constant dense<0.000000e+00> : vector<4x8xf32>
    %224 = vector.multi_reduction <add>, %223, %cst_61 [2] : vector<4x8x8xf32> to vector<4x8xf32>
    %225 = vector.shape_cast %224 : vector<4x8xf32> to vector<4x8x1xf32>
    %226 = tpu.reciprocal %225 {approx = true} : vector<4x8x1xf32> -> vector<4x8x1xf32>
    %227 = vector.broadcast %226 : vector<4x8x1xf32> to vector<4x8x8xf32>
    %228 = arith.mulf %223, %227 : vector<4x8x8xf32>
    %229 = vector.broadcast %17 : vector<1x1x64xf32> to vector<4x8x64xf32>
    %230 = arith.mulf %193, %229 : vector<4x8x64xf32>
    %231 = arith.truncf %230 : vector<4x8x64xf32> to vector<4x8x64xbf16>
    %232 = arith.truncf %228 : vector<4x8x8xf32> to vector<4x8x8xbf16>
    "tpu.trace_start"() <{level = 10 : i32, message = "bqk,bkd->bqd"}> : () -> ()
    %cst_62 = arith.constant dense<0.000000e+00> : vector<4x8x64xf32>
    %233 = tpu.matmul %232, %231, %cst_62 {dimension_numbers = #tpu.dot_dimension_numbers<[2], [1], [1], [2], [0, 0, 0, 1, 1, 2], [0], [0]>} : vector<4x8x8xbf16>, vector<4x8x64xbf16>, vector<4x8x64xf32> -> vector<4x8x64xf32>
    "tpu.trace_stop"() : () -> ()
    %234 = arith.addf %214, %233 : vector<4x8x64xf32>
    %235 = vector.broadcast %24 : vector<1x1x64xf32> to vector<4x8x64xf32>
    %236 = arith.mulf %190, %235 : vector<4x8x64xf32>
    %237 = arith.truncf %236 : vector<4x8x64xf32> to vector<4x8x64xbf16>
    "tpu.trace_start"() <{level = 10 : i32, message = "bqd,bkd->bqk"}> : () -> ()
    %cst_63 = arith.constant dense<0.000000e+00> : vector<4x8x8xf32>
    %238 = tpu.matmul %237, %192, %cst_63 {dimension_numbers = #tpu.dot_dimension_numbers<[2], [2], [1], [1], [0, 0, 0, 1, 1, 1], [0], [0]>} : vector<4x8x64xbf16>, vector<4x8x64xbf16>, vector<4x8x8xf32> -> vector<4x8x8xf32>
    "tpu.trace_stop"() : () -> ()
    %cst_64 = arith.constant dense<0xFF800000> : vector<4x8xf32>
    %239 = vector.multi_reduction <maximumf>, %238, %cst_64 [2] : vector<4x8x8xf32> to vector<4x8xf32>
    %240 = vector.shape_cast %239 : vector<4x8xf32> to vector<4x8x1xf32>
    %241 = vector.broadcast %240 : vector<4x8x1xf32> to vector<4x8x8xf32>
    %242 = arith.subf %238, %241 : vector<4x8x8xf32>
    %243 = math.exp %242 : vector<4x8x8xf32>
    %cst_65 = arith.constant dense<0.000000e+00> : vector<4x8xf32>
    %244 = vector.multi_reduction <add>, %243, %cst_65 [2] : vector<4x8x8xf32> to vector<4x8xf32>
    %245 = vector.shape_cast %244 : vector<4x8xf32> to vector<4x8x1xf32>
    %246 = tpu.reciprocal %245 {approx = true} : vector<4x8x1xf32> -> vector<4x8x1xf32>
    %247 = vector.broadcast %246 : vector<4x8x1xf32> to vector<4x8x8xf32>
    %248 = arith.mulf %243, %247 : vector<4x8x8xf32>
    %249 = vector.broadcast %24 : vector<1x1x64xf32> to vector<4x8x64xf32>
    %250 = arith.mulf %193, %249 : vector<4x8x64xf32>
    %251 = arith.truncf %250 : vector<4x8x64xf32> to vector<4x8x64xbf16>
    %252 = arith.truncf %248 : vector<4x8x8xf32> to vector<4x8x8xbf16>
    "tpu.trace_start"() <{level = 10 : i32, message = "bqk,bkd->bqd"}> : () -> ()
    %cst_66 = arith.constant dense<0.000000e+00> : vector<4x8x64xf32>
    %253 = tpu.matmul %252, %251, %cst_66 {dimension_numbers = #tpu.dot_dimension_numbers<[2], [1], [1], [2], [0, 0, 0, 1, 1, 2], [0], [0]>} : vector<4x8x8xbf16>, vector<4x8x64xbf16>, vector<4x8x64xf32> -> vector<4x8x64xf32>
    "tpu.trace_stop"() : () -> ()
    %254 = arith.addf %234, %253 : vector<4x8x64xf32>
    %255 = vector.broadcast %31 : vector<1x1x64xf32> to vector<4x8x64xf32>
    %256 = arith.mulf %190, %255 : vector<4x8x64xf32>
    %257 = arith.truncf %256 : vector<4x8x64xf32> to vector<4x8x64xbf16>
    "tpu.trace_start"() <{level = 10 : i32, message = "bqd,bkd->bqk"}> : () -> ()
    %cst_67 = arith.constant dense<0.000000e+00> : vector<4x8x8xf32>
    %258 = tpu.matmul %257, %192, %cst_67 {dimension_numbers = #tpu.dot_dimension_numbers<[2], [2], [1], [1], [0, 0, 0, 1, 1, 1], [0], [0]>} : vector<4x8x64xbf16>, vector<4x8x64xbf16>, vector<4x8x8xf32> -> vector<4x8x8xf32>
    "tpu.trace_stop"() : () -> ()
    %cst_68 = arith.constant dense<0xFF800000> : vector<4x8xf32>
    %259 = vector.multi_reduction <maximumf>, %258, %cst_68 [2] : vector<4x8x8xf32> to vector<4x8xf32>
    %260 = vector.shape_cast %259 : vector<4x8xf32> to vector<4x8x1xf32>
    %261 = vector.broadcast %260 : vector<4x8x1xf32> to vector<4x8x8xf32>
    %262 = arith.subf %258, %261 : vector<4x8x8xf32>
    %263 = math.exp %262 : vector<4x8x8xf32>
    %cst_69 = arith.constant dense<0.000000e+00> : vector<4x8xf32>
    %264 = vector.multi_reduction <add>, %263, %cst_69 [2] : vector<4x8x8xf32> to vector<4x8xf32>
    %265 = vector.shape_cast %264 : vector<4x8xf32> to vector<4x8x1xf32>
    %266 = tpu.reciprocal %265 {approx = true} : vector<4x8x1xf32> -> vector<4x8x1xf32>
    %267 = vector.broadcast %266 : vector<4x8x1xf32> to vector<4x8x8xf32>
    %268 = arith.mulf %263, %267 : vector<4x8x8xf32>
    %269 = vector.broadcast %31 : vector<1x1x64xf32> to vector<4x8x64xf32>
    %270 = arith.mulf %193, %269 : vector<4x8x64xf32>
    %271 = arith.truncf %270 : vector<4x8x64xf32> to vector<4x8x64xbf16>
    %272 = arith.truncf %268 : vector<4x8x8xf32> to vector<4x8x8xbf16>
    "tpu.trace_start"() <{level = 10 : i32, message = "bqk,bkd->bqd"}> : () -> ()
    %cst_70 = arith.constant dense<0.000000e+00> : vector<4x8x64xf32>
    %273 = tpu.matmul %272, %271, %cst_70 {dimension_numbers = #tpu.dot_dimension_numbers<[2], [1], [1], [2], [0, 0, 0, 1, 1, 2], [0], [0]>} : vector<4x8x8xbf16>, vector<4x8x64xbf16>, vector<4x8x64xf32> -> vector<4x8x64xf32>
    "tpu.trace_stop"() : () -> ()
    %274 = arith.addf %254, %273 : vector<4x8x64xf32>
    %275 = vector.shape_cast %274 : vector<4x8x64xf32> to vector<32x64xf32>
    %276 = arith.truncf %275 : vector<32x64xf32> to vector<32x64xbf16>
    %c0_71 = arith.constant 0 : index
    %c0_72 = arith.constant 0 : index
    %277 = vector.load %arg10[%c0_71, %c0_72] : memref<64x64xbf16, #tpu.memory_space<vmem>>, vector<64x64xbf16>
    %cst_73 = arith.constant dense<0.000000e+00> : vector<32x64xf32>
    %278 = tpu.matmul %276, %277, %cst_73 {dimension_numbers = #tpu.dot_dimension_numbers<[1], [0], [0], [1], [0, 0, 1, 1], [], []>} : vector<32x64xbf16>, vector<64x64xbf16>, vector<32x64xf32> -> vector<32x64xf32>
    %c0_74 = arith.constant 0 : index
    %c0_75 = arith.constant 0 : index
    %279 = vector.load %arg11[%c0_74, %c0_75] : memref<1x64xf32, #tpu.memory_space<vmem>>, vector<1x64xf32>
    %280 = vector.broadcast %279 : vector<1x64xf32> to vector<32x64xf32>
    %281 = arith.addf %278, %280 : vector<32x64xf32>
    %282 = arith.addf %176, %281 : vector<32x64xf32>
    %c0_76 = arith.constant 0 : index
    %c0_77 = arith.constant 0 : index
    %283 = vector.load %arg14[%c0_76, %c0_77] : memref<1x64xf32, #tpu.memory_space<vmem>>, vector<1x64xf32>
    %c0_78 = arith.constant 0 : index
    %c0_79 = arith.constant 0 : index
    %284 = vector.load %arg15[%c0_78, %c0_79] : memref<1x64xf32, #tpu.memory_space<vmem>>, vector<1x64xf32>
    %cst_80 = arith.constant dense<0.000000e+00> : vector<32xf32>
    %285 = vector.multi_reduction <add>, %282, %cst_80 [1] : vector<32x64xf32> to vector<32xf32>
    %286 = vector.shape_cast %285 : vector<32xf32> to vector<32x1xf32>
    %cst_81 = arith.constant 6.400000e+01 : f32
    %287 = vector.broadcast %cst_81 : f32 to vector<32x1xf32>
    %288 = arith.divf %286, %287 : vector<32x1xf32>
    %289 = vector.broadcast %288 : vector<32x1xf32> to vector<32x64xf32>
    %290 = arith.subf %282, %289 : vector<32x64xf32>
    %291 = arith.mulf %290, %290 : vector<32x64xf32>
    %cst_82 = arith.constant dense<0.000000e+00> : vector<32xf32>
    %292 = vector.multi_reduction <add>, %291, %cst_82 [1] : vector<32x64xf32> to vector<32xf32>
    %293 = vector.shape_cast %292 : vector<32xf32> to vector<32x1xf32>
    %cst_83 = arith.constant 6.400000e+01 : f32
    %294 = vector.broadcast %cst_83 : f32 to vector<32x1xf32>
    %295 = arith.divf %293, %294 : vector<32x1xf32>
    %296 = vector.broadcast %288 : vector<32x1xf32> to vector<32x64xf32>
    %297 = arith.subf %282, %296 : vector<32x64xf32>
    %cst_84 = arith.constant 9.99999974E-6 : f32
    %298 = vector.broadcast %cst_84 : f32 to vector<32x1xf32>
    %299 = arith.addf %295, %298 : vector<32x1xf32>
    %300 = math.rsqrt %299 : vector<32x1xf32>
    %301 = vector.broadcast %300 : vector<32x1xf32> to vector<32x64xf32>
    %302 = arith.mulf %297, %301 : vector<32x64xf32>
    %303 = vector.broadcast %283 : vector<1x64xf32> to vector<32x64xf32>
    %304 = arith.mulf %302, %303 : vector<32x64xf32>
    %305 = vector.broadcast %284 : vector<1x64xf32> to vector<32x64xf32>
    %306 = arith.addf %304, %305 : vector<32x64xf32>
    %307 = arith.truncf %306 : vector<32x64xf32> to vector<32x64xbf16>
    %c0_85 = arith.constant 0 : index
    %c0_86 = arith.constant 0 : index
    %308 = vector.load %arg18[%c0_85, %c0_86] : memref<64x128xbf16, #tpu.memory_space<vmem>>, vector<64x128xbf16>
    %cst_87 = arith.constant dense<0.000000e+00> : vector<32x128xf32>
    %309 = tpu.matmul %307, %308, %cst_87 {dimension_numbers = #tpu.dot_dimension_numbers<[1], [0], [0], [1], [0, 0, 1, 1], [], []>} : vector<32x64xbf16>, vector<64x128xbf16>, vector<32x128xf32> -> vector<32x128xf32>
    %c0_88 = arith.constant 0 : index
    %c0_89 = arith.constant 0 : index
    %310 = vector.load %arg19[%c0_88, %c0_89] : memref<1x128xf32, #tpu.memory_space<vmem>>, vector<1x128xf32>
    %311 = vector.broadcast %310 : vector<1x128xf32> to vector<32x128xf32>
    %312 = arith.addf %309, %311 : vector<32x128xf32>
    %cst_90 = arith.constant 0.000000e+00 : f32
    %313 = vector.broadcast %cst_90 : f32 to vector<32x128xf32>
    %314 = arith.maximumf %312, %313 : vector<32x128xf32>
    %315 = arith.truncf %314 : vector<32x128xf32> to vector<32x128xbf16>
    %c0_91 = arith.constant 0 : index
    %c0_92 = arith.constant 0 : index
    %316 = vector.load %arg20[%c0_91, %c0_92] : memref<128x64xbf16, #tpu.memory_space<vmem>>, vector<128x64xbf16>
    %cst_93 = arith.constant dense<0.000000e+00> : vector<32x64xf32>
    %317 = tpu.matmul %315, %316, %cst_93 {dimension_numbers = #tpu.dot_dimension_numbers<[1], [0], [0], [1], [0, 0, 1, 1], [], []>} : vector<32x128xbf16>, vector<128x64xbf16>, vector<32x64xf32> -> vector<32x64xf32>
    %c0_94 = arith.constant 0 : index
    %c0_95 = arith.constant 0 : index
    %318 = vector.load %arg21[%c0_94, %c0_95] : memref<1x64xf32, #tpu.memory_space<vmem>>, vector<1x64xf32>
    %319 = vector.broadcast %318 : vector<1x64xf32> to vector<32x64xf32>
    %320 = arith.addf %317, %319 : vector<32x64xf32>
    %321 = arith.addf %306, %320 : vector<32x64xf32>
    %c0_96 = arith.constant 0 : index
    %c0_97 = arith.constant 0 : index
    %322 = vector.load %arg16[%c0_96, %c0_97] : memref<1x64xf32, #tpu.memory_space<vmem>>, vector<1x64xf32>
    %c0_98 = arith.constant 0 : index
    %c0_99 = arith.constant 0 : index
    %323 = vector.load %arg17[%c0_98, %c0_99] : memref<1x64xf32, #tpu.memory_space<vmem>>, vector<1x64xf32>
    %cst_100 = arith.constant dense<0.000000e+00> : vector<32xf32>
    %324 = vector.multi_reduction <add>, %321, %cst_100 [1] : vector<32x64xf32> to vector<32xf32>
    %325 = vector.shape_cast %324 : vector<32xf32> to vector<32x1xf32>
    %cst_101 = arith.constant 6.400000e+01 : f32
    %326 = vector.broadcast %cst_101 : f32 to vector<32x1xf32>
    %327 = arith.divf %325, %326 : vector<32x1xf32>
    %328 = vector.broadcast %327 : vector<32x1xf32> to vector<32x64xf32>
    %329 = arith.subf %321, %328 : vector<32x64xf32>
    %330 = arith.mulf %329, %329 : vector<32x64xf32>
    %cst_102 = arith.constant dense<0.000000e+00> : vector<32xf32>
    %331 = vector.multi_reduction <add>, %330, %cst_102 [1] : vector<32x64xf32> to vector<32xf32>
    %332 = vector.shape_cast %331 : vector<32xf32> to vector<32x1xf32>
    %cst_103 = arith.constant 6.400000e+01 : f32
    %333 = vector.broadcast %cst_103 : f32 to vector<32x1xf32>
    %334 = arith.divf %332, %333 : vector<32x1xf32>
    %335 = vector.broadcast %327 : vector<32x1xf32> to vector<32x64xf32>
    %336 = arith.subf %321, %335 : vector<32x64xf32>
    %cst_104 = arith.constant 9.99999974E-6 : f32
    %337 = vector.broadcast %cst_104 : f32 to vector<32x1xf32>
    %338 = arith.addf %334, %337 : vector<32x1xf32>
    %339 = math.rsqrt %338 : vector<32x1xf32>
    %340 = vector.broadcast %339 : vector<32x1xf32> to vector<32x64xf32>
    %341 = arith.mulf %336, %340 : vector<32x64xf32>
    %342 = vector.broadcast %322 : vector<1x64xf32> to vector<32x64xf32>
    %343 = arith.mulf %341, %342 : vector<32x64xf32>
    %344 = vector.broadcast %323 : vector<1x64xf32> to vector<32x64xf32>
    %345 = arith.addf %343, %344 : vector<32x64xf32>
    %346 = arith.truncf %345 : vector<32x64xf32> to vector<32x64xbf16>
    %c0_105 = arith.constant 0 : index
    %c0_106 = arith.constant 0 : index
    %347 = vector.load %arg22[%c0_105, %c0_106] : memref<64x192xbf16, #tpu.memory_space<vmem>>, vector<64x192xbf16>
    %cst_107 = arith.constant dense<0.000000e+00> : vector<32x192xf32>
    %348 = tpu.matmul %346, %347, %cst_107 {dimension_numbers = #tpu.dot_dimension_numbers<[1], [0], [0], [1], [0, 0, 1, 1], [], []>} : vector<32x64xbf16>, vector<64x192xbf16>, vector<32x192xf32> -> vector<32x192xf32>
    %c0_108 = arith.constant 0 : index
    %c0_109 = arith.constant 0 : index
    %349 = vector.load %arg23[%c0_108, %c0_109] : memref<1x192xf32, #tpu.memory_space<vmem>>, vector<1x192xf32>
    %350 = vector.broadcast %349 : vector<1x192xf32> to vector<32x192xf32>
    %351 = arith.addf %348, %350 : vector<32x192xf32>
    %352 = vector.extract_strided_slice %351 {offsets = [0, 0], sizes = [32, 64], strides = [1, 1]} : vector<32x192xf32> to vector<32x64xf32>
    %353 = vector.extract_strided_slice %351 {offsets = [0, 64], sizes = [32, 64], strides = [1, 1]} : vector<32x192xf32> to vector<32x64xf32>
    %354 = vector.extract_strided_slice %351 {offsets = [0, 128], sizes = [32, 64], strides = [1, 1]} : vector<32x192xf32> to vector<32x64xf32>
    %355 = vector.shape_cast %352 : vector<32x64xf32> to vector<4x8x64xf32>
    %356 = vector.shape_cast %353 : vector<32x64xf32> to vector<4x8x64xf32>
    %357 = arith.truncf %356 : vector<4x8x64xf32> to vector<4x8x64xbf16>
    %358 = vector.shape_cast %354 : vector<32x64xf32> to vector<4x8x64xf32>
    %cst_110 = arith.constant 0.000000e+00 : f32
    %359 = vector.broadcast %cst_110 : f32 to vector<4x8x64xf32>
    %360 = vector.broadcast %10 : vector<1x1x64xf32> to vector<4x8x64xf32>
    %361 = arith.mulf %355, %360 : vector<4x8x64xf32>
    %362 = arith.truncf %361 : vector<4x8x64xf32> to vector<4x8x64xbf16>
    "tpu.trace_start"() <{level = 10 : i32, message = "bqd,bkd->bqk"}> : () -> ()
    %cst_111 = arith.constant dense<0.000000e+00> : vector<4x8x8xf32>
    %363 = tpu.matmul %362, %357, %cst_111 {dimension_numbers = #tpu.dot_dimension_numbers<[2], [2], [1], [1], [0, 0, 0, 1, 1, 1], [0], [0]>} : vector<4x8x64xbf16>, vector<4x8x64xbf16>, vector<4x8x8xf32> -> vector<4x8x8xf32>
    %cst_112 = arith.constant -1.000000e+30 : f32
    "tpu.trace_stop"() : () -> ()
    %364 = vector.shape_cast %34 : vector<1x8x8xi1> to vector<1x8x8xi1>
    %365 = vector.broadcast %364 : vector<1x8x8xi1> to vector<4x8x8xi1>
    %366 = vector.broadcast %cst_112 : f32 to vector<4x8x8xf32>
    %367 = arith.select %365, %366, %363 : vector<4x8x8xi1>, vector<4x8x8xf32>
    %cst_113 = arith.constant dense<0xFF800000> : vector<4x8xf32>
    %368 = vector.multi_reduction <maximumf>, %367, %cst_113 [2] : vector<4x8x8xf32> to vector<4x8xf32>
    %369 = vector.shape_cast %368 : vector<4x8xf32> to vector<4x8x1xf32>
    %370 = vector.broadcast %369 : vector<4x8x1xf32> to vector<4x8x8xf32>
    %371 = arith.subf %367, %370 : vector<4x8x8xf32>
    %372 = math.exp %371 : vector<4x8x8xf32>
    %cst_114 = arith.constant dense<0.000000e+00> : vector<4x8xf32>
    %373 = vector.multi_reduction <add>, %372, %cst_114 [2] : vector<4x8x8xf32> to vector<4x8xf32>
    %374 = vector.shape_cast %373 : vector<4x8xf32> to vector<4x8x1xf32>
    %375 = tpu.reciprocal %374 {approx = true} : vector<4x8x1xf32> -> vector<4x8x1xf32>
    %376 = vector.broadcast %375 : vector<4x8x1xf32> to vector<4x8x8xf32>
    %377 = arith.mulf %372, %376 : vector<4x8x8xf32>
    %378 = vector.broadcast %10 : vector<1x1x64xf32> to vector<4x8x64xf32>
    %379 = arith.mulf %358, %378 : vector<4x8x64xf32>
    %380 = arith.truncf %379 : vector<4x8x64xf32> to vector<4x8x64xbf16>
    %381 = arith.truncf %377 : vector<4x8x8xf32> to vector<4x8x8xbf16>
    "tpu.trace_start"() <{level = 10 : i32, message = "bqk,bkd->bqd"}> : () -> ()
    %cst_115 = arith.constant dense<0.000000e+00> : vector<4x8x64xf32>
    %382 = tpu.matmul %381, %380, %cst_115 {dimension_numbers = #tpu.dot_dimension_numbers<[2], [1], [1], [2], [0, 0, 0, 1, 1, 2], [0], [0]>} : vector<4x8x8xbf16>, vector<4x8x64xbf16>, vector<4x8x64xf32> -> vector<4x8x64xf32>
    "tpu.trace_stop"() : () -> ()
    %383 = arith.addf %359, %382 : vector<4x8x64xf32>
    %384 = vector.broadcast %17 : vector<1x1x64xf32> to vector<4x8x64xf32>
    %385 = arith.mulf %355, %384 : vector<4x8x64xf32>
    %386 = arith.truncf %385 : vector<4x8x64xf32> to vector<4x8x64xbf16>
    "tpu.trace_start"() <{level = 10 : i32, message = "bqd,bkd->bqk"}> : () -> ()
    %cst_116 = arith.constant dense<0.000000e+00> : vector<4x8x8xf32>
    %387 = tpu.matmul %386, %357, %cst_116 {dimension_numbers = #tpu.dot_dimension_numbers<[2], [2], [1], [1], [0, 0, 0, 1, 1, 1], [0], [0]>} : vector<4x8x64xbf16>, vector<4x8x64xbf16>, vector<4x8x8xf32> -> vector<4x8x8xf32>
    %cst_117 = arith.constant -1.000000e+30 : f32
    "tpu.trace_stop"() : () -> ()
    %388 = vector.shape_cast %34 : vector<1x8x8xi1> to vector<1x8x8xi1>
    %389 = vector.broadcast %388 : vector<1x8x8xi1> to vector<4x8x8xi1>
    %390 = vector.broadcast %cst_117 : f32 to vector<4x8x8xf32>
    %391 = arith.select %389, %390, %387 : vector<4x8x8xi1>, vector<4x8x8xf32>
    %cst_118 = arith.constant dense<0xFF800000> : vector<4x8xf32>
    %392 = vector.multi_reduction <maximumf>, %391, %cst_118 [2] : vector<4x8x8xf32> to vector<4x8xf32>
    %393 = vector.shape_cast %392 : vector<4x8xf32> to vector<4x8x1xf32>
    %394 = vector.broadcast %393 : vector<4x8x1xf32> to vector<4x8x8xf32>
    %395 = arith.subf %391, %394 : vector<4x8x8xf32>
    %396 = math.exp %395 : vector<4x8x8xf32>
    %cst_119 = arith.constant dense<0.000000e+00> : vector<4x8xf32>
    %397 = vector.multi_reduction <add>, %396, %cst_119 [2] : vector<4x8x8xf32> to vector<4x8xf32>
    %398 = vector.shape_cast %397 : vector<4x8xf32> to vector<4x8x1xf32>
    %399 = tpu.reciprocal %398 {approx = true} : vector<4x8x1xf32> -> vector<4x8x1xf32>
    %400 = vector.broadcast %399 : vector<4x8x1xf32> to vector<4x8x8xf32>
    %401 = arith.mulf %396, %400 : vector<4x8x8xf32>
    %402 = vector.broadcast %17 : vector<1x1x64xf32> to vector<4x8x64xf32>
    %403 = arith.mulf %358, %402 : vector<4x8x64xf32>
    %404 = arith.truncf %403 : vector<4x8x64xf32> to vector<4x8x64xbf16>
    %405 = arith.truncf %401 : vector<4x8x8xf32> to vector<4x8x8xbf16>
    "tpu.trace_start"() <{level = 10 : i32, message = "bqk,bkd->bqd"}> : () -> ()
    %cst_120 = arith.constant dense<0.000000e+00> : vector<4x8x64xf32>
    %406 = tpu.matmul %405, %404, %cst_120 {dimension_numbers = #tpu.dot_dimension_numbers<[2], [1], [1], [2], [0, 0, 0, 1, 1, 2], [0], [0]>} : vector<4x8x8xbf16>, vector<4x8x64xbf16>, vector<4x8x64xf32> -> vector<4x8x64xf32>
    "tpu.trace_stop"() : () -> ()
    %407 = arith.addf %383, %406 : vector<4x8x64xf32>
    %408 = vector.broadcast %24 : vector<1x1x64xf32> to vector<4x8x64xf32>
    %409 = arith.mulf %355, %408 : vector<4x8x64xf32>
    %410 = arith.truncf %409 : vector<4x8x64xf32> to vector<4x8x64xbf16>
    "tpu.trace_start"() <{level = 10 : i32, message = "bqd,bkd->bqk"}> : () -> ()
    %cst_121 = arith.constant dense<0.000000e+00> : vector<4x8x8xf32>
    %411 = tpu.matmul %410, %357, %cst_121 {dimension_numbers = #tpu.dot_dimension_numbers<[2], [2], [1], [1], [0, 0, 0, 1, 1, 1], [0], [0]>} : vector<4x8x64xbf16>, vector<4x8x64xbf16>, vector<4x8x8xf32> -> vector<4x8x8xf32>
    %cst_122 = arith.constant -1.000000e+30 : f32
    "tpu.trace_stop"() : () -> ()
    %412 = vector.shape_cast %34 : vector<1x8x8xi1> to vector<1x8x8xi1>
    %413 = vector.broadcast %412 : vector<1x8x8xi1> to vector<4x8x8xi1>
    %414 = vector.broadcast %cst_122 : f32 to vector<4x8x8xf32>
    %415 = arith.select %413, %414, %411 : vector<4x8x8xi1>, vector<4x8x8xf32>
    %cst_123 = arith.constant dense<0xFF800000> : vector<4x8xf32>
    %416 = vector.multi_reduction <maximumf>, %415, %cst_123 [2] : vector<4x8x8xf32> to vector<4x8xf32>
    %417 = vector.shape_cast %416 : vector<4x8xf32> to vector<4x8x1xf32>
    %418 = vector.broadcast %417 : vector<4x8x1xf32> to vector<4x8x8xf32>
    %419 = arith.subf %415, %418 : vector<4x8x8xf32>
    %420 = math.exp %419 : vector<4x8x8xf32>
    %cst_124 = arith.constant dense<0.000000e+00> : vector<4x8xf32>
    %421 = vector.multi_reduction <add>, %420, %cst_124 [2] : vector<4x8x8xf32> to vector<4x8xf32>
    %422 = vector.shape_cast %421 : vector<4x8xf32> to vector<4x8x1xf32>
    %423 = tpu.reciprocal %422 {approx = true} : vector<4x8x1xf32> -> vector<4x8x1xf32>
    %424 = vector.broadcast %423 : vector<4x8x1xf32> to vector<4x8x8xf32>
    %425 = arith.mulf %420, %424 : vector<4x8x8xf32>
    %426 = vector.broadcast %24 : vector<1x1x64xf32> to vector<4x8x64xf32>
    %427 = arith.mulf %358, %426 : vector<4x8x64xf32>
    %428 = arith.truncf %427 : vector<4x8x64xf32> to vector<4x8x64xbf16>
    %429 = arith.truncf %425 : vector<4x8x8xf32> to vector<4x8x8xbf16>
    "tpu.trace_start"() <{level = 10 : i32, message = "bqk,bkd->bqd"}> : () -> ()
    %cst_125 = arith.constant dense<0.000000e+00> : vector<4x8x64xf32>
    %430 = tpu.matmul %429, %428, %cst_125 {dimension_numbers = #tpu.dot_dimension_numbers<[2], [1], [1], [2], [0, 0, 0, 1, 1, 2], [0], [0]>} : vector<4x8x8xbf16>, vector<4x8x64xbf16>, vector<4x8x64xf32> -> vector<4x8x64xf32>
    "tpu.trace_stop"() : () -> ()
    %431 = arith.addf %407, %430 : vector<4x8x64xf32>
    %432 = vector.broadcast %31 : vector<1x1x64xf32> to vector<4x8x64xf32>
    %433 = arith.mulf %355, %432 : vector<4x8x64xf32>
    %434 = arith.truncf %433 : vector<4x8x64xf32> to vector<4x8x64xbf16>
    "tpu.trace_start"() <{level = 10 : i32, message = "bqd,bkd->bqk"}> : () -> ()
    %cst_126 = arith.constant dense<0.000000e+00> : vector<4x8x8xf32>
    %435 = tpu.matmul %434, %357, %cst_126 {dimension_numbers = #tpu.dot_dimension_numbers<[2], [2], [1], [1], [0, 0, 0, 1, 1, 1], [0], [0]>} : vector<4x8x64xbf16>, vector<4x8x64xbf16>, vector<4x8x8xf32> -> vector<4x8x8xf32>
    %cst_127 = arith.constant -1.000000e+30 : f32
    "tpu.trace_stop"() : () -> ()
    %436 = vector.shape_cast %34 : vector<1x8x8xi1> to vector<1x8x8xi1>
    %437 = vector.broadcast %436 : vector<1x8x8xi1> to vector<4x8x8xi1>
    %438 = vector.broadcast %cst_127 : f32 to vector<4x8x8xf32>
    %439 = arith.select %437, %438, %435 : vector<4x8x8xi1>, vector<4x8x8xf32>
    %cst_128 = arith.constant dense<0xFF800000> : vector<4x8xf32>
    %440 = vector.multi_reduction <maximumf>, %439, %cst_128 [2] : vector<4x8x8xf32> to vector<4x8xf32>
    %441 = vector.shape_cast %440 : vector<4x8xf32> to vector<4x8x1xf32>
    %442 = vector.broadcast %441 : vector<4x8x1xf32> to vector<4x8x8xf32>
    %443 = arith.subf %439, %442 : vector<4x8x8xf32>
    %444 = math.exp %443 : vector<4x8x8xf32>
    %cst_129 = arith.constant dense<0.000000e+00> : vector<4x8xf32>
    %445 = vector.multi_reduction <add>, %444, %cst_129 [2] : vector<4x8x8xf32> to vector<4x8xf32>
    %446 = vector.shape_cast %445 : vector<4x8xf32> to vector<4x8x1xf32>
    %447 = tpu.reciprocal %446 {approx = true} : vector<4x8x1xf32> -> vector<4x8x1xf32>
    %448 = vector.broadcast %447 : vector<4x8x1xf32> to vector<4x8x8xf32>
    %449 = arith.mulf %444, %448 : vector<4x8x8xf32>
    %450 = vector.broadcast %31 : vector<1x1x64xf32> to vector<4x8x64xf32>
    %451 = arith.mulf %358, %450 : vector<4x8x64xf32>
    %452 = arith.truncf %451 : vector<4x8x64xf32> to vector<4x8x64xbf16>
    %453 = arith.truncf %449 : vector<4x8x8xf32> to vector<4x8x8xbf16>
    "tpu.trace_start"() <{level = 10 : i32, message = "bqk,bkd->bqd"}> : () -> ()
    %cst_130 = arith.constant dense<0.000000e+00> : vector<4x8x64xf32>
    %454 = tpu.matmul %453, %452, %cst_130 {dimension_numbers = #tpu.dot_dimension_numbers<[2], [1], [1], [2], [0, 0, 0, 1, 1, 2], [0], [0]>} : vector<4x8x8xbf16>, vector<4x8x64xbf16>, vector<4x8x64xf32> -> vector<4x8x64xf32>
    "tpu.trace_stop"() : () -> ()
    %455 = arith.addf %431, %454 : vector<4x8x64xf32>
    %456 = vector.shape_cast %455 : vector<4x8x64xf32> to vector<32x64xf32>
    %457 = arith.truncf %456 : vector<32x64xf32> to vector<32x64xbf16>
    %c0_131 = arith.constant 0 : index
    %c0_132 = arith.constant 0 : index
    %458 = vector.load %arg24[%c0_131, %c0_132] : memref<64x64xbf16, #tpu.memory_space<vmem>>, vector<64x64xbf16>
    %cst_133 = arith.constant dense<0.000000e+00> : vector<32x64xf32>
    %459 = tpu.matmul %457, %458, %cst_133 {dimension_numbers = #tpu.dot_dimension_numbers<[1], [0], [0], [1], [0, 0, 1, 1], [], []>} : vector<32x64xbf16>, vector<64x64xbf16>, vector<32x64xf32> -> vector<32x64xf32>
    %c0_134 = arith.constant 0 : index
    %c0_135 = arith.constant 0 : index
    %460 = vector.load %arg25[%c0_134, %c0_135] : memref<1x64xf32, #tpu.memory_space<vmem>>, vector<1x64xf32>
    %461 = vector.broadcast %460 : vector<1x64xf32> to vector<32x64xf32>
    %462 = arith.addf %459, %461 : vector<32x64xf32>
    %463 = arith.addf %345, %462 : vector<32x64xf32>
    %c0_136 = arith.constant 0 : index
    %c0_137 = arith.constant 0 : index
    %464 = vector.load %arg32[%c0_136, %c0_137] : memref<1x64xf32, #tpu.memory_space<vmem>>, vector<1x64xf32>
    %c0_138 = arith.constant 0 : index
    %c0_139 = arith.constant 0 : index
    %465 = vector.load %arg33[%c0_138, %c0_139] : memref<1x64xf32, #tpu.memory_space<vmem>>, vector<1x64xf32>
    %cst_140 = arith.constant dense<0.000000e+00> : vector<32xf32>
    %466 = vector.multi_reduction <add>, %463, %cst_140 [1] : vector<32x64xf32> to vector<32xf32>
    %467 = vector.shape_cast %466 : vector<32xf32> to vector<32x1xf32>
    %cst_141 = arith.constant 6.400000e+01 : f32
    %468 = vector.broadcast %cst_141 : f32 to vector<32x1xf32>
    %469 = arith.divf %467, %468 : vector<32x1xf32>
    %470 = vector.broadcast %469 : vector<32x1xf32> to vector<32x64xf32>
    %471 = arith.subf %463, %470 : vector<32x64xf32>
    %472 = arith.mulf %471, %471 : vector<32x64xf32>
    %cst_142 = arith.constant dense<0.000000e+00> : vector<32xf32>
    %473 = vector.multi_reduction <add>, %472, %cst_142 [1] : vector<32x64xf32> to vector<32xf32>
    %474 = vector.shape_cast %473 : vector<32xf32> to vector<32x1xf32>
    %cst_143 = arith.constant 6.400000e+01 : f32
    %475 = vector.broadcast %cst_143 : f32 to vector<32x1xf32>
    %476 = arith.divf %474, %475 : vector<32x1xf32>
    %477 = vector.broadcast %469 : vector<32x1xf32> to vector<32x64xf32>
    %478 = arith.subf %463, %477 : vector<32x64xf32>
    %cst_144 = arith.constant 9.99999974E-6 : f32
    %479 = vector.broadcast %cst_144 : f32 to vector<32x1xf32>
    %480 = arith.addf %476, %479 : vector<32x1xf32>
    %481 = math.rsqrt %480 : vector<32x1xf32>
    %482 = vector.broadcast %481 : vector<32x1xf32> to vector<32x64xf32>
    %483 = arith.mulf %478, %482 : vector<32x64xf32>
    %484 = vector.broadcast %464 : vector<1x64xf32> to vector<32x64xf32>
    %485 = arith.mulf %483, %484 : vector<32x64xf32>
    %486 = vector.broadcast %465 : vector<1x64xf32> to vector<32x64xf32>
    %487 = arith.addf %485, %486 : vector<32x64xf32>
    %488 = arith.truncf %487 : vector<32x64xf32> to vector<32x64xbf16>
    %c0_145 = arith.constant 0 : index
    %c0_146 = arith.constant 0 : index
    %489 = vector.load %arg26[%c0_145, %c0_146] : memref<64x64xbf16, #tpu.memory_space<vmem>>, vector<64x64xbf16>
    %cst_147 = arith.constant dense<0.000000e+00> : vector<32x64xf32>
    %490 = tpu.matmul %488, %489, %cst_147 {dimension_numbers = #tpu.dot_dimension_numbers<[1], [0], [0], [1], [0, 0, 1, 1], [], []>} : vector<32x64xbf16>, vector<64x64xbf16>, vector<32x64xf32> -> vector<32x64xf32>
    %c0_148 = arith.constant 0 : index
    %c0_149 = arith.constant 0 : index
    %491 = vector.load %arg27[%c0_148, %c0_149] : memref<1x64xf32, #tpu.memory_space<vmem>>, vector<1x64xf32>
    %492 = vector.broadcast %491 : vector<1x64xf32> to vector<32x64xf32>
    %493 = arith.addf %490, %492 : vector<32x64xf32>
    %c0_150 = arith.constant 0 : index
    %c0_151 = arith.constant 0 : index
    %494 = vector.load %arg28[%c0_150, %c0_151] : memref<64x128xbf16, #tpu.memory_space<vmem>>, vector<64x128xbf16>
    %cst_152 = arith.constant dense<0.000000e+00> : vector<32x128xf32>
    %495 = tpu.matmul %2, %494, %cst_152 {dimension_numbers = #tpu.dot_dimension_numbers<[1], [0], [0], [1], [0, 0, 1, 1], [], []>} : vector<32x64xbf16>, vector<64x128xbf16>, vector<32x128xf32> -> vector<32x128xf32>
    %c0_153 = arith.constant 0 : index
    %c0_154 = arith.constant 0 : index
    %496 = vector.load %arg29[%c0_153, %c0_154] : memref<1x128xf32, #tpu.memory_space<vmem>>, vector<1x128xf32>
    %497 = vector.broadcast %496 : vector<1x128xf32> to vector<32x128xf32>
    %498 = arith.addf %495, %497 : vector<32x128xf32>
    %499 = vector.extract_strided_slice %498 {offsets = [0, 0], sizes = [32, 64], strides = [1, 1]} : vector<32x128xf32> to vector<32x64xf32>
    %500 = vector.extract_strided_slice %498 {offsets = [0, 64], sizes = [32, 64], strides = [1, 1]} : vector<32x128xf32> to vector<32x64xf32>
    %501 = vector.shape_cast %493 : vector<32x64xf32> to vector<4x8x64xf32>
    %502 = vector.shape_cast %499 : vector<32x64xf32> to vector<4x8x64xf32>
    %503 = arith.truncf %502 : vector<4x8x64xf32> to vector<4x8x64xbf16>
    %504 = vector.shape_cast %500 : vector<32x64xf32> to vector<4x8x64xf32>
    %cst_155 = arith.constant 0.000000e+00 : f32
    %505 = vector.broadcast %cst_155 : f32 to vector<4x8x64xf32>
    %506 = vector.broadcast %10 : vector<1x1x64xf32> to vector<4x8x64xf32>
    %507 = arith.mulf %501, %506 : vector<4x8x64xf32>
    %508 = arith.truncf %507 : vector<4x8x64xf32> to vector<4x8x64xbf16>
    "tpu.trace_start"() <{level = 10 : i32, message = "bqd,bkd->bqk"}> : () -> ()
    %cst_156 = arith.constant dense<0.000000e+00> : vector<4x8x8xf32>
    %509 = tpu.matmul %508, %503, %cst_156 {dimension_numbers = #tpu.dot_dimension_numbers<[2], [2], [1], [1], [0, 0, 0, 1, 1, 1], [0], [0]>} : vector<4x8x64xbf16>, vector<4x8x64xbf16>, vector<4x8x8xf32> -> vector<4x8x8xf32>
    "tpu.trace_stop"() : () -> ()
    %cst_157 = arith.constant dense<0xFF800000> : vector<4x8xf32>
    %510 = vector.multi_reduction <maximumf>, %509, %cst_157 [2] : vector<4x8x8xf32> to vector<4x8xf32>
    %511 = vector.shape_cast %510 : vector<4x8xf32> to vector<4x8x1xf32>
    %512 = vector.broadcast %511 : vector<4x8x1xf32> to vector<4x8x8xf32>
    %513 = arith.subf %509, %512 : vector<4x8x8xf32>
    %514 = math.exp %513 : vector<4x8x8xf32>
    %cst_158 = arith.constant dense<0.000000e+00> : vector<4x8xf32>
    %515 = vector.multi_reduction <add>, %514, %cst_158 [2] : vector<4x8x8xf32> to vector<4x8xf32>
    %516 = vector.shape_cast %515 : vector<4x8xf32> to vector<4x8x1xf32>
    %517 = tpu.reciprocal %516 {approx = true} : vector<4x8x1xf32> -> vector<4x8x1xf32>
    %518 = vector.broadcast %517 : vector<4x8x1xf32> to vector<4x8x8xf32>
    %519 = arith.mulf %514, %518 : vector<4x8x8xf32>
    %520 = vector.broadcast %10 : vector<1x1x64xf32> to vector<4x8x64xf32>
    %521 = arith.mulf %504, %520 : vector<4x8x64xf32>
    %522 = arith.truncf %521 : vector<4x8x64xf32> to vector<4x8x64xbf16>
    %523 = arith.truncf %519 : vector<4x8x8xf32> to vector<4x8x8xbf16>
    "tpu.trace_start"() <{level = 10 : i32, message = "bqk,bkd->bqd"}> : () -> ()
    %cst_159 = arith.constant dense<0.000000e+00> : vector<4x8x64xf32>
    %524 = tpu.matmul %523, %522, %cst_159 {dimension_numbers = #tpu.dot_dimension_numbers<[2], [1], [1], [2], [0, 0, 0, 1, 1, 2], [0], [0]>} : vector<4x8x8xbf16>, vector<4x8x64xbf16>, vector<4x8x64xf32> -> vector<4x8x64xf32>
    "tpu.trace_stop"() : () -> ()
    %525 = arith.addf %505, %524 : vector<4x8x64xf32>
    %526 = vector.broadcast %17 : vector<1x1x64xf32> to vector<4x8x64xf32>
    %527 = arith.mulf %501, %526 : vector<4x8x64xf32>
    %528 = arith.truncf %527 : vector<4x8x64xf32> to vector<4x8x64xbf16>
    "tpu.trace_start"() <{level = 10 : i32, message = "bqd,bkd->bqk"}> : () -> ()
    %cst_160 = arith.constant dense<0.000000e+00> : vector<4x8x8xf32>
    %529 = tpu.matmul %528, %503, %cst_160 {dimension_numbers = #tpu.dot_dimension_numbers<[2], [2], [1], [1], [0, 0, 0, 1, 1, 1], [0], [0]>} : vector<4x8x64xbf16>, vector<4x8x64xbf16>, vector<4x8x8xf32> -> vector<4x8x8xf32>
    "tpu.trace_stop"() : () -> ()
    %cst_161 = arith.constant dense<0xFF800000> : vector<4x8xf32>
    %530 = vector.multi_reduction <maximumf>, %529, %cst_161 [2] : vector<4x8x8xf32> to vector<4x8xf32>
    %531 = vector.shape_cast %530 : vector<4x8xf32> to vector<4x8x1xf32>
    %532 = vector.broadcast %531 : vector<4x8x1xf32> to vector<4x8x8xf32>
    %533 = arith.subf %529, %532 : vector<4x8x8xf32>
    %534 = math.exp %533 : vector<4x8x8xf32>
    %cst_162 = arith.constant dense<0.000000e+00> : vector<4x8xf32>
    %535 = vector.multi_reduction <add>, %534, %cst_162 [2] : vector<4x8x8xf32> to vector<4x8xf32>
    %536 = vector.shape_cast %535 : vector<4x8xf32> to vector<4x8x1xf32>
    %537 = tpu.reciprocal %536 {approx = true} : vector<4x8x1xf32> -> vector<4x8x1xf32>
    %538 = vector.broadcast %537 : vector<4x8x1xf32> to vector<4x8x8xf32>
    %539 = arith.mulf %534, %538 : vector<4x8x8xf32>
    %540 = vector.broadcast %17 : vector<1x1x64xf32> to vector<4x8x64xf32>
    %541 = arith.mulf %504, %540 : vector<4x8x64xf32>
    %542 = arith.truncf %541 : vector<4x8x64xf32> to vector<4x8x64xbf16>
    %543 = arith.truncf %539 : vector<4x8x8xf32> to vector<4x8x8xbf16>
    "tpu.trace_start"() <{level = 10 : i32, message = "bqk,bkd->bqd"}> : () -> ()
    %cst_163 = arith.constant dense<0.000000e+00> : vector<4x8x64xf32>
    %544 = tpu.matmul %543, %542, %cst_163 {dimension_numbers = #tpu.dot_dimension_numbers<[2], [1], [1], [2], [0, 0, 0, 1, 1, 2], [0], [0]>} : vector<4x8x8xbf16>, vector<4x8x64xbf16>, vector<4x8x64xf32> -> vector<4x8x64xf32>
    "tpu.trace_stop"() : () -> ()
    %545 = arith.addf %525, %544 : vector<4x8x64xf32>
    %546 = vector.broadcast %24 : vector<1x1x64xf32> to vector<4x8x64xf32>
    %547 = arith.mulf %501, %546 : vector<4x8x64xf32>
    %548 = arith.truncf %547 : vector<4x8x64xf32> to vector<4x8x64xbf16>
    "tpu.trace_start"() <{level = 10 : i32, message = "bqd,bkd->bqk"}> : () -> ()
    %cst_164 = arith.constant dense<0.000000e+00> : vector<4x8x8xf32>
    %549 = tpu.matmul %548, %503, %cst_164 {dimension_numbers = #tpu.dot_dimension_numbers<[2], [2], [1], [1], [0, 0, 0, 1, 1, 1], [0], [0]>} : vector<4x8x64xbf16>, vector<4x8x64xbf16>, vector<4x8x8xf32> -> vector<4x8x8xf32>
    "tpu.trace_stop"() : () -> ()
    %cst_165 = arith.constant dense<0xFF800000> : vector<4x8xf32>
    %550 = vector.multi_reduction <maximumf>, %549, %cst_165 [2] : vector<4x8x8xf32> to vector<4x8xf32>
    %551 = vector.shape_cast %550 : vector<4x8xf32> to vector<4x8x1xf32>
    %552 = vector.broadcast %551 : vector<4x8x1xf32> to vector<4x8x8xf32>
    %553 = arith.subf %549, %552 : vector<4x8x8xf32>
    %554 = math.exp %553 : vector<4x8x8xf32>
    %cst_166 = arith.constant dense<0.000000e+00> : vector<4x8xf32>
    %555 = vector.multi_reduction <add>, %554, %cst_166 [2] : vector<4x8x8xf32> to vector<4x8xf32>
    %556 = vector.shape_cast %555 : vector<4x8xf32> to vector<4x8x1xf32>
    %557 = tpu.reciprocal %556 {approx = true} : vector<4x8x1xf32> -> vector<4x8x1xf32>
    %558 = vector.broadcast %557 : vector<4x8x1xf32> to vector<4x8x8xf32>
    %559 = arith.mulf %554, %558 : vector<4x8x8xf32>
    %560 = vector.broadcast %24 : vector<1x1x64xf32> to vector<4x8x64xf32>
    %561 = arith.mulf %504, %560 : vector<4x8x64xf32>
    %562 = arith.truncf %561 : vector<4x8x64xf32> to vector<4x8x64xbf16>
    %563 = arith.truncf %559 : vector<4x8x8xf32> to vector<4x8x8xbf16>
    "tpu.trace_start"() <{level = 10 : i32, message = "bqk,bkd->bqd"}> : () -> ()
    %cst_167 = arith.constant dense<0.000000e+00> : vector<4x8x64xf32>
    %564 = tpu.matmul %563, %562, %cst_167 {dimension_numbers = #tpu.dot_dimension_numbers<[2], [1], [1], [2], [0, 0, 0, 1, 1, 2], [0], [0]>} : vector<4x8x8xbf16>, vector<4x8x64xbf16>, vector<4x8x64xf32> -> vector<4x8x64xf32>
    "tpu.trace_stop"() : () -> ()
    %565 = arith.addf %545, %564 : vector<4x8x64xf32>
    %566 = vector.broadcast %31 : vector<1x1x64xf32> to vector<4x8x64xf32>
    %567 = arith.mulf %501, %566 : vector<4x8x64xf32>
    %568 = arith.truncf %567 : vector<4x8x64xf32> to vector<4x8x64xbf16>
    "tpu.trace_start"() <{level = 10 : i32, message = "bqd,bkd->bqk"}> : () -> ()
    %cst_168 = arith.constant dense<0.000000e+00> : vector<4x8x8xf32>
    %569 = tpu.matmul %568, %503, %cst_168 {dimension_numbers = #tpu.dot_dimension_numbers<[2], [2], [1], [1], [0, 0, 0, 1, 1, 1], [0], [0]>} : vector<4x8x64xbf16>, vector<4x8x64xbf16>, vector<4x8x8xf32> -> vector<4x8x8xf32>
    "tpu.trace_stop"() : () -> ()
    %cst_169 = arith.constant dense<0xFF800000> : vector<4x8xf32>
    %570 = vector.multi_reduction <maximumf>, %569, %cst_169 [2] : vector<4x8x8xf32> to vector<4x8xf32>
    %571 = vector.shape_cast %570 : vector<4x8xf32> to vector<4x8x1xf32>
    %572 = vector.broadcast %571 : vector<4x8x1xf32> to vector<4x8x8xf32>
    %573 = arith.subf %569, %572 : vector<4x8x8xf32>
    %574 = math.exp %573 : vector<4x8x8xf32>
    %cst_170 = arith.constant dense<0.000000e+00> : vector<4x8xf32>
    %575 = vector.multi_reduction <add>, %574, %cst_170 [2] : vector<4x8x8xf32> to vector<4x8xf32>
    %576 = vector.shape_cast %575 : vector<4x8xf32> to vector<4x8x1xf32>
    %577 = tpu.reciprocal %576 {approx = true} : vector<4x8x1xf32> -> vector<4x8x1xf32>
    %578 = vector.broadcast %577 : vector<4x8x1xf32> to vector<4x8x8xf32>
    %579 = arith.mulf %574, %578 : vector<4x8x8xf32>
    %580 = vector.broadcast %31 : vector<1x1x64xf32> to vector<4x8x64xf32>
    %581 = arith.mulf %504, %580 : vector<4x8x64xf32>
    %582 = arith.truncf %581 : vector<4x8x64xf32> to vector<4x8x64xbf16>
    %583 = arith.truncf %579 : vector<4x8x8xf32> to vector<4x8x8xbf16>
    "tpu.trace_start"() <{level = 10 : i32, message = "bqk,bkd->bqd"}> : () -> ()
    %cst_171 = arith.constant dense<0.000000e+00> : vector<4x8x64xf32>
    %584 = tpu.matmul %583, %582, %cst_171 {dimension_numbers = #tpu.dot_dimension_numbers<[2], [1], [1], [2], [0, 0, 0, 1, 1, 2], [0], [0]>} : vector<4x8x8xbf16>, vector<4x8x64xbf16>, vector<4x8x64xf32> -> vector<4x8x64xf32>
    "tpu.trace_stop"() : () -> ()
    %585 = arith.addf %565, %584 : vector<4x8x64xf32>
    %586 = vector.shape_cast %585 : vector<4x8x64xf32> to vector<32x64xf32>
    %587 = arith.truncf %586 : vector<32x64xf32> to vector<32x64xbf16>
    %c0_172 = arith.constant 0 : index
    %c0_173 = arith.constant 0 : index
    %588 = vector.load %arg30[%c0_172, %c0_173] : memref<64x64xbf16, #tpu.memory_space<vmem>>, vector<64x64xbf16>
    %cst_174 = arith.constant dense<0.000000e+00> : vector<32x64xf32>
    %589 = tpu.matmul %587, %588, %cst_174 {dimension_numbers = #tpu.dot_dimension_numbers<[1], [0], [0], [1], [0, 0, 1, 1], [], []>} : vector<32x64xbf16>, vector<64x64xbf16>, vector<32x64xf32> -> vector<32x64xf32>
    %c0_175 = arith.constant 0 : index
    %c0_176 = arith.constant 0 : index
    %590 = vector.load %arg31[%c0_175, %c0_176] : memref<1x64xf32, #tpu.memory_space<vmem>>, vector<1x64xf32>
    %591 = vector.broadcast %590 : vector<1x64xf32> to vector<32x64xf32>
    %592 = arith.addf %589, %591 : vector<32x64xf32>
    %593 = arith.addf %487, %592 : vector<32x64xf32>
    %c0_177 = arith.constant 0 : index
    %c0_178 = arith.constant 0 : index
    %594 = vector.load %arg34[%c0_177, %c0_178] : memref<1x64xf32, #tpu.memory_space<vmem>>, vector<1x64xf32>
    %c0_179 = arith.constant 0 : index
    %c0_180 = arith.constant 0 : index
    %595 = vector.load %arg35[%c0_179, %c0_180] : memref<1x64xf32, #tpu.memory_space<vmem>>, vector<1x64xf32>
    %cst_181 = arith.constant dense<0.000000e+00> : vector<32xf32>
    %596 = vector.multi_reduction <add>, %593, %cst_181 [1] : vector<32x64xf32> to vector<32xf32>
    %597 = vector.shape_cast %596 : vector<32xf32> to vector<32x1xf32>
    %cst_182 = arith.constant 6.400000e+01 : f32
    %598 = vector.broadcast %cst_182 : f32 to vector<32x1xf32>
    %599 = arith.divf %597, %598 : vector<32x1xf32>
    %600 = vector.broadcast %599 : vector<32x1xf32> to vector<32x64xf32>
    %601 = arith.subf %593, %600 : vector<32x64xf32>
    %602 = arith.mulf %601, %601 : vector<32x64xf32>
    %cst_183 = arith.constant dense<0.000000e+00> : vector<32xf32>
    %603 = vector.multi_reduction <add>, %602, %cst_183 [1] : vector<32x64xf32> to vector<32xf32>
    %604 = vector.shape_cast %603 : vector<32xf32> to vector<32x1xf32>
    %cst_184 = arith.constant 6.400000e+01 : f32
    %605 = vector.broadcast %cst_184 : f32 to vector<32x1xf32>
    %606 = arith.divf %604, %605 : vector<32x1xf32>
    %607 = vector.broadcast %599 : vector<32x1xf32> to vector<32x64xf32>
    %608 = arith.subf %593, %607 : vector<32x64xf32>
    %cst_185 = arith.constant 9.99999974E-6 : f32
    %609 = vector.broadcast %cst_185 : f32 to vector<32x1xf32>
    %610 = arith.addf %606, %609 : vector<32x1xf32>
    %611 = math.rsqrt %610 : vector<32x1xf32>
    %612 = vector.broadcast %611 : vector<32x1xf32> to vector<32x64xf32>
    %613 = arith.mulf %608, %612 : vector<32x64xf32>
    %614 = vector.broadcast %594 : vector<1x64xf32> to vector<32x64xf32>
    %615 = arith.mulf %613, %614 : vector<32x64xf32>
    %616 = vector.broadcast %595 : vector<1x64xf32> to vector<32x64xf32>
    %617 = arith.addf %615, %616 : vector<32x64xf32>
    %618 = arith.truncf %617 : vector<32x64xf32> to vector<32x64xbf16>
    %c0_186 = arith.constant 0 : index
    %c0_187 = arith.constant 0 : index
    %619 = vector.load %arg38[%c0_186, %c0_187] : memref<64x128xbf16, #tpu.memory_space<vmem>>, vector<64x128xbf16>
    %cst_188 = arith.constant dense<0.000000e+00> : vector<32x128xf32>
    %620 = tpu.matmul %618, %619, %cst_188 {dimension_numbers = #tpu.dot_dimension_numbers<[1], [0], [0], [1], [0, 0, 1, 1], [], []>} : vector<32x64xbf16>, vector<64x128xbf16>, vector<32x128xf32> -> vector<32x128xf32>
    %c0_189 = arith.constant 0 : index
    %c0_190 = arith.constant 0 : index
    %621 = vector.load %arg39[%c0_189, %c0_190] : memref<1x128xf32, #tpu.memory_space<vmem>>, vector<1x128xf32>
    %622 = vector.broadcast %621 : vector<1x128xf32> to vector<32x128xf32>
    %623 = arith.addf %620, %622 : vector<32x128xf32>
    %cst_191 = arith.constant 0.000000e+00 : f32
    %624 = vector.broadcast %cst_191 : f32 to vector<32x128xf32>
    %625 = arith.maximumf %623, %624 : vector<32x128xf32>
    %626 = arith.truncf %625 : vector<32x128xf32> to vector<32x128xbf16>
    %c0_192 = arith.constant 0 : index
    %c0_193 = arith.constant 0 : index
    %627 = vector.load %arg40[%c0_192, %c0_193] : memref<128x64xbf16, #tpu.memory_space<vmem>>, vector<128x64xbf16>
    %cst_194 = arith.constant dense<0.000000e+00> : vector<32x64xf32>
    %628 = tpu.matmul %626, %627, %cst_194 {dimension_numbers = #tpu.dot_dimension_numbers<[1], [0], [0], [1], [0, 0, 1, 1], [], []>} : vector<32x128xbf16>, vector<128x64xbf16>, vector<32x64xf32> -> vector<32x64xf32>
    %c0_195 = arith.constant 0 : index
    %c0_196 = arith.constant 0 : index
    %629 = vector.load %arg41[%c0_195, %c0_196] : memref<1x64xf32, #tpu.memory_space<vmem>>, vector<1x64xf32>
    %630 = vector.broadcast %629 : vector<1x64xf32> to vector<32x64xf32>
    %631 = arith.addf %628, %630 : vector<32x64xf32>
    %632 = arith.addf %617, %631 : vector<32x64xf32>
    %c0_197 = arith.constant 0 : index
    %c0_198 = arith.constant 0 : index
    %633 = vector.load %arg36[%c0_197, %c0_198] : memref<1x64xf32, #tpu.memory_space<vmem>>, vector<1x64xf32>
    %c0_199 = arith.constant 0 : index
    %c0_200 = arith.constant 0 : index
    %634 = vector.load %arg37[%c0_199, %c0_200] : memref<1x64xf32, #tpu.memory_space<vmem>>, vector<1x64xf32>
    %cst_201 = arith.constant dense<0.000000e+00> : vector<32xf32>
    %635 = vector.multi_reduction <add>, %632, %cst_201 [1] : vector<32x64xf32> to vector<32xf32>
    %636 = vector.shape_cast %635 : vector<32xf32> to vector<32x1xf32>
    %cst_202 = arith.constant 6.400000e+01 : f32
    %637 = vector.broadcast %cst_202 : f32 to vector<32x1xf32>
    %638 = arith.divf %636, %637 : vector<32x1xf32>
    %639 = vector.broadcast %638 : vector<32x1xf32> to vector<32x64xf32>
    %640 = arith.subf %632, %639 : vector<32x64xf32>
    %641 = arith.mulf %640, %640 : vector<32x64xf32>
    %cst_203 = arith.constant dense<0.000000e+00> : vector<32xf32>
    %642 = vector.multi_reduction <add>, %641, %cst_203 [1] : vector<32x64xf32> to vector<32xf32>
    %643 = vector.shape_cast %642 : vector<32xf32> to vector<32x1xf32>
    %cst_204 = arith.constant 6.400000e+01 : f32
    %644 = vector.broadcast %cst_204 : f32 to vector<32x1xf32>
    %645 = arith.divf %643, %644 : vector<32x1xf32>
    %646 = vector.broadcast %638 : vector<32x1xf32> to vector<32x64xf32>
    %647 = arith.subf %632, %646 : vector<32x64xf32>
    %cst_205 = arith.constant 9.99999974E-6 : f32
    %648 = vector.broadcast %cst_205 : f32 to vector<32x1xf32>
    %649 = arith.addf %645, %648 : vector<32x1xf32>
    %650 = math.rsqrt %649 : vector<32x1xf32>
    %651 = vector.broadcast %650 : vector<32x1xf32> to vector<32x64xf32>
    %652 = arith.mulf %647, %651 : vector<32x64xf32>
    %653 = vector.broadcast %633 : vector<1x64xf32> to vector<32x64xf32>
    %654 = arith.mulf %652, %653 : vector<32x64xf32>
    %655 = vector.broadcast %634 : vector<1x64xf32> to vector<32x64xf32>
    %656 = arith.addf %654, %655 : vector<32x64xf32>
    %657 = arith.truncf %656 : vector<32x64xf32> to vector<32x64xbf16>
    %c0_206 = arith.constant 0 : index
    %c0_207 = arith.constant 0 : index
    %658 = vector.load %arg42[%c0_206, %c0_207] : memref<64x512xbf16, #tpu.memory_space<vmem>>, vector<64x512xbf16>
    %cst_208 = arith.constant dense<0.000000e+00> : vector<32x512xf32>
    %659 = tpu.matmul %657, %658, %cst_208 {dimension_numbers = #tpu.dot_dimension_numbers<[1], [0], [0], [1], [0, 0, 1, 1], [], []>} : vector<32x64xbf16>, vector<64x512xbf16>, vector<32x512xf32> -> vector<32x512xf32>
    %c0_209 = arith.constant 0 : index
    %c0_210 = arith.constant 0 : index
    %660 = vector.load %arg43[%c0_209, %c0_210] : memref<1x512xf32, #tpu.memory_space<vmem>>, vector<1x512xf32>
    %661 = vector.broadcast %660 : vector<1x512xf32> to vector<32x512xf32>
    %662 = arith.addf %659, %661 : vector<32x512xf32>
    %663 = vector.shape_cast %662 : vector<32x512xf32> to vector<4x8x512xf32>
    %c0_211 = arith.constant 0 : index
    %c0_212 = arith.constant 0 : index
    %c0_213 = arith.constant 0 : index
    %664 = vector.load %arg44[%c0_211, %c0_212, %c0_213] : memref<4x8x512xf32, #tpu.memory_space<vmem>>, vector<4x8x512xf32>
    tpu.vector_store %arg44[%c0_211, %c0_212, %c0_213], %663 {strides = array<i32>} : memref<4x8x512xf32, #tpu.memory_space<vmem>>, vector<4x8x512xf32>,
    return
  }
  func.func @transform_0(%arg0: i32) -> (i32, i32, i32) {
    %c0_i32 = arith.constant 0 : i32
    %c0_i32_0 = arith.constant 0 : i32
    %c0_i32_1 = arith.constant 0 : i32
    return %arg0, %c0_i32, %c0_i32_0 : i32, i32, i32
  }
  func.func @transform_1(%arg0: i32) -> (i32, i32) {
    %c0_i32 = arith.constant 0 : i32
    %c0_i32_0 = arith.constant 0 : i32
    %c0_i32_1 = arith.constant 0 : i32
    return %c0_i32, %c0_i32_0 : i32, i32
  }
  func.func @transform_2(%arg0: i32) -> (i32, i32) {
    %c0_i32 = arith.constant 0 : i32
    %c0_i32_0 = arith.constant 0 : i32
    %c0_i32_1 = arith.constant 0 : i32
    return %c0_i32, %c0_i32_0 : i32, i32
  }
  func.func @transform_3(%arg0: i32) -> (i32, i32) {
    %c0_i32 = arith.constant 0 : i32
    %c0_i32_0 = arith.constant 0 : i32
    %c0_i32_1 = arith.constant 0 : i32
    return %c0_i32, %c0_i32_0 : i32, i32
  }
  func.func @transform_4(%arg0: i32) -> (i32, i32) {
    %c0_i32 = arith.constant 0 : i32
    %c0_i32_0 = arith.constant 0 : i32
    %c0_i32_1 = arith.constant 0 : i32
    return %c0_i32, %c0_i32_0 : i32, i32
  }
  func.func @transform_5(%arg0: i32) -> (i32, i32) {
    %c0_i32 = arith.constant 0 : i32
    %c0_i32_0 = arith.constant 0 : i32
    %c0_i32_1 = arith.constant 0 : i32
    return %c0_i32, %c0_i32_0 : i32, i32
  }
  func.func @transform_6(%arg0: i32) -> (i32, i32) {
    %c0_i32 = arith.constant 0 : i32
    %c0_i32_0 = arith.constant 0 : i32
    %c0_i32_1 = arith.constant 0 : i32
    return %c0_i32, %c0_i32_0 : i32, i32
  }
  func.func @transform_7(%arg0: i32) -> (i32, i32) {
    %c0_i32 = arith.constant 0 : i32
    %c0_i32_0 = arith.constant 0 : i32
    %c0_i32_1 = arith.constant 0 : i32
    return %c0_i32, %c0_i32_0 : i32, i32
  }
  func.func @transform_8(%arg0: i32) -> (i32, i32) {
    %c0_i32 = arith.constant 0 : i32
    %c0_i32_0 = arith.constant 0 : i32
    %c0_i32_1 = arith.constant 0 : i32
    return %c0_i32, %c0_i32_0 : i32, i32
  }
  func.func @transform_9(%arg0: i32) -> (i32, i32) {
    %c0_i32 = arith.constant 0 : i32
    %c0_i32_0 = arith.constant 0 : i32
    %c0_i32_1 = arith.constant 0 : i32
    return %c0_i32, %c0_i32_0 : i32, i32
  }
  func.func @transform_10(%arg0: i32) -> (i32, i32) {
    %c0_i32 = arith.constant 0 : i32
    %c0_i32_0 = arith.constant 0 : i32
    %c0_i32_1 = arith.constant 0 : i32
    return %c0_i32, %c0_i32_0 : i32, i32
  }
  func.func @transform_11(%arg0: i32) -> (i32, i32) {
    %c0_i32 = arith.constant 0 : i32
    %c0_i32_0 = arith.constant 0 : i32
    %c0_i32_1 = arith.constant 0 : i32
    return %c0_i32, %c0_i32_0 : i32, i32
  }
  func.func @transform_12(%arg0: i32) -> (i32, i32) {
    %c0_i32 = arith.constant 0 : i32
    %c0_i32_0 = arith.constant 0 : i32
    %c0_i32_1 = arith.constant 0 : i32
    return %c0_i32, %c0_i32_0 : i32, i32
  }
  func.func @transform_13(%arg0: i32) -> (i32, i32) {
    %c0_i32 = arith.constant 0 : i32
    %c0_i32_0 = arith.constant 0 : i32
    %c0_i32_1 = arith.constant 0 : i32
    return %c0_i32, %c0_i32_0 : i32, i32
  }
  func.func @transform_14(%arg0: i32) -> (i32, i32) {
    %c0_i32 = arith.constant 0 : i32
    %c0_i32_0 = arith.constant 0 : i32
    %c0_i32_1 = arith.constant 0 : i32
    return %c0_i32, %c0_i32_0 : i32, i32
  }
  func.func @transform_15(%arg0: i32) -> (i32, i32) {
    %c0_i32 = arith.constant 0 : i32
    %c0_i32_0 = arith.constant 0 : i32
    %c0_i32_1 = arith.constant 0 : i32
    return %c0_i32, %c0_i32_0 : i32, i32
  }
  func.func @transform_16(%arg0: i32) -> (i32, i32) {
    %c0_i32 = arith.constant 0 : i32
    %c0_i32_0 = arith.constant 0 : i32
    %c0_i32_1 = arith.constant 0 : i32
    return %c0_i32, %c0_i32_0 : i32, i32
  }
  func.func @transform_17(%arg0: i32) -> (i32, i32) {
    %c0_i32 = arith.constant 0 : i32
    %c0_i32_0 = arith.constant 0 : i32
    %c0_i32_1 = arith.constant 0 : i32
    return %c0_i32, %c0_i32_0 : i32, i32
  }
  func.func @transform_18(%arg0: i32) -> (i32, i32) {
    %c0_i32 = arith.constant 0 : i32
    %c0_i32_0 = arith.constant 0 : i32
    %c0_i32_1 = arith.constant 0 : i32
    return %c0_i32, %c0_i32_0 : i32, i32
  }
  func.func @transform_19(%arg0: i32) -> (i32, i32) {
    %c0_i32 = arith.constant 0 : i32
    %c0_i32_0 = arith.constant 0 : i32
    %c0_i32_1 = arith.constant 0 : i32
    return %c0_i32, %c0_i32_0 : i32, i32
  }
  func.func @transform_20(%arg0: i32) -> (i32, i32) {
    %c0_i32 = arith.constant 0 : i32
    %c0_i32_0 = arith.constant 0 : i32
    %c0_i32_1 = arith.constant 0 : i32
    return %c0_i32, %c0_i32_0 : i32, i32
  }
  func.func @transform_21(%arg0: i32) -> (i32, i32) {
    %c0_i32 = arith.constant 0 : i32
    %c0_i32_0 = arith.constant 0 : i32
    %c0_i32_1 = arith.constant 0 : i32
    return %c0_i32, %c0_i32_0 : i32, i32
  }
  func.func @transform_22(%arg0: i32) -> (i32, i32) {
    %c0_i32 = arith.constant 0 : i32
    %c0_i32_0 = arith.constant 0 : i32
    %c0_i32_1 = arith.constant 0 : i32
    return %c0_i32, %c0_i32_0 : i32, i32
  }
  func.func @transform_23(%arg0: i32) -> (i32, i32) {
    %c0_i32 = arith.constant 0 : i32
    %c0_i32_0 = arith.constant 0 : i32
    %c0_i32_1 = arith.constant 0 : i32
    return %c0_i32, %c0_i32_0 : i32, i32
  }
  func.func @transform_24(%arg0: i32) -> (i32, i32) {
    %c0_i32 = arith.constant 0 : i32
    %c0_i32_0 = arith.constant 0 : i32
    %c0_i32_1 = arith.constant 0 : i32
    return %c0_i32, %c0_i32_0 : i32, i32
  }
  func.func @transform_25(%arg0: i32) -> (i32, i32) {
    %c0_i32 = arith.constant 0 : i32
    %c0_i32_0 = arith.constant 0 : i32
    %c0_i32_1 = arith.constant 0 : i32
    return %c0_i32, %c0_i32_0 : i32, i32
  }
  func.func @transform_26(%arg0: i32) -> (i32, i32) {
    %c0_i32 = arith.constant 0 : i32
    %c0_i32_0 = arith.constant 0 : i32
    %c0_i32_1 = arith.constant 0 : i32
    return %c0_i32, %c0_i32_0 : i32, i32
  }
  func.func @transform_27(%arg0: i32) -> (i32, i32) {
    %c0_i32 = arith.constant 0 : i32
    %c0_i32_0 = arith.constant 0 : i32
    %c0_i32_1 = arith.constant 0 : i32
    return %c0_i32, %c0_i32_0 : i32, i32
  }
  func.func @transform_28(%arg0: i32) -> (i32, i32) {
    %c0_i32 = arith.constant 0 : i32
    %c0_i32_0 = arith.constant 0 : i32
    %c0_i32_1 = arith.constant 0 : i32
    return %c0_i32, %c0_i32_0 : i32, i32
  }
  func.func @transform_29(%arg0: i32) -> (i32, i32) {
    %c0_i32 = arith.constant 0 : i32
    %c0_i32_0 = arith.constant 0 : i32
    %c0_i32_1 = arith.constant 0 : i32
    return %c0_i32, %c0_i32_0 : i32, i32
  }
  func.func @transform_30(%arg0: i32) -> (i32, i32) {
    %c0_i32 = arith.constant 0 : i32
    %c0_i32_0 = arith.constant 0 : i32
    %c0_i32_1 = arith.constant 0 : i32
    return %c0_i32, %c0_i32_0 : i32, i32
  }
  func.func @transform_31(%arg0: i32) -> (i32, i32) {
    %c0_i32 = arith.constant 0 : i32
    %c0_i32_0 = arith.constant 0 : i32
    %c0_i32_1 = arith.constant 0 : i32
    return %c0_i32, %c0_i32_0 : i32, i32
  }
  func.func @transform_32(%arg0: i32) -> (i32, i32) {
    %c0_i32 = arith.constant 0 : i32
    %c0_i32_0 = arith.constant 0 : i32
    %c0_i32_1 = arith.constant 0 : i32
    return %c0_i32, %c0_i32_0 : i32, i32
  }
  func.func @transform_33(%arg0: i32) -> (i32, i32) {
    %c0_i32 = arith.constant 0 : i32
    %c0_i32_0 = arith.constant 0 : i32
    %c0_i32_1 = arith.constant 0 : i32
    return %c0_i32, %c0_i32_0 : i32, i32
  }
  func.func @transform_34(%arg0: i32) -> (i32, i32) {
    %c0_i32 = arith.constant 0 : i32
    %c0_i32_0 = arith.constant 0 : i32
    %c0_i32_1 = arith.constant 0 : i32
    return %c0_i32, %c0_i32_0 : i32, i32
  }
  func.func @transform_35(%arg0: i32) -> (i32, i32) {
    %c0_i32 = arith.constant 0 : i32
    %c0_i32_0 = arith.constant 0 : i32
    %c0_i32_1 = arith.constant 0 : i32
    return %c0_i32, %c0_i32_0 : i32, i32
  }
  func.func @transform_36(%arg0: i32) -> (i32, i32) {
    %c0_i32 = arith.constant 0 : i32
    %c0_i32_0 = arith.constant 0 : i32
    %c0_i32_1 = arith.constant 0 : i32
    return %c0_i32, %c0_i32_0 : i32, i32
  }
  func.func @transform_37(%arg0: i32) -> (i32, i32) {
    %c0_i32 = arith.constant 0 : i32
    %c0_i32_0 = arith.constant 0 : i32
    %c0_i32_1 = arith.constant 0 : i32
    return %c0_i32, %c0_i32_0 : i32, i32
  }
  func.func @transform_38(%arg0: i32) -> (i32, i32) {
    %c0_i32 = arith.constant 0 : i32
    %c0_i32_0 = arith.constant 0 : i32
    %c0_i32_1 = arith.constant 0 : i32
    return %c0_i32, %c0_i32_0 : i32, i32
  }
  func.func @transform_39(%arg0: i32) -> (i32, i32) {
    %c0_i32 = arith.constant 0 : i32
    %c0_i32_0 = arith.constant 0 : i32
    %c0_i32_1 = arith.constant 0 : i32
    return %c0_i32, %c0_i32_0 : i32, i32
  }
  func.func @transform_40(%arg0: i32) -> (i32, i32) {
    %c0_i32 = arith.constant 0 : i32
    %c0_i32_0 = arith.constant 0 : i32
    %c0_i32_1 = arith.constant 0 : i32
    return %c0_i32, %c0_i32_0 : i32, i32
  }
  func.func @transform_41(%arg0: i32) -> (i32, i32) {
    %c0_i32 = arith.constant 0 : i32
    %c0_i32_0 = arith.constant 0 : i32
    %c0_i32_1 = arith.constant 0 : i32
    return %c0_i32, %c0_i32_0 : i32, i32
  }
  func.func @transform_42(%arg0: i32) -> (i32, i32) {
    %c0_i32 = arith.constant 0 : i32
    %c0_i32_0 = arith.constant 0 : i32
    %c0_i32_1 = arith.constant 0 : i32
    return %c0_i32, %c0_i32_0 : i32, i32
  }
  func.func @transform_43(%arg0: i32) -> (i32, i32, i32) {
    %c0_i32 = arith.constant 0 : i32
    %c0_i32_0 = arith.constant 0 : i32
    %c0_i32_1 = arith.constant 0 : i32
    return %arg0, %c0_i32, %c0_i32_0 : i32, i32, i32
  }
}

</mosaic_0001>

<llo_original>
// kernel: tpu_custom_call.1
$region0: #{tpu_custom_call.1}
  #allocation0 [shape = 'u32[]', space=smem, size = 0x4, offset = 0x4, fixed_abs, tag = 'smem constant byte address 0x4 - core index']
  #allocation1 [shape = 'u32[144,128]{1,0:T(1,128)}', space=vmem, size = 0x12000, scoped, tag = 'internal scratch']
  %s0 = inlined_call_operand.smem [shape: u32[44], index: -1, kind: input, shape index: {}]
  %s1 = sld [smem:[%s0]]
  %s2 = scalar_lea.smem %s0, 1
  %s3 = sld [smem:[%s2]]
  %s4 = scalar_lea.smem %s0, 2
  %s5 = sld [smem:[%s4]]
  %s6 = scalar_lea.smem %s0, 3
  %s7 = sld [smem:[%s6]]
  %s8 = scalar_lea.smem %s0, 4
  %s9 = sld [smem:[%s8]]
  %s10 = scalar_lea.smem %s0, 5
  %s11 = sld [smem:[%s10]]
  %s12 = scalar_lea.smem %s0, 6
  %s13 = sld [smem:[%s12]]
  %s14 = scalar_lea.smem %s0, 7
  %s15 = sld [smem:[%s14]]
  %s16 = scalar_lea.smem %s0, 8
  %s17 = sld [smem:[%s16]]
  %s18 = scalar_lea.smem %s0, 9
  %s19 = sld [smem:[%s18]]
  %s20 = scalar_lea.smem %s0, 10
  %s21 = sld [smem:[%s20]]
  %s22 = scalar_lea.smem %s0, 11
  %s23 = sld [smem:[%s22]]
  %s24 = scalar_lea.smem %s0, 12
  %s25 = sld [smem:[%s24]]
  %s26 = scalar_lea.smem %s0, 13
  %s27 = sld [smem:[%s26]]
  %s28 = scalar_lea.smem %s0, 14
  %s29 = sld [smem:[%s28]]
  %s30 = scalar_lea.smem %s0, 15
  %s31 = sld [smem:[%s30]]
  %s32 = scalar_lea.smem %s0, 16
  %s33 = sld [smem:[%s32]]
  %s34 = scalar_lea.smem %s0, 17
  %s35 = sld [smem:[%s34]]
  %s36 = scalar_lea.smem %s0, 18
  %s37 = sld [smem:[%s36]]
  %s38 = scalar_lea.smem %s0, 19
  %s39 = sld [smem:[%s38]]
  %s40 = scalar_lea.smem %s0, 20
  %s41 = sld [smem:[%s40]]
  %s42 = scalar_lea.smem %s0, 21
  %s43 = sld [smem:[%s42]]
  %s44 = scalar_lea.smem %s0, 22
  %s45 = sld [smem:[%s44]]
  %s46 = scalar_lea.smem %s0, 23
  %s47 = sld [smem:[%s46]]
  %s48 = scalar_lea.smem %s0, 24
  %s49 = sld [smem:[%s48]]
  %s50 = scalar_lea.smem %s0, 25
  %s51 = sld [smem:[%s50]]
  %s52 = scalar_lea.smem %s0, 26
  %s53 = sld [smem:[%s52]]
  %s54 = scalar_lea.smem %s0, 27
  %s55 = sld [smem:[%s54]]
  %s56 = scalar_lea.smem %s0, 28
  %s57 = sld [smem:[%s56]]
  %s58 = scalar_lea.smem %s0, 29
  %s59 = sld [smem:[%s58]]
  %s60 = scalar_lea.smem %s0, 30
  %s61 = sld [smem:[%s60]]
  %s62 = scalar_lea.smem %s0, 31
  %s63 = sld [smem:[%s62]]
  %s64 = scalar_lea.smem %s0, 32
  %s65 = sld [smem:[%s64]]
  %s66 = scalar_lea.smem %s0, 33
  %s67 = sld [smem:[%s66]]
  %s68 = scalar_lea.smem %s0, 34
  %s69 = sld [smem:[%s68]]
  %s70 = scalar_lea.smem %s0, 35
  %s71 = sld [smem:[%s70]]
  %s72 = scalar_lea.smem %s0, 36
  %s73 = sld [smem:[%s72]]
  %s74 = scalar_lea.smem %s0, 37
  %s75 = sld [smem:[%s74]]
  %s76 = scalar_lea.smem %s0, 38
  %s77 = sld [smem:[%s76]]
  %s78 = scalar_lea.smem %s0, 39
  %s79 = sld [smem:[%s78]]
  %s80 = scalar_lea.smem %s0, 40
  %s81 = sld [smem:[%s80]]
  %s82 = scalar_lea.smem %s0, 41
  %s83 = sld [smem:[%s82]]
  %s84 = scalar_lea.smem %s0, 42
  %s85 = sld [smem:[%s84]]
  %s86 = scalar_lea.smem %s0, 43
  %s87 = sld [smem:[%s86]]
  %s88 = sld [smem:[#allocation0]]
  $region314: #{tpu_custom_call.1} parent=0
    _
  %s90 = ssub.s32 1, %s88
  %s91 = scalar_select 0, %s90, %s88
  $region1: #{tpu_custom_call.1} parent=0
    #allocation2 [shape = 'u8[16384]{0}', space=vmem, size = 0x4000, scoped, tag = 'input window, operand 0, single buffered']
    #allocation3 [shape = 's32[1]{0}', space=sflag, size = 0x4, scoped, tag = 'scoped memory for tpu_custom_call.1']
    #allocation4 [shape = 's32[1]{0}', space=sflag, size = 0x4, scoped, tag = 'scoped memory for tpu_custom_call.1']
    #allocation5 [shape = 'u8[1024]{0}', space=vmem, size = 0x400, scoped, tag = 'input window, operand 2, single buffered']
    #allocation6 [shape = 's32[1]{0}', space=sflag, size = 0x4, scoped, tag = 'scoped memory for tpu_custom_call.1']
    #allocation7 [shape = 'u8[16384]{0}', space=vmem, size = 0x4000, scoped, tag = 'input window, operand 3, single buffered']
    #allocation8 [shape = 'u8[512]{0}', space=vmem, size = 0x400, scoped, tag = 'input window, operand 4, single buffered']
    #allocation9 [shape = 's32[1]{0}', space=sflag, size = 0x4, scoped, tag = 'scoped memory for tpu_custom_call.1']
    #allocation10 [shape = 'u8[16384]{0}', space=vmem, size = 0x4000, scoped, tag = 'input window, operand 5, single buffered']
    #allocation11 [shape = 'u8[512]{0}', space=vmem, size = 0x400, scoped, tag = 'input window, operand 6, single buffered']
    #allocation12 [shape = 's32[1]{0}', space=sflag, size = 0x4, scoped, tag = 'scoped memory for tpu_custom_call.1']
    #allocation13 [shape = 'u8[16384]{0}', space=vmem, size = 0x4000, scoped, tag = 'input window, operand 7, single buffered']
    #allocation14 [shape = 'u8[512]{0}', space=vmem, size = 0x400, scoped, tag = 'input window, operand 8, single buffered']
    #allocation15 [shape = 's32[1]{0}', space=sflag, size = 0x4, scoped, tag = 'scoped memory for tpu_custom_call.1']
    #allocation16 [shape = 'u8[16384]{0}', space=vmem, size = 0x4000, scoped, tag = 'input window, operand 9, single buffered']
    #allocation17 [shape = 'u8[512]{0}', space=vmem, size = 0x400, scoped, tag = 'input window, operand 10, single buffered']
    #allocation18 [shape = 's32[1]{0}', space=sflag, size = 0x4, scoped, tag = 'scoped memory for tpu_custom_call.1']
    #allocation19 [shape = 'u8[512]{0}', space=vmem, size = 0x400, scoped, tag = 'input window, operand 11, single buffered']
    #allocation20 [shape = 'u8[512]{0}', space=vmem, size = 0x400, scoped, tag = 'input window, operand 12, single buffered']
    #allocation21 [shape = 's32[1]{0}', space=sflag, size = 0x4, scoped, tag = 'scoped memory for tpu_custom_call.1']
    #allocation22 [shape = 'u8[512]{0}', space=vmem, size = 0x400, scoped, tag = 'input window, operand 13, single buffered']
    #allocation23 [shape = 'u8[512]{0}', space=vmem, size = 0x400, scoped, tag = 'input window, operand 14, single buffered']
    #allocation24 [shape = 's32[1]{0}', space=sflag, size = 0x4, scoped, tag = 'scoped memory for tpu_custom_call.1']
    #allocation25 [shape = 'u8[512]{0}', space=vmem, size = 0x400, scoped, tag = 'input window, operand 15, single buffered']
    #allocation26 [shape = 'u8[512]{0}', space=vmem, size = 0x400, scoped, tag = 'input window, operand 16, single buffered']
    #allocation27 [shape = 's32[1]{0}', space=sflag, size = 0x4, scoped, tag = 'scoped memory for tpu_custom_call.1']
    #allocation28 [shape = 'u8[16384]{0}', space=vmem, size = 0x4000, scoped, tag = 'input window, operand 17, single buffered']
    #allocation29 [shape = 'u8[512]{0}', space=vmem, size = 0x400, scoped, tag = 'input window, operand 18, single buffered']
    #allocation30 [shape = 's32[1]{0}', space=sflag, size = 0x4, scoped, tag = 'scoped memory for tpu_custom_call.1']
    #allocation31 [shape = 'u8[512]{0}', space=vmem, size = 0x400, scoped, tag = 'input window, operand 20, single buffered']
    #allocation32 [shape = 'u8[1024]{0}', space=vmem, size = 0x400, scoped, tag = 'input window, operand 22, single buffered']
    #allocation33 [shape = 's32[1]{0}', space=sflag, size = 0x4, scoped, tag = 'scoped memory for tpu_custom_call.1']
    #allocation34 [shape = 'u8[16384]{0}', space=vmem, size = 0x4000, scoped, tag = 'input window, operand 23, single buffered']
    #allocation35 [shape = 'u8[512]{0}', space=vmem, size = 0x400, scoped, tag = 'input window, operand 24, single buffered']
    #allocation36 [shape = 's32[1]{0}', space=sflag, size = 0x4, scoped, tag = 'scoped memory for tpu_custom_call.1']
    #allocation37 [shape = 'u8[16384]{0}', space=vmem, size = 0x4000, scoped, tag = 'input window, operand 25, single buffered']
    #allocation38 [shape = 'u8[512]{0}', space=vmem, size = 0x400, scoped, tag = 'input window, operand 26, single buffered']
    #allocation39 [shape = 's32[1]{0}', space=sflag, size = 0x4, scoped, tag = 'scoped memory for tpu_custom_call.1']
    #allocation40 [shape = 'u8[16384]{0}', space=vmem, size = 0x4000, scoped, tag = 'input window, operand 27, single buffered']
    #allocation41 [shape = 'u8[512]{0}', space=vmem, size = 0x400, scoped, tag = 'input window, operand 28, single buffered']
    #allocation42 [shape = 's32[1]{0}', space=sflag, size = 0x4, scoped, tag = 'scoped memory for tpu_custom_call.1']
    #allocation43 [shape = 'u8[16384]{0}', space=vmem, size = 0x4000, scoped, tag = 'input window, operand 29, single buffered']
    #allocation44 [shape = 'u8[512]{0}', space=vmem, size = 0x400, scoped, tag = 'input window, operand 30, single buffered']
    #allocation45 [shape = 's32[1]{0}', space=sflag, size = 0x4, scoped, tag = 'scoped memory for tpu_custom_call.1']
    #allocation46 [shape = 'u8[512]{0}', space=vmem, size = 0x400, scoped, tag = 'input window, operand 31, single buffered']
    #allocation47 [shape = 'u8[512]{0}', space=vmem, size = 0x400, scoped, tag = 'input window, operand 32, single buffered']
    #allocation48 [shape = 's32[1]{0}', space=sflag, size = 0x4, scoped, tag = 'scoped memory for tpu_custom_call.1']
    #allocation49 [shape = 'u8[512]{0}', space=vmem, size = 0x400, scoped, tag = 'input window, operand 33, single buffered']
    #allocation50 [shape = 'u8[512]{0}', space=vmem, size = 0x400, scoped, tag = 'input window, operand 34, single buffered']
    #allocation51 [shape = 's32[1]{0}', space=sflag, size = 0x4, scoped, tag = 'scoped memory for tpu_custom_call.1']
    #allocation52 [shape = 'u8[512]{0}', space=vmem, size = 0x400, scoped, tag = 'input window, operand 35, single buffered']
    #allocation53 [shape = 'u8[65536]{0}', space=vmem, size = 0x10000, scoped, tag = 'output window, operand 0, single buffered']
    %92 = vsyncpa [#allocation3], 0
    %93 = vsyncpa [#allocation6], 0
    %94 = vsyncpa [#allocation9], 0
    %95 = vsyncpa [#allocation12], 0
    %96 = vsyncpa [#allocation15], 0
    %97 = vsyncpa [#allocation18], 0
    %98 = vsyncpa [#allocation21], 0
    %99 = vsyncpa [#allocation24], 0
    %100 = vsyncpa [#allocation27], 0
    %101 = vsyncpa [#allocation30], 0
    %102 = vsyncpa [#allocation33], 0
    %103 = vsyncpa [#allocation36], 0
    %104 = vsyncpa [#allocation39], 0
    %105 = vsyncpa [#allocation42], 0
    %106 = vsyncpa [#allocation45], 0
    %107 = vsyncpa [#allocation48], 0
    %108 = vsyncpa [#allocation51], 0
    %109 = vsyncpa [#allocation4], 0
    // Predicated region
    $region2: #{tpu_custom_call.1} parent=1 // pred_check
      _
    $region3: #{tpu_custom_call.1} parent=1 // pred_check_branch
      %111 = sbr.rel (0) target = $region5
    $region4: #{tpu_custom_call.1} parent=1 // pred_region
      %s113 = ssub.s32 512, 512
      %114 = vsyncadd [#allocation3], %s113
      %s115 = sshll.u32 [#allocation2], 4
      %s116 = int_to_ptr.vmem [resolvable:$true] %s115
      %121 = dma.hbm_to_vmem [thread:$0]  %s1, 512, %s116, [#allocation3], 128, 128, 8
    $region5: #{tpu_custom_call.1} parent=1 // pred_fallthru
      _
    // Predicated region
    $region6: #{tpu_custom_call.1} parent=1 // pred_check
      _
    $region7: #{tpu_custom_call.1} parent=1 // pred_check_branch
      %123 = sbr.rel (0) target = $region9
    $region8: #{tpu_custom_call.1} parent=1 // pred_region
      _
    $region9: #{tpu_custom_call.1} parent=1 // pred_fallthru
      _
    // Predicated region
    $region10: #{tpu_custom_call.1} parent=1 // pred_check
      _
    $region11: #{tpu_custom_call.1} parent=1 // pred_check_branch
      %125 = sbr.rel (0) target = $region13
    $region12: #{tpu_custom_call.1} parent=1 // pred_region
      %s127 = ssub.s32 32, 32
      %128 = vsyncadd [#allocation6], %s127
      %s130 = sshll.u32 [#allocation5], 4
      %s131 = int_to_ptr.vmem [resolvable:$true] %s130
      %133 = dma.hbm_to_vmem [thread:$0]  %s5, 32, %s131, [#allocation6]
    $region13: #{tpu_custom_call.1} parent=1 // pred_fallthru
      _
    // Predicated region
    $region14: #{tpu_custom_call.1} parent=1 // pred_check
      _
    $region15: #{tpu_custom_call.1} parent=1 // pred_check_branch
      %135 = sbr.rel (0) target = $region17
    $region16: #{tpu_custom_call.1} parent=1 // pred_region
      %s137 = ssub.s32 512, 512
      %138 = vsyncadd [#allocation6], %s137
      %s139 = sshll.u32 [#allocation7], 4
      %s140 = int_to_ptr.vmem [resolvable:$true] %s139
      %145 = dma.hbm_to_vmem [thread:$0]  %s7, 512, %s140, [#allocation6], 64, 64, 4
    $region17: #{tpu_custom_call.1} parent=1 // pred_fallthru
      _
    // Predicated region
    $region18: #{tpu_custom_call.1} parent=1 // pred_check
      _
    $region19: #{tpu_custom_call.1} parent=1 // pred_check_branch
      %147 = sbr.rel (0) target = $region21
    $region20: #{tpu_custom_call.1} parent=1 // pred_region
      %s149 = ssub.s32 16, 16
      %150 = vsyncadd [#allocation9], %s149
      %s152 = sshll.u32 [#allocation8], 4
      %s153 = int_to_ptr.vmem [resolvable:$true] %s152
      %155 = dma.hbm_to_vmem [thread:$0]  %s9, 16, %s153, [#allocation9]
    $region21: #{tpu_custom_call.1} parent=1 // pred_fallthru
      _
    // Predicated region
    $region22: #{tpu_custom_call.1} parent=1 // pred_check
      _
    $region23: #{tpu_custom_call.1} parent=1 // pred_check_branch
      %157 = sbr.rel (0) target = $region25
    $region24: #{tpu_custom_call.1} parent=1 // pred_region
      %s159 = ssub.s32 512, 512
      %160 = vsyncadd [#allocation9], %s159
      %s161 = sshll.u32 [#allocation10], 4
      %s162 = int_to_ptr.vmem [resolvable:$true] %s161
      %167 = dma.hbm_to_vmem [thread:$0]  %s11, 512, %s162, [#allocation9], 64, 64, 4
    $region25: #{tpu_custom_call.1} parent=1 // pred_fallthru
      _
    // Predicated region
    $region26: #{tpu_custom_call.1} parent=1 // pred_check
      _
    $region27: #{tpu_custom_call.1} parent=1 // pred_check_branch
      %169 = sbr.rel (0) target = $region29
    $region28: #{tpu_custom_call.1} parent=1 // pred_region
      %s171 = ssub.s32 16, 16
      %172 = vsyncadd [#allocation12], %s171
      %s174 = sshll.u32 [#allocation11], 4
      %s175 = int_to_ptr.vmem [resolvable:$true] %s174
      %177 = dma.hbm_to_vmem [thread:$0]  %s13, 16, %s175, [#allocation12]
    $region29: #{tpu_custom_call.1} parent=1 // pred_fallthru
      _
    // Predicated region
    $region30: #{tpu_custom_call.1} parent=1 // pred_check
      _
    $region31: #{tpu_custom_call.1} parent=1 // pred_check_branch
      %179 = sbr.rel (0) target = $region33
    $region32: #{tpu_custom_call.1} parent=1 // pred_region
      %s181 = ssub.s32 512, 512
      %182 = vsyncadd [#allocation12], %s181
      %s183 = sshll.u32 [#allocation13], 4
      %s184 = int_to_ptr.vmem [resolvable:$true] %s183
      %189 = dma.hbm_to_vmem [thread:$0]  %s15, 512, %s184, [#allocation12], 64, 64, 4
    $region33: #{tpu_custom_call.1} parent=1 // pred_fallthru
      _
    // Predicated region
    $region34: #{tpu_custom_call.1} parent=1 // pred_check
      _
    $region35: #{tpu_custom_call.1} parent=1 // pred_check_branch
      %191 = sbr.rel (0) target = $region37
    $region36: #{tpu_custom_call.1} parent=1 // pred_region
      %s193 = ssub.s32 16, 16
      %194 = vsyncadd [#allocation15], %s193
      %s196 = sshll.u32 [#allocation14], 4
      %s197 = int_to_ptr.vmem [resolvable:$true] %s196
      %199 = dma.hbm_to_vmem [thread:$0]  %s17, 16, %s197, [#allocation15]
    $region37: #{tpu_custom_call.1} parent=1 // pred_fallthru
      _
    // Predicated region
    $region38: #{tpu_custom_call.1} parent=1 // pred_check
      _
    $region39: #{tpu_custom_call.1} parent=1 // pred_check_branch
      %201 = sbr.rel (0) target = $region41
    $region40: #{tpu_custom_call.1} parent=1 // pred_region
      %s203 = ssub.s32 512, 512
      %204 = vsyncadd [#allocation15], %s203
      %s205 = sshll.u32 [#allocation16], 4
      %s206 = int_to_ptr.vmem [resolvable:$true] %s205
      %211 = dma.hbm_to_vmem [thread:$0]  %s19, 512, %s206, [#allocation15], 64, 64, 4
    $region41: #{tpu_custom_call.1} parent=1 // pred_fallthru
      _
    // Predicated region
    $region42: #{tpu_custom_call.1} parent=1 // pred_check
      _
    $region43: #{tpu_custom_call.1} parent=1 // pred_check_branch
      %213 = sbr.rel (0) target = $region45
    $region44: #{tpu_custom_call.1} parent=1 // pred_region
      %s215 = ssub.s32 16, 16
      %216 = vsyncadd [#allocation18], %s215
      %s218 = sshll.u32 [#allocation17], 4
      %s219 = int_to_ptr.vmem [resolvable:$true] %s218
      %221 = dma.hbm_to_vmem [thread:$0]  %s21, 16, %s219, [#allocation18]
    $region45: #{tpu_custom_call.1} parent=1 // pred_fallthru
      _
    // Predicated region
    $region46: #{tpu_custom_call.1} parent=1 // pred_check
      _
    $region47: #{tpu_custom_call.1} parent=1 // pred_check_branch
      %223 = sbr.rel (0) target = $region49
    $region48: #{tpu_custom_call.1} parent=1 // pred_region
      %s225 = ssub.s32 16, 16
      %226 = vsyncadd [#allocation18], %s225
      %s228 = sshll.u32 [#allocation19], 4
      %s229 = int_to_ptr.vmem [resolvable:$true] %s228
      %231 = dma.hbm_to_vmem [thread:$0]  %s23, 16, %s229, [#allocation18]
    $region49: #{tpu_custom_call.1} parent=1 // pred_fallthru
      _
    // Predicated region
    $region50: #{tpu_custom_call.1} parent=1 // pred_check
      _
    $region51: #{tpu_custom_call.1} parent=1 // pred_check_branch
      %233 = sbr.rel (0) target = $region53
    $region52: #{tpu_custom_call.1} parent=1 // pred_region
      %s235 = ssub.s32 16, 16
      %236 = vsyncadd [#allocation21], %s235
      %s238 = sshll.u32 [#allocation20], 4
      %s239 = int_to_ptr.vmem [resolvable:$true] %s238
      %241 = dma.hbm_to_vmem [thread:$0]  %s25, 16, %s239, [#allocation21]
    $region53: #{tpu_custom_call.1} parent=1 // pred_fallthru
      _
    // Predicated region
    $region54: #{tpu_custom_call.1} parent=1 // pred_check
      _
    $region55: #{tpu_custom_call.1} parent=1 // pred_check_branch
      %243 = sbr.rel (0) target = $region57
    $region56: #{tpu_custom_call.1} parent=1 // pred_region
      %s245 = ssub.s32 16, 16
      %246 = vsyncadd [#allocation21], %s245
      %s248 = sshll.u32 [#allocation22], 4
      %s249 = int_to_ptr.vmem [resolvable:$true] %s248
      %251 = dma.hbm_to_vmem [thread:$0]  %s27, 16, %s249, [#allocation21]
    $region57: #{tpu_custom_call.1} parent=1 // pred_fallthru
      _
    // Predicated region
    $region58: #{tpu_custom_call.1} parent=1 // pred_check
      _
    $region59: #{tpu_custom_call.1} parent=1 // pred_check_branch
      %253 = sbr.rel (0) target = $region61
    $region60: #{tpu_custom_call.1} parent=1 // pred_region
      %s255 = ssub.s32 16, 16
      %256 = vsyncadd [#allocation24], %s255
      %s258 = sshll.u32 [#allocation23], 4
      %s259 = int_to_ptr.vmem [resolvable:$true] %s258
      %261 = dma.hbm_to_vmem [thread:$0]  %s29, 16, %s259, [#allocation24]
    $region61: #{tpu_custom_call.1} parent=1 // pred_fallthru
      _
    // Predicated region
    $region62: #{tpu_custom_call.1} parent=1 // pred_check
      _
    $region63: #{tpu_custom_call.1} parent=1 // pred_check_branch
      %263 = sbr.rel (0) target = $region65
    $region64: #{tpu_custom_call.1} parent=1 // pred_region
      %s265 = ssub.s32 16, 16
      %266 = vsyncadd [#allocation24], %s265
      %s268 = sshll.u32 [#allocation25], 4
      %s269 = int_to_ptr.vmem [resolvable:$true] %s268
      %271 = dma.hbm_to_vmem [thread:$0]  %s31, 16, %s269, [#allocation24]
    $region65: #{tpu_custom_call.1} parent=1 // pred_fallthru
      _
    // Predicated region
    $region66: #{tpu_custom_call.1} parent=1 // pred_check
      _
    $region67: #{tpu_custom_call.1} parent=1 // pred_check_branch
      %273 = sbr.rel (0) target = $region69
    $region68: #{tpu_custom_call.1} parent=1 // pred_region
      %s275 = ssub.s32 16, 16
      %276 = vsyncadd [#allocation27], %s275
      %s278 = sshll.u32 [#allocation26], 4
      %s279 = int_to_ptr.vmem [resolvable:$true] %s278
      %281 = dma.hbm_to_vmem [thread:$0]  %s33, 16, %s279, [#allocation27]
    $region69: #{tpu_custom_call.1} parent=1 // pred_fallthru
      _
    // Predicated region
    $region70: #{tpu_custom_call.1} parent=1 // pred_check
      _
    $region71: #{tpu_custom_call.1} parent=1 // pred_check_branch
      %283 = sbr.rel (0) target = $region73
    $region72: #{tpu_custom_call.1} parent=1 // pred_region
      %s285 = ssub.s32 512, 512
      %286 = vsyncadd [#allocation27], %s285
      %s287 = sshll.u32 [#allocation28], 4
      %s288 = int_to_ptr.vmem [resolvable:$true] %s287
      %293 = dma.hbm_to_vmem [thread:$0]  %s35, 512, %s288, [#allocation27], 64, 64, 4
    $region73: #{tpu_custom_call.1} parent=1 // pred_fallthru
      _
    // Predicated region
    $region74: #{tpu_custom_call.1} parent=1 // pred_check
      _
    $region75: #{tpu_custom_call.1} parent=1 // pred_check_branch
      %295 = sbr.rel (0) target = $region77
    $region76: #{tpu_custom_call.1} parent=1 // pred_region
      %s297 = ssub.s32 16, 16
      %298 = vsyncadd [#allocation30], %s297
      %s300 = sshll.u32 [#allocation29], 4
      %s301 = int_to_ptr.vmem [resolvable:$true] %s300
      %303 = dma.hbm_to_vmem [thread:$0]  %s37, 16, %s301, [#allocation30]
    $region77: #{tpu_custom_call.1} parent=1 // pred_fallthru
      _
    // Predicated region
    $region78: #{tpu_custom_call.1} parent=1 // pred_check
      _
    $region79: #{tpu_custom_call.1} parent=1 // pred_check_branch
      %305 = sbr.rel (0) target = $region81
    $region80: #{tpu_custom_call.1} parent=1 // pred_region
      _
    $region81: #{tpu_custom_call.1} parent=1 // pred_fallthru
      _
    // Predicated region
    $region82: #{tpu_custom_call.1} parent=1 // pred_check
      _
    $region83: #{tpu_custom_call.1} parent=1 // pred_check_branch
      %307 = sbr.rel (0) target = $region85
    $region84: #{tpu_custom_call.1} parent=1 // pred_region
      %s309 = ssub.s32 16, 16
      %310 = vsyncadd [#allocation30], %s309
      %s312 = sshll.u32 [#allocation31], 4
      %s313 = int_to_ptr.vmem [resolvable:$true] %s312
      %315 = dma.hbm_to_vmem [thread:$0]  %s41, 16, %s313, [#allocation30]
    $region85: #{tpu_custom_call.1} parent=1 // pred_fallthru
      _
    // Predicated region
    $region86: #{tpu_custom_call.1} parent=1 // pred_check
      _
    $region87: #{tpu_custom_call.1} parent=1 // pred_check_branch
      %317 = sbr.rel (0) target = $region89
    $region88: #{tpu_custom_call.1} parent=1 // pred_region
      _
    $region89: #{tpu_custom_call.1} parent=1 // pred_fallthru
      _
    // Predicated region
    $region90: #{tpu_custom_call.1} parent=1 // pred_check
      _
    $region91: #{tpu_custom_call.1} parent=1 // pred_check_branch
      %319 = sbr.rel (0) target = $region93
    $region92: #{tpu_custom_call.1} parent=1 // pred_region
      %s321 = ssub.s32 32, 32
      %322 = vsyncadd [#allocation33], %s321
      %s324 = sshll.u32 [#allocation32], 4
      %s325 = int_to_ptr.vmem [resolvable:$true] %s324
      %327 = dma.hbm_to_vmem [thread:$0]  %s45, 32, %s325, [#allocation33]
    $region93: #{tpu_custom_call.1} parent=1 // pred_fallthru
      _
    // Predicated region
    $region94: #{tpu_custom_call.1} parent=1 // pred_check
      _
    $region95: #{tpu_custom_call.1} parent=1 // pred_check_branch
      %329 = sbr.rel (0) target = $region97
    $region96: #{tpu_custom_call.1} parent=1 // pred_region
      %s331 = ssub.s32 512, 512
      %332 = vsyncadd [#allocation33], %s331
      %s333 = sshll.u32 [#allocation34], 4
      %s334 = int_to_ptr.vmem [resolvable:$true] %s333
      %339 = dma.hbm_to_vmem [thread:$0]  %s47, 512, %s334, [#allocation33], 64, 64, 4
    $region97: #{tpu_custom_call.1} parent=1 // pred_fallthru
      _
    // Predicated region
    $region98: #{tpu_custom_call.1} parent=1 // pred_check
      _
    $region99: #{tpu_custom_call.1} parent=1 // pred_check_branch
      %341 = sbr.rel (0) target = $region101
    $region100: #{tpu_custom_call.1} parent=1 // pred_region
      %s343 = ssub.s32 16, 16
      %344 = vsyncadd [#allocation36], %s343
      %s346 = sshll.u32 [#allocation35], 4
      %s347 = int_to_ptr.vmem [resolvable:$true] %s346
      %349 = dma.hbm_to_vmem [thread:$0]  %s49, 16, %s347, [#allocation36]
    $region101: #{tpu_custom_call.1} parent=1 // pred_fallthru
      _
    // Predicated region
    $region102: #{tpu_custom_call.1} parent=1 // pred_check
      _
    $region103: #{tpu_custom_call.1} parent=1 // pred_check_branch
      %351 = sbr.rel (0) target = $region105
    $region104: #{tpu_custom_call.1} parent=1 // pred_region
      %s353 = ssub.s32 512, 512
      %354 = vsyncadd [#allocation36], %s353
      %s355 = sshll.u32 [#allocation37], 4
      %s356 = int_to_ptr.vmem [resolvable:$true] %s355
      %361 = dma.hbm_to_vmem [thread:$0]  %s51, 512, %s356, [#allocation36], 64, 64, 4
    $region105: #{tpu_custom_call.1} parent=1 // pred_fallthru
      _
    // Predicated region
    $region106: #{tpu_custom_call.1} parent=1 // pred_check
      _
    $region107: #{tpu_custom_call.1} parent=1 // pred_check_branch
      %363 = sbr.rel (0) target = $region109
    $region108: #{tpu_custom_call.1} parent=1 // pred_region
      %s365 = ssub.s32 16, 16
      %366 = vsyncadd [#allocation39], %s365
      %s368 = sshll.u32 [#allocation38], 4
      %s369 = int_to_ptr.vmem [resolvable:$true] %s368
      %371 = dma.hbm_to_vmem [thread:$0]  %s53, 16, %s369, [#allocation39]
    $region109: #{tpu_custom_call.1} parent=1 // pred_fallthru
      _
    // Predicated region
    $region110: #{tpu_custom_call.1} parent=1 // pred_check
      _
    $region111: #{tpu_custom_call.1} parent=1 // pred_check_branch
      %373 = sbr.rel (0) target = $region113
    $region112: #{tpu_custom_call.1} parent=1 // pred_region
      %s375 = ssub.s32 512, 512
      %376 = vsyncadd [#allocation39], %s375
      %s377 = sshll.u32 [#allocation40], 4
      %s378 = int_to_ptr.vmem [resolvable:$true] %s377
      %383 = dma.hbm_to_vmem [thread:$0]  %s55, 512, %s378, [#allocation39], 64, 64, 4
    $region113: #{tpu_custom_call.1} parent=1 // pred_fallthru
      _
    // Predicated region
    $region114: #{tpu_custom_call.1} parent=1 // pred_check
      _
    $region115: #{tpu_custom_call.1} parent=1 // pred_check_branch
      %385 = sbr.rel (0) target = $region117
    $region116: #{tpu_custom_call.1} parent=1 // pred_region
      %s387 = ssub.s32 16, 16
      %388 = vsyncadd [#allocation42], %s387
      %s390 = sshll.u32 [#allocation41], 4
      %s391 = int_to_ptr.vmem [resolvable:$true] %s390
      %393 = dma.hbm_to_vmem [thread:$0]  %s57, 16, %s391, [#allocation42]
    $region117: #{tpu_custom_call.1} parent=1 // pred_fallthru
      _
    // Predicated region
    $region118: #{tpu_custom_call.1} parent=1 // pred_check
      _
    $region119: #{tpu_custom_call.1} parent=1 // pred_check_branch
      %395 = sbr.rel (0) target = $region121
    $region120: #{tpu_custom_call.1} parent=1 // pred_region
      %s397 = ssub.s32 512, 512
      %398 = vsyncadd [#allocation42], %s397
      %s399 = sshll.u32 [#allocation43], 4
      %s400 = int_to_ptr.vmem [resolvable:$true] %s399
      %405 = dma.hbm_to_vmem [thread:$0]  %s59, 512, %s400, [#allocation42], 64, 64, 4
    $region121: #{tpu_custom_call.1} parent=1 // pred_fallthru
      _
    // Predicated region
    $region122: #{tpu_custom_call.1} parent=1 // pred_check
      _
    $region123: #{tpu_custom_call.1} parent=1 // pred_check_branch
      %407 = sbr.rel (0) target = $region125
    $region124: #{tpu_custom_call.1} parent=1 // pred_region
      %s409 = ssub.s32 16, 16
      %410 = vsyncadd [#allocation45], %s409
      %s412 = sshll.u32 [#allocation44], 4
      %s413 = int_to_ptr.vmem [resolvable:$true] %s412
      %415 = dma.hbm_to_vmem [thread:$0]  %s61, 16, %s413, [#allocation45]
    $region125: #{tpu_custom_call.1} parent=1 // pred_fallthru
      _
    // Predicated region
    $region126: #{tpu_custom_call.1} parent=1 // pred_check
      _
    $region127: #{tpu_custom_call.1} parent=1 // pred_check_branch
      %417 = sbr.rel (0) target = $region129
    $region128: #{tpu_custom_call.1} parent=1 // pred_region
      %s419 = ssub.s32 16, 16
      %420 = vsyncadd [#allocation45], %s419
      %s422 = sshll.u32 [#allocation46], 4
      %s423 = int_to_ptr.vmem [resolvable:$true] %s422
      %425 = dma.hbm_to_vmem [thread:$0]  %s63, 16, %s423, [#allocation45]
    $region129: #{tpu_custom_call.1} parent=1 // pred_fallthru
      _
    // Predicated region
    $region130: #{tpu_custom_call.1} parent=1 // pred_check
      _
    $region131: #{tpu_custom_call.1} parent=1 // pred_check_branch
      %427 = sbr.rel (0) target = $region133
    $region132: #{tpu_custom_call.1} parent=1 // pred_region
      %s429 = ssub.s32 16, 16
      %430 = vsyncadd [#allocation48], %s429
      %s432 = sshll.u32 [#allocation47], 4
      %s433 = int_to_ptr.vmem [resolvable:$true] %s432
      %435 = dma.hbm_to_vmem [thread:$0]  %s65, 16, %s433, [#allocation48]
    $region133: #{tpu_custom_call.1} parent=1 // pred_fallthru
      _
    // Predicated region
    $region134: #{tpu_custom_call.1} parent=1 // pred_check
      _
    $region135: #{tpu_custom_call.1} parent=1 // pred_check_branch
      %437 = sbr.rel (0) target = $region137
    $region136: #{tpu_custom_call.1} parent=1 // pred_region
      %s439 = ssub.s32 16, 16
      %440 = vsyncadd [#allocation48], %s439
      %s442 = sshll.u32 [#allocation49], 4
      %s443 = int_to_ptr.vmem [resolvable:$true] %s442
      %445 = dma.hbm_to_vmem [thread:$0]  %s67, 16, %s443, [#allocation48]
    $region137: #{tpu_custom_call.1} parent=1 // pred_fallthru
      _
    // Predicated region
    $region138: #{tpu_custom_call.1} parent=1 // pred_check
      _
    $region139: #{tpu_custom_call.1} parent=1 // pred_check_branch
      %447 = sbr.rel (0) target = $region141
    $region140: #{tpu_custom_call.1} parent=1 // pred_region
      %s449 = ssub.s32 16, 16
      %450 = vsyncadd [#allocation51], %s449
      %s452 = sshll.u32 [#allocation50], 4
      %s453 = int_to_ptr.vmem [resolvable:$true] %s452
      %455 = dma.hbm_to_vmem [thread:$0]  %s69, 16, %s453, [#allocation51]
    $region141: #{tpu_custom_call.1} parent=1 // pred_fallthru
      _
    // Predicated region
    $region142: #{tpu_custom_call.1} parent=1 // pred_check
      _
    $region143: #{tpu_custom_call.1} parent=1 // pred_check_branch
      %457 = sbr.rel (0) target = $region145
    $region144: #{tpu_custom_call.1} parent=1 // pred_region
      %s459 = ssub.s32 16, 16
      %460 = vsyncadd [#allocation51], %s459
      %s462 = sshll.u32 [#allocation52], 4
      %s463 = int_to_ptr.vmem [resolvable:$true] %s462
      %465 = dma.hbm_to_vmem [thread:$0]  %s71, 16, %s463, [#allocation51]
    $region145: #{tpu_custom_call.1} parent=1 // pred_fallthru
      _
    // Predicated region
    $region146: #{tpu_custom_call.1} parent=1 // pred_check
      _
    $region147: #{tpu_custom_call.1} parent=1 // pred_check_branch
      %467 = sbr.rel (0) target = $region149
    $region148: #{tpu_custom_call.1} parent=1 // pred_region
      _
    $region149: #{tpu_custom_call.1} parent=1 // pred_fallthru
      _
    // Predicated region
    $region150: #{tpu_custom_call.1} parent=1 // pred_check
      _
    $region151: #{tpu_custom_call.1} parent=1 // pred_check_branch
      %469 = sbr.rel (0) target = $region153
    $region152: #{tpu_custom_call.1} parent=1 // pred_region
      _
    $region153: #{tpu_custom_call.1} parent=1 // pred_fallthru
      _
    // Predicated region
    $region154: #{tpu_custom_call.1} parent=1 // pred_check
      _
    $region155: #{tpu_custom_call.1} parent=1 // pred_check_branch
      %471 = sbr.rel (0) target = $region157
    $region156: #{tpu_custom_call.1} parent=1 // pred_region
      _
    $region157: #{tpu_custom_call.1} parent=1 // pred_fallthru
      _
    // Predicated region
    $region158: #{tpu_custom_call.1} parent=1 // pred_check
      _
    $region159: #{tpu_custom_call.1} parent=1 // pred_check_branch
      %473 = sbr.rel (0) target = $region161
    $region160: #{tpu_custom_call.1} parent=1 // pred_region
      _
    $region161: #{tpu_custom_call.1} parent=1 // pred_fallthru
      _
    // Predicated region
    $region162: #{tpu_custom_call.1} parent=1 // pred_check
      _
    $region163: #{tpu_custom_call.1} parent=1 // pred_check_branch
      %475 = sbr.rel (0) target = $region165
    $region164: #{tpu_custom_call.1} parent=1 // pred_region
      _
    $region165: #{tpu_custom_call.1} parent=1 // pred_fallthru
      _
    // Predicated region
    $region166: #{tpu_custom_call.1} parent=1 // pred_check
      _
    $region167: #{tpu_custom_call.1} parent=1 // pred_check_branch
      %477 = sbr.rel (0) target = $region169
    $region168: #{tpu_custom_call.1} parent=1 // pred_region
      _
    $region169: #{tpu_custom_call.1} parent=1 // pred_fallthru
      _
    // Predicated region
    $region170: #{tpu_custom_call.1} parent=1 // pred_check
      _
    $region171: #{tpu_custom_call.1} parent=1 // pred_check_branch
      %479 = sbr.rel (0) target = $region173
    $region172: #{tpu_custom_call.1} parent=1 // pred_region
      _
    $region173: #{tpu_custom_call.1} parent=1 // pred_fallthru
      _
    // Predicated region
    $region174: #{tpu_custom_call.1} parent=1 // pred_check
      _
    $region175: #{tpu_custom_call.1} parent=1 // pred_check_branch
      %481 = sbr.rel (0) target = $region177
    $region176: #{tpu_custom_call.1} parent=1 // pred_region
      %482 = dma.done [#allocation3], 512
    $region177: #{tpu_custom_call.1} parent=1 // pred_fallthru
      _
    // Predicated region
    $region178: #{tpu_custom_call.1} parent=1 // pred_check
      _
    $region179: #{tpu_custom_call.1} parent=1 // pred_check_branch
      %484 = sbr.rel (0) target = $region181
    $region180: #{tpu_custom_call.1} parent=1 // pred_region
      %485 = dma.done [#allocation6], 32
    $region181: #{tpu_custom_call.1} parent=1 // pred_fallthru
      _
    // Predicated region
    $region182: #{tpu_custom_call.1} parent=1 // pred_check
      _
    $region183: #{tpu_custom_call.1} parent=1 // pred_check_branch
      %487 = sbr.rel (0) target = $region185
    $region184: #{tpu_custom_call.1} parent=1 // pred_region
      %488 = dma.done [#allocation6], 512
    $region185: #{tpu_custom_call.1} parent=1 // pred_fallthru
      _
    // Predicated region
    $region186: #{tpu_custom_call.1} parent=1 // pred_check
      _
    $region187: #{tpu_custom_call.1} parent=1 // pred_check_branch
      %490 = sbr.rel (0) target = $region189
    $region188: #{tpu_custom_call.1} parent=1 // pred_region
      %491 = dma.done [#allocation9], 16
    $region189: #{tpu_custom_call.1} parent=1 // pred_fallthru
      _
    // Predicated region
    $region190: #{tpu_custom_call.1} parent=1 // pred_check
      _
    $region191: #{tpu_custom_call.1} parent=1 // pred_check_branch
      %493 = sbr.rel (0) target = $region193
    $region192: #{tpu_custom_call.1} parent=1 // pred_region
      %494 = dma.done [#allocation9], 512
    $region193: #{tpu_custom_call.1} parent=1 // pred_fallthru
      _
    // Predicated region
    $region194: #{tpu_custom_call.1} parent=1 // pred_check
      _
    $region195: #{tpu_custom_call.1} parent=1 // pred_check_branch
      %496 = sbr.rel (0) target = $region197
    $region196: #{tpu_custom_call.1} parent=1 // pred_region
      %497 = dma.done [#allocation12], 16
    $region197: #{tpu_custom_call.1} parent=1 // pred_fallthru
      _
    // Predicated region
    $region198: #{tpu_custom_call.1} parent=1 // pred_check
      _
    $region199: #{tpu_custom_call.1} parent=1 // pred_check_branch
      %499 = sbr.rel (0) target = $region201
    $region200: #{tpu_custom_call.1} parent=1 // pred_region
      %500 = dma.done [#allocation12], 512
    $region201: #{tpu_custom_call.1} parent=1 // pred_fallthru
      _
    // Predicated region
    $region202: #{tpu_custom_call.1} parent=1 // pred_check
      _
    $region203: #{tpu_custom_call.1} parent=1 // pred_check_branch
      %502 = sbr.rel (0) target = $region205
    $region204: #{tpu_custom_call.1} parent=1 // pred_region
      %503 = dma.done [#allocation15], 16
    $region205: #{tpu_custom_call.1} parent=1 // pred_fallthru
      _
    // Predicated region
    $region206: #{tpu_custom_call.1} parent=1 // pred_check
      _
    $region207: #{tpu_custom_call.1} parent=1 // pred_check_branch
      %505 = sbr.rel (0) target = $region209
    $region208: #{tpu_custom_call.1} parent=1 // pred_region
      %506 = dma.done [#allocation15], 512
    $region209: #{tpu_custom_call.1} parent=1 // pred_fallthru
      _
    // Predicated region
    $region210: #{tpu_custom_call.1} parent=1 // pred_check
      _
    $region211: #{tpu_custom_call.1} parent=1 // pred_check_branch
      %508 = sbr.rel (0) target = $region213
    $region212: #{tpu_custom_call.1} parent=1 // pred_region
      %509 = dma.done [#allocation18], 16
    $region213: #{tpu_custom_call.1} parent=1 // pred_fallthru
      _
    // Predicated region
    $region214: #{tpu_custom_call.1} parent=1 // pred_check
      _
    $region215: #{tpu_custom_call.1} parent=1 // pred_check_branch
      %511 = sbr.rel (0) target = $region217
    $region216: #{tpu_custom_call.1} parent=1 // pred_region
      %512 = dma.done [#allocation18], 16
    $region217: #{tpu_custom_call.1} parent=1 // pred_fallthru
      _
    // Predicated region
    $region218: #{tpu_custom_call.1} parent=1 // pred_check
      _
    $region219: #{tpu_custom_call.1} parent=1 // pred_check_branch
      %514 = sbr.rel (0) target = $region221
    $region220: #{tpu_custom_call.1} parent=1 // pred_region
      %515 = dma.done [#allocation21], 16
    $region221: #{tpu_custom_call.1} parent=1 // pred_fallthru
      _
    // Predicated region
    $region222: #{tpu_custom_call.1} parent=1 // pred_check
      _
    $region223: #{tpu_custom_call.1} parent=1 // pred_check_branch
      %517 = sbr.rel (0) target = $region225
    $region224: #{tpu_custom_call.1} parent=1 // pred_region
      %518 = dma.done [#allocation21], 16
    $region225: #{tpu_custom_call.1} parent=1 // pred_fallthru
      _
    // Predicated region
    $region226: #{tpu_custom_call.1} parent=1 // pred_check
      _
    $region227: #{tpu_custom_call.1} parent=1 // pred_check_branch
      %520 = sbr.rel (0) target = $region229
    $region228: #{tpu_custom_call.1} parent=1 // pred_region
      %521 = dma.done [#allocation24], 16
    $region229: #{tpu_custom_call.1} parent=1 // pred_fallthru
      _
    // Predicated region
    $region230: #{tpu_custom_call.1} parent=1 // pred_check
      _
    $region231: #{tpu_custom_call.1} parent=1 // pred_check_branch
      %523 = sbr.rel (0) target = $region233
    $region232: #{tpu_custom_call.1} parent=1 // pred_region
      %524 = dma.done [#allocation24], 16
    $region233: #{tpu_custom_call.1} parent=1 // pred_fallthru
      _
    // Predicated region
    $region234: #{tpu_custom_call.1} parent=1 // pred_check
      _
    $region235: #{tpu_custom_call.1} parent=1 // pred_check_branch
      %526 = sbr.rel (0) target = $region237
    $region236: #{tpu_custom_call.1} parent=1 // pred_region
      %527 = dma.done [#allocation27], 16
    $region237: #{tpu_custom_call.1} parent=1 // pred_fallthru
      _
    // Predicated region
    $region238: #{tpu_custom_call.1} parent=1 // pred_check
      _
    $region239: #{tpu_custom_call.1} parent=1 // pred_check_branch
      %529 = sbr.rel (0) target = $region241
    $region240: #{tpu_custom_call.1} parent=1 // pred_region
      %530 = dma.done [#allocation27], 512
    $region241: #{tpu_custom_call.1} parent=1 // pred_fallthru
      _
    // Predicated region
    $region242: #{tpu_custom_call.1} parent=1 // pred_check
      _
    $region243: #{tpu_custom_call.1} parent=1 // pred_check_branch
      %532 = sbr.rel (0) target = $region245
    $region244: #{tpu_custom_call.1} parent=1 // pred_region
      %533 = dma.done [#allocation30], 16
    $region245: #{tpu_custom_call.1} parent=1 // pred_fallthru
      _
    // Predicated region
    $region246: #{tpu_custom_call.1} parent=1 // pred_check
      _
    $region247: #{tpu_custom_call.1} parent=1 // pred_check_branch
      %535 = sbr.rel (0) target = $region249
    $region248: #{tpu_custom_call.1} parent=1 // pred_region
      %536 = dma.done [#allocation30], 16
    $region249: #{tpu_custom_call.1} parent=1 // pred_fallthru
      _
    // Predicated region
    $region250: #{tpu_custom_call.1} parent=1 // pred_check
      _
    $region251: #{tpu_custom_call.1} parent=1 // pred_check_branch
      %538 = sbr.rel (0) target = $region253
    $region252: #{tpu_custom_call.1} parent=1 // pred_region
      %539 = dma.done [#allocation33], 32
    $region253: #{tpu_custom_call.1} parent=1 // pred_fallthru
      _
    // Predicated region
    $region254: #{tpu_custom_call.1} parent=1 // pred_check
      _
    $region255: #{tpu_custom_call.1} parent=1 // pred_check_branch
      %541 = sbr.rel (0) target = $region257
    $region256: #{tpu_custom_call.1} parent=1 // pred_region
      %542 = dma.done [#allocation33], 512
    $region257: #{tpu_custom_call.1} parent=1 // pred_fallthru
      _
    // Predicated region
    $region258: #{tpu_custom_call.1} parent=1 // pred_check
      _
    $region259: #{tpu_custom_call.1} parent=1 // pred_check_branch
      %544 = sbr.rel (0) target = $region261
    $region260: #{tpu_custom_call.1} parent=1 // pred_region
      %545 = dma.done [#allocation36], 16
    $region261: #{tpu_custom_call.1} parent=1 // pred_fallthru
      _
    // Predicated region
    $region262: #{tpu_custom_call.1} parent=1 // pred_check
      _
    $region263: #{tpu_custom_call.1} parent=1 // pred_check_branch
      %547 = sbr.rel (0) target = $region265
    $region264: #{tpu_custom_call.1} parent=1 // pred_region
      %548 = dma.done [#allocation36], 512
    $region265: #{tpu_custom_call.1} parent=1 // pred_fallthru
      _
    // Predicated region
    $region266: #{tpu_custom_call.1} parent=1 // pred_check
      _
    $region267: #{tpu_custom_call.1} parent=1 // pred_check_branch
      %550 = sbr.rel (0) target = $region269
    $region268: #{tpu_custom_call.1} parent=1 // pred_region
      %551 = dma.done [#allocation39], 16
    $region269: #{tpu_custom_call.1} parent=1 // pred_fallthru
      _
    // Predicated region
    $region270: #{tpu_custom_call.1} parent=1 // pred_check
      _
    $region271: #{tpu_custom_call.1} parent=1 // pred_check_branch
      %553 = sbr.rel (0) target = $region273
    $region272: #{tpu_custom_call.1} parent=1 // pred_region
      %554 = dma.done [#allocation39], 512
    $region273: #{tpu_custom_call.1} parent=1 // pred_fallthru
      _
    // Predicated region
    $region274: #{tpu_custom_call.1} parent=1 // pred_check
      _
    $region275: #{tpu_custom_call.1} parent=1 // pred_check_branch
      %556 = sbr.rel (0) target = $region277
    $region276: #{tpu_custom_call.1} parent=1 // pred_region
      %557 = dma.done [#allocation42], 16
    $region277: #{tpu_custom_call.1} parent=1 // pred_fallthru
      _
    // Predicated region
    $region278: #{tpu_custom_call.1} parent=1 // pred_check
      _
    $region279: #{tpu_custom_call.1} parent=1 // pred_check_branch
      %559 = sbr.rel (0) target = $region281
    $region280: #{tpu_custom_call.1} parent=1 // pred_region
      %560 = dma.done [#allocation42], 512
    $region281: #{tpu_custom_call.1} parent=1 // pred_fallthru
      _
    // Predicated region
    $region282: #{tpu_custom_call.1} parent=1 // pred_check
      _
    $region283: #{tpu_custom_call.1} parent=1 // pred_check_branch
      %562 = sbr.rel (0) target = $region285
    $region284: #{tpu_custom_call.1} parent=1 // pred_region
      %563 = dma.done [#allocation45], 16
    $region285: #{tpu_custom_call.1} parent=1 // pred_fallthru
      _
    // Predicated region
    $region286: #{tpu_custom_call.1} parent=1 // pred_check
      _
    $region287: #{tpu_custom_call.1} parent=1 // pred_check_branch
      %565 = sbr.rel (0) target = $region289
    $region288: #{tpu_custom_call.1} parent=1 // pred_region
      %566 = dma.done [#allocation45], 16
    $region289: #{tpu_custom_call.1} parent=1 // pred_fallthru
      _
    // Predicated region
    $region290: #{tpu_custom_call.1} parent=1 // pred_check
      _
    $region291: #{tpu_custom_call.1} parent=1 // pred_check_branch
      %568 = sbr.rel (0) target = $region293
    $region292: #{tpu_custom_call.1} parent=1 // pred_region
      %569 = dma.done [#allocation48], 16
    $region293: #{tpu_custom_call.1} parent=1 // pred_fallthru
      _
    // Predicated region
    $region294: #{tpu_custom_call.1} parent=1 // pred_check
      _
    $region295: #{tpu_custom_call.1} parent=1 // pred_check_branch
      %571 = sbr.rel (0) target = $region297
    $region296: #{tpu_custom_call.1} parent=1 // pred_region
      %572 = dma.done [#allocation48], 16
    $region297: #{tpu_custom_call.1} parent=1 // pred_fallthru
      _
    // Predicated region
    $region298: #{tpu_custom_call.1} parent=1 // pred_check
      _
    $region299: #{tpu_custom_call.1} parent=1 // pred_check_branch
      %574 = sbr.rel (0) target = $region301
    $region300: #{tpu_custom_call.1} parent=1 // pred_region
      %575 = dma.done [#allocation51], 16
    $region301: #{tpu_custom_call.1} parent=1 // pred_fallthru
      _
    // Predicated region
    $region302: #{tpu_custom_call.1} parent=1 // pred_check
      _
    $region303: #{tpu_custom_call.1} parent=1 // pred_check_branch
      %577 = sbr.rel (0) target = $region305
    $region304: #{tpu_custom_call.1} parent=1 // pred_region
      %578 = dma.done [#allocation51], 16
    $region305: #{tpu_custom_call.1} parent=1 // pred_fallthru
      _
    %v580 = vld [vmem:[#allocation2] sm:$0xff]
    %v581 = vld [vmem:[#allocation2 + $0x8] sm:$0xff]
    %v582 = vld [vmem:[#allocation2 + $0x10] sm:$0xff]
    %v583 = vld [vmem:[#allocation2 + $0x18] sm:$0xff]
    %v584 = vpack.c.bf16 %v581, %v580
    %v585 = vpack.c.bf16 %v583, %v582
    %v586 = vlaneseq
    %v587 = vand.u32 %v586, 127
    %vm588 = vcmp.ge.s32.totalorder %v587, 0
    %vm589 = vcmp.lt.s32.totalorder %v587, 16
    %vm590 = vmand %vm588, %vm589
    %v591 = vsel %vm590, 1, 0
    %v592 = vcvt.s32.f32 %v591
    %vm593 = vcmp.ge.s32.totalorder %v587, 16
    %vm594 = vcmp.lt.s32.totalorder %v587, 32
    %vm595 = vmand %vm593, %vm594
    %v596 = vsel %vm595, 1, 0
    %v597 = vcvt.s32.f32 %v596
    %vm598 = vcmp.ge.s32.totalorder %v587, 32
    %vm599 = vcmp.lt.s32.totalorder %v587, 48
    %vm600 = vmand %vm598, %vm599
    %v601 = vsel %vm600, 1, 0
    %v602 = vcvt.s32.f32 %v601
    %vm603 = vcmp.ge.s32.totalorder %v587, 48
    %vm604 = vcmp.lt.s32.totalorder %v587, 64
    %vm605 = vmand %vm603, %vm604
    %v606 = vsel %vm605, 1, 0
    %v607 = vcvt.s32.f32 %v606
    %v608 = vlaneseq
    %v609 = vshrl.u32 %v608, 7
    %vm610 = vcmp.gt.s32.totalorder %v587, %v609
    %v611 = vld [vmem:[%s3] sm:$0xff]
    %v612 = vld [vmem:[%s3 + $0x8] sm:$0xff]
    %v613 = vld [vmem:[%s3 + $0x10] sm:$0xff]
    %v614 = vld [vmem:[%s3 + $0x18] sm:$0xff]
    %v615 = vld [vmem:[%s3 + $0x20] sm:$0xff]
    %v616 = vld [vmem:[%s3 + $0x28] sm:$0xff]
    %v617 = vld [vmem:[%s3 + $0x30] sm:$0xff]
    %v618 = vld [vmem:[%s3 + $0x38] sm:$0xff]
    %v619 = vld [vmem:[#allocation5] sm:$0x3]
    %v621 = vlaneseq
    %v622 = vshrl.u32 %v621, 7
    %v623 = vsub.s32 0, %v622
    %v624 = vrot.slane %v619, %v623
    %v625 = vlaneseq
    %v626 = vshrl.u32 %v625, 7
    %v627 = vsub.s32 1, %v626
    %v628 = vrot.slane %v619, %v627
    %v639 = vunpack.c.l.b16 %v611
    %v640 = vunpack.c.h.b16 %v611
    %v641 = vunpack.c.l.b16 %v612
    %v642 = vunpack.c.h.b16 %v612
    %v643 = vunpack.c.l.b16 %v613
    %v644 = vunpack.c.h.b16 %v613
    %v645 = vunpack.c.l.b16 %v614
    %v646 = vunpack.c.h.b16 %v614
    %v647 = vunpack.c.l.b16 %v615
    %v648 = vunpack.c.h.b16 %v615
    %v649 = vunpack.c.l.b16 %v616
    %v650 = vunpack.c.h.b16 %v616
    %v651 = vunpack.c.l.b16 %v617
    %v652 = vunpack.c.h.b16 %v617
    %v653 = vunpack.c.l.b16 %v618
    %v654 = vunpack.c.h.b16 %v618
    %v655 = vpack.c.b16 %v641, %v639
    %v656 = vpack.c.b16 %v642, %v640
    %v657 = vpack.c.b16 %v645, %v643
    %v658 = vpack.c.b16 %v646, %v644
    %v659 = vpack.c.b16 %v649, %v647
    %v660 = vpack.c.b16 %v650, %v648
    %v661 = vpack.c.b16 %v653, %v651
    %v662 = vpack.c.b16 %v654, %v652
    %vm671 = vcmask 523264
    %v673 = vsel %vm671, %v584, 0
    %v676 = vsel %vm671, %v585, 0
    %678 = vmatprep.subr.bf16.mxu0 %v656
    %679 = vmatpush1.bf16.msra.mxu0 %v655
    %680 = vmatprep.subr.bf16.mxu0 %v658
    %681 = vmatpush1.bf16.msra.mxu0 %v657
    %682 = vmatprep.subr.bf16.mxu0 %v660
    %683 = vmatpush1.bf16.msra.mxu0 %v659
    %684 = vmatprep.subr.bf16.mxu0 %v662
    %685 = vmatpush1.bf16.msra.mxu0 %v661
    %686 = vmatprep.subr.bf16.mxu0 0
    %687 = vmatpush1.bf16.msra.mxu0 0
    %688 = vmatprep.subr.bf16.mxu0 0
    %689 = vmatpush1.bf16.msra.mxu0 0
    %690 = vmatprep.subr.bf16.mxu0 0
    %691 = vmatpush1.bf16.msra.mxu0 0
    %692 = vmatprep.subr.bf16.mxu0 0
    %693 = vmatpush1.bf16.msra.mxu0 0
    %694 = vmatprep.subr.bf16.mxu0 0
    %695 = vmatpush1.bf16.msra.mxu0 0
    %696 = vmatprep.subr.bf16.mxu0 0
    %697 = vmatpush1.bf16.msra.mxu0 0
    %698 = vmatprep.subr.bf16.mxu0 0
    %699 = vmatpush1.bf16.msra.mxu0 0
    %700 = vmatprep.subr.bf16.mxu0 0
    %701 = vmatpush1.bf16.msra.mxu0 0
    %702 = vmatprep.subr.bf16.mxu0 0
    %703 = vmatpush1.bf16.msra.mxu0 0
    %704 = vmatprep.subr.bf16.mxu0 0
    %705 = vmatpush1.bf16.msra.mxu0 0
    %706 = vmatprep.subr.bf16.mxu0 0
    %707 = vmatpush1.bf16.msra.mxu0 0
    %708 = vmatprep.subr.bf16.mxu0 0
    %709 = vmatpush1.bf16.msra.mxu0 0
    %710 = vmatprep.mubr.bf16.mxu0 0
    %711 = vmatmul.mubr.bf16.gmra.mrb[0].mxu0 %v673
    %v712 = vpop.f32.mrb[0].mxu0
    %v713 = vadd.f32 %v624, %v712
    %v714 = vpop.f32.mrb[0].mxu0
    %v715 = vadd.f32 %v628, %v714
    %v716 = vpop.f32.mrb[0].mxu0
    %v717 = vadd.f32 %v624, %v716
    %v718 = vpop.f32.mrb[0].mxu0
    %v719 = vadd.f32 %v628, %v718
    %720 = vmatprep.mubr.bf16.mxu0 0
    %721 = vmatmul.mubr.bf16.gmra.mrb[0].mxu0 %v676
    %v722 = vpop.f32.mrb[0].mxu0
    %v723 = vadd.f32 %v624, %v722
    %v724 = vpop.f32.mrb[0].mxu0
    %v725 = vadd.f32 %v628, %v724
    %v726 = vpop.f32.mrb[0].mxu0
    %v727 = vadd.f32 %v624, %v726
    %v728 = vpop.f32.mrb[0].mxu0
    %v729 = vadd.f32 %v628, %v728
    %730 = vdwg.mxu0
    %v731 = vpack.c.bf16 %v713, %v713
    %v732 = vpack.c.bf16 %v717, %v717
    %v733 = vpack.c.bf16 %v723, %v723
    %v734 = vpack.c.bf16 %v727, %v727
    %v735 = vmul.f32 %v713, %v592
    %v736 = vmul.f32 %v717, %v592
    %v737 = vmul.f32 %v723, %v592
    %v738 = vmul.f32 %v727, %v592
    %v739 = vpack.c.bf16 %v735, %v735
    %v740 = vpack.c.bf16 %v736, %v736
    %v741 = vpack.c.bf16 %v737, %v737
    %v742 = vpack.c.bf16 %v738, %v738
    %744 = vrot.lane.b32.xlu0 %v731, 64
    %v745 = vpop.permute.xlu0 %744
    %v747 = vsel %vm671, %v739, 0
    %v750 = vsel %vm671, %v745, 0
    %752 = vmatprep.subr.bf16.mxu0 0
    %753 = vmatpush1.bf16.xpose.msra.mxu0 %v750
    %754 = vmatprep.subr.bf16.mxu0 0
    %755 = vmatpush1.bf16.xpose.msra.mxu0 0
    %756 = vmatprep.subr.bf16.mxu0 0
    %757 = vmatpush1.bf16.xpose.msra.mxu0 0
    %758 = vmatprep.subr.bf16.mxu0 0
    %759 = vmatpush1.bf16.xpose.msra.mxu0 0
    %760 = vmatprep.subr.bf16.mxu0 0
    %761 = vmatpush1.bf16.xpose.msra.mxu0 0
    %762 = vmatprep.subr.bf16.mxu0 0
    %763 = vmatpush1.bf16.xpose.msra.mxu0 0
    %764 = vmatprep.subr.bf16.mxu0 0
    %765 = vmatpush1.bf16.xpose.msra.mxu0 0
    %766 = vmatprep.subr.bf16.mxu0 0
    %767 = vmatpush1.bf16.xpose.msra.mxu0 0
    %768 = vmatprep.subr.bf16.mxu0 0
    %769 = vmatpush1.bf16.xpose.msra.mxu0 0
    %770 = vmatprep.subr.bf16.mxu0 0
    %771 = vmatpush1.bf16.xpose.msra.mxu0 0
    %772 = vmatprep.subr.bf16.mxu0 0
    %773 = vmatpush1.bf16.xpose.msra.mxu0 0
    %774 = vmatprep.subr.bf16.mxu0 0
    %775 = vmatpush1.bf16.xpose.msra.mxu0 0
    %776 = vmatprep.subr.bf16.mxu0 0
    %777 = vmatpush1.bf16.xpose.msra.mxu0 0
    %778 = vmatprep.subr.bf16.mxu0 0
    %779 = vmatpush1.bf16.xpose.msra.mxu0 0
    %780 = vmatprep.subr.bf16.mxu0 0
    %781 = vmatpush1.bf16.xpose.msra.mxu0 0
    %782 = vmatprep.subr.bf16.mxu0 0
    %783 = vmatpush1.bf16.xpose.msra.mxu0 0
    %784 = vmatprep.mubr.bf16.mxu0 0
    %785 = vmatmul.mubr.bf16.gmra.mrb[0].mxu0 %v747
    %v786 = vpop.f32.mrb[0].mxu0
    %v787 = vadd.f32 0.0, %v786
    %v788 = vpop.f32.mrb[0].mxu0
    %v789 = vpop.f32.mrb[0].mxu0
    %v790 = vpop.f32.mrb[0].mxu0
    %791 = vdwg.mxu0
    %793 = vrot.lane.b32.xlu0 %v732, 64
    %v794 = vpop.permute.xlu0 %793
    %v796 = vsel %vm671, %v740, 0
    %v799 = vsel %vm671, %v794, 0
    %801 = vmatprep.subr.bf16.mxu0 0
    %802 = vmatpush1.bf16.xpose.msra.mxu0 %v799
    %803 = vmatprep.subr.bf16.mxu0 0
    %804 = vmatpush1.bf16.xpose.msra.mxu0 0
    %805 = vmatprep.subr.bf16.mxu0 0
    %806 = vmatpush1.bf16.xpose.msra.mxu0 0
    %807 = vmatprep.subr.bf16.mxu0 0
    %808 = vmatpush1.bf16.xpose.msra.mxu0 0
    %809 = vmatprep.subr.bf16.mxu0 0
    %810 = vmatpush1.bf16.xpose.msra.mxu0 0
    %811 = vmatprep.subr.bf16.mxu0 0
    %812 = vmatpush1.bf16.xpose.msra.mxu0 0
    %813 = vmatprep.subr.bf16.mxu0 0
    %814 = vmatpush1.bf16.xpose.msra.mxu0 0
    %815 = vmatprep.subr.bf16.mxu0 0
    %816 = vmatpush1.bf16.xpose.msra.mxu0 0
    %817 = vmatprep.subr.bf16.mxu0 0
    %818 = vmatpush1.bf16.xpose.msra.mxu0 0
    %819 = vmatprep.subr.bf16.mxu0 0
    %820 = vmatpush1.bf16.xpose.msra.mxu0 0
    %821 = vmatprep.subr.bf16.mxu0 0
    %822 = vmatpush1.bf16.xpose.msra.mxu0 0
    %823 = vmatprep.subr.bf16.mxu0 0
    %824 = vmatpush1.bf16.xpose.msra.mxu0 0
    %825 = vmatprep.subr.bf16.mxu0 0
    %826 = vmatpush1.bf16.xpose.msra.mxu0 0
    %827 = vmatprep.subr.bf16.mxu0 0
    %828 = vmatpush1.bf16.xpose.msra.mxu0 0
    %829 = vmatprep.subr.bf16.mxu0 0
    %830 = vmatpush1.bf16.xpose.msra.mxu0 0
    %831 = vmatprep.subr.bf16.mxu0 0
    %832 = vmatpush1.bf16.xpose.msra.mxu0 0
    %833 = vmatprep.mubr.bf16.mxu0 0
    %834 = vmatmul.mubr.bf16.gmra.mrb[0].mxu0 %v796
    %v835 = vpop.f32.mrb[0].mxu0
    %v836 = vadd.f32 0.0, %v835
    %v837 = vpop.f32.mrb[0].mxu0
    %v838 = vpop.f32.mrb[0].mxu0
    %v839 = vpop.f32.mrb[0].mxu0
    %840 = vdwg.mxu0
    %842 = vrot.lane.b32.xlu0 %v733, 64
    %v843 = vpop.permute.xlu0 %842
    %v845 = vsel %vm671, %v741, 0
    %v848 = vsel %vm671, %v843, 0
    %850 = vmatprep.subr.bf16.mxu0 0
    %851 = vmatpush1.bf16.xpose.msra.mxu0 %v848
    %852 = vmatprep.subr.bf16.mxu0 0
    %853 = vmatpush1.bf16.xpose.msra.mxu0 0
    %854 = vmatprep.subr.bf16.mxu0 0
    %855 = vmatpush1.bf16.xpose.msra.mxu0 0
    %856 = vmatprep.subr.bf16.mxu0 0
    %857 = vmatpush1.bf16.xpose.msra.mxu0 0
    %858 = vmatprep.subr.bf16.mxu0 0
    %859 = vmatpush1.bf16.xpose.msra.mxu0 0
    %860 = vmatprep.subr.bf16.mxu0 0
    %861 = vmatpush1.bf16.xpose.msra.mxu0 0
    %862 = vmatprep.subr.bf16.mxu0 0
    %863 = vmatpush1.bf16.xpose.msra.mxu0 0
    %864 = vmatprep.subr.bf16.mxu0 0
    %865 = vmatpush1.bf16.xpose.msra.mxu0 0
    %866 = vmatprep.subr.bf16.mxu0 0
    %867 = vmatpush1.bf16.xpose.msra.mxu0 0
    %868 = vmatprep.subr.bf16.mxu0 0
    %869 = vmatpush1.bf16.xpose.msra.mxu0 0
    %870 = vmatprep.subr.bf16.mxu0 0
    %871 = vmatpush1.bf16.xpose.msra.mxu0 0
    %872 = vmatprep.subr.bf16.mxu0 0
    %873 = vmatpush1.bf16.xpose.msra.mxu0 0
    %874 = vmatprep.subr.bf16.mxu0 0
    %875 = vmatpush1.bf16.xpose.msra.mxu0 0
    %876 = vmatprep.subr.bf16.mxu0 0
    %877 = vmatpush1.bf16.xpose.msra.mxu0 0
    %878 = vmatprep.subr.bf16.mxu0 0
    %879 = vmatpush1.bf16.xpose.msra.mxu0 0
    %880 = vmatprep.subr.bf16.mxu0 0
    %881 = vmatpush1.bf16.xpose.msra.mxu0 0
    %882 = vmatprep.mubr.bf16.mxu0 0
    %883 = vmatmul.mubr.bf16.gmra.mrb[0].mxu0 %v845
    %v884 = vpop.f32.mrb[0].mxu0
    %v885 = vadd.f32 0.0, %v884
    %v886 = vpop.f32.mrb[0].mxu0
    %v887 = vpop.f32.mrb[0].mxu0
    %v888 = vpop.f32.mrb[0].mxu0
    %889 = vdwg.mxu0
    %891 = vrot.lane.b32.xlu0 %v734, 64
    %v892 = vpop.permute.xlu0 %891
    %v894 = vsel %vm671, %v742, 0
    %v897 = vsel %vm671, %v892, 0
    %899 = vmatprep.subr.bf16.mxu0 0
    %900 = vmatpush1.bf16.xpose.msra.mxu0 %v897
    %901 = vmatprep.subr.bf16.mxu0 0
    %902 = vmatpush1.bf16.xpose.msra.mxu0 0
    %903 = vmatprep.subr.bf16.mxu0 0
    %904 = vmatpush1.bf16.xpose.msra.mxu0 0
    %905 = vmatprep.subr.bf16.mxu0 0
    %906 = vmatpush1.bf16.xpose.msra.mxu0 0
    %907 = vmatprep.subr.bf16.mxu0 0
    %908 = vmatpush1.bf16.xpose.msra.mxu0 0
    %909 = vmatprep.subr.bf16.mxu0 0
    %910 = vmatpush1.bf16.xpose.msra.mxu0 0
    %911 = vmatprep.subr.bf16.mxu0 0
    %912 = vmatpush1.bf16.xpose.msra.mxu0 0
    %913 = vmatprep.subr.bf16.mxu0 0
    %914 = vmatpush1.bf16.xpose.msra.mxu0 0
    %915 = vmatprep.subr.bf16.mxu0 0
    %916 = vmatpush1.bf16.xpose.msra.mxu0 0
    %917 = vmatprep.subr.bf16.mxu0 0
    %918 = vmatpush1.bf16.xpose.msra.mxu0 0
    %919 = vmatprep.subr.bf16.mxu0 0
    %920 = vmatpush1.bf16.xpose.msra.mxu0 0
    %921 = vmatprep.subr.bf16.mxu0 0
    %922 = vmatpush1.bf16.xpose.msra.mxu0 0
    %923 = vmatprep.subr.bf16.mxu0 0
    %924 = vmatpush1.bf16.xpose.msra.mxu0 0
    %925 = vmatprep.subr.bf16.mxu0 0
    %926 = vmatpush1.bf16.xpose.msra.mxu0 0
    %927 = vmatprep.subr.bf16.mxu0 0
    %928 = vmatpush1.bf16.xpose.msra.mxu0 0
    %929 = vmatprep.subr.bf16.mxu0 0
    %930 = vmatpush1.bf16.xpose.msra.mxu0 0
    %931 = vmatprep.mubr.bf16.mxu0 0
    %932 = vmatmul.mubr.bf16.gmra.mrb[0].mxu0 %v894
    %v933 = vpop.f32.mrb[0].mxu0
    %v934 = vadd.f32 0.0, %v933
    %v935 = vpop.f32.mrb[0].mxu0
    %v936 = vpop.f32.mrb[0].mxu0
    %v937 = vpop.f32.mrb[0].mxu0
    %938 = vdwg.mxu0
    %v939 = vsel %vm610, 1, 0
    %vm940 = vcmp.eq.s32.totalorder %v939, 1
    %v941 = vsel %vm940, -1e+30, %v787
    %v942 = vsel %vm940, -1e+30, %v836
    %v943 = vsel %vm940, -1e+30, %v885
    %v944 = vsel %vm940, -1e+30, %v934
    %vm945 = vcmask 64512
    %v946 = vsel %vm945, %v941, -inf
    %947 = vmax.xlane.f32.xlu0 %v946
    %v948 = vpop.xlane.xlu0 %947
    %v949 = vsel %vm945, %v942, -inf
    %950 = vmax.xlane.f32.xlu0 %v949
    %v951 = vpop.xlane.xlu0 %950
    %v952 = vsel %vm945, %v943, -inf
    %953 = vmax.xlane.f32.xlu0 %v952
    %v954 = vpop.xlane.xlu0 %953
    %v955 = vsel %vm945, %v944, -inf
    %956 = vmax.xlane.f32.xlu0 %v955
    %v957 = vpop.xlane.xlu0 %956
    %v958 = vsub.f32 %v941, %v948
    %v959 = vsub.f32 %v942, %v951
    %v960 = vsub.f32 %v943, %v954
    %v961 = vsub.f32 %v944, %v957
    %v962 = vmul.f32 %v958, 1.442695
    %v963 = vpow.pop %v962
    %v964 = vmul.f32 %v959, 1.442695
    %v965 = vpow.pop %v964
    %v966 = vmul.f32 %v960, 1.442695
    %v967 = vpow.pop %v966
    %v968 = vmul.f32 %v961, 1.442695
    %v969 = vpow.pop %v968
    %v970 = vsel %vm945, %v963, 0.0
    %971 = vadd.xlane.f32.xlu0 %v970
    %v972 = vpop.xlane.xlu0 %971
    %v973 = vsel %vm945, %v965, 0.0
    %974 = vadd.xlane.f32.xlu0 %v973
    %v975 = vpop.xlane.xlu0 %974
    %v976 = vsel %vm945, %v967, 0.0
    %977 = vadd.xlane.f32.xlu0 %v976
    %v978 = vpop.xlane.xlu0 %977
    %v979 = vsel %vm945, %v969, 0.0
    %980 = vadd.xlane.f32.xlu0 %v979
    %v981 = vpop.xlane.xlu0 %980
    %v982 = vrcp.pop %v972
    %v983 = vrcp.pop %v975
    %v984 = vrcp.pop %v978
    %v985 = vrcp.pop %v981
    %v986 = vmul.f32 %v963, %v982
    %v987 = vmul.f32 %v965, %v983
    %v988 = vmul.f32 %v967, %v984
    %v989 = vmul.f32 %v969, %v985
    %v990 = vmul.f32 %v715, %v592
    %v991 = vmul.f32 %v719, %v592
    %v992 = vmul.f32 %v725, %v592
    %v993 = vmul.f32 %v729, %v592
    %v994 = vpack.c.bf16 %v990, %v990
    %v995 = vpack.c.bf16 %v991, %v991
    %v996 = vpack.c.bf16 %v992, %v992
    %v997 = vpack.c.bf16 %v993, %v993
    %v998 = vpack.c.bf16 %v986, %v986
    %v999 = vpack.c.bf16 %v987, %v987
    %v1000 = vpack.c.bf16 %v988, %v988
    %v1001 = vpack.c.bf16 %v989, %v989
    %v1002 = vmul.f32 %v713, %v597
    %v1003 = vmul.f32 %v717, %v597
    %v1004 = vmul.f32 %v723, %v597
    %v1005 = vmul.f32 %v727, %v597
    %v1006 = vpack.c.bf16 %v1002, %v1002
    %v1007 = vpack.c.bf16 %v1003, %v1003
    %v1008 = vpack.c.bf16 %v1004, %v1004
    %v1009 = vpack.c.bf16 %v1005, %v1005
    %v1011 = vsel %vm671, %v1006, 0
    %1013 = vmatprep.subr.bf16.mxu0 0
    %1014 = vmatpush1.bf16.xpose.msra.mxu0 %v750
    %1015 = vmatprep.subr.bf16.mxu0 0
    %1016 = vmatpush1.bf16.xpose.msra.mxu0 0
    %1017 = vmatprep.subr.bf16.mxu0 0
    %1018 = vmatpush1.bf16.xpose.msra.mxu0 0
    %1019 = vmatprep.subr.bf16.mxu0 0
    %1020 = vmatpush1.bf16.xpose.msra.mxu0 0
    %1021 = vmatprep.subr.bf16.mxu0 0
    %1022 = vmatpush1.bf16.xpose.msra.mxu0 0
    %1023 = vmatprep.subr.bf16.mxu0 0
    %1024 = vmatpush1.bf16.xpose.msra.mxu0 0
    %1025 = vmatprep.subr.bf16.mxu0 0
    %1026 = vmatpush1.bf16.xpose.msra.mxu0 0
    %1027 = vmatprep.subr.bf16.mxu0 0
    %1028 = vmatpush1.bf16.xpose.msra.mxu0 0
    %1029 = vmatprep.subr.bf16.mxu0 0
    %1030 = vmatpush1.bf16.xpose.msra.mxu0 0
    %1031 = vmatprep.subr.bf16.mxu0 0
    %1032 = vmatpush1.bf16.xpose.msra.mxu0 0
    %1033 = vmatprep.subr.bf16.mxu0 0
    %1034 = vmatpush1.bf16.xpose.msra.mxu0 0
    %1035 = vmatprep.subr.bf16.mxu0 0
    %1036 = vmatpush1.bf16.xpose.msra.mxu0 0
    %1037 = vmatprep.subr.bf16.mxu0 0
    %1038 = vmatpush1.bf16.xpose.msra.mxu0 0
    %1039 = vmatprep.subr.bf16.mxu0 0
    %1040 = vmatpush1.bf16.xpose.msra.mxu0 0
    %1041 = vmatprep.subr.bf16.mxu0 0
    %1042 = vmatpush1.bf16.xpose.msra.mxu0 0
    %1043 = vmatprep.subr.bf16.mxu0 0
    %1044 = vmatpush1.bf16.xpose.msra.mxu0 0
    %1045 = vmatprep.mubr.bf16.mxu0 0
    %1046 = vmatmul.mubr.bf16.gmra.mrb[0].mxu0 %v1011
    %v1047 = vpop.f32.mrb[0].mxu0
    %v1048 = vadd.f32 0.0, %v1047
    %v1049 = vpop.f32.mrb[0].mxu0
    %v1050 = vpop.f32.mrb[0].mxu0
    %v1051 = vpop.f32.mrb[0].mxu0
    %1052 = vdwg.mxu0
    %v1054 = vsel %vm671, %v1007, 0
    %1056 = vmatprep.subr.bf16.mxu0 0
    %1057 = vmatpush1.bf16.xpose.msra.mxu0 %v799
    %1058 = vmatprep.subr.bf16.mxu0 0
    %1059 = vmatpush1.bf16.xpose.msra.mxu0 0
    %1060 = vmatprep.subr.bf16.mxu0 0
    %1061 = vmatpush1.bf16.xpose.msra.mxu0 0
    %1062 = vmatprep.subr.bf16.mxu0 0
    %1063 = vmatpush1.bf16.xpose.msra.mxu0 0
    %1064 = vmatprep.subr.bf16.mxu0 0
    %1065 = vmatpush1.bf16.xpose.msra.mxu0 0
    %1066 = vmatprep.subr.bf16.mxu0 0
    %1067 = vmatpush1.bf16.xpose.msra.mxu0 0
    %1068 = vmatprep.subr.bf16.mxu0 0
    %1069 = vmatpush1.bf16.xpose.msra.mxu0 0
    %1070 = vmatprep.subr.bf16.mxu0 0
    %1071 = vmatpush1.bf16.xpose.msra.mxu0 0
    %1072 = vmatprep.subr.bf16.mxu0 0
    %1073 = vmatpush1.bf16.xpose.msra.mxu0 0
    %1074 = vmatprep.subr.bf16.mxu0 0
    %1075 = vmatpush1.bf16.xpose.msra.mxu0 0
    %1076 = vmatprep.subr.bf16.mxu0 0
    %1077 = vmatpush1.bf16.xpose.msra.mxu0 0
    %1078 = vmatprep.subr.bf16.mxu0 0
    %1079 = vmatpush1.bf16.xpose.msra.mxu0 0
    %1080 = vmatprep.subr.bf16.mxu0 0
    %1081 = vmatpush1.bf16.xpose.msra.mxu0 0
    %1082 = vmatprep.subr.bf16.mxu0 0
    %1083 = vmatpush1.bf16.xpose.msra.mxu0 0
    %1084 = vmatprep.subr.bf16.mxu0 0
    %1085 = vmatpush1.bf16.xpose.msra.mxu0 0
    %1086 = vmatprep.subr.bf16.mxu0 0
    %1087 = vmatpush1.bf16.xpose.msra.mxu0 0
    %1088 = vmatprep.mubr.bf16.mxu0 0
    %1089 = vmatmul.mubr.bf16.gmra.mrb[0].mxu0 %v1054
    %v1090 = vpop.f32.mrb[0].mxu0
    %v1091 = vadd.f32 0.0, %v1090
    %v1092 = vpop.f32.mrb[0].mxu0
    %v1093 = vpop.f32.mrb[0].mxu0
    %v1094 = vpop.f32.mrb[0].mxu0
    %1095 = vdwg.mxu0
    %v1097 = vsel %vm671, %v1008, 0
    %1099 = vmatprep.subr.bf16.mxu0 0
    %1100 = vmatpush1.bf16.xpose.msra.mxu0 %v848
    %1101 = vmatprep.subr.bf16.mxu0 0
    %1102 = vmatpush1.bf16.xpose.msra.mxu0 0
    %1103 = vmatprep.subr.bf16.mxu0 0
    %1104 = vmatpush1.bf16.xpose.msra.mxu0 0
    %1105 = vmatprep.subr.bf16.mxu0 0
    %1106 = vmatpush1.bf16.xpose.msra.mxu0 0
    %1107 = vmatprep.subr.bf16.mxu0 0
    %1108 = vmatpush1.bf16.xpose.msra.mxu0 0
    %1109 = vmatprep.subr.bf16.mxu0 0
    %1110 = vmatpush1.bf16.xpose.msra.mxu0 0
    %1111 = vmatprep.subr.bf16.mxu0 0
    %1112 = vmatpush1.bf16.xpose.msra.mxu0 0
    %1113 = vmatprep.subr.bf16.mxu0 0
    %1114 = vmatpush1.bf16.xpose.msra.mxu0 0
    %1115 = vmatprep.subr.bf16.mxu0 0
    %1116 = vmatpush1.bf16.xpose.msra.mxu0 0
    %1117 = vmatprep.subr.bf16.mxu0 0
    %1118 = vmatpush1.bf16.xpose.msra.mxu0 0
    %1119 = vmatprep.subr.bf16.mxu0 0
    %1120 = vmatpush1.bf16.xpose.msra.mxu0 0
    %1121 = vmatprep.subr.bf16.mxu0 0
    %1122 = vmatpush1.bf16.xpose.msra.mxu0 0
    %1123 = vmatprep.subr.bf16.mxu0 0
    %1124 = vmatpush1.bf16.xpose.msra.mxu0 0
    %1125 = vmatprep.subr.bf16.mxu0 0
    %1126 = vmatpush1.bf16.xpose.msra.mxu0 0
    %1127 = vmatprep.subr.bf16.mxu0 0
    %1128 = vmatpush1.bf16.xpose.msra.mxu0 0
    %1129 = vmatprep.subr.bf16.mxu0 0
    %1130 = vmatpush1.bf16.xpose.msra.mxu0 0
    %1131 = vmatprep.mubr.bf16.mxu0 0
    %1132 = vmatmul.mubr.bf16.gmra.mrb[0].mxu0 %v1097
    %v1133 = vpop.f32.mrb[0].mxu0
    %v1134 = vadd.f32 0.0, %v1133
    %v1135 = vpop.f32.mrb[0].mxu0
    %v1136 = vpop.f32.mrb[0].mxu0
    %v1137 = vpop.f32.mrb[0].mxu0
    %1138 = vdwg.mxu0
    %v1140 = vsel %vm671, %v1009, 0
    %1142 = vmatprep.subr.bf16.mxu0 0
    %1143 = vmatpush1.bf16.xpose.msra.mxu0 %v897
    %1144 = vmatprep.subr.bf16.mxu0 0
    %1145 = vmatpush1.bf16.xpose.msra.mxu0 0
    %1146 = vmatprep.subr.bf16.mxu0 0
    %1147 = vmatpush1.bf16.xpose.msra.mxu0 0
    %1148 = vmatprep.subr.bf16.mxu0 0
    %1149 = vmatpush1.bf16.xpose.msra.mxu0 0
    %1150 = vmatprep.subr.bf16.mxu0 0
    %1151 = vmatpush1.bf16.xpose.msra.mxu0 0
    %1152 = vmatprep.subr.bf16.mxu0 0
    %1153 = vmatpush1.bf16.xpose.msra.mxu0 0
    %1154 = vmatprep.subr.bf16.mxu0 0
    %1155 = vmatpush1.bf16.xpose.msra.mxu0 0
    %1156 = vmatprep.subr.bf16.mxu0 0
    %1157 = vmatpush1.bf16.xpose.msra.mxu0 0
    %1158 = vmatprep.subr.bf16.mxu0 0
    %1159 = vmatpush1.bf16.xpose.msra.mxu0 0
    %1160 = vmatprep.subr.bf16.mxu0 0
    %1161 = vmatpush1.bf16.xpose.msra.mxu0 0
    %1162 = vmatprep.subr.bf16.mxu0 0
    %1163 = vmatpush1.bf16.xpose.msra.mxu0 0
    %1164 = vmatprep.subr.bf16.mxu0 0
    %1165 = vmatpush1.bf16.xpose.msra.mxu0 0
    %1166 = vmatprep.subr.bf16.mxu0 0
    %1167 = vmatpush1.bf16.xpose.msra.mxu0 0
    %1168 = vmatprep.subr.bf16.mxu0 0
    %1169 = vmatpush1.bf16.xpose.msra.mxu0 0
    %1170 = vmatprep.subr.bf16.mxu0 0
    %1171 = vmatpush1.bf16.xpose.msra.mxu0 0
    %1172 = vmatprep.subr.bf16.mxu0 0
    %1173 = vmatpush1.bf16.xpose.msra.mxu0 0
    %1174 = vmatprep.mubr.bf16.mxu0 0
    %1175 = vmatmul.mubr.bf16.gmra.mrb[0].mxu0 %v1140
    %v1176 = vpop.f32.mrb[0].mxu0
    %v1177 = vadd.f32 0.0, %v1176
    %v1178 = vpop.f32.mrb[0].mxu0
    %v1179 = vpop.f32.mrb[0].mxu0
    %v1180 = vpop.f32.mrb[0].mxu0
    %1181 = vdwg.mxu0
    %v1182 = vsel %vm940, -1e+30, %v1048
    %v1183 = vsel %vm940, -1e+30, %v1091
    %v1184 = vsel %vm940, -1e+30, %v1134
    %v1185 = vsel %vm940, -1e+30, %v1177
    %v1186 = vsel %vm945, %v1182, -inf
    %1187 = vmax.xlane.f32.xlu0 %v1186
    %v1188 = vpop.xlane.xlu0 %1187
    %v1189 = vsel %vm945, %v1183, -inf
    %1190 = vmax.xlane.f32.xlu0 %v1189
    %v1191 = vpop.xlane.xlu0 %1190
    %v1192 = vsel %vm945, %v1184, -inf
    %1193 = vmax.xlane.f32.xlu0 %v1192
    %v1194 = vpop.xlane.xlu0 %1193
    %v1195 = vsel %vm945, %v1185, -inf
    %1196 = vmax.xlane.f32.xlu0 %v1195
    %v1197 = vpop.xlane.xlu0 %1196
    %v1198 = vsub.f32 %v1182, %v1188
    %v1199 = vsub.f32 %v1183, %v1191
    %v1200 = vsub.f32 %v1184, %v1194
    %v1201 = vsub.f32 %v1185, %v1197
    %v1202 = vmul.f32 %v1198, 1.442695
    %v1203 = vpow.pop %v1202
    %v1204 = vmul.f32 %v1199, 1.442695
    %v1205 = vpow.pop %v1204
    %v1206 = vmul.f32 %v1200, 1.442695
    %v1207 = vpow.pop %v1206
    %v1208 = vmul.f32 %v1201, 1.442695
    %v1209 = vpow.pop %v1208
    %v1210 = vsel %vm945, %v1203, 0.0
    %1211 = vadd.xlane.f32.xlu0 %v1210
    %v1212 = vpop.xlane.xlu0 %1211
    %v1213 = vsel %vm945, %v1205, 0.0
    %1214 = vadd.xlane.f32.xlu0 %v1213
    %v1215 = vpop.xlane.xlu0 %1214
    %v1216 = vsel %vm945, %v1207, 0.0
    %1217 = vadd.xlane.f32.xlu0 %v1216
    %v1218 = vpop.xlane.xlu0 %1217
    %v1219 = vsel %vm945, %v1209, 0.0
    %1220 = vadd.xlane.f32.xlu0 %v1219
    %v1221 = vpop.xlane.xlu0 %1220
    %v1222 = vrcp.pop %v1212
    %v1223 = vrcp.pop %v1215
    %v1224 = vrcp.pop %v1218
    %v1225 = vrcp.pop %v1221
    %v1226 = vmul.f32 %v1203, %v1222
    %v1227 = vmul.f32 %v1205, %v1223
    %v1228 = vmul.f32 %v1207, %v1224
    %v1229 = vmul.f32 %v1209, %v1225
    %v1230 = vmul.f32 %v715, %v597
    %v1231 = vmul.f32 %v719, %v597
    %v1232 = vmul.f32 %v725, %v597
    %v1233 = vmul.f32 %v729, %v597
    %v1234 = vpack.c.bf16 %v1230, %v1230
    %v1235 = vpack.c.bf16 %v1231, %v1231
    %v1236 = vpack.c.bf16 %v1232, %v1232
    %v1237 = vpack.c.bf16 %v1233, %v1233
    %v1238 = vpack.c.bf16 %v1226, %v1226
    %v1239 = vpack.c.bf16 %v1227, %v1227
    %v1240 = vpack.c.bf16 %v1228, %v1228
    %v1241 = vpack.c.bf16 %v1229, %v1229
    %v1243 = vsel %vm945, %v1238, 0
    %vm1245 = vcmask 1043456
    %v1247 = vsel %vm1245, %v1234, 0
    %1249 = vmatprep.subr.bf16.mxu0 0
    %1250 = vmatpush1.bf16.msra.mxu0 %v1247
    %1251 = vmatprep.subr.bf16.mxu0 0
    %1252 = vmatpush1.bf16.msra.mxu0 0
    %1253 = vmatprep.subr.bf16.mxu0 0
    %1254 = vmatpush1.bf16.msra.mxu0 0
    %1255 = vmatprep.subr.bf16.mxu0 0
    %1256 = vmatpush1.bf16.msra.mxu0 0
    %1257 = vmatprep.subr.bf16.mxu0 0
    %1258 = vmatpush1.bf16.msra.mxu0 0
    %1259 = vmatprep.subr.bf16.mxu0 0
    %1260 = vmatpush1.bf16.msra.mxu0 0
    %1261 = vmatprep.subr.bf16.mxu0 0
    %1262 = vmatpush1.bf16.msra.mxu0 0
    %1263 = vmatprep.subr.bf16.mxu0 0
    %1264 = vmatpush1.bf16.msra.mxu0 0
    %1265 = vmatprep.subr.bf16.mxu0 0
    %1266 = vmatpush1.bf16.msra.mxu0 0
    %1267 = vmatprep.subr.bf16.mxu0 0
    %1268 = vmatpush1.bf16.msra.mxu0 0
    %1269 = vmatprep.subr.bf16.mxu0 0
    %1270 = vmatpush1.bf16.msra.mxu0 0
    %1271 = vmatprep.subr.bf16.mxu0 0
    %1272 = vmatpush1.bf16.msra.mxu0 0
    %1273 = vmatprep.subr.bf16.mxu0 0
    %1274 = vmatpush1.bf16.msra.mxu0 0
    %1275 = vmatprep.subr.bf16.mxu0 0
    %1276 = vmatpush1.bf16.msra.mxu0 0
    %1277 = vmatprep.subr.bf16.mxu0 0
    %1278 = vmatpush1.bf16.msra.mxu0 0
    %1279 = vmatprep.subr.bf16.mxu0 0
    %1280 = vmatpush1.bf16.msra.mxu0 0
    %1281 = vmatprep.mubr.bf16.mxu0 0
    %1282 = vmatmul.mubr.bf16.gmra.mrb[0].mxu0 %v1243
    %v1283 = vpop.f32.mrb[0].mxu0
    %v1284 = vadd.f32 0.0, %v1283
    %v1285 = vpop.f32.mrb[0].mxu0
    %v1286 = vpop.f32.mrb[0].mxu0
    %v1287 = vpop.f32.mrb[0].mxu0
    %1288 = vdwg.mxu0
    %v1290 = vsel %vm945, %v1239, 0
    %v1293 = vsel %vm1245, %v1235, 0
    %1295 = vmatprep.subr.bf16.mxu0 0
    %1296 = vmatpush1.bf16.msra.mxu0 %v1293
    %1297 = vmatprep.subr.bf16.mxu0 0
    %1298 = vmatpush1.bf16.msra.mxu0 0
    %1299 = vmatprep.subr.bf16.mxu0 0
    %1300 = vmatpush1.bf16.msra.mxu0 0
    %1301 = vmatprep.subr.bf16.mxu0 0
    %1302 = vmatpush1.bf16.msra.mxu0 0
    %1303 = vmatprep.subr.bf16.mxu0 0
    %1304 = vmatpush1.bf16.msra.mxu0 0
    %1305 = vmatprep.subr.bf16.mxu0 0
    %1306 = vmatpush1.bf16.msra.mxu0 0
    %1307 = vmatprep.subr.bf16.mxu0 0
    %1308 = vmatpush1.bf16.msra.mxu0 0
    %1309 = vmatprep.subr.bf16.mxu0 0
    %1310 = vmatpush1.bf16.msra.mxu0 0
    %1311 = vmatprep.subr.bf16.mxu0 0
    %1312 = vmatpush1.bf16.msra.mxu0 0
    %1313 = vmatprep.subr.bf16.mxu0 0
    %1314 = vmatpush1.bf16.msra.mxu0 0
    %1315 = vmatprep.subr.bf16.mxu0 0
    %1316 = vmatpush1.bf16.msra.mxu0 0
    %1317 = vmatprep.subr.bf16.mxu0 0
    %1318 = vmatpush1.bf16.msra.mxu0 0
    %1319 = vmatprep.subr.bf16.mxu0 0
    %1320 = vmatpush1.bf16.msra.mxu0 0
    %1321 = vmatprep.subr.bf16.mxu0 0
    %1322 = vmatpush1.bf16.msra.mxu0 0
    %1323 = vmatprep.subr.bf16.mxu0 0
    %1324 = vmatpush1.bf16.msra.mxu0 0
    %1325 = vmatprep.subr.bf16.mxu0 0
    %1326 = vmatpush1.bf16.msra.mxu0 0
    %1327 = vmatprep.mubr.bf16.mxu0 0
    %1328 = vmatmul.mubr.bf16.gmra.mrb[0].mxu0 %v1290
    %v1329 = vpop.f32.mrb[0].mxu0
    %v1330 = vadd.f32 0.0, %v1329
    %v1331 = vpop.f32.mrb[0].mxu0
    %v1332 = vpop.f32.mrb[0].mxu0
    %v1333 = vpop.f32.mrb[0].mxu0
    %1334 = vdwg.mxu0
    %v1336 = vsel %vm945, %v1240, 0
    %v1339 = vsel %vm1245, %v1236, 0
    %1341 = vmatprep.subr.bf16.mxu0 0
    %1342 = vmatpush1.bf16.msra.mxu0 %v1339
    %1343 = vmatprep.subr.bf16.mxu0 0
    %1344 = vmatpush1.bf16.msra.mxu0 0
    %1345 = vmatprep.subr.bf16.mxu0 0
    %1346 = vmatpush1.bf16.msra.mxu0 0
    %1347 = vmatprep.subr.bf16.mxu0 0
    %1348 = vmatpush1.bf16.msra.mxu0 0
    %1349 = vmatprep.subr.bf16.mxu0 0
    %1350 = vmatpush1.bf16.msra.mxu0 0
    %1351 = vmatprep.subr.bf16.mxu0 0
    %1352 = vmatpush1.bf16.msra.mxu0 0
    %1353 = vmatprep.subr.bf16.mxu0 0
    %1354 = vmatpush1.bf16.msra.mxu0 0
    %1355 = vmatprep.subr.bf16.mxu0 0
    %1356 = vmatpush1.bf16.msra.mxu0 0
    %1357 = vmatprep.subr.bf16.mxu0 0
    %1358 = vmatpush1.bf16.msra.mxu0 0
    %1359 = vmatprep.subr.bf16.mxu0 0
    %1360 = vmatpush1.bf16.msra.mxu0 0
    %1361 = vmatprep.subr.bf16.mxu0 0
    %1362 = vmatpush1.bf16.msra.mxu0 0
    %1363 = vmatprep.subr.bf16.mxu0 0
    %1364 = vmatpush1.bf16.msra.mxu0 0
    %1365 = vmatprep.subr.bf16.mxu0 0
    %1366 = vmatpush1.bf16.msra.mxu0 0
    %1367 = vmatprep.subr.bf16.mxu0 0
    %1368 = vmatpush1.bf16.msra.mxu0 0
    %1369 = vmatprep.subr.bf16.mxu0 0
    %1370 = vmatpush1.bf16.msra.mxu0 0
    %1371 = vmatprep.subr.bf16.mxu0 0
    %1372 = vmatpush1.bf16.msra.mxu0 0
    %1373 = vmatprep.mubr.bf16.mxu0 0
    %1374 = vmatmul.mubr.bf16.gmra.mrb[0].mxu0 %v1336
    %v1375 = vpop.f32.mrb[0].mxu0
    %v1376 = vadd.f32 0.0, %v1375
    %v1377 = vpop.f32.mrb[0].mxu0
    %v1378 = vpop.f32.mrb[0].mxu0
    %v1379 = vpop.f32.mrb[0].mxu0
    %1380 = vdwg.mxu0
    %v1382 = vsel %vm945, %v1241, 0
    %v1385 = vsel %vm1245, %v1237, 0
    %1387 = vmatprep.subr.bf16.mxu0 0
    %1388 = vmatpush1.bf16.msra.mxu0 %v1385
    %1389 = vmatprep.subr.bf16.mxu0 0
    %1390 = vmatpush1.bf16.msra.mxu0 0
    %1391 = vmatprep.subr.bf16.mxu0 0
    %1392 = vmatpush1.bf16.msra.mxu0 0
    %1393 = vmatprep.subr.bf16.mxu0 0
    %1394 = vmatpush1.bf16.msra.mxu0 0
    %1395 = vmatprep.subr.bf16.mxu0 0
    %1396 = vmatpush1.bf16.msra.mxu0 0
    %1397 = vmatprep.subr.bf16.mxu0 0
    %1398 = vmatpush1.bf16.msra.mxu0 0
    %1399 = vmatprep.subr.bf16.mxu0 0
    %1400 = vmatpush1.bf16.msra.mxu0 0
    %1401 = vmatprep.subr.bf16.mxu0 0
    %1402 = vmatpush1.bf16.msra.mxu0 0
    %1403 = vmatprep.subr.bf16.mxu0 0
    %1404 = vmatpush1.bf16.msra.mxu0 0
    %1405 = vmatprep.subr.bf16.mxu0 0
    %1406 = vmatpush1.bf16.msra.mxu0 0
    %1407 = vmatprep.subr.bf16.mxu0 0
    %1408 = vmatpush1.bf16.msra.mxu0 0
    %1409 = vmatprep.subr.bf16.mxu0 0
    %1410 = vmatpush1.bf16.msra.mxu0 0
    %1411 = vmatprep.subr.bf16.mxu0 0
    %1412 = vmatpush1.bf16.msra.mxu0 0
    %1413 = vmatprep.subr.bf16.mxu0 0
    %1414 = vmatpush1.bf16.msra.mxu0 0
    %1415 = vmatprep.subr.bf16.mxu0 0
    %1416 = vmatpush1.bf16.msra.mxu0 0
    %1417 = vmatprep.subr.bf16.mxu0 0
    %1418 = vmatpush1.bf16.msra.mxu0 0
    %1419 = vmatprep.mubr.bf16.mxu0 0
    %1420 = vmatmul.mubr.bf16.gmra.mrb[0].mxu0 %v1382
    %v1421 = vpop.f32.mrb[0].mxu0
    %v1422 = vadd.f32 0.0, %v1421
    %v1423 = vpop.f32.mrb[0].mxu0
    %v1424 = vpop.f32.mrb[0].mxu0
    %v1425 = vpop.f32.mrb[0].mxu0
    %1426 = vdwg.mxu0
    %v1428 = vsel %vm945, %v998, 0
    %v1431 = vsel %vm1245, %v994, 0
    %1433 = vmatprep.subr.bf16.mxu0 0
    %1434 = vmatpush1.bf16.msra.mxu0 %v1431
    %1435 = vmatprep.subr.bf16.mxu0 0
    %1436 = vmatpush1.bf16.msra.mxu0 0
    %1437 = vmatprep.subr.bf16.mxu0 0
    %1438 = vmatpush1.bf16.msra.mxu0 0
    %1439 = vmatprep.subr.bf16.mxu0 0
    %1440 = vmatpush1.bf16.msra.mxu0 0
    %1441 = vmatprep.subr.bf16.mxu0 0
    %1442 = vmatpush1.bf16.msra.mxu0 0
    %1443 = vmatprep.subr.bf16.mxu0 0
    %1444 = vmatpush1.bf16.msra.mxu0 0
    %1445 = vmatprep.subr.bf16.mxu0 0
    %1446 = vmatpush1.bf16.msra.mxu0 0
    %1447 = vmatprep.subr.bf16.mxu0 0
    %1448 = vmatpush1.bf16.msra.mxu0 0
    %1449 = vmatprep.subr.bf16.mxu0 0
    %1450 = vmatpush1.bf16.msra.mxu0 0
    %1451 = vmatprep.subr.bf16.mxu0 0
    %1452 = vmatpush1.bf16.msra.mxu0 0
    %1453 = vmatprep.subr.bf16.mxu0 0
    %1454 = vmatpush1.bf16.msra.mxu0 0
    %1455 = vmatprep.subr.bf16.mxu0 0
    %1456 = vmatpush1.bf16.msra.mxu0 0
    %1457 = vmatprep.subr.bf16.mxu0 0
    %1458 = vmatpush1.bf16.msra.mxu0 0
    %1459 = vmatprep.subr.bf16.mxu0 0
    %1460 = vmatpush1.bf16.msra.mxu0 0
    %1461 = vmatprep.subr.bf16.mxu0 0
    %1462 = vmatpush1.bf16.msra.mxu0 0
    %1463 = vmatprep.subr.bf16.mxu0 0
    %1464 = vmatpush1.bf16.msra.mxu0 0
    %1465 = vmatprep.mubr.bf16.mxu0 0
    %1466 = vmatmul.mubr.bf16.gmra.mrb[0].mxu0 %v1428
    %v1467 = vpop.f32.mrb[0].mxu0
    %v1468 = vadd.f32 %v1284, %v1467
    %v1469 = vpop.f32.mrb[0].mxu0
    %v1470 = vpop.f32.mrb[0].mxu0
    %v1471 = vpop.f32.mrb[0].mxu0
    %1472 = vdwg.mxu0
    %v1474 = vsel %vm945, %v999, 0
    %v1477 = vsel %vm1245, %v995, 0
    %1479 = vmatprep.subr.bf16.mxu0 0
    %1480 = vmatpush1.bf16.msra.mxu0 %v1477
    %1481 = vmatprep.subr.bf16.mxu0 0
    %1482 = vmatpush1.bf16.msra.mxu0 0
    %1483 = vmatprep.subr.bf16.mxu0 0
    %1484 = vmatpush1.bf16.msra.mxu0 0
    %1485 = vmatprep.subr.bf16.mxu0 0
    %1486 = vmatpush1.bf16.msra.mxu0 0
    %1487 = vmatprep.subr.bf16.mxu0 0
    %1488 = vmatpush1.bf16.msra.mxu0 0
    %1489 = vmatprep.subr.bf16.mxu0 0
    %1490 = vmatpush1.bf16.msra.mxu0 0
    %1491 = vmatprep.subr.bf16.mxu0 0
    %1492 = vmatpush1.bf16.msra.mxu0 0
    %1493 = vmatprep.subr.bf16.mxu0 0
    %1494 = vmatpush1.bf16.msra.mxu0 0
    %1495 = vmatprep.subr.bf16.mxu0 0
    %1496 = vmatpush1.bf16.msra.mxu0 0
    %1497 = vmatprep.subr.bf16.mxu0 0
    %1498 = vmatpush1.bf16.msra.mxu0 0
    %1499 = vmatprep.subr.bf16.mxu0 0
    %1500 = vmatpush1.bf16.msra.mxu0 0
    %1501 = vmatprep.subr.bf16.mxu0 0
    %1502 = vmatpush1.bf16.msra.mxu0 0
    %1503 = vmatprep.subr.bf16.mxu0 0
    %1504 = vmatpush1.bf16.msra.mxu0 0
    %1505 = vmatprep.subr.bf16.mxu0 0
    %1506 = vmatpush1.bf16.msra.mxu0 0
    %1507 = vmatprep.subr.bf16.mxu0 0
    %1508 = vmatpush1.bf16.msra.mxu0 0
    %1509 = vmatprep.subr.bf16.mxu0 0
    %1510 = vmatpush1.bf16.msra.mxu0 0
    %1511 = vmatprep.mubr.bf16.mxu0 0
    %1512 = vmatmul.mubr.bf16.gmra.mrb[0].mxu0 %v1474
    %v1513 = vpop.f32.mrb[0].mxu0
    %v1514 = vadd.f32 %v1330, %v1513
    %v1515 = vpop.f32.mrb[0].mxu0
    %v1516 = vpop.f32.mrb[0].mxu0
    %v1517 = vpop.f32.mrb[0].mxu0
    %1518 = vdwg.mxu0
    %v1520 = vsel %vm945, %v1000, 0
    %v1523 = vsel %vm1245, %v996, 0
    %1525 = vmatprep.subr.bf16.mxu0 0
    %1526 = vmatpush1.bf16.msra.mxu0 %v1523
    %1527 = vmatprep.subr.bf16.mxu0 0
    %1528 = vmatpush1.bf16.msra.mxu0 0
    %1529 = vmatprep.subr.bf16.mxu0 0
    %1530 = vmatpush1.bf16.msra.mxu0 0
    %1531 = vmatprep.subr.bf16.mxu0 0
    %1532 = vmatpush1.bf16.msra.mxu0 0
    %1533 = vmatprep.subr.bf16.mxu0 0
    %1534 = vmatpush1.bf16.msra.mxu0 0
    %1535 = vmatprep.subr.bf16.mxu0 0
    %1536 = vmatpush1.bf16.msra.mxu0 0
    %1537 = vmatprep.subr.bf16.mxu0 0
    %1538 = vmatpush1.bf16.msra.mxu0 0
    %1539 = vmatprep.subr.bf16.mxu0 0
    %1540 = vmatpush1.bf16.msra.mxu0 0
    %1541 = vmatprep.subr.bf16.mxu0 0
    %1542 = vmatpush1.bf16.msra.mxu0 0
    %1543 = vmatprep.subr.bf16.mxu0 0
    %1544 = vmatpush1.bf16.msra.mxu0 0
    %1545 = vmatprep.subr.bf16.mxu0 0
    %1546 = vmatpush1.bf16.msra.mxu0 0
    %1547 = vmatprep.subr.bf16.mxu0 0
    %1548 = vmatpush1.bf16.msra.mxu0 0
    %1549 = vmatprep.subr.bf16.mxu0 0
    %1550 = vmatpush1.bf16.msra.mxu0 0
    %1551 = vmatprep.subr.bf16.mxu0 0
    %1552 = vmatpush1.bf16.msra.mxu0 0
    %1553 = vmatprep.subr.bf16.mxu0 0
    %1554 = vmatpush1.bf16.msra.mxu0 0
    %1555 = vmatprep.subr.bf16.mxu0 0
    %1556 = vmatpush1.bf16.msra.mxu0 0
    %1557 = vmatprep.mubr.bf16.mxu0 0
    %1558 = vmatmul.mubr.bf16.gmra.mrb[0].mxu0 %v1520
    %v1559 = vpop.f32.mrb[0].mxu0
    %v1560 = vadd.f32 %v1376, %v1559
    %v1561 = vpop.f32.mrb[0].mxu0
    %v1562 = vpop.f32.mrb[0].mxu0
    %v1563 = vpop.f32.mrb[0].mxu0
    %1564 = vdwg.mxu0
    %v1566 = vsel %vm945, %v1001, 0
    %v1569 = vsel %vm1245, %v997, 0
    %1571 = vmatprep.subr.bf16.mxu0 0
    %1572 = vmatpush1.bf16.msra.mxu0 %v1569
    %1573 = vmatprep.subr.bf16.mxu0 0
    %1574 = vmatpush1.bf16.msra.mxu0 0
    %1575 = vmatprep.subr.bf16.mxu0 0
    %1576 = vmatpush1.bf16.msra.mxu0 0
    %1577 = vmatprep.subr.bf16.mxu0 0
    %1578 = vmatpush1.bf16.msra.mxu0 0
    %1579 = vmatprep.subr.bf16.mxu0 0
    %1580 = vmatpush1.bf16.msra.mxu0 0
    %1581 = vmatprep.subr.bf16.mxu0 0
    %1582 = vmatpush1.bf16.msra.mxu0 0
    %1583 = vmatprep.subr.bf16.mxu0 0
    %1584 = vmatpush1.bf16.msra.mxu0 0
    %1585 = vmatprep.subr.bf16.mxu0 0
    %1586 = vmatpush1.bf16.msra.mxu0 0
    %1587 = vmatprep.subr.bf16.mxu0 0
    %1588 = vmatpush1.bf16.msra.mxu0 0
    %1589 = vmatprep.subr.bf16.mxu0 0
    %1590 = vmatpush1.bf16.msra.mxu0 0
    %1591 = vmatprep.subr.bf16.mxu0 0
    %1592 = vmatpush1.bf16.msra.mxu0 0
    %1593 = vmatprep.subr.bf16.mxu0 0
    %1594 = vmatpush1.bf16.msra.mxu0 0
    %1595 = vmatprep.subr.bf16.mxu0 0
    %1596 = vmatpush1.bf16.msra.mxu0 0
    %1597 = vmatprep.subr.bf16.mxu0 0
    %1598 = vmatpush1.bf16.msra.mxu0 0
    %1599 = vmatprep.subr.bf16.mxu0 0
    %1600 = vmatpush1.bf16.msra.mxu0 0
    %1601 = vmatprep.subr.bf16.mxu0 0
    %1602 = vmatpush1.bf16.msra.mxu0 0
    %1603 = vmatprep.mubr.bf16.mxu0 0
    %1604 = vmatmul.mubr.bf16.gmra.mrb[0].mxu0 %v1566
    %v1605 = vpop.f32.mrb[0].mxu0
    %v1606 = vadd.f32 %v1422, %v1605
    %v1607 = vpop.f32.mrb[0].mxu0
    %v1608 = vpop.f32.mrb[0].mxu0
    %v1609 = vpop.f32.mrb[0].mxu0
    %1610 = vdwg.mxu0
    %v1611 = vmul.f32 %v713, %v602
    %v1612 = vmul.f32 %v717, %v602
    %v1613 = vmul.f32 %v723, %v602
    %v1614 = vmul.f32 %v727, %v602
    %v1615 = vpack.c.bf16 %v1611, %v1611
    %v1616 = vpack.c.bf16 %v1612, %v1612
    %v1617 = vpack.c.bf16 %v1613, %v1613
    %v1618 = vpack.c.bf16 %v1614, %v1614
    %v1620 = vsel %vm671, %v1615, 0
    %1622 = vmatprep.subr.bf16.mxu0 0
    %1623 = vmatpush1.bf16.xpose.msra.mxu0 %v750
    %1624 = vmatprep.subr.bf16.mxu0 0
    %1625 = vmatpush1.bf16.xpose.msra.mxu0 0
    %1626 = vmatprep.subr.bf16.mxu0 0
    %1627 = vmatpush1.bf16.xpose.msra.mxu0 0
    %1628 = vmatprep.subr.bf16.mxu0 0
    %1629 = vmatpush1.bf16.xpose.msra.mxu0 0
    %1630 = vmatprep.subr.bf16.mxu0 0
    %1631 = vmatpush1.bf16.xpose.msra.mxu0 0
    %1632 = vmatprep.subr.bf16.mxu0 0
    %1633 = vmatpush1.bf16.xpose.msra.mxu0 0
    %1634 = vmatprep.subr.bf16.mxu0 0
    %1635 = vmatpush1.bf16.xpose.msra.mxu0 0
    %1636 = vmatprep.subr.bf16.mxu0 0
    %1637 = vmatpush1.bf16.xpose.msra.mxu0 0
    %1638 = vmatprep.subr.bf16.mxu0 0
    %1639 = vmatpush1.bf16.xpose.msra.mxu0 0
    %1640 = vmatprep.subr.bf16.mxu0 0
    %1641 = vmatpush1.bf16.xpose.msra.mxu0 0
    %1642 = vmatprep.subr.bf16.mxu0 0
    %1643 = vmatpush1.bf16.xpose.msra.mxu0 0
    %1644 = vmatprep.subr.bf16.mxu0 0
    %1645 = vmatpush1.bf16.xpose.msra.mxu0 0
    %1646 = vmatprep.subr.bf16.mxu0 0
    %1647 = vmatpush1.bf16.xpose.msra.mxu0 0
    %1648 = vmatprep.subr.bf16.mxu0 0
    %1649 = vmatpush1.bf16.xpose.msra.mxu0 0
    %1650 = vmatprep.subr.bf16.mxu0 0
    %1651 = vmatpush1.bf16.xpose.msra.mxu0 0
    %1652 = vmatprep.subr.bf16.mxu0 0
    %1653 = vmatpush1.bf16.xpose.msra.mxu0 0
    %1654 = vmatprep.mubr.bf16.mxu0 0
    %1655 = vmatmul.mubr.bf16.gmra.mrb[0].mxu0 %v1620
    %v1656 = vpop.f32.mrb[0].mxu0
    %v1657 = vadd.f32 0.0, %v1656
    %v1658 = vpop.f32.mrb[0].mxu0
    %v1659 = vpop.f32.mrb[0].mxu0
    %v1660 = vpop.f32.mrb[0].mxu0
    %1661 = vdwg.mxu0
    %v1663 = vsel %vm671, %v1616, 0
    %1665 = vmatprep.subr.bf16.mxu0 0
    %1666 = vmatpush1.bf16.xpose.msra.mxu0 %v799
    %1667 = vmatprep.subr.bf16.mxu0 0
    %1668 = vmatpush1.bf16.xpose.msra.mxu0 0
    %1669 = vmatprep.subr.bf16.mxu0 0
    %1670 = vmatpush1.bf16.xpose.msra.mxu0 0
    %1671 = vmatprep.subr.bf16.mxu0 0
    %1672 = vmatpush1.bf16.xpose.msra.mxu0 0
    %1673 = vmatprep.subr.bf16.mxu0 0
    %1674 = vmatpush1.bf16.xpose.msra.mxu0 0
    %1675 = vmatprep.subr.bf16.mxu0 0
    %1676 = vmatpush1.bf16.xpose.msra.mxu0 0
    %1677 = vmatprep.subr.bf16.mxu0 0
    %1678 = vmatpush1.bf16.xpose.msra.mxu0 0
    %1679 = vmatprep.subr.bf16.mxu0 0
    %1680 = vmatpush1.bf16.xpose.msra.mxu0 0
    %1681 = vmatprep.subr.bf16.mxu0 0
    %1682 = vmatpush1.bf16.xpose.msra.mxu0 0
    %1683 = vmatprep.subr.bf16.mxu0 0
    %1684 = vmatpush1.bf16.xpose.msra.mxu0 0
    %1685 = vmatprep.subr.bf16.mxu0 0
    %1686 = vmatpush1.bf16.xpose.msra.mxu0 0
    %1687 = vmatprep.subr.bf16.mxu0 0
    %1688 = vmatpush1.bf16.xpose.msra.mxu0 0
    %1689 = vmatprep.subr.bf16.mxu0 0
    %1690 = vmatpush1.bf16.xpose.msra.mxu0 0
    %1691 = vmatprep.subr.bf16.mxu0 0
    %1692 = vmatpush1.bf16.xpose.msra.mxu0 0
    %1693 = vmatprep.subr.bf16.mxu0 0
    %1694 = vmatpush1.bf16.xpose.msra.mxu0 0
    %1695 = vmatprep.subr.bf16.mxu0 0
    %1696 = vmatpush1.bf16.xpose.msra.mxu0 0
    %1697 = vmatprep.mubr.bf16.mxu0 0
    %1698 = vmatmul.mubr.bf16.gmra.mrb[0].mxu0 %v1663
    %v1699 = vpop.f32.mrb[0].mxu0
    %v1700 = vadd.f32 0.0, %v1699
    %v1701 = vpop.f32.mrb[0].mxu0
    %v1702 = vpop.f32.mrb[0].mxu0
    %v1703 = vpop.f32.mrb[0].mxu0
    %1704 = vdwg.mxu0
    %v1706 = vsel %vm671, %v1617, 0
    %1708 = vmatprep.subr.bf16.mxu0 0
    %1709 = vmatpush1.bf16.xpose.msra.mxu0 %v848
    %1710 = vmatprep.subr.bf16.mxu0 0
    %1711 = vmatpush1.bf16.xpose.msra.mxu0 0
    %1712 = vmatprep.subr.bf16.mxu0 0
    %1713 = vmatpush1.bf16.xpose.msra.mxu0 0
    %1714 = vmatprep.subr.bf16.mxu0 0
    %1715 = vmatpush1.bf16.xpose.msra.mxu0 0
    %1716 = vmatprep.subr.bf16.mxu0 0
    %1717 = vmatpush1.bf16.xpose.msra.mxu0 0
    %1718 = vmatprep.subr.bf16.mxu0 0
    %1719 = vmatpush1.bf16.xpose.msra.mxu0 0
    %1720 = vmatprep.subr.bf16.mxu0 0
    %1721 = vmatpush1.bf16.xpose.msra.mxu0 0
    %1722 = vmatprep.subr.bf16.mxu0 0
    %1723 = vmatpush1.bf16.xpose.msra.mxu0 0
    %1724 = vmatprep.subr.bf16.mxu0 0
    %1725 = vmatpush1.bf16.xpose.msra.mxu0 0
    %1726 = vmatprep.subr.bf16.mxu0 0
    %1727 = vmatpush1.bf16.xpose.msra.mxu0 0
    %1728 = vmatprep.subr.bf16.mxu0 0
    %1729 = vmatpush1.bf16.xpose.msra.mxu0 0
    %1730 = vmatprep.subr.bf16.mxu0 0
    %1731 = vmatpush1.bf16.xpose.msra.mxu0 0
    %1732 = vmatprep.subr.bf16.mxu0 0
    %1733 = vmatpush1.bf16.xpose.msra.mxu0 0
    %1734 = vmatprep.subr.bf16.mxu0 0
    %1735 = vmatpush1.bf16.xpose.msra.mxu0 0
    %1736 = vmatprep.subr.bf16.mxu0 0
    %1737 = vmatpush1.bf16.xpose.msra.mxu0 0
    %1738 = vmatprep.subr.bf16.mxu0 0
    %1739 = vmatpush1.bf16.xpose.msra.mxu0 0
    %1740 = vmatprep.mubr.bf16.mxu0 0
    %1741 = vmatmul.mubr.bf16.gmra.mrb[0].mxu0 %v1706
    %v1742 = vpop.f32.mrb[0].mxu0
    %v1743 = vadd.f32 0.0, %v1742
    %v1744 = vpop.f32.mrb[0].mxu0
    %v1745 = vpop.f32.mrb[0].mxu0
    %v1746 = vpop.f32.mrb[0].mxu0
    %1747 = vdwg.mxu0
    %v1749 = vsel %vm671, %v1618, 0
    %1751 = vmatprep.subr.bf16.mxu0 0
    %1752 = vmatpush1.bf16.xpose.msra.mxu0 %v897
    %1753 = vmatprep.subr.bf16.mxu0 0
    %1754 = vmatpush1.bf16.xpose.msra.mxu0 0
    %1755 = vmatprep.subr.bf16.mxu0 0
    %1756 = vmatpush1.bf16.xpose.msra.mxu0 0
    %1757 = vmatprep.subr.bf16.mxu0 0
    %1758 = vmatpush1.bf16.xpose.msra.mxu0 0
    %1759 = vmatprep.subr.bf16.mxu0 0
    %1760 = vmatpush1.bf16.xpose.msra.mxu0 0
    %1761 = vmatprep.subr.bf16.mxu0 0
    %1762 = vmatpush1.bf16.xpose.msra.mxu0 0
    %1763 = vmatprep.subr.bf16.mxu0 0
    %1764 = vmatpush1.bf16.xpose.msra.mxu0 0
    %1765 = vmatprep.subr.bf16.mxu0 0
    %1766 = vmatpush1.bf16.xpose.msra.mxu0 0
    %1767 = vmatprep.subr.bf16.mxu0 0
    %1768 = vmatpush1.bf16.xpose.msra.mxu0 0
    %1769 = vmatprep.subr.bf16.mxu0 0
    %1770 = vmatpush1.bf16.xpose.msra.mxu0 0
    %1771 = vmatprep.subr.bf16.mxu0 0
    %1772 = vmatpush1.bf16.xpose.msra.mxu0 0
    %1773 = vmatprep.subr.bf16.mxu0 0
    %1774 = vmatpush1.bf16.xpose.msra.mxu0 0
    %1775 = vmatprep.subr.bf16.mxu0 0
    %1776 = vmatpush1.bf16.xpose.msra.mxu0 0
    %1777 = vmatprep.subr.bf16.mxu0 0
    %1778 = vmatpush1.bf16.xpose.msra.mxu0 0
    %1779 = vmatprep.subr.bf16.mxu0 0
    %1780 = vmatpush1.bf16.xpose.msra.mxu0 0
    %1781 = vmatprep.subr.bf16.mxu0 0
    %1782 = vmatpush1.bf16.xpose.msra.mxu0 0
    %1783 = vmatprep.mubr.bf16.mxu0 0
    %1784 = vmatmul.mubr.bf16.gmra.mrb[0].mxu0 %v1749
    %v1785 = vpop.f32.mrb[0].mxu0
    %v1786 = vadd.f32 0.0, %v1785
    %v1787 = vpop.f32.mrb[0].mxu0
    %v1788 = vpop.f32.mrb[0].mxu0
    %v1789 = vpop.f32.mrb[0].mxu0
    %1790 = vdwg.mxu0
    %v1791 = vsel %vm940, -1e+30, %v1657
    %v1792 = vsel %vm940, -1e+30, %v1700
    %v1793 = vsel %vm940, -1e+30, %v1743
    %v1794 = vsel %vm940, -1e+30, %v1786
    %v1795 = vsel %vm945, %v1791, -inf
    %1796 = vmax.xlane.f32.xlu0 %v1795
    %v1797 = vpop.xlane.xlu0 %1796
    %v1798 = vsel %vm945, %v1792, -inf
    %1799 = vmax.xlane.f32.xlu0 %v1798
    %v1800 = vpop.xlane.xlu0 %1799
    %v1801 = vsel %vm945, %v1793, -inf
    %1802 = vmax.xlane.f32.xlu0 %v1801
    %v1803 = vpop.xlane.xlu0 %1802
    %v1804 = vsel %vm945, %v1794, -inf
    %1805 = vmax.xlane.f32.xlu0 %v1804
    %v1806 = vpop.xlane.xlu0 %1805
    %v1807 = vsub.f32 %v1791, %v1797
    %v1808 = vsub.f32 %v1792, %v1800
    %v1809 = vsub.f32 %v1793, %v1803
    %v1810 = vsub.f32 %v1794, %v1806
    %v1811 = vmul.f32 %v1807, 1.442695
    %v1812 = vpow.pop %v1811
    %v1813 = vmul.f32 %v1808, 1.442695
    %v1814 = vpow.pop %v1813
    %v1815 = vmul.f32 %v1809, 1.442695
    %v1816 = vpow.pop %v1815
    %v1817 = vmul.f32 %v1810, 1.442695
    %v1818 = vpow.pop %v1817
    %v1819 = vsel %vm945, %v1812, 0.0
    %1820 = vadd.xlane.f32.xlu0 %v1819
    %v1821 = vpop.xlane.xlu0 %1820
    %v1822 = vsel %vm945, %v1814, 0.0
    %1823 = vadd.xlane.f32.xlu0 %v1822
    %v1824 = vpop.xlane.xlu0 %1823
    %v1825 = vsel %vm945, %v1816, 0.0
    %1826 = vadd.xlane.f32.xlu0 %v1825
    %v1827 = vpop.xlane.xlu0 %1826
    %v1828 = vsel %vm945, %v1818, 0.0
    %1829 = vadd.xlane.f32.xlu0 %v1828
    %v1830 = vpop.xlane.xlu0 %1829
    %v1831 = vrcp.pop %v1821
    %v1832 = vrcp.pop %v1824
    %v1833 = vrcp.pop %v1827
    %v1834 = vrcp.pop %v1830
    %v1835 = vmul.f32 %v1812, %v1831
    %v1836 = vmul.f32 %v1814, %v1832
    %v1837 = vmul.f32 %v1816, %v1833
    %v1838 = vmul.f32 %v1818, %v1834
    %v1839 = vmul.f32 %v715, %v602
    %v1840 = vmul.f32 %v719, %v602
    %v1841 = vmul.f32 %v725, %v602
    %v1842 = vmul.f32 %v729, %v602
    %v1843 = vpack.c.bf16 %v1839, %v1839
    %v1844 = vpack.c.bf16 %v1840, %v1840
    %v1845 = vpack.c.bf16 %v1841, %v1841
    %v1846 = vpack.c.bf16 %v1842, %v1842
    %v1847 = vpack.c.bf16 %v1835, %v1835
    %v1848 = vpack.c.bf16 %v1836, %v1836
    %v1849 = vpack.c.bf16 %v1837, %v1837
    %v1850 = vpack.c.bf16 %v1838, %v1838
    %v1852 = vsel %vm945, %v1847, 0
    %v1855 = vsel %vm1245, %v1843, 0
    %1857 = vmatprep.subr.bf16.mxu0 0
    %1858 = vmatpush1.bf16.msra.mxu0 %v1855
    %1859 = vmatprep.subr.bf16.mxu0 0
    %1860 = vmatpush1.bf16.msra.mxu0 0
    %1861 = vmatprep.subr.bf16.mxu0 0
    %1862 = vmatpush1.bf16.msra.mxu0 0
    %1863 = vmatprep.subr.bf16.mxu0 0
    %1864 = vmatpush1.bf16.msra.mxu0 0
    %1865 = vmatprep.subr.bf16.mxu0 0
    %1866 = vmatpush1.bf16.msra.mxu0 0
    %1867 = vmatprep.subr.bf16.mxu0 0
    %1868 = vmatpush1.bf16.msra.mxu0 0
    %1869 = vmatprep.subr.bf16.mxu0 0
    %1870 = vmatpush1.bf16.msra.mxu0 0
    %1871 = vmatprep.subr.bf16.mxu0 0
    %1872 = vmatpush1.bf16.msra.mxu0 0
    %1873 = vmatprep.subr.bf16.mxu0 0
    %1874 = vmatpush1.bf16.msra.mxu0 0
    %1875 = vmatprep.subr.bf16.mxu0 0
    %1876 = vmatpush1.bf16.msra.mxu0 0
    %1877 = vmatprep.subr.bf16.mxu0 0
    %1878 = vmatpush1.bf16.msra.mxu0 0
    %1879 = vmatprep.subr.bf16.mxu0 0
    %1880 = vmatpush1.bf16.msra.mxu0 0
    %1881 = vmatprep.subr.bf16.mxu0 0
    %1882 = vmatpush1.bf16.msra.mxu0 0
    %1883 = vmatprep.subr.bf16.mxu0 0
    %1884 = vmatpush1.bf16.msra.mxu0 0
    %1885 = vmatprep.subr.bf16.mxu0 0
    %1886 = vmatpush1.bf16.msra.mxu0 0
    %1887 = vmatprep.subr.bf16.mxu0 0
    %1888 = vmatpush1.bf16.msra.mxu0 0
    %1889 = vmatprep.mubr.bf16.mxu0 0
    %1890 = vmatmul.mubr.bf16.gmra.mrb[0].mxu0 %v1852
    %v1891 = vpop.f32.mrb[0].mxu0
    %v1892 = vadd.f32 0.0, %v1891
    %v1893 = vpop.f32.mrb[0].mxu0
    %v1894 = vpop.f32.mrb[0].mxu0
    %v1895 = vpop.f32.mrb[0].mxu0
    %1896 = vdwg.mxu0
    %v1898 = vsel %vm945, %v1848, 0
    %v1901 = vsel %vm1245, %v1844, 0
    %1903 = vmatprep.subr.bf16.mxu0 0
    %1904 = vmatpush1.bf16.msra.mxu0 %v1901
    %1905 = vmatprep.subr.bf16.mxu0 0
    %1906 = vmatpush1.bf16.msra.mxu0 0
    %1907 = vmatprep.subr.bf16.mxu0 0
    %1908 = vmatpush1.bf16.msra.mxu0 0
    %1909 = vmatprep.subr.bf16.mxu0 0
    %1910 = vmatpush1.bf16.msra.mxu0 0
    %1911 = vmatprep.subr.bf16.mxu0 0
    %1912 = vmatpush1.bf16.msra.mxu0 0
    %1913 = vmatprep.subr.bf16.mxu0 0
    %1914 = vmatpush1.bf16.msra.mxu0 0
    %1915 = vmatprep.subr.bf16.mxu0 0
    %1916 = vmatpush1.bf16.msra.mxu0 0
    %1917 = vmatprep.subr.bf16.mxu0 0
    %1918 = vmatpush1.bf16.msra.mxu0 0
    %1919 = vmatprep.subr.bf16.mxu0 0
    %1920 = vmatpush1.bf16.msra.mxu0 0
    %1921 = vmatprep.subr.bf16.mxu0 0
    %1922 = vmatpush1.bf16.msra.mxu0 0
    %1923 = vmatprep.subr.bf16.mxu0 0
    %1924 = vmatpush1.bf16.msra.mxu0 0
    %1925 = vmatprep.subr.bf16.mxu0 0
    %1926 = vmatpush1.bf16.msra.mxu0 0
    %1927 = vmatprep.subr.bf16.mxu0 0
    %1928 = vmatpush1.bf16.msra.mxu0 0
    %1929 = vmatprep.subr.bf16.mxu0 0
    %1930 = vmatpush1.bf16.msra.mxu0 0
    %1931 = vmatprep.subr.bf16.mxu0 0
    %1932 = vmatpush1.bf16.msra.mxu0 0
    %1933 = vmatprep.subr.bf16.mxu0 0
    %1934 = vmatpush1.bf16.msra.mxu0 0
    %1935 = vmatprep.mubr.bf16.mxu0 0
    %1936 = vmatmul.mubr.bf16.gmra.mrb[0].mxu0 %v1898
    %v1937 = vpop.f32.mrb[0].mxu0
    %v1938 = vadd.f32 0.0, %v1937
    %v1939 = vpop.f32.mrb[0].mxu0
    %v1940 = vpop.f32.mrb[0].mxu0
    %v1941 = vpop.f32.mrb[0].mxu0
    %1942 = vdwg.mxu0
    %v1944 = vsel %vm945, %v1849, 0
    %v1947 = vsel %vm1245, %v1845, 0
    %1949 = vmatprep.subr.bf16.mxu0 0
    %1950 = vmatpush1.bf16.msra.mxu0 %v1947
    %1951 = vmatprep.subr.bf16.mxu0 0
    %1952 = vmatpush1.bf16.msra.mxu0 0
    %1953 = vmatprep.subr.bf16.mxu0 0
    %1954 = vmatpush1.bf16.msra.mxu0 0
    %1955 = vmatprep.subr.bf16.mxu0 0
    %1956 = vmatpush1.bf16.msra.mxu0 0
    %1957 = vmatprep.subr.bf16.mxu0 0
    %1958 = vmatpush1.bf16.msra.mxu0 0
    %1959 = vmatprep.subr.bf16.mxu0 0
    %1960 = vmatpush1.bf16.msra.mxu0 0
    %1961 = vmatprep.subr.bf16.mxu0 0
    %1962 = vmatpush1.bf16.msra.mxu0 0
    %1963 = vmatprep.subr.bf16.mxu0 0
    %1964 = vmatpush1.bf16.msra.mxu0 0
    %1965 = vmatprep.subr.bf16.mxu0 0
    %1966 = vmatpush1.bf16.msra.mxu0 0
    %1967 = vmatprep.subr.bf16.mxu0 0
    %1968 = vmatpush1.bf16.msra.mxu0 0
    %1969 = vmatprep.subr.bf16.mxu0 0
    %1970 = vmatpush1.bf16.msra.mxu0 0
    %1971 = vmatprep.subr.bf16.mxu0 0
    %1972 = vmatpush1.bf16.msra.mxu0 0
    %1973 = vmatprep.subr.bf16.mxu0 0
    %1974 = vmatpush1.bf16.msra.mxu0 0
    %1975 = vmatprep.subr.bf16.mxu0 0
    %1976 = vmatpush1.bf16.msra.mxu0 0
    %1977 = vmatprep.subr.bf16.mxu0 0
    %1978 = vmatpush1.bf16.msra.mxu0 0
    %1979 = vmatprep.subr.bf16.mxu0 0
    %1980 = vmatpush1.bf16.msra.mxu0 0
    %1981 = vmatprep.mubr.bf16.mxu0 0
    %1982 = vmatmul.mubr.bf16.gmra.mrb[0].mxu0 %v1944
    %v1983 = vpop.f32.mrb[0].mxu0
    %v1984 = vadd.f32 0.0, %v1983
    %v1985 = vpop.f32.mrb[0].mxu0
    %v1986 = vpop.f32.mrb[0].mxu0
    %v1987 = vpop.f32.mrb[0].mxu0
    %1988 = vdwg.mxu0
    %v1990 = vsel %vm945, %v1850, 0
    %v1993 = vsel %vm1245, %v1846, 0
    %1995 = vmatprep.subr.bf16.mxu0 0
    %1996 = vmatpush1.bf16.msra.mxu0 %v1993
    %1997 = vmatprep.subr.bf16.mxu0 0
    %1998 = vmatpush1.bf16.msra.mxu0 0
    %1999 = vmatprep.subr.bf16.mxu0 0
    %2000 = vmatpush1.bf16.msra.mxu0 0
    %2001 = vmatprep.subr.bf16.mxu0 0
    %2002 = vmatpush1.bf16.msra.mxu0 0
    %2003 = vmatprep.subr.bf16.mxu0 0
    %2004 = vmatpush1.bf16.msra.mxu0 0
    %2005 = vmatprep.subr.bf16.mxu0 0
    %2006 = vmatpush1.bf16.msra.mxu0 0
    %2007 = vmatprep.subr.bf16.mxu0 0
    %2008 = vmatpush1.bf16.msra.mxu0 0
    %2009 = vmatprep.subr.bf16.mxu0 0
    %2010 = vmatpush1.bf16.msra.mxu0 0
    %2011 = vmatprep.subr.bf16.mxu0 0
    %2012 = vmatpush1.bf16.msra.mxu0 0
    %2013 = vmatprep.subr.bf16.mxu0 0
    %2014 = vmatpush1.bf16.msra.mxu0 0
    %2015 = vmatprep.subr.bf16.mxu0 0
    %2016 = vmatpush1.bf16.msra.mxu0 0
    %2017 = vmatprep.subr.bf16.mxu0 0
    %2018 = vmatpush1.bf16.msra.mxu0 0
    %2019 = vmatprep.subr.bf16.mxu0 0
    %2020 = vmatpush1.bf16.msra.mxu0 0
    %2021 = vmatprep.subr.bf16.mxu0 0
    %2022 = vmatpush1.bf16.msra.mxu0 0
    %2023 = vmatprep.subr.bf16.mxu0 0
    %2024 = vmatpush1.bf16.msra.mxu0 0
    %2025 = vmatprep.subr.bf16.mxu0 0
    %2026 = vmatpush1.bf16.msra.mxu0 0
    %2027 = vmatprep.mubr.bf16.mxu0 0
    %2028 = vmatmul.mubr.bf16.gmra.mrb[0].mxu0 %v1990
    %v2029 = vpop.f32.mrb[0].mxu0
    %v2030 = vadd.f32 0.0, %v2029
    %v2031 = vpop.f32.mrb[0].mxu0
    %v2032 = vpop.f32.mrb[0].mxu0
    %v2033 = vpop.f32.mrb[0].mxu0
    %2034 = vdwg.mxu0
    %v2035 = vadd.f32 %v1468, %v1892
    %v2036 = vadd.f32 %v1514, %v1938
    %v2037 = vadd.f32 %v1560, %v1984
    %v2038 = vadd.f32 %v1606, %v2030
    %v2039 = vmul.f32 %v713, %v607
    %v2040 = vmul.f32 %v717, %v607
    %v2041 = vmul.f32 %v723, %v607
    %v2042 = vmul.f32 %v727, %v607
    %v2043 = vpack.c.bf16 %v2039, %v2039
    %v2044 = vpack.c.bf16 %v2040, %v2040
    %v2045 = vpack.c.bf16 %v2041, %v2041
    %v2046 = vpack.c.bf16 %v2042, %v2042
    %v2048 = vsel %vm671, %v2043, 0
    %2050 = vmatprep.subr.bf16.mxu0 0
    %2051 = vmatpush1.bf16.xpose.msra.mxu0 %v750
    %2052 = vmatprep.subr.bf16.mxu0 0
    %2053 = vmatpush1.bf16.xpose.msra.mxu0 0
    %2054 = vmatprep.subr.bf16.mxu0 0
    %2055 = vmatpush1.bf16.xpose.msra.mxu0 0
    %2056 = vmatprep.subr.bf16.mxu0 0
    %2057 = vmatpush1.bf16.xpose.msra.mxu0 0
    %2058 = vmatprep.subr.bf16.mxu0 0
    %2059 = vmatpush1.bf16.xpose.msra.mxu0 0
    %2060 = vmatprep.subr.bf16.mxu0 0
    %2061 = vmatpush1.bf16.xpose.msra.mxu0 0
    %2062 = vmatprep.subr.bf16.mxu0 0
    %2063 = vmatpush1.bf16.xpose.msra.mxu0 0
    %2064 = vmatprep.subr.bf16.mxu0 0
    %2065 = vmatpush1.bf16.xpose.msra.mxu0 0
    %2066 = vmatprep.subr.bf16.mxu0 0
    %2067 = vmatpush1.bf16.xpose.msra.mxu0 0
    %2068 = vmatprep.subr.bf16.mxu0 0
    %2069 = vmatpush1.bf16.xpose.msra.mxu0 0
    %2070 = vmatprep.subr.bf16.mxu0 0
    %2071 = vmatpush1.bf16.xpose.msra.mxu0 0
    %2072 = vmatprep.subr.bf16.mxu0 0
    %2073 = vmatpush1.bf16.xpose.msra.mxu0 0
    %2074 = vmatprep.subr.bf16.mxu0 0
    %2075 = vmatpush1.bf16.xpose.msra.mxu0 0
    %2076 = vmatprep.subr.bf16.mxu0 0
    %2077 = vmatpush1.bf16.xpose.msra.mxu0 0
    %2078 = vmatprep.subr.bf16.mxu0 0
    %2079 = vmatpush1.bf16.xpose.msra.mxu0 0
    %2080 = vmatprep.subr.bf16.mxu0 0
    %2081 = vmatpush1.bf16.xpose.msra.mxu0 0
    %2082 = vmatprep.mubr.bf16.mxu0 0
    %2083 = vmatmul.mubr.bf16.gmra.mrb[0].mxu0 %v2048
    %v2084 = vpop.f32.mrb[0].mxu0
    %v2085 = vadd.f32 0.0, %v2084
    %v2086 = vpop.f32.mrb[0].mxu0
    %v2087 = vpop.f32.mrb[0].mxu0
    %v2088 = vpop.f32.mrb[0].mxu0
    %2089 = vdwg.mxu0
    %v2091 = vsel %vm671, %v2044, 0
    %2093 = vmatprep.subr.bf16.mxu0 0
    %2094 = vmatpush1.bf16.xpose.msra.mxu0 %v799
    %2095 = vmatprep.subr.bf16.mxu0 0
    %2096 = vmatpush1.bf16.xpose.msra.mxu0 0
    %2097 = vmatprep.subr.bf16.mxu0 0
    %2098 = vmatpush1.bf16.xpose.msra.mxu0 0
    %2099 = vmatprep.subr.bf16.mxu0 0
    %2100 = vmatpush1.bf16.xpose.msra.mxu0 0
    %2101 = vmatprep.subr.bf16.mxu0 0
    %2102 = vmatpush1.bf16.xpose.msra.mxu0 0
    %2103 = vmatprep.subr.bf16.mxu0 0
    %2104 = vmatpush1.bf16.xpose.msra.mxu0 0
    %2105 = vmatprep.subr.bf16.mxu0 0
    %2106 = vmatpush1.bf16.xpose.msra.mxu0 0
    %2107 = vmatprep.subr.bf16.mxu0 0
    %2108 = vmatpush1.bf16.xpose.msra.mxu0 0
    %2109 = vmatprep.subr.bf16.mxu0 0
    %2110 = vmatpush1.bf16.xpose.msra.mxu0 0
    %2111 = vmatprep.subr.bf16.mxu0 0
    %2112 = vmatpush1.bf16.xpose.msra.mxu0 0
    %2113 = vmatprep.subr.bf16.mxu0 0
    %2114 = vmatpush1.bf16.xpose.msra.mxu0 0
    %2115 = vmatprep.subr.bf16.mxu0 0
    %2116 = vmatpush1.bf16.xpose.msra.mxu0 0
    %2117 = vmatprep.subr.bf16.mxu0 0
    %2118 = vmatpush1.bf16.xpose.msra.mxu0 0
    %2119 = vmatprep.subr.bf16.mxu0 0
    %2120 = vmatpush1.bf16.xpose.msra.mxu0 0
    %2121 = vmatprep.subr.bf16.mxu0 0
    %2122 = vmatpush1.bf16.xpose.msra.mxu0 0
    %2123 = vmatprep.subr.bf16.mxu0 0
    %2124 = vmatpush1.bf16.xpose.msra.mxu0 0
    %2125 = vmatprep.mubr.bf16.mxu0 0
    %2126 = vmatmul.mubr.bf16.gmra.mrb[0].mxu0 %v2091
    %v2127 = vpop.f32.mrb[0].mxu0
    %v2128 = vadd.f32 0.0, %v2127
    %v2129 = vpop.f32.mrb[0].mxu0
    %v2130 = vpop.f32.mrb[0].mxu0
    %v2131 = vpop.f32.mrb[0].mxu0
    %2132 = vdwg.mxu0
    %v2134 = vsel %vm671, %v2045, 0
    %2136 = vmatprep.subr.bf16.mxu0 0
    %2137 = vmatpush1.bf16.xpose.msra.mxu0 %v848
    %2138 = vmatprep.subr.bf16.mxu0 0
    %2139 = vmatpush1.bf16.xpose.msra.mxu0 0
    %2140 = vmatprep.subr.bf16.mxu0 0
    %2141 = vmatpush1.bf16.xpose.msra.mxu0 0
    %2142 = vmatprep.subr.bf16.mxu0 0
    %2143 = vmatpush1.bf16.xpose.msra.mxu0 0
    %2144 = vmatprep.subr.bf16.mxu0 0
    %2145 = vmatpush1.bf16.xpose.msra.mxu0 0
    %2146 = vmatprep.subr.bf16.mxu0 0
    %2147 = vmatpush1.bf16.xpose.msra.mxu0 0
    %2148 = vmatprep.subr.bf16.mxu0 0
    %2149 = vmatpush1.bf16.xpose.msra.mxu0 0
    %2150 = vmatprep.subr.bf16.mxu0 0
    %2151 = vmatpush1.bf16.xpose.msra.mxu0 0
    %2152 = vmatprep.subr.bf16.mxu0 0
    %2153 = vmatpush1.bf16.xpose.msra.mxu0 0
    %2154 = vmatprep.subr.bf16.mxu0 0
    %2155 = vmatpush1.bf16.xpose.msra.mxu0 0
    %2156 = vmatprep.subr.bf16.mxu0 0
    %2157 = vmatpush1.bf16.xpose.msra.mxu0 0
    %2158 = vmatprep.subr.bf16.mxu0 0
    %2159 = vmatpush1.bf16.xpose.msra.mxu0 0
    %2160 = vmatprep.subr.bf16.mxu0 0
    %2161 = vmatpush1.bf16.xpose.msra.mxu0 0
    %2162 = vmatprep.subr.bf16.mxu0 0
    %2163 = vmatpush1.bf16.xpose.msra.mxu0 0
    %2164 = vmatprep.subr.bf16.mxu0 0
    %2165 = vmatpush1.bf16.xpose.msra.mxu0 0
    %2166 = vmatprep.subr.bf16.mxu0 0
    %2167 = vmatpush1.bf16.xpose.msra.mxu0 0
    %2168 = vmatprep.mubr.bf16.mxu0 0
    %2169 = vmatmul.mubr.bf16.gmra.mrb[0].mxu0 %v2134
    %v2170 = vpop.f32.mrb[0].mxu0
    %v2171 = vadd.f32 0.0, %v2170
    %v2172 = vpop.f32.mrb[0].mxu0
    %v2173 = vpop.f32.mrb[0].mxu0
    %v2174 = vpop.f32.mrb[0].mxu0
    %2175 = vdwg.mxu0
    %v2177 = vsel %vm671, %v2046, 0
    %2179 = vmatprep.subr.bf16.mxu0 0
    %2180 = vmatpush1.bf16.xpose.msra.mxu0 %v897
    %2181 = vmatprep.subr.bf16.mxu0 0
    %2182 = vmatpush1.bf16.xpose.msra.mxu0 0
    %2183 = vmatprep.subr.bf16.mxu0 0
    %2184 = vmatpush1.bf16.xpose.msra.mxu0 0
    %2185 = vmatprep.subr.bf16.mxu0 0
    %2186 = vmatpush1.bf16.xpose.msra.mxu0 0
    %2187 = vmatprep.subr.bf16.mxu0 0
    %2188 = vmatpush1.bf16.xpose.msra.mxu0 0
    %2189 = vmatprep.subr.bf16.mxu0 0
    %2190 = vmatpush1.bf16.xpose.msra.mxu0 0
    %2191 = vmatprep.subr.bf16.mxu0 0
    %2192 = vmatpush1.bf16.xpose.msra.mxu0 0
    %2193 = vmatprep.subr.bf16.mxu0 0
    %2194 = vmatpush1.bf16.xpose.msra.mxu0 0
    %2195 = vmatprep.subr.bf16.mxu0 0
    %2196 = vmatpush1.bf16.xpose.msra.mxu0 0
    %2197 = vmatprep.subr.bf16.mxu0 0
    %2198 = vmatpush1.bf16.xpose.msra.mxu0 0
    %2199 = vmatprep.subr.bf16.mxu0 0
    %2200 = vmatpush1.bf16.xpose.msra.mxu0 0
    %2201 = vmatprep.subr.bf16.mxu0 0
    %2202 = vmatpush1.bf16.xpose.msra.mxu0 0
    %2203 = vmatprep.subr.bf16.mxu0 0
    %2204 = vmatpush1.bf16.xpose.msra.mxu0 0
    %2205 = vmatprep.subr.bf16.mxu0 0
    %2206 = vmatpush1.bf16.xpose.msra.mxu0 0
    %2207 = vmatprep.subr.bf16.mxu0 0
    %2208 = vmatpush1.bf16.xpose.msra.mxu0 0
    %2209 = vmatprep.subr.bf16.mxu0 0
    %2210 = vmatpush1.bf16.xpose.msra.mxu0 0
    %2211 = vmatprep.mubr.bf16.mxu0 0
    %2212 = vmatmul.mubr.bf16.gmra.mrb[0].mxu0 %v2177
    %v2213 = vpop.f32.mrb[0].mxu0
    %v2214 = vadd.f32 0.0, %v2213
    %v2215 = vpop.f32.mrb[0].mxu0
    %v2216 = vpop.f32.mrb[0].mxu0
    %v2217 = vpop.f32.mrb[0].mxu0
    %2218 = vdwg.mxu0
    %v2219 = vsel %vm940, -1e+30, %v2085
    %v2220 = vsel %vm940, -1e+30, %v2128
    %v2221 = vsel %vm940, -1e+30, %v2171
    %v2222 = vsel %vm940, -1e+30, %v2214
    %v2223 = vsel %vm945, %v2219, -inf
    %2224 = vmax.xlane.f32.xlu0 %v2223
    %v2225 = vpop.xlane.xlu0 %2224
    %v2226 = vsel %vm945, %v2220, -inf
    %2227 = vmax.xlane.f32.xlu0 %v2226
    %v2228 = vpop.xlane.xlu0 %2227
    %v2229 = vsel %vm945, %v2221, -inf
    %2230 = vmax.xlane.f32.xlu0 %v2229
    %v2231 = vpop.xlane.xlu0 %2230
    %v2232 = vsel %vm945, %v2222, -inf
    %2233 = vmax.xlane.f32.xlu0 %v2232
    %v2234 = vpop.xlane.xlu0 %2233
    %v2235 = vsub.f32 %v2219, %v2225
    %v2236 = vsub.f32 %v2220, %v2228
    %v2237 = vsub.f32 %v2221, %v2231
    %v2238 = vsub.f32 %v2222, %v2234
    %v2239 = vmul.f32 %v2235, 1.442695
    %v2240 = vpow.pop %v2239
    %v2241 = vmul.f32 %v2236, 1.442695
    %v2242 = vpow.pop %v2241
    %v2243 = vmul.f32 %v2237, 1.442695
    %v2244 = vpow.pop %v2243
    %v2245 = vmul.f32 %v2238, 1.442695
    %v2246 = vpow.pop %v2245
    %v2247 = vsel %vm945, %v2240, 0.0
    %2248 = vadd.xlane.f32.xlu0 %v2247
    %v2249 = vpop.xlane.xlu0 %2248
    %v2250 = vsel %vm945, %v2242, 0.0
    %2251 = vadd.xlane.f32.xlu0 %v2250
    %v2252 = vpop.xlane.xlu0 %2251
    %v2253 = vsel %vm945, %v2244, 0.0
    %2254 = vadd.xlane.f32.xlu0 %v2253
    %v2255 = vpop.xlane.xlu0 %2254
    %v2256 = vsel %vm945, %v2246, 0.0
    %2257 = vadd.xlane.f32.xlu0 %v2256
    %v2258 = vpop.xlane.xlu0 %2257
    %v2259 = vrcp.pop %v2249
    %v2260 = vrcp.pop %v2252
    %v2261 = vrcp.pop %v2255
    %v2262 = vrcp.pop %v2258
    %v2263 = vmul.f32 %v2240, %v2259
    %v2264 = vmul.f32 %v2242, %v2260
    %v2265 = vmul.f32 %v2244, %v2261
    %v2266 = vmul.f32 %v2246, %v2262
    %v2267 = vmul.f32 %v715, %v607
    %v2268 = vmul.f32 %v719, %v607
    %v2269 = vmul.f32 %v725, %v607
    %v2270 = vmul.f32 %v729, %v607
    %v2271 = vpack.c.bf16 %v2267, %v2267
    %v2272 = vpack.c.bf16 %v2268, %v2268
    %v2273 = vpack.c.bf16 %v2269, %v2269
    %v2274 = vpack.c.bf16 %v2270, %v2270
    %v2275 = vpack.c.bf16 %v2263, %v2263
    %v2276 = vpack.c.bf16 %v2264, %v2264
    %v2277 = vpack.c.bf16 %v2265, %v2265
    %v2278 = vpack.c.bf16 %v2266, %v2266
    %v2280 = vsel %vm945, %v2275, 0
    %v2283 = vsel %vm1245, %v2271, 0
    %2285 = vmatprep.subr.bf16.mxu0 0
    %2286 = vmatpush1.bf16.msra.mxu0 %v2283
    %2287 = vmatprep.subr.bf16.mxu0 0
    %2288 = vmatpush1.bf16.msra.mxu0 0
    %2289 = vmatprep.subr.bf16.mxu0 0
    %2290 = vmatpush1.bf16.msra.mxu0 0
    %2291 = vmatprep.subr.bf16.mxu0 0
    %2292 = vmatpush1.bf16.msra.mxu0 0
    %2293 = vmatprep.subr.bf16.mxu0 0
    %2294 = vmatpush1.bf16.msra.mxu0 0
    %2295 = vmatprep.subr.bf16.mxu0 0
    %2296 = vmatpush1.bf16.msra.mxu0 0
    %2297 = vmatprep.subr.bf16.mxu0 0
    %2298 = vmatpush1.bf16.msra.mxu0 0
    %2299 = vmatprep.subr.bf16.mxu0 0
    %2300 = vmatpush1.bf16.msra.mxu0 0
    %2301 = vmatprep.subr.bf16.mxu0 0
    %2302 = vmatpush1.bf16.msra.mxu0 0
    %2303 = vmatprep.subr.bf16.mxu0 0
    %2304 = vmatpush1.bf16.msra.mxu0 0
    %2305 = vmatprep.subr.bf16.mxu0 0
    %2306 = vmatpush1.bf16.msra.mxu0 0
    %2307 = vmatprep.subr.bf16.mxu0 0
    %2308 = vmatpush1.bf16.msra.mxu0 0
    %2309 = vmatprep.subr.bf16.mxu0 0
    %2310 = vmatpush1.bf16.msra.mxu0 0
    %2311 = vmatprep.subr.bf16.mxu0 0
    %2312 = vmatpush1.bf16.msra.mxu0 0
    %2313 = vmatprep.subr.bf16.mxu0 0
    %2314 = vmatpush1.bf16.msra.mxu0 0
    %2315 = vmatprep.subr.bf16.mxu0 0
    %2316 = vmatpush1.bf16.msra.mxu0 0
    %2317 = vmatprep.mubr.bf16.mxu0 0
    %2318 = vmatmul.mubr.bf16.gmra.mrb[0].mxu0 %v2280
    %v2319 = vpop.f32.mrb[0].mxu0
    %v2320 = vadd.f32 0.0, %v2319
    %v2321 = vpop.f32.mrb[0].mxu0
    %v2322 = vpop.f32.mrb[0].mxu0
    %v2323 = vpop.f32.mrb[0].mxu0
    %2324 = vdwg.mxu0
    %v2326 = vsel %vm945, %v2276, 0
    %v2329 = vsel %vm1245, %v2272, 0
    %2331 = vmatprep.subr.bf16.mxu0 0
    %2332 = vmatpush1.bf16.msra.mxu0 %v2329
    %2333 = vmatprep.subr.bf16.mxu0 0
    %2334 = vmatpush1.bf16.msra.mxu0 0
    %2335 = vmatprep.subr.bf16.mxu0 0
    %2336 = vmatpush1.bf16.msra.mxu0 0
    %2337 = vmatprep.subr.bf16.mxu0 0
    %2338 = vmatpush1.bf16.msra.mxu0 0
    %2339 = vmatprep.subr.bf16.mxu0 0
    %2340 = vmatpush1.bf16.msra.mxu0 0
    %2341 = vmatprep.subr.bf16.mxu0 0
    %2342 = vmatpush1.bf16.msra.mxu0 0
    %2343 = vmatprep.subr.bf16.mxu0 0
    %2344 = vmatpush1.bf16.msra.mxu0 0
    %2345 = vmatprep.subr.bf16.mxu0 0
    %2346 = vmatpush1.bf16.msra.mxu0 0
    %2347 = vmatprep.subr.bf16.mxu0 0
    %2348 = vmatpush1.bf16.msra.mxu0 0
    %2349 = vmatprep.subr.bf16.mxu0 0
    %2350 = vmatpush1.bf16.msra.mxu0 0
    %2351 = vmatprep.subr.bf16.mxu0 0
    %2352 = vmatpush1.bf16.msra.mxu0 0
    %2353 = vmatprep.subr.bf16.mxu0 0
    %2354 = vmatpush1.bf16.msra.mxu0 0
    %2355 = vmatprep.subr.bf16.mxu0 0
    %2356 = vmatpush1.bf16.msra.mxu0 0
    %2357 = vmatprep.subr.bf16.mxu0 0
    %2358 = vmatpush1.bf16.msra.mxu0 0
    %2359 = vmatprep.subr.bf16.mxu0 0
    %2360 = vmatpush1.bf16.msra.mxu0 0
    %2361 = vmatprep.subr.bf16.mxu0 0
    %2362 = vmatpush1.bf16.msra.mxu0 0
    %2363 = vmatprep.mubr.bf16.mxu0 0
    %2364 = vmatmul.mubr.bf16.gmra.mrb[0].mxu0 %v2326
    %v2365 = vpop.f32.mrb[0].mxu0
    %v2366 = vadd.f32 0.0, %v2365
    %v2367 = vpop.f32.mrb[0].mxu0
    %v2368 = vpop.f32.mrb[0].mxu0
    %v2369 = vpop.f32.mrb[0].mxu0
    %2370 = vdwg.mxu0
    %v2372 = vsel %vm945, %v2277, 0
    %v2375 = vsel %vm1245, %v2273, 0
    %2377 = vmatprep.subr.bf16.mxu0 0
    %2378 = vmatpush1.bf16.msra.mxu0 %v2375
    %2379 = vmatprep.subr.bf16.mxu0 0
    %2380 = vmatpush1.bf16.msra.mxu0 0
    %2381 = vmatprep.subr.bf16.mxu0 0
    %2382 = vmatpush1.bf16.msra.mxu0 0
    %2383 = vmatprep.subr.bf16.mxu0 0
    %2384 = vmatpush1.bf16.msra.mxu0 0
    %2385 = vmatprep.subr.bf16.mxu0 0
    %2386 = vmatpush1.bf16.msra.mxu0 0
    %2387 = vmatprep.subr.bf16.mxu0 0
    %2388 = vmatpush1.bf16.msra.mxu0 0
    %2389 = vmatprep.subr.bf16.mxu0 0
    %2390 = vmatpush1.bf16.msra.mxu0 0
    %2391 = vmatprep.subr.bf16.mxu0 0
    %2392 = vmatpush1.bf16.msra.mxu0 0
    %2393 = vmatprep.subr.bf16.mxu0 0
    %2394 = vmatpush1.bf16.msra.mxu0 0
    %2395 = vmatprep.subr.bf16.mxu0 0
    %2396 = vmatpush1.bf16.msra.mxu0 0
    %2397 = vmatprep.subr.bf16.mxu0 0
    %2398 = vmatpush1.bf16.msra.mxu0 0
    %2399 = vmatprep.subr.bf16.mxu0 0
    %2400 = vmatpush1.bf16.msra.mxu0 0
    %2401 = vmatprep.subr.bf16.mxu0 0
    %2402 = vmatpush1.bf16.msra.mxu0 0
    %2403 = vmatprep.subr.bf16.mxu0 0
    %2404 = vmatpush1.bf16.msra.mxu0 0
    %2405 = vmatprep.subr.bf16.mxu0 0
    %2406 = vmatpush1.bf16.msra.mxu0 0
    %2407 = vmatprep.subr.bf16.mxu0 0
    %2408 = vmatpush1.bf16.msra.mxu0 0
    %2409 = vmatprep.mubr.bf16.mxu0 0
    %2410 = vmatmul.mubr.bf16.gmra.mrb[0].mxu0 %v2372
    %v2411 = vpop.f32.mrb[0].mxu0
    %v2412 = vadd.f32 0.0, %v2411
    %v2413 = vpop.f32.mrb[0].mxu0
    %v2414 = vpop.f32.mrb[0].mxu0
    %v2415 = vpop.f32.mrb[0].mxu0
    %2416 = vdwg.mxu0
    %v2418 = vsel %vm945, %v2278, 0
    %v2421 = vsel %vm1245, %v2274, 0
    %2423 = vmatprep.subr.bf16.mxu0 0
    %2424 = vmatpush1.bf16.msra.mxu0 %v2421
    %2425 = vmatprep.subr.bf16.mxu0 0
    %2426 = vmatpush1.bf16.msra.mxu0 0
    %2427 = vmatprep.subr.bf16.mxu0 0
    %2428 = vmatpush1.bf16.msra.mxu0 0
    %2429 = vmatprep.subr.bf16.mxu0 0
    %2430 = vmatpush1.bf16.msra.mxu0 0
    %2431 = vmatprep.subr.bf16.mxu0 0
    %2432 = vmatpush1.bf16.msra.mxu0 0
    %2433 = vmatprep.subr.bf16.mxu0 0
    %2434 = vmatpush1.bf16.msra.mxu0 0
    %2435 = vmatprep.subr.bf16.mxu0 0
    %2436 = vmatpush1.bf16.msra.mxu0 0
    %2437 = vmatprep.subr.bf16.mxu0 0
    %2438 = vmatpush1.bf16.msra.mxu0 0
    %2439 = vmatprep.subr.bf16.mxu0 0
    %2440 = vmatpush1.bf16.msra.mxu0 0
    %2441 = vmatprep.subr.bf16.mxu0 0
    %2442 = vmatpush1.bf16.msra.mxu0 0
    %2443 = vmatprep.subr.bf16.mxu0 0
    %2444 = vmatpush1.bf16.msra.mxu0 0
    %2445 = vmatprep.subr.bf16.mxu0 0
    %2446 = vmatpush1.bf16.msra.mxu0 0
    %2447 = vmatprep.subr.bf16.mxu0 0
    %2448 = vmatpush1.bf16.msra.mxu0 0
    %2449 = vmatprep.subr.bf16.mxu0 0
    %2450 = vmatpush1.bf16.msra.mxu0 0
    %2451 = vmatprep.subr.bf16.mxu0 0
    %2452 = vmatpush1.bf16.msra.mxu0 0
    %2453 = vmatprep.subr.bf16.mxu0 0
    %2454 = vmatpush1.bf16.msra.mxu0 0
    %2455 = vmatprep.mubr.bf16.mxu0 0
    %2456 = vmatmul.mubr.bf16.gmra.mrb[0].mxu0 %v2418
    %v2457 = vpop.f32.mrb[0].mxu0
    %v2458 = vadd.f32 0.0, %v2457
    %v2459 = vpop.f32.mrb[0].mxu0
    %v2460 = vpop.f32.mrb[0].mxu0
    %v2461 = vpop.f32.mrb[0].mxu0
    %2462 = vdwg.mxu0
    %v2463 = vadd.f32 %v2035, %v2320
    %v2464 = vadd.f32 %v2036, %v2366
    %v2465 = vadd.f32 %v2037, %v2412
    %v2466 = vadd.f32 %v2038, %v2458
    %v2467 = vpack.c.bf16 %v2464, %v2463
    %v2468 = vpack.c.bf16 %v2466, %v2465
    %v2469 = vld [vmem:[#allocation7] sm:$0xf]
    %v2470 = vld [vmem:[#allocation7 + $0x4] sm:$0xf]
    %v2471 = vld [vmem:[#allocation7 + $0x8] sm:$0xf]
    %v2472 = vld [vmem:[#allocation7 + $0xc] sm:$0xf]
    %v2473 = vld [vmem:[#allocation7 + $0x10] sm:$0xf]
    %v2474 = vld [vmem:[#allocation7 + $0x14] sm:$0xf]
    %v2475 = vld [vmem:[#allocation7 + $0x18] sm:$0xf]
    %v2476 = vld [vmem:[#allocation7 + $0x1c] sm:$0xf]
    %v2477 = vld [vmem:[#allocation8] sm:$0x1]
    %v2479 = vlaneseq
    %v2480 = vshrl.u32 %v2479, 7
    %v2481 = vsub.s32 0, %v2480
    %v2482 = vrot.slane %v2477, %v2481
    %v2492 = vunpack.c.l.b16 %v2469
    %v2493 = vunpack.c.l.b16 %v2470
    %v2494 = vunpack.c.l.b16 %v2471
    %v2495 = vunpack.c.l.b16 %v2472
    %v2496 = vunpack.c.l.b16 %v2473
    %v2497 = vunpack.c.l.b16 %v2474
    %v2498 = vunpack.c.l.b16 %v2475
    %v2499 = vunpack.c.l.b16 %v2476
    %v2500 = vpack.c.b16 %v2493, %v2492
    %v2501 = vpack.c.b16 %v2495, %v2494
    %v2502 = vpack.c.b16 %v2497, %v2496
    %v2503 = vpack.c.b16 %v2499, %v2498
    %v2509 = vsel %vm671, %v2467, 0
    %v2512 = vsel %vm671, %v2468, 0
    %2514 = vmatprep.subr.bf16.mxu0 0
    %2515 = vmatpush1.bf16.msra.mxu0 %v2500
    %2516 = vmatprep.subr.bf16.mxu0 0
    %2517 = vmatpush1.bf16.msra.mxu0 %v2501
    %2518 = vmatprep.subr.bf16.mxu0 0
    %2519 = vmatpush1.bf16.msra.mxu0 %v2502
    %2520 = vmatprep.subr.bf16.mxu0 0
    %2521 = vmatpush1.bf16.msra.mxu0 %v2503
    %2522 = vmatprep.subr.bf16.mxu0 0
    %2523 = vmatpush1.bf16.msra.mxu0 0
    %2524 = vmatprep.subr.bf16.mxu0 0
    %2525 = vmatpush1.bf16.msra.mxu0 0
    %2526 = vmatprep.subr.bf16.mxu0 0
    %2527 = vmatpush1.bf16.msra.mxu0 0
    %2528 = vmatprep.subr.bf16.mxu0 0
    %2529 = vmatpush1.bf16.msra.mxu0 0
    %2530 = vmatprep.subr.bf16.mxu0 0
    %2531 = vmatpush1.bf16.msra.mxu0 0
    %2532 = vmatprep.subr.bf16.mxu0 0
    %2533 = vmatpush1.bf16.msra.mxu0 0
    %2534 = vmatprep.subr.bf16.mxu0 0
    %2535 = vmatpush1.bf16.msra.mxu0 0
    %2536 = vmatprep.subr.bf16.mxu0 0
    %2537 = vmatpush1.bf16.msra.mxu0 0
    %2538 = vmatprep.subr.bf16.mxu0 0
    %2539 = vmatpush1.bf16.msra.mxu0 0
    %2540 = vmatprep.subr.bf16.mxu0 0
    %2541 = vmatpush1.bf16.msra.mxu0 0
    %2542 = vmatprep.subr.bf16.mxu0 0
    %2543 = vmatpush1.bf16.msra.mxu0 0
    %2544 = vmatprep.subr.bf16.mxu0 0
    %2545 = vmatpush1.bf16.msra.mxu0 0
    %2546 = vmatprep.mubr.bf16.mxu0 0
    %2547 = vmatmul.mubr.bf16.gmra.mrb[0].mxu0 %v2509
    %v2548 = vpop.f32.mrb[0].mxu0
    %v2549 = vadd.f32 %v2482, %v2548
    %v2550 = vpop.f32.mrb[0].mxu0
    %v2551 = vpop.f32.mrb[0].mxu0
    %v2552 = vadd.f32 %v2482, %v2551
    %v2553 = vpop.f32.mrb[0].mxu0
    %2554 = vmatprep.mubr.bf16.mxu0 0
    %2555 = vmatmul.mubr.bf16.gmra.mrb[0].mxu0 %v2512
    %v2556 = vpop.f32.mrb[0].mxu0
    %v2557 = vadd.f32 %v2482, %v2556
    %v2558 = vpop.f32.mrb[0].mxu0
    %v2559 = vpop.f32.mrb[0].mxu0
    %v2560 = vadd.f32 %v2482, %v2559
    %v2561 = vpop.f32.mrb[0].mxu0
    %2562 = vdwg.mxu0
    %v2563 = vadd.f32 %v580, %v2549
    %v2564 = vadd.f32 %v581, %v2552
    %v2565 = vadd.f32 %v582, %v2557
    %v2566 = vadd.f32 %v583, %v2560
    %v2567 = vld [vmem:[#allocation19] sm:$0x1]
    %v2568 = vld [vmem:[#allocation20] sm:$0x1]
    %v2569 = vsel %vm671, %v2563, 0.0
    %2570 = vadd.xlane.f32.xlu0 %v2569
    %v2571 = vpop.xlane.xlu0 %2570
    %v2572 = vsel %vm671, %v2564, 0.0
    %2573 = vadd.xlane.f32.xlu0 %v2572
    %v2574 = vpop.xlane.xlu0 %2573
    %v2575 = vsel %vm671, %v2565, 0.0
    %2576 = vadd.xlane.f32.xlu0 %v2575
    %v2577 = vpop.xlane.xlu0 %2576
    %v2578 = vsel %vm671, %v2566, 0.0
    %2579 = vadd.xlane.f32.xlu0 %v2578
    %v2580 = vpop.xlane.xlu0 %2579
    %v2581 = vrcp.pop 64.0
    %v2582 = vmul.f32 %v2571, %v2581
    %v2583 = vmul.f32 %v2574, %v2581
    %v2584 = vmul.f32 %v2577, %v2581
    %v2585 = vmul.f32 %v2580, %v2581
    %v2586 = vsub.f32 %v2563, %v2582
    %v2587 = vsub.f32 %v2564, %v2583
    %v2588 = vsub.f32 %v2565, %v2584
    %v2589 = vsub.f32 %v2566, %v2585
    %v2590 = vmul.f32 %v2586, %v2586
    %v2591 = vmul.f32 %v2587, %v2587
    %v2592 = vmul.f32 %v2588, %v2588
    %v2593 = vmul.f32 %v2589, %v2589
    %v2594 = vsel %vm671, %v2590, 0.0
    %2595 = vadd.xlane.f32.xlu0 %v2594
    %v2596 = vpop.xlane.xlu0 %2595
    %v2597 = vsel %vm671, %v2591, 0.0
    %2598 = vadd.xlane.f32.xlu0 %v2597
    %v2599 = vpop.xlane.xlu0 %2598
    %v2600 = vsel %vm671, %v2592, 0.0
    %2601 = vadd.xlane.f32.xlu0 %v2600
    %v2602 = vpop.xlane.xlu0 %2601
    %v2603 = vsel %vm671, %v2593, 0.0
    %2604 = vadd.xlane.f32.xlu0 %v2603
    %v2605 = vpop.xlane.xlu0 %2604
    %v2606 = vmul.f32 %v2596, %v2581
    %v2607 = vmul.f32 %v2599, %v2581
    %v2608 = vmul.f32 %v2602, %v2581
    %v2609 = vmul.f32 %v2605, %v2581
    %v2610 = vadd.f32 %v2606, 1e-05
    %v2611 = vadd.f32 %v2607, 1e-05
    %v2612 = vadd.f32 %v2608, 1e-05
    %v2613 = vadd.f32 %v2609, 1e-05
    %v2614 = vrsqrt.pop %v2610
    %v2615 = vrsqrt.pop %v2611
    %v2616 = vrsqrt.pop %v2612
    %v2617 = vrsqrt.pop %v2613
    %v2618 = vmul.f32 %v2586, %v2614
    %v2619 = vmul.f32 %v2587, %v2615
    %v2620 = vmul.f32 %v2588, %v2616
    %v2621 = vmul.f32 %v2589, %v2617
    %v2623 = vlaneseq
    %v2624 = vshrl.u32 %v2623, 7
    %v2625 = vsub.s32 0, %v2624
    %v2626 = vrot.slane %v2567, %v2625
    %v2628 = vmul.f32 %v2618, %v2626
    %v2629 = vmul.f32 %v2619, %v2626
    %v2630 = vmul.f32 %v2620, %v2626
    %v2631 = vmul.f32 %v2621, %v2626
    %v2633 = vlaneseq
    %v2634 = vshrl.u32 %v2633, 7
    %v2635 = vsub.s32 0, %v2634
    %v2636 = vrot.slane %v2568, %v2635
    %v2638 = vadd.f32 %v2628, %v2636
    %v2639 = vadd.f32 %v2629, %v2636
    %v2640 = vadd.f32 %v2630, %v2636
    %v2641 = vadd.f32 %v2631, %v2636
    %v2642 = vpack.c.bf16 %v2639, %v2638
    %v2643 = vpack.c.bf16 %v2641, %v2640
    %v2644 = vld [vmem:[#allocation10] sm:$0xf]
    %v2645 = vld [vmem:[#allocation10 + $0x4] sm:$0xf]
    %v2646 = vld [vmem:[#allocation10 + $0x8] sm:$0xf]
    %v2647 = vld [vmem:[#allocation10 + $0xc] sm:$0xf]
    %v2648 = vld [vmem:[#allocation10 + $0x10] sm:$0xf]
    %v2649 = vld [vmem:[#allocation10 + $0x14] sm:$0xf]
    %v2650 = vld [vmem:[#allocation10 + $0x18] sm:$0xf]
    %v2651 = vld [vmem:[#allocation10 + $0x1c] sm:$0xf]
    %v2652 = vld [vmem:[#allocation11] sm:$0x1]
    %v2654 = vlaneseq
    %v2655 = vshrl.u32 %v2654, 7
    %v2656 = vsub.s32 0, %v2655
    %v2657 = vrot.slane %v2652, %v2656
    %v2667 = vunpack.c.l.b16 %v2644
    %v2668 = vunpack.c.l.b16 %v2645
    %v2669 = vunpack.c.l.b16 %v2646
    %v2670 = vunpack.c.l.b16 %v2647
    %v2671 = vunpack.c.l.b16 %v2648
    %v2672 = vunpack.c.l.b16 %v2649
    %v2673 = vunpack.c.l.b16 %v2650
    %v2674 = vunpack.c.l.b16 %v2651
    %v2675 = vpack.c.b16 %v2668, %v2667
    %v2676 = vpack.c.b16 %v2670, %v2669
    %v2677 = vpack.c.b16 %v2672, %v2671
    %v2678 = vpack.c.b16 %v2674, %v2673
    %v2684 = vsel %vm671, %v2642, 0
    %v2687 = vsel %vm671, %v2643, 0
    %2689 = vmatprep.subr.bf16.mxu0 0
    %2690 = vmatpush1.bf16.msra.mxu0 %v2675
    %2691 = vmatprep.subr.bf16.mxu0 0
    %2692 = vmatpush1.bf16.msra.mxu0 %v2676
    %2693 = vmatprep.subr.bf16.mxu0 0
    %2694 = vmatpush1.bf16.msra.mxu0 %v2677
    %2695 = vmatprep.subr.bf16.mxu0 0
    %2696 = vmatpush1.bf16.msra.mxu0 %v2678
    %2697 = vmatprep.subr.bf16.mxu0 0
    %2698 = vmatpush1.bf16.msra.mxu0 0
    %2699 = vmatprep.subr.bf16.mxu0 0
    %2700 = vmatpush1.bf16.msra.mxu0 0
    %2701 = vmatprep.subr.bf16.mxu0 0
    %2702 = vmatpush1.bf16.msra.mxu0 0
    %2703 = vmatprep.subr.bf16.mxu0 0
    %2704 = vmatpush1.bf16.msra.mxu0 0
    %2705 = vmatprep.subr.bf16.mxu0 0
    %2706 = vmatpush1.bf16.msra.mxu0 0
    %2707 = vmatprep.subr.bf16.mxu0 0
    %2708 = vmatpush1.bf16.msra.mxu0 0
    %2709 = vmatprep.subr.bf16.mxu0 0
    %2710 = vmatpush1.bf16.msra.mxu0 0
    %2711 = vmatprep.subr.bf16.mxu0 0
    %2712 = vmatpush1.bf16.msra.mxu0 0
    %2713 = vmatprep.subr.bf16.mxu0 0
    %2714 = vmatpush1.bf16.msra.mxu0 0
    %2715 = vmatprep.subr.bf16.mxu0 0
    %2716 = vmatpush1.bf16.msra.mxu0 0
    %2717 = vmatprep.subr.bf16.mxu0 0
    %2718 = vmatpush1.bf16.msra.mxu0 0
    %2719 = vmatprep.subr.bf16.mxu0 0
    %2720 = vmatpush1.bf16.msra.mxu0 0
    %2721 = vmatprep.mubr.bf16.mxu0 0
    %2722 = vmatmul.mubr.bf16.gmra.mrb[0].mxu0 %v2684
    %v2723 = vpop.f32.mrb[0].mxu0
    %v2724 = vadd.f32 %v2657, %v2723
    %v2725 = vpop.f32.mrb[0].mxu0
    %v2726 = vpop.f32.mrb[0].mxu0
    %v2727 = vadd.f32 %v2657, %v2726
    %v2728 = vpop.f32.mrb[0].mxu0
    %2729 = vmatprep.mubr.bf16.mxu0 0
    %2730 = vmatmul.mubr.bf16.gmra.mrb[0].mxu0 %v2687
    %v2731 = vpop.f32.mrb[0].mxu0
    %v2732 = vadd.f32 %v2657, %v2731
    %v2733 = vpop.f32.mrb[0].mxu0
    %v2734 = vpop.f32.mrb[0].mxu0
    %v2735 = vadd.f32 %v2657, %v2734
    %v2736 = vpop.f32.mrb[0].mxu0
    %2737 = vdwg.mxu0
    %v2738 = vld [vmem:[#allocation13] sm:$0xf]
    %v2739 = vld [vmem:[#allocation13 + $0x4] sm:$0xf]
    %v2740 = vld [vmem:[#allocation13 + $0x8] sm:$0xf]
    %v2741 = vld [vmem:[#allocation13 + $0xc] sm:$0xf]
    %v2742 = vld [vmem:[#allocation13 + $0x10] sm:$0xf]
    %v2743 = vld [vmem:[#allocation13 + $0x14] sm:$0xf]
    %v2744 = vld [vmem:[#allocation13 + $0x18] sm:$0xf]
    %v2745 = vld [vmem:[#allocation13 + $0x1c] sm:$0xf]
    %v2746 = vld [vmem:[#allocation14] sm:$0x1]
    %v2748 = vlaneseq
    %v2749 = vshrl.u32 %v2748, 7
    %v2750 = vsub.s32 0, %v2749
    %v2751 = vrot.slane %v2746, %v2750
    %v2761 = vunpack.c.l.b16 %v2738
    %v2762 = vunpack.c.l.b16 %v2739
    %v2763 = vunpack.c.l.b16 %v2740
    %v2764 = vunpack.c.l.b16 %v2741
    %v2765 = vunpack.c.l.b16 %v2742
    %v2766 = vunpack.c.l.b16 %v2743
    %v2767 = vunpack.c.l.b16 %v2744
    %v2768 = vunpack.c.l.b16 %v2745
    %v2769 = vpack.c.b16 %v2762, %v2761
    %v2770 = vpack.c.b16 %v2764, %v2763
    %v2771 = vpack.c.b16 %v2766, %v2765
    %v2772 = vpack.c.b16 %v2768, %v2767
    %2777 = vmatprep.subr.bf16.mxu0 0
    %2778 = vmatpush1.bf16.msra.mxu0 %v2769
    %2779 = vmatprep.subr.bf16.mxu0 0
    %2780 = vmatpush1.bf16.msra.mxu0 %v2770
    %2781 = vmatprep.subr.bf16.mxu0 0
    %2782 = vmatpush1.bf16.msra.mxu0 %v2771
    %2783 = vmatprep.subr.bf16.mxu0 0
    %2784 = vmatpush1.bf16.msra.mxu0 %v2772
    %2785 = vmatprep.subr.bf16.mxu0 0
    %2786 = vmatpush1.bf16.msra.mxu0 0
    %2787 = vmatprep.subr.bf16.mxu0 0
    %2788 = vmatpush1.bf16.msra.mxu0 0
    %2789 = vmatprep.subr.bf16.mxu0 0
    %2790 = vmatpush1.bf16.msra.mxu0 0
    %2791 = vmatprep.subr.bf16.mxu0 0
    %2792 = vmatpush1.bf16.msra.mxu0 0
    %2793 = vmatprep.subr.bf16.mxu0 0
    %2794 = vmatpush1.bf16.msra.mxu0 0
    %2795 = vmatprep.subr.bf16.mxu0 0
    %2796 = vmatpush1.bf16.msra.mxu0 0
    %2797 = vmatprep.subr.bf16.mxu0 0
    %2798 = vmatpush1.bf16.msra.mxu0 0
    %2799 = vmatprep.subr.bf16.mxu0 0
    %2800 = vmatpush1.bf16.msra.mxu0 0
    %2801 = vmatprep.subr.bf16.mxu0 0
    %2802 = vmatpush1.bf16.msra.mxu0 0
    %2803 = vmatprep.subr.bf16.mxu0 0
    %2804 = vmatpush1.bf16.msra.mxu0 0
    %2805 = vmatprep.subr.bf16.mxu0 0
    %2806 = vmatpush1.bf16.msra.mxu0 0
    %2807 = vmatprep.subr.bf16.mxu0 0
    %2808 = vmatpush1.bf16.msra.mxu0 0
    %2809 = vmatprep.mubr.bf16.mxu0 0
    %2810 = vmatmul.mubr.bf16.gmra.mrb[0].mxu0 %v673
    %v2811 = vpop.f32.mrb[0].mxu0
    %v2812 = vadd.f32 %v2751, %v2811
    %v2813 = vpop.f32.mrb[0].mxu0
    %v2814 = vpop.f32.mrb[0].mxu0
    %v2815 = vadd.f32 %v2751, %v2814
    %v2816 = vpop.f32.mrb[0].mxu0
    %2817 = vmatprep.mubr.bf16.mxu0 0
    %2818 = vmatmul.mubr.bf16.gmra.mrb[0].mxu0 %v676
    %v2819 = vpop.f32.mrb[0].mxu0
    %v2820 = vadd.f32 %v2751, %v2819
    %v2821 = vpop.f32.mrb[0].mxu0
    %v2822 = vpop.f32.mrb[0].mxu0
    %v2823 = vadd.f32 %v2751, %v2822
    %v2824 = vpop.f32.mrb[0].mxu0
    %2825 = vdwg.mxu0
    %v2826 = vpack.c.bf16 %v2812, %v2812
    %v2827 = vpack.c.bf16 %v2815, %v2815
    %v2828 = vpack.c.bf16 %v2820, %v2820
    %v2829 = vpack.c.bf16 %v2823, %v2823
    %v2830 = vmul.f32 %v2724, %v592
    %v2831 = vmul.f32 %v2727, %v592
    %v2832 = vmul.f32 %v2732, %v592
    %v2833 = vmul.f32 %v2735, %v592
    %v2834 = vpack.c.bf16 %v2830, %v2830
    %v2835 = vpack.c.bf16 %v2831, %v2831
    %v2836 = vpack.c.bf16 %v2832, %v2832
    %v2837 = vpack.c.bf16 %v2833, %v2833
    %v2839 = vsel %vm671, %v2834, 0
    %v2842 = vsel %vm671, %v2826, 0
    %2844 = vmatprep.subr.bf16.mxu0 0
    %2845 = vmatpush1.bf16.xpose.msra.mxu0 %v2842
    %2846 = vmatprep.subr.bf16.mxu0 0
    %2847 = vmatpush1.bf16.xpose.msra.mxu0 0
    %2848 = vmatprep.subr.bf16.mxu0 0
    %2849 = vmatpush1.bf16.xpose.msra.mxu0 0
    %2850 = vmatprep.subr.bf16.mxu0 0
    %2851 = vmatpush1.bf16.xpose.msra.mxu0 0
    %2852 = vmatprep.subr.bf16.mxu0 0
    %2853 = vmatpush1.bf16.xpose.msra.mxu0 0
    %2854 = vmatprep.subr.bf16.mxu0 0
    %2855 = vmatpush1.bf16.xpose.msra.mxu0 0
    %2856 = vmatprep.subr.bf16.mxu0 0
    %2857 = vmatpush1.bf16.xpose.msra.mxu0 0
    %2858 = vmatprep.subr.bf16.mxu0 0
    %2859 = vmatpush1.bf16.xpose.msra.mxu0 0
    %2860 = vmatprep.subr.bf16.mxu0 0
    %2861 = vmatpush1.bf16.xpose.msra.mxu0 0
    %2862 = vmatprep.subr.bf16.mxu0 0
    %2863 = vmatpush1.bf16.xpose.msra.mxu0 0
    %2864 = vmatprep.subr.bf16.mxu0 0
    %2865 = vmatpush1.bf16.xpose.msra.mxu0 0
    %2866 = vmatprep.subr.bf16.mxu0 0
    %2867 = vmatpush1.bf16.xpose.msra.mxu0 0
    %2868 = vmatprep.subr.bf16.mxu0 0
    %2869 = vmatpush1.bf16.xpose.msra.mxu0 0
    %2870 = vmatprep.subr.bf16.mxu0 0
    %2871 = vmatpush1.bf16.xpose.msra.mxu0 0
    %2872 = vmatprep.subr.bf16.mxu0 0
    %2873 = vmatpush1.bf16.xpose.msra.mxu0 0
    %2874 = vmatprep.subr.bf16.mxu0 0
    %2875 = vmatpush1.bf16.xpose.msra.mxu0 0
    %2876 = vmatprep.mubr.bf16.mxu0 0
    %2877 = vmatmul.mubr.bf16.gmra.mrb[0].mxu0 %v2839
    %v2878 = vpop.f32.mrb[0].mxu0
    %v2879 = vadd.f32 0.0, %v2878
    %v2880 = vpop.f32.mrb[0].mxu0
    %v2881 = vpop.f32.mrb[0].mxu0
    %v2882 = vpop.f32.mrb[0].mxu0
    %2883 = vdwg.mxu0
    %v2885 = vsel %vm671, %v2835, 0
    %v2888 = vsel %vm671, %v2827, 0
    %2890 = vmatprep.subr.bf16.mxu0 0
    %2891 = vmatpush1.bf16.xpose.msra.mxu0 %v2888
    %2892 = vmatprep.subr.bf16.mxu0 0
    %2893 = vmatpush1.bf16.xpose.msra.mxu0 0
    %2894 = vmatprep.subr.bf16.mxu0 0
    %2895 = vmatpush1.bf16.xpose.msra.mxu0 0
    %2896 = vmatprep.subr.bf16.mxu0 0
    %2897 = vmatpush1.bf16.xpose.msra.mxu0 0
    %2898 = vmatprep.subr.bf16.mxu0 0
    %2899 = vmatpush1.bf16.xpose.msra.mxu0 0
    %2900 = vmatprep.subr.bf16.mxu0 0
    %2901 = vmatpush1.bf16.xpose.msra.mxu0 0
    %2902 = vmatprep.subr.bf16.mxu0 0
    %2903 = vmatpush1.bf16.xpose.msra.mxu0 0
    %2904 = vmatprep.subr.bf16.mxu0 0
    %2905 = vmatpush1.bf16.xpose.msra.mxu0 0
    %2906 = vmatprep.subr.bf16.mxu0 0
    %2907 = vmatpush1.bf16.xpose.msra.mxu0 0
    %2908 = vmatprep.subr.bf16.mxu0 0
    %2909 = vmatpush1.bf16.xpose.msra.mxu0 0
    %2910 = vmatprep.subr.bf16.mxu0 0
    %2911 = vmatpush1.bf16.xpose.msra.mxu0 0
    %2912 = vmatprep.subr.bf16.mxu0 0
    %2913 = vmatpush1.bf16.xpose.msra.mxu0 0
    %2914 = vmatprep.subr.bf16.mxu0 0
    %2915 = vmatpush1.bf16.xpose.msra.mxu0 0
    %2916 = vmatprep.subr.bf16.mxu0 0
    %2917 = vmatpush1.bf16.xpose.msra.mxu0 0
    %2918 = vmatprep.subr.bf16.mxu0 0
    %2919 = vmatpush1.bf16.xpose.msra.mxu0 0
    %2920 = vmatprep.subr.bf16.mxu0 0
    %2921 = vmatpush1.bf16.xpose.msra.mxu0 0
    %2922 = vmatprep.mubr.bf16.mxu0 0
    %2923 = vmatmul.mubr.bf16.gmra.mrb[0].mxu0 %v2885
    %v2924 = vpop.f32.mrb[0].mxu0
    %v2925 = vadd.f32 0.0, %v2924
    %v2926 = vpop.f32.mrb[0].mxu0
    %v2927 = vpop.f32.mrb[0].mxu0
    %v2928 = vpop.f32.mrb[0].mxu0
    %2929 = vdwg.mxu0
    %v2931 = vsel %vm671, %v2836, 0
    %v2934 = vsel %vm671, %v2828, 0
    %2936 = vmatprep.subr.bf16.mxu0 0
    %2937 = vmatpush1.bf16.xpose.msra.mxu0 %v2934
    %2938 = vmatprep.subr.bf16.mxu0 0
    %2939 = vmatpush1.bf16.xpose.msra.mxu0 0
    %2940 = vmatprep.subr.bf16.mxu0 0
    %2941 = vmatpush1.bf16.xpose.msra.mxu0 0
    %2942 = vmatprep.subr.bf16.mxu0 0
    %2943 = vmatpush1.bf16.xpose.msra.mxu0 0
    %2944 = vmatprep.subr.bf16.mxu0 0
    %2945 = vmatpush1.bf16.xpose.msra.mxu0 0
    %2946 = vmatprep.subr.bf16.mxu0 0
    %2947 = vmatpush1.bf16.xpose.msra.mxu0 0
    %2948 = vmatprep.subr.bf16.mxu0 0
    %2949 = vmatpush1.bf16.xpose.msra.mxu0 0
    %2950 = vmatprep.subr.bf16.mxu0 0
    %2951 = vmatpush1.bf16.xpose.msra.mxu0 0
    %2952 = vmatprep.subr.bf16.mxu0 0
    %2953 = vmatpush1.bf16.xpose.msra.mxu0 0
    %2954 = vmatprep.subr.bf16.mxu0 0
    %2955 = vmatpush1.bf16.xpose.msra.mxu0 0
    %2956 = vmatprep.subr.bf16.mxu0 0
    %2957 = vmatpush1.bf16.xpose.msra.mxu0 0
    %2958 = vmatprep.subr.bf16.mxu0 0
    %2959 = vmatpush1.bf16.xpose.msra.mxu0 0
    %2960 = vmatprep.subr.bf16.mxu0 0
    %2961 = vmatpush1.bf16.xpose.msra.mxu0 0
    %2962 = vmatprep.subr.bf16.mxu0 0
    %2963 = vmatpush1.bf16.xpose.msra.mxu0 0
    %2964 = vmatprep.subr.bf16.mxu0 0
    %2965 = vmatpush1.bf16.xpose.msra.mxu0 0
    %2966 = vmatprep.subr.bf16.mxu0 0
    %2967 = vmatpush1.bf16.xpose.msra.mxu0 0
    %2968 = vmatprep.mubr.bf16.mxu0 0
    %2969 = vmatmul.mubr.bf16.gmra.mrb[0].mxu0 %v2931
    %v2970 = vpop.f32.mrb[0].mxu0
    %v2971 = vadd.f32 0.0, %v2970
    %v2972 = vpop.f32.mrb[0].mxu0
    %v2973 = vpop.f32.mrb[0].mxu0
    %v2974 = vpop.f32.mrb[0].mxu0
    %2975 = vdwg.mxu0
    %v2977 = vsel %vm671, %v2837, 0
    %v2980 = vsel %vm671, %v2829, 0
    %2982 = vmatprep.subr.bf16.mxu0 0
    %2983 = vmatpush1.bf16.xpose.msra.mxu0 %v2980
    %2984 = vmatprep.subr.bf16.mxu0 0
    %2985 = vmatpush1.bf16.xpose.msra.mxu0 0
    %2986 = vmatprep.subr.bf16.mxu0 0
    %2987 = vmatpush1.bf16.xpose.msra.mxu0 0
    %2988 = vmatprep.subr.bf16.mxu0 0
    %2989 = vmatpush1.bf16.xpose.msra.mxu0 0
    %2990 = vmatprep.subr.bf16.mxu0 0
    %2991 = vmatpush1.bf16.xpose.msra.mxu0 0
    %2992 = vmatprep.subr.bf16.mxu0 0
    %2993 = vmatpush1.bf16.xpose.msra.mxu0 0
    %2994 = vmatprep.subr.bf16.mxu0 0
    %2995 = vmatpush1.bf16.xpose.msra.mxu0 0
    %2996 = vmatprep.subr.bf16.mxu0 0
    %2997 = vmatpush1.bf16.xpose.msra.mxu0 0
    %2998 = vmatprep.subr.bf16.mxu0 0
    %2999 = vmatpush1.bf16.xpose.msra.mxu0 0
    %3000 = vmatprep.subr.bf16.mxu0 0
    %3001 = vmatpush1.bf16.xpose.msra.mxu0 0
    %3002 = vmatprep.subr.bf16.mxu0 0
    %3003 = vmatpush1.bf16.xpose.msra.mxu0 0
    %3004 = vmatprep.subr.bf16.mxu0 0
    %3005 = vmatpush1.bf16.xpose.msra.mxu0 0
    %3006 = vmatprep.subr.bf16.mxu0 0
    %3007 = vmatpush1.bf16.xpose.msra.mxu0 0
    %3008 = vmatprep.subr.bf16.mxu0 0
    %3009 = vmatpush1.bf16.xpose.msra.mxu0 0
    %3010 = vmatprep.subr.bf16.mxu0 0
    %3011 = vmatpush1.bf16.xpose.msra.mxu0 0
    %3012 = vmatprep.subr.bf16.mxu0 0
    %3013 = vmatpush1.bf16.xpose.msra.mxu0 0
    %3014 = vmatprep.mubr.bf16.mxu0 0
    %3015 = vmatmul.mubr.bf16.gmra.mrb[0].mxu0 %v2977
    %v3016 = vpop.f32.mrb[0].mxu0
    %v3017 = vadd.f32 0.0, %v3016
    %v3018 = vpop.f32.mrb[0].mxu0
    %v3019 = vpop.f32.mrb[0].mxu0
    %v3020 = vpop.f32.mrb[0].mxu0
    %3021 = vdwg.mxu0
    %v3022 = vsel %vm945, %v2879, -inf
    %3023 = vmax.xlane.f32.xlu0 %v3022
    %v3024 = vpop.xlane.xlu0 %3023
    %v3025 = vsel %vm945, %v2925, -inf
    %3026 = vmax.xlane.f32.xlu0 %v3025
    %v3027 = vpop.xlane.xlu0 %3026
    %v3028 = vsel %vm945, %v2971, -inf
    %3029 = vmax.xlane.f32.xlu0 %v3028
    %v3030 = vpop.xlane.xlu0 %3029
    %v3031 = vsel %vm945, %v3017, -inf
    %3032 = vmax.xlane.f32.xlu0 %v3031
    %v3033 = vpop.xlane.xlu0 %3032
    %v3034 = vsub.f32 %v2879, %v3024
    %v3035 = vsub.f32 %v2925, %v3027
    %v3036 = vsub.f32 %v2971, %v3030
    %v3037 = vsub.f32 %v3017, %v3033
    %v3038 = vmul.f32 %v3034, 1.442695
    %v3039 = vpow.pop %v3038
    %v3040 = vmul.f32 %v3035, 1.442695
    %v3041 = vpow.pop %v3040
    %v3042 = vmul.f32 %v3036, 1.442695
    %v3043 = vpow.pop %v3042
    %v3044 = vmul.f32 %v3037, 1.442695
    %v3045 = vpow.pop %v3044
    %v3046 = vsel %vm945, %v3039, 0.0
    %3047 = vadd.xlane.f32.xlu0 %v3046
    %v3048 = vpop.xlane.xlu0 %3047
    %v3049 = vsel %vm945, %v3041, 0.0
    %3050 = vadd.xlane.f32.xlu0 %v3049
    %v3051 = vpop.xlane.xlu0 %3050
    %v3052 = vsel %vm945, %v3043, 0.0
    %3053 = vadd.xlane.f32.xlu0 %v3052
    %v3054 = vpop.xlane.xlu0 %3053
    %v3055 = vsel %vm945, %v3045, 0.0
    %3056 = vadd.xlane.f32.xlu0 %v3055
    %v3057 = vpop.xlane.xlu0 %3056
    %v3058 = vrcp.pop %v3048
    %v3059 = vrcp.pop %v3051
    %v3060 = vrcp.pop %v3054
    %v3061 = vrcp.pop %v3057
    %v3062 = vmul.f32 %v3039, %v3058
    %v3063 = vmul.f32 %v3041, %v3059
    %v3064 = vmul.f32 %v3043, %v3060
    %v3065 = vmul.f32 %v3045, %v3061
    %3067 = vrot.lane.b32.xlu0 %v592, 64
    %v3068 = vpop.permute.xlu0 %3067
    %v3070 = vmul.f32 %v2812, %v3068
    %v3071 = vmul.f32 %v2815, %v3068
    %v3072 = vmul.f32 %v2820, %v3068
    %v3073 = vmul.f32 %v2823, %v3068
    %v3074 = vpack.c.bf16 %v3070, %v3070
    %v3075 = vpack.c.bf16 %v3071, %v3071
    %v3076 = vpack.c.bf16 %v3072, %v3072
    %v3077 = vpack.c.bf16 %v3073, %v3073
    %v3078 = vpack.c.bf16 %v3062, %v3062
    %v3079 = vpack.c.bf16 %v3063, %v3063
    %v3080 = vpack.c.bf16 %v3064, %v3064
    %v3081 = vpack.c.bf16 %v3065, %v3065
    %v3082 = vmul.f32 %v2724, %v597
    %v3083 = vmul.f32 %v2727, %v597
    %v3084 = vmul.f32 %v2732, %v597
    %v3085 = vmul.f32 %v2735, %v597
    %v3086 = vpack.c.bf16 %v3082, %v3082
    %v3087 = vpack.c.bf16 %v3083, %v3083
    %v3088 = vpack.c.bf16 %v3084, %v3084
    %v3089 = vpack.c.bf16 %v3085, %v3085
    %v3091 = vsel %vm671, %v3086, 0
    %3093 = vmatprep.subr.bf16.mxu0 0
    %3094 = vmatpush1.bf16.xpose.msra.mxu0 %v2842
    %3095 = vmatprep.subr.bf16.mxu0 0
    %3096 = vmatpush1.bf16.xpose.msra.mxu0 0
    %3097 = vmatprep.subr.bf16.mxu0 0
    %3098 = vmatpush1.bf16.xpose.msra.mxu0 0
    %3099 = vmatprep.subr.bf16.mxu0 0
    %3100 = vmatpush1.bf16.xpose.msra.mxu0 0
    %3101 = vmatprep.subr.bf16.mxu0 0
    %3102 = vmatpush1.bf16.xpose.msra.mxu0 0
    %3103 = vmatprep.subr.bf16.mxu0 0
    %3104 = vmatpush1.bf16.xpose.msra.mxu0 0
    %3105 = vmatprep.subr.bf16.mxu0 0
    %3106 = vmatpush1.bf16.xpose.msra.mxu0 0
    %3107 = vmatprep.subr.bf16.mxu0 0
    %3108 = vmatpush1.bf16.xpose.msra.mxu0 0
    %3109 = vmatprep.subr.bf16.mxu0 0
    %3110 = vmatpush1.bf16.xpose.msra.mxu0 0
    %3111 = vmatprep.subr.bf16.mxu0 0
    %3112 = vmatpush1.bf16.xpose.msra.mxu0 0
    %3113 = vmatprep.subr.bf16.mxu0 0
    %3114 = vmatpush1.bf16.xpose.msra.mxu0 0
    %3115 = vmatprep.subr.bf16.mxu0 0
    %3116 = vmatpush1.bf16.xpose.msra.mxu0 0
    %3117 = vmatprep.subr.bf16.mxu0 0
    %3118 = vmatpush1.bf16.xpose.msra.mxu0 0
    %3119 = vmatprep.subr.bf16.mxu0 0
    %3120 = vmatpush1.bf16.xpose.msra.mxu0 0
    %3121 = vmatprep.subr.bf16.mxu0 0
    %3122 = vmatpush1.bf16.xpose.msra.mxu0 0
    %3123 = vmatprep.subr.bf16.mxu0 0
    %3124 = vmatpush1.bf16.xpose.msra.mxu0 0
    %3125 = vmatprep.mubr.bf16.mxu0 0
    %3126 = vmatmul.mubr.bf16.gmra.mrb[0].mxu0 %v3091
    %v3127 = vpop.f32.mrb[0].mxu0
    %v3128 = vadd.f32 0.0, %v3127
    %v3129 = vpop.f32.mrb[0].mxu0
    %v3130 = vpop.f32.mrb[0].mxu0
    %v3131 = vpop.f32.mrb[0].mxu0
    %3132 = vdwg.mxu0
    %v3134 = vsel %vm671, %v3087, 0
    %3136 = vmatprep.subr.bf16.mxu0 0
    %3137 = vmatpush1.bf16.xpose.msra.mxu0 %v2888
    %3138 = vmatprep.subr.bf16.mxu0 0
    %3139 = vmatpush1.bf16.xpose.msra.mxu0 0
    %3140 = vmatprep.subr.bf16.mxu0 0
    %3141 = vmatpush1.bf16.xpose.msra.mxu0 0
    %3142 = vmatprep.subr.bf16.mxu0 0
    %3143 = vmatpush1.bf16.xpose.msra.mxu0 0
    %3144 = vmatprep.subr.bf16.mxu0 0
    %3145 = vmatpush1.bf16.xpose.msra.mxu0 0
    %3146 = vmatprep.subr.bf16.mxu0 0
    %3147 = vmatpush1.bf16.xpose.msra.mxu0 0
    %3148 = vmatprep.subr.bf16.mxu0 0
    %3149 = vmatpush1.bf16.xpose.msra.mxu0 0
    %3150 = vmatprep.subr.bf16.mxu0 0
    %3151 = vmatpush1.bf16.xpose.msra.mxu0 0
    %3152 = vmatprep.subr.bf16.mxu0 0
    %3153 = vmatpush1.bf16.xpose.msra.mxu0 0
    %3154 = vmatprep.subr.bf16.mxu0 0
    %3155 = vmatpush1.bf16.xpose.msra.mxu0 0
    %3156 = vmatprep.subr.bf16.mxu0 0
    %3157 = vmatpush1.bf16.xpose.msra.mxu0 0
    %3158 = vmatprep.subr.bf16.mxu0 0
    %3159 = vmatpush1.bf16.xpose.msra.mxu0 0
    %3160 = vmatprep.subr.bf16.mxu0 0
    %3161 = vmatpush1.bf16.xpose.msra.mxu0 0
    %3162 = vmatprep.subr.bf16.mxu0 0
    %3163 = vmatpush1.bf16.xpose.msra.mxu0 0
    %3164 = vmatprep.subr.bf16.mxu0 0
    %3165 = vmatpush1.bf16.xpose.msra.mxu0 0
    %3166 = vmatprep.subr.bf16.mxu0 0
    %3167 = vmatpush1.bf16.xpose.msra.mxu0 0
    %3168 = vmatprep.mubr.bf16.mxu0 0
    %3169 = vmatmul.mubr.bf16.gmra.mrb[0].mxu0 %v3134
    %v3170 = vpop.f32.mrb[0].mxu0
    %v3171 = vadd.f32 0.0, %v3170
    %v3172 = vpop.f32.mrb[0].mxu0
    %v3173 = vpop.f32.mrb[0].mxu0
    %v3174 = vpop.f32.mrb[0].mxu0
    %3175 = vdwg.mxu0
    %v3177 = vsel %vm671, %v3088, 0
    %3179 = vmatprep.subr.bf16.mxu0 0
    %3180 = vmatpush1.bf16.xpose.msra.mxu0 %v2934
    %3181 = vmatprep.subr.bf16.mxu0 0
    %3182 = vmatpush1.bf16.xpose.msra.mxu0 0
    %3183 = vmatprep.subr.bf16.mxu0 0
    %3184 = vmatpush1.bf16.xpose.msra.mxu0 0
    %3185 = vmatprep.subr.bf16.mxu0 0
    %3186 = vmatpush1.bf16.xpose.msra.mxu0 0
    %3187 = vmatprep.subr.bf16.mxu0 0
    %3188 = vmatpush1.bf16.xpose.msra.mxu0 0
    %3189 = vmatprep.subr.bf16.mxu0 0
    %3190 = vmatpush1.bf16.xpose.msra.mxu0 0
    %3191 = vmatprep.subr.bf16.mxu0 0
    %3192 = vmatpush1.bf16.xpose.msra.mxu0 0
    %3193 = vmatprep.subr.bf16.mxu0 0
    %3194 = vmatpush1.bf16.xpose.msra.mxu0 0
    %3195 = vmatprep.subr.bf16.mxu0 0
    %3196 = vmatpush1.bf16.xpose.msra.mxu0 0
    %3197 = vmatprep.subr.bf16.mxu0 0
    %3198 = vmatpush1.bf16.xpose.msra.mxu0 0
    %3199 = vmatprep.subr.bf16.mxu0 0
    %3200 = vmatpush1.bf16.xpose.msra.mxu0 0
    %3201 = vmatprep.subr.bf16.mxu0 0
    %3202 = vmatpush1.bf16.xpose.msra.mxu0 0
    %3203 = vmatprep.subr.bf16.mxu0 0
    %3204 = vmatpush1.bf16.xpose.msra.mxu0 0
    %3205 = vmatprep.subr.bf16.mxu0 0
    %3206 = vmatpush1.bf16.xpose.msra.mxu0 0
    %3207 = vmatprep.subr.bf16.mxu0 0
    %3208 = vmatpush1.bf16.xpose.msra.mxu0 0
    %3209 = vmatprep.subr.bf16.mxu0 0
    %3210 = vmatpush1.bf16.xpose.msra.mxu0 0
    %3211 = vmatprep.mubr.bf16.mxu0 0
    %3212 = vmatmul.mubr.bf16.gmra.mrb[0].mxu0 %v3177
    %v3213 = vpop.f32.mrb[0].mxu0
    %v3214 = vadd.f32 0.0, %v3213
    %v3215 = vpop.f32.mrb[0].mxu0
    %v3216 = vpop.f32.mrb[0].mxu0
    %v3217 = vpop.f32.mrb[0].mxu0
    %3218 = vdwg.mxu0
    %v3220 = vsel %vm671, %v3089, 0
    %3222 = vmatprep.subr.bf16.mxu0 0
    %3223 = vmatpush1.bf16.xpose.msra.mxu0 %v2980
    %3224 = vmatprep.subr.bf16.mxu0 0
    %3225 = vmatpush1.bf16.xpose.msra.mxu0 0
    %3226 = vmatprep.subr.bf16.mxu0 0
    %3227 = vmatpush1.bf16.xpose.msra.mxu0 0
    %3228 = vmatprep.subr.bf16.mxu0 0
    %3229 = vmatpush1.bf16.xpose.msra.mxu0 0
    %3230 = vmatprep.subr.bf16.mxu0 0
    %3231 = vmatpush1.bf16.xpose.msra.mxu0 0
    %3232 = vmatprep.subr.bf16.mxu0 0
    %3233 = vmatpush1.bf16.xpose.msra.mxu0 0
    %3234 = vmatprep.subr.bf16.mxu0 0
    %3235 = vmatpush1.bf16.xpose.msra.mxu0 0
    %3236 = vmatprep.subr.bf16.mxu0 0
    %3237 = vmatpush1.bf16.xpose.msra.mxu0 0
    %3238 = vmatprep.subr.bf16.mxu0 0
    %3239 = vmatpush1.bf16.xpose.msra.mxu0 0
    %3240 = vmatprep.subr.bf16.mxu0 0
    %3241 = vmatpush1.bf16.xpose.msra.mxu0 0
    %3242 = vmatprep.subr.bf16.mxu0 0
    %3243 = vmatpush1.bf16.xpose.msra.mxu0 0
    %3244 = vmatprep.subr.bf16.mxu0 0
    %3245 = vmatpush1.bf16.xpose.msra.mxu0 0
    %3246 = vmatprep.subr.bf16.mxu0 0
    %3247 = vmatpush1.bf16.xpose.msra.mxu0 0
    %3248 = vmatprep.subr.bf16.mxu0 0
    %3249 = vmatpush1.bf16.xpose.msra.mxu0 0
    %3250 = vmatprep.subr.bf16.mxu0 0
    %3251 = vmatpush1.bf16.xpose.msra.mxu0 0
    %3252 = vmatprep.subr.bf16.mxu0 0
    %3253 = vmatpush1.bf16.xpose.msra.mxu0 0
    %3254 = vmatprep.mubr.bf16.mxu0 0
    %3255 = vmatmul.mubr.bf16.gmra.mrb[0].mxu0 %v3220
    %v3256 = vpop.f32.mrb[0].mxu0
    %v3257 = vadd.f32 0.0, %v3256
    %v3258 = vpop.f32.mrb[0].mxu0
    %v3259 = vpop.f32.mrb[0].mxu0
    %v3260 = vpop.f32.mrb[0].mxu0
    %3261 = vdwg.mxu0
    %v3262 = vsel %vm945, %v3128, -inf
    %3263 = vmax.xlane.f32.xlu0 %v3262
    %v3264 = vpop.xlane.xlu0 %3263
    %v3265 = vsel %vm945, %v3171, -inf
    %3266 = vmax.xlane.f32.xlu0 %v3265
    %v3267 = vpop.xlane.xlu0 %3266
    %v3268 = vsel %vm945, %v3214, -inf
    %3269 = vmax.xlane.f32.xlu0 %v3268
    %v3270 = vpop.xlane.xlu0 %3269
    %v3271 = vsel %vm945, %v3257, -inf
    %3272 = vmax.xlane.f32.xlu0 %v3271
    %v3273 = vpop.xlane.xlu0 %3272
    %v3274 = vsub.f32 %v3128, %v3264
    %v3275 = vsub.f32 %v3171, %v3267
    %v3276 = vsub.f32 %v3214, %v3270
    %v3277 = vsub.f32 %v3257, %v3273
    %v3278 = vmul.f32 %v3274, 1.442695
    %v3279 = vpow.pop %v3278
    %v3280 = vmul.f32 %v3275, 1.442695
    %v3281 = vpow.pop %v3280
    %v3282 = vmul.f32 %v3276, 1.442695
    %v3283 = vpow.pop %v3282
    %v3284 = vmul.f32 %v3277, 1.442695
    %v3285 = vpow.pop %v3284
    %v3286 = vsel %vm945, %v3279, 0.0
    %3287 = vadd.xlane.f32.xlu0 %v3286
    %v3288 = vpop.xlane.xlu0 %3287
    %v3289 = vsel %vm945, %v3281, 0.0
    %3290 = vadd.xlane.f32.xlu0 %v3289
    %v3291 = vpop.xlane.xlu0 %3290
    %v3292 = vsel %vm945, %v3283, 0.0
    %3293 = vadd.xlane.f32.xlu0 %v3292
    %v3294 = vpop.xlane.xlu0 %3293
    %v3295 = vsel %vm945, %v3285, 0.0
    %3296 = vadd.xlane.f32.xlu0 %v3295
    %v3297 = vpop.xlane.xlu0 %3296
    %v3298 = vrcp.pop %v3288
    %v3299 = vrcp.pop %v3291
    %v3300 = vrcp.pop %v3294
    %v3301 = vrcp.pop %v3297
    %v3302 = vmul.f32 %v3279, %v3298
    %v3303 = vmul.f32 %v3281, %v3299
    %v3304 = vmul.f32 %v3283, %v3300
    %v3305 = vmul.f32 %v3285, %v3301
    %3307 = vrot.lane.b32.xlu0 %v597, 64
    %v3308 = vpop.permute.xlu0 %3307
    %v3310 = vmul.f32 %v2812, %v3308
    %v3311 = vmul.f32 %v2815, %v3308
    %v3312 = vmul.f32 %v2820, %v3308
    %v3313 = vmul.f32 %v2823, %v3308
    %v3314 = vpack.c.bf16 %v3310, %v3310
    %v3315 = vpack.c.bf16 %v3311, %v3311
    %v3316 = vpack.c.bf16 %v3312, %v3312
    %v3317 = vpack.c.bf16 %v3313, %v3313
    %v3318 = vpack.c.bf16 %v3302, %v3302
    %v3319 = vpack.c.bf16 %v3303, %v3303
    %v3320 = vpack.c.bf16 %v3304, %v3304
    %v3321 = vpack.c.bf16 %v3305, %v3305
    %3323 = vrot.lane.b32.xlu0 %v3314, 64
    %v3324 = vpop.permute.xlu0 %3323
    %v3326 = vsel %vm945, %v3318, 0
    %v3329 = vsel %vm1245, %v3324, 0
    %3331 = vmatprep.subr.bf16.mxu0 0
    %3332 = vmatpush1.bf16.msra.mxu0 %v3329
    %3333 = vmatprep.subr.bf16.mxu0 0
    %3334 = vmatpush1.bf16.msra.mxu0 0
    %3335 = vmatprep.subr.bf16.mxu0 0
    %3336 = vmatpush1.bf16.msra.mxu0 0
    %3337 = vmatprep.subr.bf16.mxu0 0
    %3338 = vmatpush1.bf16.msra.mxu0 0
    %3339 = vmatprep.subr.bf16.mxu0 0
    %3340 = vmatpush1.bf16.msra.mxu0 0
    %3341 = vmatprep.subr.bf16.mxu0 0
    %3342 = vmatpush1.bf16.msra.mxu0 0
    %3343 = vmatprep.subr.bf16.mxu0 0
    %3344 = vmatpush1.bf16.msra.mxu0 0
    %3345 = vmatprep.subr.bf16.mxu0 0
    %3346 = vmatpush1.bf16.msra.mxu0 0
    %3347 = vmatprep.subr.bf16.mxu0 0
    %3348 = vmatpush1.bf16.msra.mxu0 0
    %3349 = vmatprep.subr.bf16.mxu0 0
    %3350 = vmatpush1.bf16.msra.mxu0 0
    %3351 = vmatprep.subr.bf16.mxu0 0
    %3352 = vmatpush1.bf16.msra.mxu0 0
    %3353 = vmatprep.subr.bf16.mxu0 0
    %3354 = vmatpush1.bf16.msra.mxu0 0
    %3355 = vmatprep.subr.bf16.mxu0 0
    %3356 = vmatpush1.bf16.msra.mxu0 0
    %3357 = vmatprep.subr.bf16.mxu0 0
    %3358 = vmatpush1.bf16.msra.mxu0 0
    %3359 = vmatprep.subr.bf16.mxu0 0
    %3360 = vmatpush1.bf16.msra.mxu0 0
    %3361 = vmatprep.subr.bf16.mxu0 0
    %3362 = vmatpush1.bf16.msra.mxu0 0
    %3363 = vmatprep.mubr.bf16.mxu0 0
    %3364 = vmatmul.mubr.bf16.gmra.mrb[0].mxu0 %v3326
    %v3365 = vpop.f32.mrb[0].mxu0
    %v3366 = vadd.f32 0.0, %v3365
    %v3367 = vpop.f32.mrb[0].mxu0
    %v3368 = vpop.f32.mrb[0].mxu0
    %v3369 = vpop.f32.mrb[0].mxu0
    %3370 = vdwg.mxu0
    %3372 = vrot.lane.b32.xlu0 %v3315, 64
    %v3373 = vpop.permute.xlu0 %3372
    %v3375 = vsel %vm945, %v3319, 0
    %v3378 = vsel %vm1245, %v3373, 0
    %3380 = vmatprep.subr.bf16.mxu0 0
    %3381 = vmatpush1.bf16.msra.mxu0 %v3378
    %3382 = vmatprep.subr.bf16.mxu0 0
    %3383 = vmatpush1.bf16.msra.mxu0 0
    %3384 = vmatprep.subr.bf16.mxu0 0
    %3385 = vmatpush1.bf16.msra.mxu0 0
    %3386 = vmatprep.subr.bf16.mxu0 0
    %3387 = vmatpush1.bf16.msra.mxu0 0
    %3388 = vmatprep.subr.bf16.mxu0 0
    %3389 = vmatpush1.bf16.msra.mxu0 0
    %3390 = vmatprep.subr.bf16.mxu0 0
    %3391 = vmatpush1.bf16.msra.mxu0 0
    %3392 = vmatprep.subr.bf16.mxu0 0
    %3393 = vmatpush1.bf16.msra.mxu0 0
    %3394 = vmatprep.subr.bf16.mxu0 0
    %3395 = vmatpush1.bf16.msra.mxu0 0
    %3396 = vmatprep.subr.bf16.mxu0 0
    %3397 = vmatpush1.bf16.msra.mxu0 0
    %3398 = vmatprep.subr.bf16.mxu0 0
    %3399 = vmatpush1.bf16.msra.mxu0 0
    %3400 = vmatprep.subr.bf16.mxu0 0
    %3401 = vmatpush1.bf16.msra.mxu0 0
    %3402 = vmatprep.subr.bf16.mxu0 0
    %3403 = vmatpush1.bf16.msra.mxu0 0
    %3404 = vmatprep.subr.bf16.mxu0 0
    %3405 = vmatpush1.bf16.msra.mxu0 0
    %3406 = vmatprep.subr.bf16.mxu0 0
    %3407 = vmatpush1.bf16.msra.mxu0 0
    %3408 = vmatprep.subr.bf16.mxu0 0
    %3409 = vmatpush1.bf16.msra.mxu0 0
    %3410 = vmatprep.subr.bf16.mxu0 0
    %3411 = vmatpush1.bf16.msra.mxu0 0
    %3412 = vmatprep.mubr.bf16.mxu0 0
    %3413 = vmatmul.mubr.bf16.gmra.mrb[0].mxu0 %v3375
    %v3414 = vpop.f32.mrb[0].mxu0
    %v3415 = vadd.f32 0.0, %v3414
    %v3416 = vpop.f32.mrb[0].mxu0
    %v3417 = vpop.f32.mrb[0].mxu0
    %v3418 = vpop.f32.mrb[0].mxu0
    %3419 = vdwg.mxu0
    %3421 = vrot.lane.b32.xlu0 %v3316, 64
    %v3422 = vpop.permute.xlu0 %3421
    %v3424 = vsel %vm945, %v3320, 0
    %v3427 = vsel %vm1245, %v3422, 0
    %3429 = vmatprep.subr.bf16.mxu0 0
    %3430 = vmatpush1.bf16.msra.mxu0 %v3427
    %3431 = vmatprep.subr.bf16.mxu0 0
    %3432 = vmatpush1.bf16.msra.mxu0 0
    %3433 = vmatprep.subr.bf16.mxu0 0
    %3434 = vmatpush1.bf16.msra.mxu0 0
    %3435 = vmatprep.subr.bf16.mxu0 0
    %3436 = vmatpush1.bf16.msra.mxu0 0
    %3437 = vmatprep.subr.bf16.mxu0 0
    %3438 = vmatpush1.bf16.msra.mxu0 0
    %3439 = vmatprep.subr.bf16.mxu0 0
    %3440 = vmatpush1.bf16.msra.mxu0 0
    %3441 = vmatprep.subr.bf16.mxu0 0
    %3442 = vmatpush1.bf16.msra.mxu0 0
    %3443 = vmatprep.subr.bf16.mxu0 0
    %3444 = vmatpush1.bf16.msra.mxu0 0
    %3445 = vmatprep.subr.bf16.mxu0 0
    %3446 = vmatpush1.bf16.msra.mxu0 0
    %3447 = vmatprep.subr.bf16.mxu0 0
    %3448 = vmatpush1.bf16.msra.mxu0 0
    %3449 = vmatprep.subr.bf16.mxu0 0
    %3450 = vmatpush1.bf16.msra.mxu0 0
    %3451 = vmatprep.subr.bf16.mxu0 0
    %3452 = vmatpush1.bf16.msra.mxu0 0
    %3453 = vmatprep.subr.bf16.mxu0 0
    %3454 = vmatpush1.bf16.msra.mxu0 0
    %3455 = vmatprep.subr.bf16.mxu0 0
    %3456 = vmatpush1.bf16.msra.mxu0 0
    %3457 = vmatprep.subr.bf16.mxu0 0
    %3458 = vmatpush1.bf16.msra.mxu0 0
    %3459 = vmatprep.subr.bf16.mxu0 0
    %3460 = vmatpush1.bf16.msra.mxu0 0
    %3461 = vmatprep.mubr.bf16.mxu0 0
    %3462 = vmatmul.mubr.bf16.gmra.mrb[0].mxu0 %v3424
    %v3463 = vpop.f32.mrb[0].mxu0
    %v3464 = vadd.f32 0.0, %v3463
    %v3465 = vpop.f32.mrb[0].mxu0
    %v3466 = vpop.f32.mrb[0].mxu0
    %v3467 = vpop.f32.mrb[0].mxu0
    %3468 = vdwg.mxu0
    %3470 = vrot.lane.b32.xlu0 %v3317, 64
    %v3471 = vpop.permute.xlu0 %3470
    %v3473 = vsel %vm945, %v3321, 0
    %v3476 = vsel %vm1245, %v3471, 0
    %3478 = vmatprep.subr.bf16.mxu0 0
    %3479 = vmatpush1.bf16.msra.mxu0 %v3476
    %3480 = vmatprep.subr.bf16.mxu0 0
    %3481 = vmatpush1.bf16.msra.mxu0 0
    %3482 = vmatprep.subr.bf16.mxu0 0
    %3483 = vmatpush1.bf16.msra.mxu0 0
    %3484 = vmatprep.subr.bf16.mxu0 0
    %3485 = vmatpush1.bf16.msra.mxu0 0
    %3486 = vmatprep.subr.bf16.mxu0 0
    %3487 = vmatpush1.bf16.msra.mxu0 0
    %3488 = vmatprep.subr.bf16.mxu0 0
    %3489 = vmatpush1.bf16.msra.mxu0 0
    %3490 = vmatprep.subr.bf16.mxu0 0
    %3491 = vmatpush1.bf16.msra.mxu0 0
    %3492 = vmatprep.subr.bf16.mxu0 0
    %3493 = vmatpush1.bf16.msra.mxu0 0
    %3494 = vmatprep.subr.bf16.mxu0 0
    %3495 = vmatpush1.bf16.msra.mxu0 0
    %3496 = vmatprep.subr.bf16.mxu0 0
    %3497 = vmatpush1.bf16.msra.mxu0 0
    %3498 = vmatprep.subr.bf16.mxu0 0
    %3499 = vmatpush1.bf16.msra.mxu0 0
    %3500 = vmatprep.subr.bf16.mxu0 0
    %3501 = vmatpush1.bf16.msra.mxu0 0
    %3502 = vmatprep.subr.bf16.mxu0 0
    %3503 = vmatpush1.bf16.msra.mxu0 0
    %3504 = vmatprep.subr.bf16.mxu0 0
    %3505 = vmatpush1.bf16.msra.mxu0 0
    %3506 = vmatprep.subr.bf16.mxu0 0
    %3507 = vmatpush1.bf16.msra.mxu0 0
    %3508 = vmatprep.subr.bf16.mxu0 0
    %3509 = vmatpush1.bf16.msra.mxu0 0
    %3510 = vmatprep.mubr.bf16.mxu0 0
    %3511 = vmatmul.mubr.bf16.gmra.mrb[0].mxu0 %v3473
    %v3512 = vpop.f32.mrb[0].mxu0
    %v3513 = vadd.f32 0.0, %v3512
    %v3514 = vpop.f32.mrb[0].mxu0
    %v3515 = vpop.f32.mrb[0].mxu0
    %v3516 = vpop.f32.mrb[0].mxu0
    %3517 = vdwg.mxu0
    %3519 = vrot.lane.b32.xlu0 %v3074, 64
    %v3520 = vpop.permute.xlu0 %3519
    %v3522 = vsel %vm945, %v3078, 0
    %v3525 = vsel %vm1245, %v3520, 0
    %3527 = vmatprep.subr.bf16.mxu0 0
    %3528 = vmatpush1.bf16.msra.mxu0 %v3525
    %3529 = vmatprep.subr.bf16.mxu0 0
    %3530 = vmatpush1.bf16.msra.mxu0 0
    %3531 = vmatprep.subr.bf16.mxu0 0
    %3532 = vmatpush1.bf16.msra.mxu0 0
    %3533 = vmatprep.subr.bf16.mxu0 0
    %3534 = vmatpush1.bf16.msra.mxu0 0
    %3535 = vmatprep.subr.bf16.mxu0 0
    %3536 = vmatpush1.bf16.msra.mxu0 0
    %3537 = vmatprep.subr.bf16.mxu0 0
    %3538 = vmatpush1.bf16.msra.mxu0 0
    %3539 = vmatprep.subr.bf16.mxu0 0
    %3540 = vmatpush1.bf16.msra.mxu0 0
    %3541 = vmatprep.subr.bf16.mxu0 0
    %3542 = vmatpush1.bf16.msra.mxu0 0
    %3543 = vmatprep.subr.bf16.mxu0 0
    %3544 = vmatpush1.bf16.msra.mxu0 0
    %3545 = vmatprep.subr.bf16.mxu0 0
    %3546 = vmatpush1.bf16.msra.mxu0 0
    %3547 = vmatprep.subr.bf16.mxu0 0
    %3548 = vmatpush1.bf16.msra.mxu0 0
    %3549 = vmatprep.subr.bf16.mxu0 0
    %3550 = vmatpush1.bf16.msra.mxu0 0
    %3551 = vmatprep.subr.bf16.mxu0 0
    %3552 = vmatpush1.bf16.msra.mxu0 0
    %3553 = vmatprep.subr.bf16.mxu0 0
    %3554 = vmatpush1.bf16.msra.mxu0 0
    %3555 = vmatprep.subr.bf16.mxu0 0
    %3556 = vmatpush1.bf16.msra.mxu0 0
    %3557 = vmatprep.subr.bf16.mxu0 0
    %3558 = vmatpush1.bf16.msra.mxu0 0
    %3559 = vmatprep.mubr.bf16.mxu0 0
    %3560 = vmatmul.mubr.bf16.gmra.mrb[0].mxu0 %v3522
    %v3561 = vpop.f32.mrb[0].mxu0
    %v3562 = vadd.f32 %v3366, %v3561
    %v3563 = vpop.f32.mrb[0].mxu0
    %v3564 = vpop.f32.mrb[0].mxu0
    %v3565 = vpop.f32.mrb[0].mxu0
    %3566 = vdwg.mxu0
    %3568 = vrot.lane.b32.xlu0 %v3075, 64
    %v3569 = vpop.permute.xlu0 %3568
    %v3571 = vsel %vm945, %v3079, 0
    %v3574 = vsel %vm1245, %v3569, 0
    %3576 = vmatprep.subr.bf16.mxu0 0
    %3577 = vmatpush1.bf16.msra.mxu0 %v3574
    %3578 = vmatprep.subr.bf16.mxu0 0
    %3579 = vmatpush1.bf16.msra.mxu0 0
    %3580 = vmatprep.subr.bf16.mxu0 0
    %3581 = vmatpush1.bf16.msra.mxu0 0
    %3582 = vmatprep.subr.bf16.mxu0 0
    %3583 = vmatpush1.bf16.msra.mxu0 0
    %3584 = vmatprep.subr.bf16.mxu0 0
    %3585 = vmatpush1.bf16.msra.mxu0 0
    %3586 = vmatprep.subr.bf16.mxu0 0
    %3587 = vmatpush1.bf16.msra.mxu0 0
    %3588 = vmatprep.subr.bf16.mxu0 0
    %3589 = vmatpush1.bf16.msra.mxu0 0
    %3590 = vmatprep.subr.bf16.mxu0 0
    %3591 = vmatpush1.bf16.msra.mxu0 0
    %3592 = vmatprep.subr.bf16.mxu0 0
    %3593 = vmatpush1.bf16.msra.mxu0 0
    %3594 = vmatprep.subr.bf16.mxu0 0
    %3595 = vmatpush1.bf16.msra.mxu0 0
    %3596 = vmatprep.subr.bf16.mxu0 0
    %3597 = vmatpush1.bf16.msra.mxu0 0
    %3598 = vmatprep.subr.bf16.mxu0 0
    %3599 = vmatpush1.bf16.msra.mxu0 0
    %3600 = vmatprep.subr.bf16.mxu0 0
    %3601 = vmatpush1.bf16.msra.mxu0 0
    %3602 = vmatprep.subr.bf16.mxu0 0
    %3603 = vmatpush1.bf16.msra.mxu0 0
    %3604 = vmatprep.subr.bf16.mxu0 0
    %3605 = vmatpush1.bf16.msra.mxu0 0
    %3606 = vmatprep.subr.bf16.mxu0 0
    %3607 = vmatpush1.bf16.msra.mxu0 0
    %3608 = vmatprep.mubr.bf16.mxu0 0
    %3609 = vmatmul.mubr.bf16.gmra.mrb[0].mxu0 %v3571
    %v3610 = vpop.f32.mrb[0].mxu0
    %v3611 = vadd.f32 %v3415, %v3610
    %v3612 = vpop.f32.mrb[0].mxu0
    %v3613 = vpop.f32.mrb[0].mxu0
    %v3614 = vpop.f32.mrb[0].mxu0
    %3615 = vdwg.mxu0
    %3617 = vrot.lane.b32.xlu0 %v3076, 64
    %v3618 = vpop.permute.xlu0 %3617
    %v3620 = vsel %vm945, %v3080, 0
    %v3623 = vsel %vm1245, %v3618, 0
    %3625 = vmatprep.subr.bf16.mxu0 0
    %3626 = vmatpush1.bf16.msra.mxu0 %v3623
    %3627 = vmatprep.subr.bf16.mxu0 0
    %3628 = vmatpush1.bf16.msra.mxu0 0
    %3629 = vmatprep.subr.bf16.mxu0 0
    %3630 = vmatpush1.bf16.msra.mxu0 0
    %3631 = vmatprep.subr.bf16.mxu0 0
    %3632 = vmatpush1.bf16.msra.mxu0 0
    %3633 = vmatprep.subr.bf16.mxu0 0
    %3634 = vmatpush1.bf16.msra.mxu0 0
    %3635 = vmatprep.subr.bf16.mxu0 0
    %3636 = vmatpush1.bf16.msra.mxu0 0
    %3637 = vmatprep.subr.bf16.mxu0 0
    %3638 = vmatpush1.bf16.msra.mxu0 0
    %3639 = vmatprep.subr.bf16.mxu0 0
    %3640 = vmatpush1.bf16.msra.mxu0 0
    %3641 = vmatprep.subr.bf16.mxu0 0
    %3642 = vmatpush1.bf16.msra.mxu0 0
    %3643 = vmatprep.subr.bf16.mxu0 0
    %3644 = vmatpush1.bf16.msra.mxu0 0
    %3645 = vmatprep.subr.bf16.mxu0 0
    %3646 = vmatpush1.bf16.msra.mxu0 0
    %3647 = vmatprep.subr.bf16.mxu0 0
    %3648 = vmatpush1.bf16.msra.mxu0 0
    %3649 = vmatprep.subr.bf16.mxu0 0
    %3650 = vmatpush1.bf16.msra.mxu0 0
    %3651 = vmatprep.subr.bf16.mxu0 0
    %3652 = vmatpush1.bf16.msra.mxu0 0
    %3653 = vmatprep.subr.bf16.mxu0 0
    %3654 = vmatpush1.bf16.msra.mxu0 0
    %3655 = vmatprep.subr.bf16.mxu0 0
    %3656 = vmatpush1.bf16.msra.mxu0 0
    %3657 = vmatprep.mubr.bf16.mxu0 0
    %3658 = vmatmul.mubr.bf16.gmra.mrb[0].mxu0 %v3620
    %v3659 = vpop.f32.mrb[0].mxu0
    %v3660 = vadd.f32 %v3464, %v3659
    %v3661 = vpop.f32.mrb[0].mxu0
    %v3662 = vpop.f32.mrb[0].mxu0
    %v3663 = vpop.f32.mrb[0].mxu0
    %3664 = vdwg.mxu0
    %3666 = vrot.lane.b32.xlu0 %v3077, 64
    %v3667 = vpop.permute.xlu0 %3666
    %v3669 = vsel %vm945, %v3081, 0
    %v3672 = vsel %vm1245, %v3667, 0
    %3674 = vmatprep.subr.bf16.mxu0 0
    %3675 = vmatpush1.bf16.msra.mxu0 %v3672
    %3676 = vmatprep.subr.bf16.mxu0 0
    %3677 = vmatpush1.bf16.msra.mxu0 0
    %3678 = vmatprep.subr.bf16.mxu0 0
    %3679 = vmatpush1.bf16.msra.mxu0 0
    %3680 = vmatprep.subr.bf16.mxu0 0
    %3681 = vmatpush1.bf16.msra.mxu0 0
    %3682 = vmatprep.subr.bf16.mxu0 0
    %3683 = vmatpush1.bf16.msra.mxu0 0
    %3684 = vmatprep.subr.bf16.mxu0 0
    %3685 = vmatpush1.bf16.msra.mxu0 0
    %3686 = vmatprep.subr.bf16.mxu0 0
    %3687 = vmatpush1.bf16.msra.mxu0 0
    %3688 = vmatprep.subr.bf16.mxu0 0
    %3689 = vmatpush1.bf16.msra.mxu0 0
    %3690 = vmatprep.subr.bf16.mxu0 0
    %3691 = vmatpush1.bf16.msra.mxu0 0
    %3692 = vmatprep.subr.bf16.mxu0 0
    %3693 = vmatpush1.bf16.msra.mxu0 0
    %3694 = vmatprep.subr.bf16.mxu0 0
    %3695 = vmatpush1.bf16.msra.mxu0 0
    %3696 = vmatprep.subr.bf16.mxu0 0
    %3697 = vmatpush1.bf16.msra.mxu0 0
    %3698 = vmatprep.subr.bf16.mxu0 0
    %3699 = vmatpush1.bf16.msra.mxu0 0
    %3700 = vmatprep.subr.bf16.mxu0 0
    %3701 = vmatpush1.bf16.msra.mxu0 0
    %3702 = vmatprep.subr.bf16.mxu0 0
    %3703 = vmatpush1.bf16.msra.mxu0 0
    %3704 = vmatprep.subr.bf16.mxu0 0
    %3705 = vmatpush1.bf16.msra.mxu0 0
    %3706 = vmatprep.mubr.bf16.mxu0 0
    %3707 = vmatmul.mubr.bf16.gmra.mrb[0].mxu0 %v3669
    %v3708 = vpop.f32.mrb[0].mxu0
    %v3709 = vadd.f32 %v3513, %v3708
    %v3710 = vpop.f32.mrb[0].mxu0
    %v3711 = vpop.f32.mrb[0].mxu0
    %v3712 = vpop.f32.mrb[0].mxu0
    %3713 = vdwg.mxu0
    %v3714 = vmul.f32 %v2724, %v602
    %v3715 = vmul.f32 %v2727, %v602
    %v3716 = vmul.f32 %v2732, %v602
    %v3717 = vmul.f32 %v2735, %v602
    %v3718 = vpack.c.bf16 %v3714, %v3714
    %v3719 = vpack.c.bf16 %v3715, %v3715
    %v3720 = vpack.c.bf16 %v3716, %v3716
    %v3721 = vpack.c.bf16 %v3717, %v3717
    %v3723 = vsel %vm671, %v3718, 0
    %3725 = vmatprep.subr.bf16.mxu0 0
    %3726 = vmatpush1.bf16.xpose.msra.mxu0 %v2842
    %3727 = vmatprep.subr.bf16.mxu0 0
    %3728 = vmatpush1.bf16.xpose.msra.mxu0 0
    %3729 = vmatprep.subr.bf16.mxu0 0
    %3730 = vmatpush1.bf16.xpose.msra.mxu0 0
    %3731 = vmatprep.subr.bf16.mxu0 0
    %3732 = vmatpush1.bf16.xpose.msra.mxu0 0
    %3733 = vmatprep.subr.bf16.mxu0 0
    %3734 = vmatpush1.bf16.xpose.msra.mxu0 0
    %3735 = vmatprep.subr.bf16.mxu0 0
    %3736 = vmatpush1.bf16.xpose.msra.mxu0 0
    %3737 = vmatprep.subr.bf16.mxu0 0
    %3738 = vmatpush1.bf16.xpose.msra.mxu0 0
    %3739 = vmatprep.subr.bf16.mxu0 0
    %3740 = vmatpush1.bf16.xpose.msra.mxu0 0
    %3741 = vmatprep.subr.bf16.mxu0 0
    %3742 = vmatpush1.bf16.xpose.msra.mxu0 0
    %3743 = vmatprep.subr.bf16.mxu0 0
    %3744 = vmatpush1.bf16.xpose.msra.mxu0 0
    %3745 = vmatprep.subr.bf16.mxu0 0
    %3746 = vmatpush1.bf16.xpose.msra.mxu0 0
    %3747 = vmatprep.subr.bf16.mxu0 0
    %3748 = vmatpush1.bf16.xpose.msra.mxu0 0
    %3749 = vmatprep.subr.bf16.mxu0 0
    %3750 = vmatpush1.bf16.xpose.msra.mxu0 0
    %3751 = vmatprep.subr.bf16.mxu0 0
    %3752 = vmatpush1.bf16.xpose.msra.mxu0 0
    %3753 = vmatprep.subr.bf16.mxu0 0
    %3754 = vmatpush1.bf16.xpose.msra.mxu0 0
    %3755 = vmatprep.subr.bf16.mxu0 0
    %3756 = vmatpush1.bf16.xpose.msra.mxu0 0
    %3757 = vmatprep.mubr.bf16.mxu0 0
    %3758 = vmatmul.mubr.bf16.gmra.mrb[0].mxu0 %v3723
    %v3759 = vpop.f32.mrb[0].mxu0
    %v3760 = vadd.f32 0.0, %v3759
    %v3761 = vpop.f32.mrb[0].mxu0
    %v3762 = vpop.f32.mrb[0].mxu0
    %v3763 = vpop.f32.mrb[0].mxu0
    %3764 = vdwg.mxu0
    %v3766 = vsel %vm671, %v3719, 0
    %3768 = vmatprep.subr.bf16.mxu0 0
    %3769 = vmatpush1.bf16.xpose.msra.mxu0 %v2888
    %3770 = vmatprep.subr.bf16.mxu0 0
    %3771 = vmatpush1.bf16.xpose.msra.mxu0 0
    %3772 = vmatprep.subr.bf16.mxu0 0
    %3773 = vmatpush1.bf16.xpose.msra.mxu0 0
    %3774 = vmatprep.subr.bf16.mxu0 0
    %3775 = vmatpush1.bf16.xpose.msra.mxu0 0
    %3776 = vmatprep.subr.bf16.mxu0 0
    %3777 = vmatpush1.bf16.xpose.msra.mxu0 0
    %3778 = vmatprep.subr.bf16.mxu0 0
    %3779 = vmatpush1.bf16.xpose.msra.mxu0 0
    %3780 = vmatprep.subr.bf16.mxu0 0
    %3781 = vmatpush1.bf16.xpose.msra.mxu0 0
    %3782 = vmatprep.subr.bf16.mxu0 0
    %3783 = vmatpush1.bf16.xpose.msra.mxu0 0
    %3784 = vmatprep.subr.bf16.mxu0 0
    %3785 = vmatpush1.bf16.xpose.msra.mxu0 0
    %3786 = vmatprep.subr.bf16.mxu0 0
    %3787 = vmatpush1.bf16.xpose.msra.mxu0 0
    %3788 = vmatprep.subr.bf16.mxu0 0
    %3789 = vmatpush1.bf16.xpose.msra.mxu0 0
    %3790 = vmatprep.subr.bf16.mxu0 0
    %3791 = vmatpush1.bf16.xpose.msra.mxu0 0
    %3792 = vmatprep.subr.bf16.mxu0 0
    %3793 = vmatpush1.bf16.xpose.msra.mxu0 0
    %3794 = vmatprep.subr.bf16.mxu0 0
    %3795 = vmatpush1.bf16.xpose.msra.mxu0 0
    %3796 = vmatprep.subr.bf16.mxu0 0
    %3797 = vmatpush1.bf16.xpose.msra.mxu0 0
    %3798 = vmatprep.subr.bf16.mxu0 0
    %3799 = vmatpush1.bf16.xpose.msra.mxu0 0
    %3800 = vmatprep.mubr.bf16.mxu0 0
    %3801 = vmatmul.mubr.bf16.gmra.mrb[0].mxu0 %v3766
    %v3802 = vpop.f32.mrb[0].mxu0
    %v3803 = vadd.f32 0.0, %v3802
    %v3804 = vpop.f32.mrb[0].mxu0
    %v3805 = vpop.f32.mrb[0].mxu0
    %v3806 = vpop.f32.mrb[0].mxu0
    %3807 = vdwg.mxu0
    %v3809 = vsel %vm671, %v3720, 0
    %3811 = vmatprep.subr.bf16.mxu0 0
    %3812 = vmatpush1.bf16.xpose.msra.mxu0 %v2934
    %3813 = vmatprep.subr.bf16.mxu0 0
    %3814 = vmatpush1.bf16.xpose.msra.mxu0 0
    %3815 = vmatprep.subr.bf16.mxu0 0
    %3816 = vmatpush1.bf16.xpose.msra.mxu0 0
    %3817 = vmatprep.subr.bf16.mxu0 0
    %3818 = vmatpush1.bf16.xpose.msra.mxu0 0
    %3819 = vmatprep.subr.bf16.mxu0 0
    %3820 = vmatpush1.bf16.xpose.msra.mxu0 0
    %3821 = vmatprep.subr.bf16.mxu0 0
    %3822 = vmatpush1.bf16.xpose.msra.mxu0 0
    %3823 = vmatprep.subr.bf16.mxu0 0
    %3824 = vmatpush1.bf16.xpose.msra.mxu0 0
    %3825 = vmatprep.subr.bf16.mxu0 0
    %3826 = vmatpush1.bf16.xpose.msra.mxu0 0
    %3827 = vmatprep.subr.bf16.mxu0 0
    %3828 = vmatpush1.bf16.xpose.msra.mxu0 0
    %3829 = vmatprep.subr.bf16.mxu0 0
    %3830 = vmatpush1.bf16.xpose.msra.mxu0 0
    %3831 = vmatprep.subr.bf16.mxu0 0
    %3832 = vmatpush1.bf16.xpose.msra.mxu0 0
    %3833 = vmatprep.subr.bf16.mxu0 0
    %3834 = vmatpush1.bf16.xpose.msra.mxu0 0
    %3835 = vmatprep.subr.bf16.mxu0 0
    %3836 = vmatpush1.bf16.xpose.msra.mxu0 0
    %3837 = vmatprep.subr.bf16.mxu0 0
    %3838 = vmatpush1.bf16.xpose.msra.mxu0 0
    %3839 = vmatprep.subr.bf16.mxu0 0
    %3840 = vmatpush1.bf16.xpose.msra.mxu0 0
    %3841 = vmatprep.subr.bf16.mxu0 0
    %3842 = vmatpush1.bf16.xpose.msra.mxu0 0
    %3843 = vmatprep.mubr.bf16.mxu0 0
    %3844 = vmatmul.mubr.bf16.gmra.mrb[0].mxu0 %v3809
    %v3845 = vpop.f32.mrb[0].mxu0
    %v3846 = vadd.f32 0.0, %v3845
    %v3847 = vpop.f32.mrb[0].mxu0
    %v3848 = vpop.f32.mrb[0].mxu0
    %v3849 = vpop.f32.mrb[0].mxu0
    %3850 = vdwg.mxu0
    %v3852 = vsel %vm671, %v3721, 0
    %3854 = vmatprep.subr.bf16.mxu0 0
    %3855 = vmatpush1.bf16.xpose.msra.mxu0 %v2980
    %3856 = vmatprep.subr.bf16.mxu0 0
    %3857 = vmatpush1.bf16.xpose.msra.mxu0 0
    %3858 = vmatprep.subr.bf16.mxu0 0
    %3859 = vmatpush1.bf16.xpose.msra.mxu0 0
    %3860 = vmatprep.subr.bf16.mxu0 0
    %3861 = vmatpush1.bf16.xpose.msra.mxu0 0
    %3862 = vmatprep.subr.bf16.mxu0 0
    %3863 = vmatpush1.bf16.xpose.msra.mxu0 0
    %3864 = vmatprep.subr.bf16.mxu0 0
    %3865 = vmatpush1.bf16.xpose.msra.mxu0 0
    %3866 = vmatprep.subr.bf16.mxu0 0
    %3867 = vmatpush1.bf16.xpose.msra.mxu0 0
    %3868 = vmatprep.subr.bf16.mxu0 0
    %3869 = vmatpush1.bf16.xpose.msra.mxu0 0
    %3870 = vmatprep.subr.bf16.mxu0 0
    %3871 = vmatpush1.bf16.xpose.msra.mxu0 0
    %3872 = vmatprep.subr.bf16.mxu0 0
    %3873 = vmatpush1.bf16.xpose.msra.mxu0 0
    %3874 = vmatprep.subr.bf16.mxu0 0
    %3875 = vmatpush1.bf16.xpose.msra.mxu0 0
    %3876 = vmatprep.subr.bf16.mxu0 0
    %3877 = vmatpush1.bf16.xpose.msra.mxu0 0
    %3878 = vmatprep.subr.bf16.mxu0 0
    %3879 = vmatpush1.bf16.xpose.msra.mxu0 0
    %3880 = vmatprep.subr.bf16.mxu0 0
    %3881 = vmatpush1.bf16.xpose.msra.mxu0 0
    %3882 = vmatprep.subr.bf16.mxu0 0
    %3883 = vmatpush1.bf16.xpose.msra.mxu0 0
    %3884 = vmatprep.subr.bf16.mxu0 0
    %3885 = vmatpush1.bf16.xpose.msra.mxu0 0
    %3886 = vmatprep.mubr.bf16.mxu0 0
    %3887 = vmatmul.mubr.bf16.gmra.mrb[0].mxu0 %v3852
    %v3888 = vpop.f32.mrb[0].mxu0
    %v3889 = vadd.f32 0.0, %v3888
    %v3890 = vpop.f32.mrb[0].mxu0
    %v3891 = vpop.f32.mrb[0].mxu0
    %v3892 = vpop.f32.mrb[0].mxu0
    %3893 = vdwg.mxu0
    %v3894 = vsel %vm945, %v3760, -inf
    %3895 = vmax.xlane.f32.xlu0 %v3894
    %v3896 = vpop.xlane.xlu0 %3895
    %v3897 = vsel %vm945, %v3803, -inf
    %3898 = vmax.xlane.f32.xlu0 %v3897
    %v3899 = vpop.xlane.xlu0 %3898
    %v3900 = vsel %vm945, %v3846, -inf
    %3901 = vmax.xlane.f32.xlu0 %v3900
    %v3902 = vpop.xlane.xlu0 %3901
    %v3903 = vsel %vm945, %v3889, -inf
    %3904 = vmax.xlane.f32.xlu0 %v3903
    %v3905 = vpop.xlane.xlu0 %3904
    %v3906 = vsub.f32 %v3760, %v3896
    %v3907 = vsub.f32 %v3803, %v3899
    %v3908 = vsub.f32 %v3846, %v3902
    %v3909 = vsub.f32 %v3889, %v3905
    %v3910 = vmul.f32 %v3906, 1.442695
    %v3911 = vpow.pop %v3910
    %v3912 = vmul.f32 %v3907, 1.442695
    %v3913 = vpow.pop %v3912
    %v3914 = vmul.f32 %v3908, 1.442695
    %v3915 = vpow.pop %v3914
    %v3916 = vmul.f32 %v3909, 1.442695
    %v3917 = vpow.pop %v3916
    %v3918 = vsel %vm945, %v3911, 0.0
    %3919 = vadd.xlane.f32.xlu0 %v3918
    %v3920 = vpop.xlane.xlu0 %3919
    %v3921 = vsel %vm945, %v3913, 0.0
    %3922 = vadd.xlane.f32.xlu0 %v3921
    %v3923 = vpop.xlane.xlu0 %3922
    %v3924 = vsel %vm945, %v3915, 0.0
    %3925 = vadd.xlane.f32.xlu0 %v3924
    %v3926 = vpop.xlane.xlu0 %3925
    %v3927 = vsel %vm945, %v3917, 0.0
    %3928 = vadd.xlane.f32.xlu0 %v3927
    %v3929 = vpop.xlane.xlu0 %3928
    %v3930 = vrcp.pop %v3920
    %v3931 = vrcp.pop %v3923
    %v3932 = vrcp.pop %v3926
    %v3933 = vrcp.pop %v3929
    %v3934 = vmul.f32 %v3911, %v3930
    %v3935 = vmul.f32 %v3913, %v3931
    %v3936 = vmul.f32 %v3915, %v3932
    %v3937 = vmul.f32 %v3917, %v3933
    %3939 = vrot.lane.b32.xlu0 %v602, 64
    %v3940 = vpop.permute.xlu0 %3939
    %v3942 = vmul.f32 %v2812, %v3940
    %v3943 = vmul.f32 %v2815, %v3940
    %v3944 = vmul.f32 %v2820, %v3940
    %v3945 = vmul.f32 %v2823, %v3940
    %v3946 = vpack.c.bf16 %v3942, %v3942
    %v3947 = vpack.c.bf16 %v3943, %v3943
    %v3948 = vpack.c.bf16 %v3944, %v3944
    %v3949 = vpack.c.bf16 %v3945, %v3945
    %v3950 = vpack.c.bf16 %v3934, %v3934
    %v3951 = vpack.c.bf16 %v3935, %v3935
    %v3952 = vpack.c.bf16 %v3936, %v3936
    %v3953 = vpack.c.bf16 %v3937, %v3937
    %3955 = vrot.lane.b32.xlu0 %v3946, 64
    %v3956 = vpop.permute.xlu0 %3955
    %v3958 = vsel %vm945, %v3950, 0
    %v3961 = vsel %vm1245, %v3956, 0
    %3963 = vmatprep.subr.bf16.mxu0 0
    %3964 = vmatpush1.bf16.msra.mxu0 %v3961
    %3965 = vmatprep.subr.bf16.mxu0 0
    %3966 = vmatpush1.bf16.msra.mxu0 0
    %3967 = vmatprep.subr.bf16.mxu0 0
    %3968 = vmatpush1.bf16.msra.mxu0 0
    %3969 = vmatprep.subr.bf16.mxu0 0
    %3970 = vmatpush1.bf16.msra.mxu0 0
    %3971 = vmatprep.subr.bf16.mxu0 0
    %3972 = vmatpush1.bf16.msra.mxu0 0
    %3973 = vmatprep.subr.bf16.mxu0 0
    %3974 = vmatpush1.bf16.msra.mxu0 0
    %3975 = vmatprep.subr.bf16.mxu0 0
    %3976 = vmatpush1.bf16.msra.mxu0 0
    %3977 = vmatprep.subr.bf16.mxu0 0
    %3978 = vmatpush1.bf16.msra.mxu0 0
    %3979 = vmatprep.subr.bf16.mxu0 0
    %3980 = vmatpush1.bf16.msra.mxu0 0
    %3981 = vmatprep.subr.bf16.mxu0 0
    %3982 = vmatpush1.bf16.msra.mxu0 0
    %3983 = vmatprep.subr.bf16.mxu0 0
    %3984 = vmatpush1.bf16.msra.mxu0 0
    %3985 = vmatprep.subr.bf16.mxu0 0
    %3986 = vmatpush1.bf16.msra.mxu0 0
    %3987 = vmatprep.subr.bf16.mxu0 0
    %3988 = vmatpush1.bf16.msra.mxu0 0
    %3989 = vmatprep.subr.bf16.mxu0 0
    %3990 = vmatpush1.bf16.msra.mxu0 0
    %3991 = vmatprep.subr.bf16.mxu0 0
    %3992 = vmatpush1.bf16.msra.mxu0 0
    %3993 = vmatprep.subr.bf16.mxu0 0
    %3994 = vmatpush1.bf16.msra.mxu0 0
    %3995 = vmatprep.mubr.bf16.mxu0 0
    %3996 = vmatmul.mubr.bf16.gmra.mrb[0].mxu0 %v3958
    %v3997 = vpop.f32.mrb[0].mxu0
    %v3998 = vadd.f32 0.0, %v3997
    %v3999 = vpop.f32.mrb[0].mxu0
    %v4000 = vpop.f32.mrb[0].mxu0
    %v4001 = vpop.f32.mrb[0].mxu0
    %4002 = vdwg.mxu0
    %4004 = vrot.lane.b32.xlu0 %v3947, 64
    %v4005 = vpop.permute.xlu0 %4004
    %v4007 = vsel %vm945, %v3951, 0
    %v4010 = vsel %vm1245, %v4005, 0
    %4012 = vmatprep.subr.bf16.mxu0 0
    %4013 = vmatpush1.bf16.msra.mxu0 %v4010
    %4014 = vmatprep.subr.bf16.mxu0 0
    %4015 = vmatpush1.bf16.msra.mxu0 0
    %4016 = vmatprep.subr.bf16.mxu0 0
    %4017 = vmatpush1.bf16.msra.mxu0 0
    %4018 = vmatprep.subr.bf16.mxu0 0
    %4019 = vmatpush1.bf16.msra.mxu0 0
    %4020 = vmatprep.subr.bf16.mxu0 0
    %4021 = vmatpush1.bf16.msra.mxu0 0
    %4022 = vmatprep.subr.bf16.mxu0 0
    %4023 = vmatpush1.bf16.msra.mxu0 0
    %4024 = vmatprep.subr.bf16.mxu0 0
    %4025 = vmatpush1.bf16.msra.mxu0 0
    %4026 = vmatprep.subr.bf16.mxu0 0
    %4027 = vmatpush1.bf16.msra.mxu0 0
    %4028 = vmatprep.subr.bf16.mxu0 0
    %4029 = vmatpush1.bf16.msra.mxu0 0
    %4030 = vmatprep.subr.bf16.mxu0 0
    %4031 = vmatpush1.bf16.msra.mxu0 0
    %4032 = vmatprep.subr.bf16.mxu0 0
    %4033 = vmatpush1.bf16.msra.mxu0 0
    %4034 = vmatprep.subr.bf16.mxu0 0
    %4035 = vmatpush1.bf16.msra.mxu0 0
    %4036 = vmatprep.subr.bf16.mxu0 0
    %4037 = vmatpush1.bf16.msra.mxu0 0
    %4038 = vmatprep.subr.bf16.mxu0 0
    %4039 = vmatpush1.bf16.msra.mxu0 0
    %4040 = vmatprep.subr.bf16.mxu0 0
    %4041 = vmatpush1.bf16.msra.mxu0 0
    %4042 = vmatprep.subr.bf16.mxu0 0
    %4043 = vmatpush1.bf16.msra.mxu0 0
    %4044 = vmatprep.mubr.bf16.mxu0 0
    %4045 = vmatmul.mubr.bf16.gmra.mrb[0].mxu0 %v4007
    %v4046 = vpop.f32.mrb[0].mxu0
    %v4047 = vadd.f32 0.0, %v4046
    %v4048 = vpop.f32.mrb[0].mxu0
    %v4049 = vpop.f32.mrb[0].mxu0
    %v4050 = vpop.f32.mrb[0].mxu0
    %4051 = vdwg.mxu0
    %4053 = vrot.lane.b32.xlu0 %v3948, 64
    %v4054 = vpop.permute.xlu0 %4053
    %v4056 = vsel %vm945, %v3952, 0
    %v4059 = vsel %vm1245, %v4054, 0
    %4061 = vmatprep.subr.bf16.mxu0 0
    %4062 = vmatpush1.bf16.msra.mxu0 %v4059
    %4063 = vmatprep.subr.bf16.mxu0 0
    %4064 = vmatpush1.bf16.msra.mxu0 0
    %4065 = vmatprep.subr.bf16.mxu0 0
    %4066 = vmatpush1.bf16.msra.mxu0 0
    %4067 = vmatprep.subr.bf16.mxu0 0
    %4068 = vmatpush1.bf16.msra.mxu0 0
    %4069 = vmatprep.subr.bf16.mxu0 0
    %4070 = vmatpush1.bf16.msra.mxu0 0
    %4071 = vmatprep.subr.bf16.mxu0 0
    %4072 = vmatpush1.bf16.msra.mxu0 0
    %4073 = vmatprep.subr.bf16.mxu0 0
    %4074 = vmatpush1.bf16.msra.mxu0 0
    %4075 = vmatprep.subr.bf16.mxu0 0
    %4076 = vmatpush1.bf16.msra.mxu0 0
    %4077 = vmatprep.subr.bf16.mxu0 0
    %4078 = vmatpush1.bf16.msra.mxu0 0
    %4079 = vmatprep.subr.bf16.mxu0 0
    %4080 = vmatpush1.bf16.msra.mxu0 0
    %4081 = vmatprep.subr.bf16.mxu0 0
    %4082 = vmatpush1.bf16.msra.mxu0 0
    %4083 = vmatprep.subr.bf16.mxu0 0
    %4084 = vmatpush1.bf16.msra.mxu0 0
    %4085 = vmatprep.subr.bf16.mxu0 0
    %4086 = vmatpush1.bf16.msra.mxu0 0
    %4087 = vmatprep.subr.bf16.mxu0 0
    %4088 = vmatpush1.bf16.msra.mxu0 0
    %4089 = vmatprep.subr.bf16.mxu0 0
    %4090 = vmatpush1.bf16.msra.mxu0 0
    %4091 = vmatprep.subr.bf16.mxu0 0
    %4092 = vmatpush1.bf16.msra.mxu0 0
    %4093 = vmatprep.mubr.bf16.mxu0 0
    %4094 = vmatmul.mubr.bf16.gmra.mrb[0].mxu0 %v4056
    %v4095 = vpop.f32.mrb[0].mxu0
    %v4096 = vadd.f32 0.0, %v4095
    %v4097 = vpop.f32.mrb[0].mxu0
    %v4098 = vpop.f32.mrb[0].mxu0
    %v4099 = vpop.f32.mrb[0].mxu0
    %4100 = vdwg.mxu0
    %4102 = vrot.lane.b32.xlu0 %v3949, 64
    %v4103 = vpop.permute.xlu0 %4102
    %v4105 = vsel %vm945, %v3953, 0
    %v4108 = vsel %vm1245, %v4103, 0
    %4110 = vmatprep.subr.bf16.mxu0 0
    %4111 = vmatpush1.bf16.msra.mxu0 %v4108
    %4112 = vmatprep.subr.bf16.mxu0 0
    %4113 = vmatpush1.bf16.msra.mxu0 0
    %4114 = vmatprep.subr.bf16.mxu0 0
    %4115 = vmatpush1.bf16.msra.mxu0 0
    %4116 = vmatprep.subr.bf16.mxu0 0
    %4117 = vmatpush1.bf16.msra.mxu0 0
    %4118 = vmatprep.subr.bf16.mxu0 0
    %4119 = vmatpush1.bf16.msra.mxu0 0
    %4120 = vmatprep.subr.bf16.mxu0 0
    %4121 = vmatpush1.bf16.msra.mxu0 0
    %4122 = vmatprep.subr.bf16.mxu0 0
    %4123 = vmatpush1.bf16.msra.mxu0 0
    %4124 = vmatprep.subr.bf16.mxu0 0
    %4125 = vmatpush1.bf16.msra.mxu0 0
    %4126 = vmatprep.subr.bf16.mxu0 0
    %4127 = vmatpush1.bf16.msra.mxu0 0
    %4128 = vmatprep.subr.bf16.mxu0 0
    %4129 = vmatpush1.bf16.msra.mxu0 0
    %4130 = vmatprep.subr.bf16.mxu0 0
    %4131 = vmatpush1.bf16.msra.mxu0 0
    %4132 = vmatprep.subr.bf16.mxu0 0
    %4133 = vmatpush1.bf16.msra.mxu0 0
    %4134 = vmatprep.subr.bf16.mxu0 0
    %4135 = vmatpush1.bf16.msra.mxu0 0
    %4136 = vmatprep.subr.bf16.mxu0 0
    %4137 = vmatpush1.bf16.msra.mxu0 0
    %4138 = vmatprep.subr.bf16.mxu0 0
    %4139 = vmatpush1.bf16.msra.mxu0 0
    %4140 = vmatprep.subr.bf16.mxu0 0
    %4141 = vmatpush1.bf16.msra.mxu0 0
    %4142 = vmatprep.mubr.bf16.mxu0 0
    %4143 = vmatmul.mubr.bf16.gmra.mrb[0].mxu0 %v4105
    %v4144 = vpop.f32.mrb[0].mxu0
    %v4145 = vadd.f32 0.0, %v4144
    %v4146 = vpop.f32.mrb[0].mxu0
    %v4147 = vpop.f32.mrb[0].mxu0
    %v4148 = vpop.f32.mrb[0].mxu0
    %4149 = vdwg.mxu0
    %v4150 = vadd.f32 %v3562, %v3998
    %v4151 = vadd.f32 %v3611, %v4047
    %v4152 = vadd.f32 %v3660, %v4096
    %v4153 = vadd.f32 %v3709, %v4145
    %v4154 = vmul.f32 %v2724, %v607
    %v4155 = vmul.f32 %v2727, %v607
    %v4156 = vmul.f32 %v2732, %v607
    %v4157 = vmul.f32 %v2735, %v607
    %v4158 = vpack.c.bf16 %v4154, %v4154
    %v4159 = vpack.c.bf16 %v4155, %v4155
    %v4160 = vpack.c.bf16 %v4156, %v4156
    %v4161 = vpack.c.bf16 %v4157, %v4157
    %v4163 = vsel %vm671, %v4158, 0
    %4165 = vmatprep.subr.bf16.mxu0 0
    %4166 = vmatpush1.bf16.xpose.msra.mxu0 %v2842
    %4167 = vmatprep.subr.bf16.mxu0 0
    %4168 = vmatpush1.bf16.xpose.msra.mxu0 0
    %4169 = vmatprep.subr.bf16.mxu0 0
    %4170 = vmatpush1.bf16.xpose.msra.mxu0 0
    %4171 = vmatprep.subr.bf16.mxu0 0
    %4172 = vmatpush1.bf16.xpose.msra.mxu0 0
    %4173 = vmatprep.subr.bf16.mxu0 0
    %4174 = vmatpush1.bf16.xpose.msra.mxu0 0
    %4175 = vmatprep.subr.bf16.mxu0 0
    %4176 = vmatpush1.bf16.xpose.msra.mxu0 0
    %4177 = vmatprep.subr.bf16.mxu0 0
    %4178 = vmatpush1.bf16.xpose.msra.mxu0 0
    %4179 = vmatprep.subr.bf16.mxu0 0
    %4180 = vmatpush1.bf16.xpose.msra.mxu0 0
    %4181 = vmatprep.subr.bf16.mxu0 0
    %4182 = vmatpush1.bf16.xpose.msra.mxu0 0
    %4183 = vmatprep.subr.bf16.mxu0 0
    %4184 = vmatpush1.bf16.xpose.msra.mxu0 0
    %4185 = vmatprep.subr.bf16.mxu0 0
    %4186 = vmatpush1.bf16.xpose.msra.mxu0 0
    %4187 = vmatprep.subr.bf16.mxu0 0
    %4188 = vmatpush1.bf16.xpose.msra.mxu0 0
    %4189 = vmatprep.subr.bf16.mxu0 0
    %4190 = vmatpush1.bf16.xpose.msra.mxu0 0
    %4191 = vmatprep.subr.bf16.mxu0 0
    %4192 = vmatpush1.bf16.xpose.msra.mxu0 0
    %4193 = vmatprep.subr.bf16.mxu0 0
    %4194 = vmatpush1.bf16.xpose.msra.mxu0 0
    %4195 = vmatprep.subr.bf16.mxu0 0
    %4196 = vmatpush1.bf16.xpose.msra.mxu0 0
    %4197 = vmatprep.mubr.bf16.mxu0 0
    %4198 = vmatmul.mubr.bf16.gmra.mrb[0].mxu0 %v4163
    %v4199 = vpop.f32.mrb[0].mxu0
    %v4200 = vadd.f32 0.0, %v4199
    %v4201 = vpop.f32.mrb[0].mxu0
    %v4202 = vpop.f32.mrb[0].mxu0
    %v4203 = vpop.f32.mrb[0].mxu0
    %4204 = vdwg.mxu0
    %v4206 = vsel %vm671, %v4159, 0
    %4208 = vmatprep.subr.bf16.mxu0 0
    %4209 = vmatpush1.bf16.xpose.msra.mxu0 %v2888
    %4210 = vmatprep.subr.bf16.mxu0 0
    %4211 = vmatpush1.bf16.xpose.msra.mxu0 0
    %4212 = vmatprep.subr.bf16.mxu0 0
    %4213 = vmatpush1.bf16.xpose.msra.mxu0 0
    %4214 = vmatprep.subr.bf16.mxu0 0
    %4215 = vmatpush1.bf16.xpose.msra.mxu0 0
    %4216 = vmatprep.subr.bf16.mxu0 0
    %4217 = vmatpush1.bf16.xpose.msra.mxu0 0
    %4218 = vmatprep.subr.bf16.mxu0 0
    %4219 = vmatpush1.bf16.xpose.msra.mxu0 0
    %4220 = vmatprep.subr.bf16.mxu0 0
    %4221 = vmatpush1.bf16.xpose.msra.mxu0 0
    %4222 = vmatprep.subr.bf16.mxu0 0
    %4223 = vmatpush1.bf16.xpose.msra.mxu0 0
    %4224 = vmatprep.subr.bf16.mxu0 0
    %4225 = vmatpush1.bf16.xpose.msra.mxu0 0
    %4226 = vmatprep.subr.bf16.mxu0 0
    %4227 = vmatpush1.bf16.xpose.msra.mxu0 0
    %4228 = vmatprep.subr.bf16.mxu0 0
    %4229 = vmatpush1.bf16.xpose.msra.mxu0 0
    %4230 = vmatprep.subr.bf16.mxu0 0
    %4231 = vmatpush1.bf16.xpose.msra.mxu0 0
    %4232 = vmatprep.subr.bf16.mxu0 0
    %4233 = vmatpush1.bf16.xpose.msra.mxu0 0
    %4234 = vmatprep.subr.bf16.mxu0 0
    %4235 = vmatpush1.bf16.xpose.msra.mxu0 0
    %4236 = vmatprep.subr.bf16.mxu0 0
    %4237 = vmatpush1.bf16.xpose.msra.mxu0 0
    %4238 = vmatprep.subr.bf16.mxu0 0
    %4239 = vmatpush1.bf16.xpose.msra.mxu0 0
    %4240 = vmatprep.mubr.bf16.mxu0 0
    %4241 = vmatmul.mubr.bf16.gmra.mrb[0].mxu0 %v4206
    %v4242 = vpop.f32.mrb[0].mxu0
    %v4243 = vadd.f32 0.0, %v4242
    %v4244 = vpop.f32.mrb[0].mxu0
    %v4245 = vpop.f32.mrb[0].mxu0
    %v4246 = vpop.f32.mrb[0].mxu0
    %4247 = vdwg.mxu0
    %v4249 = vsel %vm671, %v4160, 0
    %4251 = vmatprep.subr.bf16.mxu0 0
    %4252 = vmatpush1.bf16.xpose.msra.mxu0 %v2934
    %4253 = vmatprep.subr.bf16.mxu0 0
    %4254 = vmatpush1.bf16.xpose.msra.mxu0 0
    %4255 = vmatprep.subr.bf16.mxu0 0
    %4256 = vmatpush1.bf16.xpose.msra.mxu0 0
    %4257 = vmatprep.subr.bf16.mxu0 0
    %4258 = vmatpush1.bf16.xpose.msra.mxu0 0
    %4259 = vmatprep.subr.bf16.mxu0 0
    %4260 = vmatpush1.bf16.xpose.msra.mxu0 0
    %4261 = vmatprep.subr.bf16.mxu0 0
    %4262 = vmatpush1.bf16.xpose.msra.mxu0 0
    %4263 = vmatprep.subr.bf16.mxu0 0
    %4264 = vmatpush1.bf16.xpose.msra.mxu0 0
    %4265 = vmatprep.subr.bf16.mxu0 0
    %4266 = vmatpush1.bf16.xpose.msra.mxu0 0
    %4267 = vmatprep.subr.bf16.mxu0 0
    %4268 = vmatpush1.bf16.xpose.msra.mxu0 0
    %4269 = vmatprep.subr.bf16.mxu0 0
    %4270 = vmatpush1.bf16.xpose.msra.mxu0 0
    %4271 = vmatprep.subr.bf16.mxu0 0
    %4272 = vmatpush1.bf16.xpose.msra.mxu0 0
    %4273 = vmatprep.subr.bf16.mxu0 0
    %4274 = vmatpush1.bf16.xpose.msra.mxu0 0
    %4275 = vmatprep.subr.bf16.mxu0 0
    %4276 = vmatpush1.bf16.xpose.msra.mxu0 0
    %4277 = vmatprep.subr.bf16.mxu0 0
    %4278 = vmatpush1.bf16.xpose.msra.mxu0 0
    %4279 = vmatprep.subr.bf16.mxu0 0
    %4280 = vmatpush1.bf16.xpose.msra.mxu0 0
    %4281 = vmatprep.subr.bf16.mxu0 0
    %4282 = vmatpush1.bf16.xpose.msra.mxu0 0
    %4283 = vmatprep.mubr.bf16.mxu0 0
    %4284 = vmatmul.mubr.bf16.gmra.mrb[0].mxu0 %v4249
    %v4285 = vpop.f32.mrb[0].mxu0
    %v4286 = vadd.f32 0.0, %v4285
    %v4287 = vpop.f32.mrb[0].mxu0
    %v4288 = vpop.f32.mrb[0].mxu0
    %v4289 = vpop.f32.mrb[0].mxu0
    %4290 = vdwg.mxu0
    %v4292 = vsel %vm671, %v4161, 0
    %4294 = vmatprep.subr.bf16.mxu0 0
    %4295 = vmatpush1.bf16.xpose.msra.mxu0 %v2980
    %4296 = vmatprep.subr.bf16.mxu0 0
    %4297 = vmatpush1.bf16.xpose.msra.mxu0 0
    %4298 = vmatprep.subr.bf16.mxu0 0
    %4299 = vmatpush1.bf16.xpose.msra.mxu0 0
    %4300 = vmatprep.subr.bf16.mxu0 0
    %4301 = vmatpush1.bf16.xpose.msra.mxu0 0
    %4302 = vmatprep.subr.bf16.mxu0 0
    %4303 = vmatpush1.bf16.xpose.msra.mxu0 0
    %4304 = vmatprep.subr.bf16.mxu0 0
    %4305 = vmatpush1.bf16.xpose.msra.mxu0 0
    %4306 = vmatprep.subr.bf16.mxu0 0
    %4307 = vmatpush1.bf16.xpose.msra.mxu0 0
    %4308 = vmatprep.subr.bf16.mxu0 0
    %4309 = vmatpush1.bf16.xpose.msra.mxu0 0
    %4310 = vmatprep.subr.bf16.mxu0 0
    %4311 = vmatpush1.bf16.xpose.msra.mxu0 0
    %4312 = vmatprep.subr.bf16.mxu0 0
    %4313 = vmatpush1.bf16.xpose.msra.mxu0 0
    %4314 = vmatprep.subr.bf16.mxu0 0
    %4315 = vmatpush1.bf16.xpose.msra.mxu0 0
    %4316 = vmatprep.subr.bf16.mxu0 0
    %4317 = vmatpush1.bf16.xpose.msra.mxu0 0
    %4318 = vmatprep.subr.bf16.mxu0 0
    %4319 = vmatpush1.bf16.xpose.msra.mxu0 0
    %4320 = vmatprep.subr.bf16.mxu0 0
    %4321 = vmatpush1.bf16.xpose.msra.mxu0 0
    %4322 = vmatprep.subr.bf16.mxu0 0
    %4323 = vmatpush1.bf16.xpose.msra.mxu0 0
    %4324 = vmatprep.subr.bf16.mxu0 0
    %4325 = vmatpush1.bf16.xpose.msra.mxu0 0
    %4326 = vmatprep.mubr.bf16.mxu0 0
    %4327 = vmatmul.mubr.bf16.gmra.mrb[0].mxu0 %v4292
    %v4328 = vpop.f32.mrb[0].mxu0
    %v4329 = vadd.f32 0.0, %v4328
    %v4330 = vpop.f32.mrb[0].mxu0
    %v4331 = vpop.f32.mrb[0].mxu0
    %v4332 = vpop.f32.mrb[0].mxu0
    %4333 = vdwg.mxu0
    %v4334 = vsel %vm945, %v4200, -inf
    %4335 = vmax.xlane.f32.xlu0 %v4334
    %v4336 = vpop.xlane.xlu0 %4335
    %v4337 = vsel %vm945, %v4243, -inf
    %4338 = vmax.xlane.f32.xlu0 %v4337
    %v4339 = vpop.xlane.xlu0 %4338
    %v4340 = vsel %vm945, %v4286, -inf
    %4341 = vmax.xlane.f32.xlu0 %v4340
    %v4342 = vpop.xlane.xlu0 %4341
    %v4343 = vsel %vm945, %v4329, -inf
    %4344 = vmax.xlane.f32.xlu0 %v4343
    %v4345 = vpop.xlane.xlu0 %4344
    %v4346 = vsub.f32 %v4200, %v4336
    %v4347 = vsub.f32 %v4243, %v4339
    %v4348 = vsub.f32 %v4286, %v4342
    %v4349 = vsub.f32 %v4329, %v4345
    %v4350 = vmul.f32 %v4346, 1.442695
    %v4351 = vpow.pop %v4350
    %v4352 = vmul.f32 %v4347, 1.442695
    %v4353 = vpow.pop %v4352
    %v4354 = vmul.f32 %v4348, 1.442695
    %v4355 = vpow.pop %v4354
    %v4356 = vmul.f32 %v4349, 1.442695
    %v4357 = vpow.pop %v4356
    %v4358 = vsel %vm945, %v4351, 0.0
    %4359 = vadd.xlane.f32.xlu0 %v4358
    %v4360 = vpop.xlane.xlu0 %4359
    %v4361 = vsel %vm945, %v4353, 0.0
    %4362 = vadd.xlane.f32.xlu0 %v4361
    %v4363 = vpop.xlane.xlu0 %4362
    %v4364 = vsel %vm945, %v4355, 0.0
    %4365 = vadd.xlane.f32.xlu0 %v4364
    %v4366 = vpop.xlane.xlu0 %4365
    %v4367 = vsel %vm945, %v4357, 0.0
    %4368 = vadd.xlane.f32.xlu0 %v4367
    %v4369 = vpop.xlane.xlu0 %4368
    %v4370 = vrcp.pop %v4360
    %v4371 = vrcp.pop %v4363
    %v4372 = vrcp.pop %v4366
    %v4373 = vrcp.pop %v4369
    %v4374 = vmul.f32 %v4351, %v4370
    %v4375 = vmul.f32 %v4353, %v4371
    %v4376 = vmul.f32 %v4355, %v4372
    %v4377 = vmul.f32 %v4357, %v4373
    %4379 = vrot.lane.b32.xlu0 %v607, 64
    %v4380 = vpop.permute.xlu0 %4379
    %v4382 = vmul.f32 %v2812, %v4380
    %v4383 = vmul.f32 %v2815, %v4380
    %v4384 = vmul.f32 %v2820, %v4380
    %v4385 = vmul.f32 %v2823, %v4380
    %v4386 = vpack.c.bf16 %v4382, %v4382
    %v4387 = vpack.c.bf16 %v4383, %v4383
    %v4388 = vpack.c.bf16 %v4384, %v4384
    %v4389 = vpack.c.bf16 %v4385, %v4385
    %v4390 = vpack.c.bf16 %v4374, %v4374
    %v4391 = vpack.c.bf16 %v4375, %v4375
    %v4392 = vpack.c.bf16 %v4376, %v4376
    %v4393 = vpack.c.bf16 %v4377, %v4377
    %4395 = vrot.lane.b32.xlu0 %v4386, 64
    %v4396 = vpop.permute.xlu0 %4395
    %v4398 = vsel %vm945, %v4390, 0
    %v4401 = vsel %vm1245, %v4396, 0
    %4403 = vmatprep.subr.bf16.mxu0 0
    %4404 = vmatpush1.bf16.msra.mxu0 %v4401
    %4405 = vmatprep.subr.bf16.mxu0 0
    %4406 = vmatpush1.bf16.msra.mxu0 0
    %4407 = vmatprep.subr.bf16.mxu0 0
    %4408 = vmatpush1.bf16.msra.mxu0 0
    %4409 = vmatprep.subr.bf16.mxu0 0
    %4410 = vmatpush1.bf16.msra.mxu0 0
    %4411 = vmatprep.subr.bf16.mxu0 0
    %4412 = vmatpush1.bf16.msra.mxu0 0
    %4413 = vmatprep.subr.bf16.mxu0 0
    %4414 = vmatpush1.bf16.msra.mxu0 0
    %4415 = vmatprep.subr.bf16.mxu0 0
    %4416 = vmatpush1.bf16.msra.mxu0 0
    %4417 = vmatprep.subr.bf16.mxu0 0
    %4418 = vmatpush1.bf16.msra.mxu0 0
    %4419 = vmatprep.subr.bf16.mxu0 0
    %4420 = vmatpush1.bf16.msra.mxu0 0
    %4421 = vmatprep.subr.bf16.mxu0 0
    %4422 = vmatpush1.bf16.msra.mxu0 0
    %4423 = vmatprep.subr.bf16.mxu0 0
    %4424 = vmatpush1.bf16.msra.mxu0 0
    %4425 = vmatprep.subr.bf16.mxu0 0
    %4426 = vmatpush1.bf16.msra.mxu0 0
    %4427 = vmatprep.subr.bf16.mxu0 0
    %4428 = vmatpush1.bf16.msra.mxu0 0
    %4429 = vmatprep.subr.bf16.mxu0 0
    %4430 = vmatpush1.bf16.msra.mxu0 0
    %4431 = vmatprep.subr.bf16.mxu0 0
    %4432 = vmatpush1.bf16.msra.mxu0 0
    %4433 = vmatprep.subr.bf16.mxu0 0
    %4434 = vmatpush1.bf16.msra.mxu0 0
    %4435 = vmatprep.mubr.bf16.mxu0 0
    %4436 = vmatmul.mubr.bf16.gmra.mrb[0].mxu0 %v4398
    %v4437 = vpop.f32.mrb[0].mxu0
    %v4438 = vadd.f32 0.0, %v4437
    %v4439 = vpop.f32.mrb[0].mxu0
    %v4440 = vpop.f32.mrb[0].mxu0
    %v4441 = vpop.f32.mrb[0].mxu0
    %4442 = vdwg.mxu0
    %4444 = vrot.lane.b32.xlu0 %v4387, 64
    %v4445 = vpop.permute.xlu0 %4444
    %v4447 = vsel %vm945, %v4391, 0
    %v4450 = vsel %vm1245, %v4445, 0
    %4452 = vmatprep.subr.bf16.mxu0 0
    %4453 = vmatpush1.bf16.msra.mxu0 %v4450
    %4454 = vmatprep.subr.bf16.mxu0 0
    %4455 = vmatpush1.bf16.msra.mxu0 0
    %4456 = vmatprep.subr.bf16.mxu0 0
    %4457 = vmatpush1.bf16.msra.mxu0 0
    %4458 = vmatprep.subr.bf16.mxu0 0
    %4459 = vmatpush1.bf16.msra.mxu0 0
    %4460 = vmatprep.subr.bf16.mxu0 0
    %4461 = vmatpush1.bf16.msra.mxu0 0
    %4462 = vmatprep.subr.bf16.mxu0 0
    %4463 = vmatpush1.bf16.msra.mxu0 0
    %4464 = vmatprep.subr.bf16.mxu0 0
    %4465 = vmatpush1.bf16.msra.mxu0 0
    %4466 = vmatprep.subr.bf16.mxu0 0
    %4467 = vmatpush1.bf16.msra.mxu0 0
    %4468 = vmatprep.subr.bf16.mxu0 0
    %4469 = vmatpush1.bf16.msra.mxu0 0
    %4470 = vmatprep.subr.bf16.mxu0 0
    %4471 = vmatpush1.bf16.msra.mxu0 0
    %4472 = vmatprep.subr.bf16.mxu0 0
    %4473 = vmatpush1.bf16.msra.mxu0 0
    %4474 = vmatprep.subr.bf16.mxu0 0
    %4475 = vmatpush1.bf16.msra.mxu0 0
    %4476 = vmatprep.subr.bf16.mxu0 0
    %4477 = vmatpush1.bf16.msra.mxu0 0
    %4478 = vmatprep.subr.bf16.mxu0 0
    %4479 = vmatpush1.bf16.msra.mxu0 0
    %4480 = vmatprep.subr.bf16.mxu0 0
    %4481 = vmatpush1.bf16.msra.mxu0 0
    %4482 = vmatprep.subr.bf16.mxu0 0
    %4483 = vmatpush1.bf16.msra.mxu0 0
    %4484 = vmatprep.mubr.bf16.mxu0 0
    %4485 = vmatmul.mubr.bf16.gmra.mrb[0].mxu0 %v4447
    %v4486 = vpop.f32.mrb[0].mxu0
    %v4487 = vadd.f32 0.0, %v4486
    %v4488 = vpop.f32.mrb[0].mxu0
    %v4489 = vpop.f32.mrb[0].mxu0
    %v4490 = vpop.f32.mrb[0].mxu0
    %4491 = vdwg.mxu0
    %4493 = vrot.lane.b32.xlu0 %v4388, 64
    %v4494 = vpop.permute.xlu0 %4493
    %v4496 = vsel %vm945, %v4392, 0
    %v4499 = vsel %vm1245, %v4494, 0
    %4501 = vmatprep.subr.bf16.mxu0 0
    %4502 = vmatpush1.bf16.msra.mxu0 %v4499
    %4503 = vmatprep.subr.bf16.mxu0 0
    %4504 = vmatpush1.bf16.msra.mxu0 0
    %4505 = vmatprep.subr.bf16.mxu0 0
    %4506 = vmatpush1.bf16.msra.mxu0 0
    %4507 = vmatprep.subr.bf16.mxu0 0
    %4508 = vmatpush1.bf16.msra.mxu0 0
    %4509 = vmatprep.subr.bf16.mxu0 0
    %4510 = vmatpush1.bf16.msra.mxu0 0
    %4511 = vmatprep.subr.bf16.mxu0 0
    %4512 = vmatpush1.bf16.msra.mxu0 0
    %4513 = vmatprep.subr.bf16.mxu0 0
    %4514 = vmatpush1.bf16.msra.mxu0 0
    %4515 = vmatprep.subr.bf16.mxu0 0
    %4516 = vmatpush1.bf16.msra.mxu0 0
    %4517 = vmatprep.subr.bf16.mxu0 0
    %4518 = vmatpush1.bf16.msra.mxu0 0
    %4519 = vmatprep.subr.bf16.mxu0 0
    %4520 = vmatpush1.bf16.msra.mxu0 0
    %4521 = vmatprep.subr.bf16.mxu0 0
    %4522 = vmatpush1.bf16.msra.mxu0 0
    %4523 = vmatprep.subr.bf16.mxu0 0
    %4524 = vmatpush1.bf16.msra.mxu0 0
    %4525 = vmatprep.subr.bf16.mxu0 0
    %4526 = vmatpush1.bf16.msra.mxu0 0
    %4527 = vmatprep.subr.bf16.mxu0 0
    %4528 = vmatpush1.bf16.msra.mxu0 0
    %4529 = vmatprep.subr.bf16.mxu0 0
    %4530 = vmatpush1.bf16.msra.mxu0 0
    %4531 = vmatprep.subr.bf16.mxu0 0
    %4532 = vmatpush1.bf16.msra.mxu0 0
    %4533 = vmatprep.mubr.bf16.mxu0 0
    %4534 = vmatmul.mubr.bf16.gmra.mrb[0].mxu0 %v4496
    %v4535 = vpop.f32.mrb[0].mxu0
    %v4536 = vadd.f32 0.0, %v4535
    %v4537 = vpop.f32.mrb[0].mxu0
    %v4538 = vpop.f32.mrb[0].mxu0
    %v4539 = vpop.f32.mrb[0].mxu0
    %4540 = vdwg.mxu0
    %4542 = vrot.lane.b32.xlu0 %v4389, 64
    %v4543 = vpop.permute.xlu0 %4542
    %v4545 = vsel %vm945, %v4393, 0
    %v4548 = vsel %vm1245, %v4543, 0
    %4550 = vmatprep.subr.bf16.mxu0 0
    %4551 = vmatpush1.bf16.msra.mxu0 %v4548
    %4552 = vmatprep.subr.bf16.mxu0 0
    %4553 = vmatpush1.bf16.msra.mxu0 0
    %4554 = vmatprep.subr.bf16.mxu0 0
    %4555 = vmatpush1.bf16.msra.mxu0 0
    %4556 = vmatprep.subr.bf16.mxu0 0
    %4557 = vmatpush1.bf16.msra.mxu0 0
    %4558 = vmatprep.subr.bf16.mxu0 0
    %4559 = vmatpush1.bf16.msra.mxu0 0
    %4560 = vmatprep.subr.bf16.mxu0 0
    %4561 = vmatpush1.bf16.msra.mxu0 0
    %4562 = vmatprep.subr.bf16.mxu0 0
    %4563 = vmatpush1.bf16.msra.mxu0 0
    %4564 = vmatprep.subr.bf16.mxu0 0
    %4565 = vmatpush1.bf16.msra.mxu0 0
    %4566 = vmatprep.subr.bf16.mxu0 0
    %4567 = vmatpush1.bf16.msra.mxu0 0
    %4568 = vmatprep.subr.bf16.mxu0 0
    %4569 = vmatpush1.bf16.msra.mxu0 0
    %4570 = vmatprep.subr.bf16.mxu0 0
    %4571 = vmatpush1.bf16.msra.mxu0 0
    %4572 = vmatprep.subr.bf16.mxu0 0
    %4573 = vmatpush1.bf16.msra.mxu0 0
    %4574 = vmatprep.subr.bf16.mxu0 0
    %4575 = vmatpush1.bf16.msra.mxu0 0
    %4576 = vmatprep.subr.bf16.mxu0 0
    %4577 = vmatpush1.bf16.msra.mxu0 0
    %4578 = vmatprep.subr.bf16.mxu0 0
    %4579 = vmatpush1.bf16.msra.mxu0 0
    %4580 = vmatprep.subr.bf16.mxu0 0
    %4581 = vmatpush1.bf16.msra.mxu0 0
    %4582 = vmatprep.mubr.bf16.mxu0 0
    %4583 = vmatmul.mubr.bf16.gmra.mrb[0].mxu0 %v4545
    %v4584 = vpop.f32.mrb[0].mxu0
    %v4585 = vadd.f32 0.0, %v4584
    %v4586 = vpop.f32.mrb[0].mxu0
    %v4587 = vpop.f32.mrb[0].mxu0
    %v4588 = vpop.f32.mrb[0].mxu0
    %4589 = vdwg.mxu0
    %v4590 = vadd.f32 %v4150, %v4438
    %v4591 = vadd.f32 %v4151, %v4487
    %v4592 = vadd.f32 %v4152, %v4536
    %v4593 = vadd.f32 %v4153, %v4585
    %v4594 = vpack.c.bf16 %v4591, %v4590
    %v4595 = vpack.c.bf16 %v4593, %v4592
    %v4596 = vld [vmem:[#allocation16] sm:$0xf]
    %v4597 = vld [vmem:[#allocation16 + $0x4] sm:$0xf]
    %v4598 = vld [vmem:[#allocation16 + $0x8] sm:$0xf]
    %v4599 = vld [vmem:[#allocation16 + $0xc] sm:$0xf]
    %v4600 = vld [vmem:[#allocation16 + $0x10] sm:$0xf]
    %v4601 = vld [vmem:[#allocation16 + $0x14] sm:$0xf]
    %v4602 = vld [vmem:[#allocation16 + $0x18] sm:$0xf]
    %v4603 = vld [vmem:[#allocation16 + $0x1c] sm:$0xf]
    %v4604 = vld [vmem:[#allocation17] sm:$0x1]
    %v4606 = vlaneseq
    %v4607 = vshrl.u32 %v4606, 7
    %v4608 = vsub.s32 0, %v4607
    %v4609 = vrot.slane %v4604, %v4608
    %v4619 = vunpack.c.l.b16 %v4596
    %v4620 = vunpack.c.l.b16 %v4597
    %v4621 = vunpack.c.l.b16 %v4598
    %v4622 = vunpack.c.l.b16 %v4599
    %v4623 = vunpack.c.l.b16 %v4600
    %v4624 = vunpack.c.l.b16 %v4601
    %v4625 = vunpack.c.l.b16 %v4602
    %v4626 = vunpack.c.l.b16 %v4603
    %v4627 = vpack.c.b16 %v4620, %v4619
    %v4628 = vpack.c.b16 %v4622, %v4621
    %v4629 = vpack.c.b16 %v4624, %v4623
    %v4630 = vpack.c.b16 %v4626, %v4625
    %v4636 = vsel %vm671, %v4594, 0
    %v4639 = vsel %vm671, %v4595, 0
    %4641 = vmatprep.subr.bf16.mxu0 0
    %4642 = vmatpush1.bf16.msra.mxu0 %v4627
    %4643 = vmatprep.subr.bf16.mxu0 0
    %4644 = vmatpush1.bf16.msra.mxu0 %v4628
    %4645 = vmatprep.subr.bf16.mxu0 0
    %4646 = vmatpush1.bf16.msra.mxu0 %v4629
    %4647 = vmatprep.subr.bf16.mxu0 0
    %4648 = vmatpush1.bf16.msra.mxu0 %v4630
    %4649 = vmatprep.subr.bf16.mxu0 0
    %4650 = vmatpush1.bf16.msra.mxu0 0
    %4651 = vmatprep.subr.bf16.mxu0 0
    %4652 = vmatpush1.bf16.msra.mxu0 0
    %4653 = vmatprep.subr.bf16.mxu0 0
    %4654 = vmatpush1.bf16.msra.mxu0 0
    %4655 = vmatprep.subr.bf16.mxu0 0
    %4656 = vmatpush1.bf16.msra.mxu0 0
    %4657 = vmatprep.subr.bf16.mxu0 0
    %4658 = vmatpush1.bf16.msra.mxu0 0
    %4659 = vmatprep.subr.bf16.mxu0 0
    %4660 = vmatpush1.bf16.msra.mxu0 0
    %4661 = vmatprep.subr.bf16.mxu0 0
    %4662 = vmatpush1.bf16.msra.mxu0 0
    %4663 = vmatprep.subr.bf16.mxu0 0
    %4664 = vmatpush1.bf16.msra.mxu0 0
    %4665 = vmatprep.subr.bf16.mxu0 0
    %4666 = vmatpush1.bf16.msra.mxu0 0
    %4667 = vmatprep.subr.bf16.mxu0 0
    %4668 = vmatpush1.bf16.msra.mxu0 0
    %4669 = vmatprep.subr.bf16.mxu0 0
    %4670 = vmatpush1.bf16.msra.mxu0 0
    %4671 = vmatprep.subr.bf16.mxu0 0
    %4672 = vmatpush1.bf16.msra.mxu0 0
    %4673 = vmatprep.mubr.bf16.mxu0 0
    %4674 = vmatmul.mubr.bf16.gmra.mrb[0].mxu0 %v4636
    %v4675 = vpop.f32.mrb[0].mxu0
    %v4676 = vadd.f32 %v4609, %v4675
    %v4677 = vpop.f32.mrb[0].mxu0
    %v4678 = vpop.f32.mrb[0].mxu0
    %v4679 = vadd.f32 %v4609, %v4678
    %v4680 = vpop.f32.mrb[0].mxu0
    %4681 = vmatprep.mubr.bf16.mxu0 0
    %4682 = vmatmul.mubr.bf16.gmra.mrb[0].mxu0 %v4639
    %v4683 = vpop.f32.mrb[0].mxu0
    %v4684 = vadd.f32 %v4609, %v4683
    %v4685 = vpop.f32.mrb[0].mxu0
    %v4686 = vpop.f32.mrb[0].mxu0
    %v4687 = vadd.f32 %v4609, %v4686
    %v4688 = vpop.f32.mrb[0].mxu0
    %4689 = vdwg.mxu0
    %v4690 = vadd.f32 %v2638, %v4676
    %v4691 = vadd.f32 %v2639, %v4679
    %v4692 = vadd.f32 %v2640, %v4684
    %v4693 = vadd.f32 %v2641, %v4687
    %v4694 = vld [vmem:[#allocation22] sm:$0x1]
    %v4695 = vld [vmem:[#allocation23] sm:$0x1]
    %v4696 = vsel %vm671, %v4690, 0.0
    %4697 = vadd.xlane.f32.xlu0 %v4696
    %v4698 = vpop.xlane.xlu0 %4697
    %v4699 = vsel %vm671, %v4691, 0.0
    %4700 = vadd.xlane.f32.xlu0 %v4699
    %v4701 = vpop.xlane.xlu0 %4700
    %v4702 = vsel %vm671, %v4692, 0.0
    %4703 = vadd.xlane.f32.xlu0 %v4702
    %v4704 = vpop.xlane.xlu0 %4703
    %v4705 = vsel %vm671, %v4693, 0.0
    %4706 = vadd.xlane.f32.xlu0 %v4705
    %v4707 = vpop.xlane.xlu0 %4706
    %v4708 = vmul.f32 %v4698, %v2581
    %v4709 = vmul.f32 %v4701, %v2581
    %v4710 = vmul.f32 %v4704, %v2581
    %v4711 = vmul.f32 %v4707, %v2581
    %v4712 = vsub.f32 %v4690, %v4708
    %v4713 = vsub.f32 %v4691, %v4709
    %v4714 = vsub.f32 %v4692, %v4710
    %v4715 = vsub.f32 %v4693, %v4711
    %v4716 = vmul.f32 %v4712, %v4712
    %v4717 = vmul.f32 %v4713, %v4713
    %v4718 = vmul.f32 %v4714, %v4714
    %v4719 = vmul.f32 %v4715, %v4715
    %v4720 = vsel %vm671, %v4716, 0.0
    %4721 = vadd.xlane.f32.xlu0 %v4720
    %v4722 = vpop.xlane.xlu0 %4721
    %v4723 = vsel %vm671, %v4717, 0.0
    %4724 = vadd.xlane.f32.xlu0 %v4723
    %v4725 = vpop.xlane.xlu0 %4724
    %v4726 = vsel %vm671, %v4718, 0.0
    %4727 = vadd.xlane.f32.xlu0 %v4726
    %v4728 = vpop.xlane.xlu0 %4727
    %v4729 = vsel %vm671, %v4719, 0.0
    %4730 = vadd.xlane.f32.xlu0 %v4729
    %v4731 = vpop.xlane.xlu0 %4730
    %v4732 = vmul.f32 %v4722, %v2581
    %v4733 = vmul.f32 %v4725, %v2581
    %v4734 = vmul.f32 %v4728, %v2581
    %v4735 = vmul.f32 %v4731, %v2581
    %v4736 = vadd.f32 %v4732, 1e-05
    %v4737 = vadd.f32 %v4733, 1e-05
    %v4738 = vadd.f32 %v4734, 1e-05
    %v4739 = vadd.f32 %v4735, 1e-05
    %v4740 = vrsqrt.pop %v4736
    %v4741 = vrsqrt.pop %v4737
    %v4742 = vrsqrt.pop %v4738
    %v4743 = vrsqrt.pop %v4739
    %v4744 = vmul.f32 %v4712, %v4740
    %v4745 = vmul.f32 %v4713, %v4741
    %v4746 = vmul.f32 %v4714, %v4742
    %v4747 = vmul.f32 %v4715, %v4743
    %v4749 = vlaneseq
    %v4750 = vshrl.u32 %v4749, 7
    %v4751 = vsub.s32 0, %v4750
    %v4752 = vrot.slane %v4694, %v4751
    %v4754 = vmul.f32 %v4744, %v4752
    %v4755 = vmul.f32 %v4745, %v4752
    %v4756 = vmul.f32 %v4746, %v4752
    %v4757 = vmul.f32 %v4747, %v4752
    %v4759 = vlaneseq
    %v4760 = vshrl.u32 %v4759, 7
    %v4761 = vsub.s32 0, %v4760
    %v4762 = vrot.slane %v4695, %v4761
    %v4764 = vadd.f32 %v4754, %v4762
    %v4765 = vadd.f32 %v4755, %v4762
    %v4766 = vadd.f32 %v4756, %v4762
    %v4767 = vadd.f32 %v4757, %v4762
    %v4768 = vpack.c.bf16 %v4765, %v4764
    %v4769 = vpack.c.bf16 %v4767, %v4766
    %v4770 = vld [vmem:[#allocation28] sm:$0xf]
    %v4771 = vld [vmem:[#allocation28 + $0x4] sm:$0xf]
    %v4772 = vld [vmem:[#allocation28 + $0x8] sm:$0xf]
    %v4773 = vld [vmem:[#allocation28 + $0xc] sm:$0xf]
    %v4774 = vld [vmem:[#allocation28 + $0x10] sm:$0xf]
    %v4775 = vld [vmem:[#allocation28 + $0x14] sm:$0xf]
    %v4776 = vld [vmem:[#allocation28 + $0x18] sm:$0xf]
    %v4777 = vld [vmem:[#allocation28 + $0x1c] sm:$0xf]
    %v4778 = vld [vmem:[#allocation29] sm:$0x1]
    %v4780 = vlaneseq
    %v4781 = vshrl.u32 %v4780, 7
    %v4782 = vsub.s32 0, %v4781
    %v4783 = vrot.slane %v4778, %v4782
    %v4793 = vunpack.c.l.b16 %v4770
    %v4794 = vunpack.c.l.b16 %v4771
    %v4795 = vunpack.c.l.b16 %v4772
    %v4796 = vunpack.c.l.b16 %v4773
    %v4797 = vunpack.c.l.b16 %v4774
    %v4798 = vunpack.c.l.b16 %v4775
    %v4799 = vunpack.c.l.b16 %v4776
    %v4800 = vunpack.c.l.b16 %v4777
    %v4801 = vpack.c.b16 %v4794, %v4793
    %v4802 = vpack.c.b16 %v4796, %v4795
    %v4803 = vpack.c.b16 %v4798, %v4797
    %v4804 = vpack.c.b16 %v4800, %v4799
    %v4810 = vsel %vm671, %v4768, 0
    %v4813 = vsel %vm671, %v4769, 0
    %4815 = vmatprep.subr.bf16.mxu0 0
    %4816 = vmatpush1.bf16.msra.mxu0 %v4801
    %4817 = vmatprep.subr.bf16.mxu0 0
    %4818 = vmatpush1.bf16.msra.mxu0 %v4802
    %4819 = vmatprep.subr.bf16.mxu0 0
    %4820 = vmatpush1.bf16.msra.mxu0 %v4803
    %4821 = vmatprep.subr.bf16.mxu0 0
    %4822 = vmatpush1.bf16.msra.mxu0 %v4804
    %4823 = vmatprep.subr.bf16.mxu0 0
    %4824 = vmatpush1.bf16.msra.mxu0 0
    %4825 = vmatprep.subr.bf16.mxu0 0
    %4826 = vmatpush1.bf16.msra.mxu0 0
    %4827 = vmatprep.subr.bf16.mxu0 0
    %4828 = vmatpush1.bf16.msra.mxu0 0
    %4829 = vmatprep.subr.bf16.mxu0 0
    %4830 = vmatpush1.bf16.msra.mxu0 0
    %4831 = vmatprep.subr.bf16.mxu0 0
    %4832 = vmatpush1.bf16.msra.mxu0 0
    %4833 = vmatprep.subr.bf16.mxu0 0
    %4834 = vmatpush1.bf16.msra.mxu0 0
    %4835 = vmatprep.subr.bf16.mxu0 0
    %4836 = vmatpush1.bf16.msra.mxu0 0
    %4837 = vmatprep.subr.bf16.mxu0 0
    %4838 = vmatpush1.bf16.msra.mxu0 0
    %4839 = vmatprep.subr.bf16.mxu0 0
    %4840 = vmatpush1.bf16.msra.mxu0 0
    %4841 = vmatprep.subr.bf16.mxu0 0
    %4842 = vmatpush1.bf16.msra.mxu0 0
    %4843 = vmatprep.subr.bf16.mxu0 0
    %4844 = vmatpush1.bf16.msra.mxu0 0
    %4845 = vmatprep.subr.bf16.mxu0 0
    %4846 = vmatpush1.bf16.msra.mxu0 0
    %4847 = vmatprep.mubr.bf16.mxu0 0
    %4848 = vmatmul.mubr.bf16.gmra.mrb[0].mxu0 %v4810
    %v4849 = vpop.f32.mrb[0].mxu0
    %v4850 = vadd.f32 %v4783, %v4849
    %v4851 = vpop.f32.mrb[0].mxu0
    %v4852 = vpop.f32.mrb[0].mxu0
    %v4853 = vadd.f32 %v4783, %v4852
    %v4854 = vpop.f32.mrb[0].mxu0
    %4855 = vmatprep.mubr.bf16.mxu0 0
    %4856 = vmatmul.mubr.bf16.gmra.mrb[0].mxu0 %v4813
    %v4857 = vpop.f32.mrb[0].mxu0
    %v4858 = vadd.f32 %v4783, %v4857
    %v4859 = vpop.f32.mrb[0].mxu0
    %v4860 = vpop.f32.mrb[0].mxu0
    %v4861 = vadd.f32 %v4783, %v4860
    %v4862 = vpop.f32.mrb[0].mxu0
    %4863 = vdwg.mxu0
    %v4864 = vmax.f32 %v4850, 0.0
    %v4865 = vmax.f32 %v4853, 0.0
    %v4866 = vmax.f32 %v4858, 0.0
    %v4867 = vmax.f32 %v4861, 0.0
    %v4868 = vpack.c.bf16 %v4865, %v4864
    %v4869 = vpack.c.bf16 %v4867, %v4866
    %v4870 = vld [vmem:[%s39] sm:$0xf]
    %v4871 = vld [vmem:[%s39 + $0x4] sm:$0xf]
    %v4872 = vld [vmem:[%s39 + $0x8] sm:$0xf]
    %v4873 = vld [vmem:[%s39 + $0xc] sm:$0xf]
    %v4874 = vld [vmem:[%s39 + $0x10] sm:$0xf]
    %v4875 = vld [vmem:[%s39 + $0x14] sm:$0xf]
    %v4876 = vld [vmem:[%s39 + $0x18] sm:$0xf]
    %v4877 = vld [vmem:[%s39 + $0x1c] sm:$0xf]
    %v4878 = vld [vmem:[%s39 + $0x20] sm:$0xf]
    %v4879 = vld [vmem:[%s39 + $0x24] sm:$0xf]
    %v4880 = vld [vmem:[%s39 + $0x28] sm:$0xf]
    %v4881 = vld [vmem:[%s39 + $0x2c] sm:$0xf]
    %v4882 = vld [vmem:[%s39 + $0x30] sm:$0xf]
    %v4883 = vld [vmem:[%s39 + $0x34] sm:$0xf]
    %v4884 = vld [vmem:[%s39 + $0x38] sm:$0xf]
    %v4885 = vld [vmem:[%s39 + $0x3c] sm:$0xf]
    %v4886 = vld [vmem:[#allocation31] sm:$0x1]
    %v4888 = vlaneseq
    %v4889 = vshrl.u32 %v4888, 7
    %v4890 = vsub.s32 0, %v4889
    %v4891 = vrot.slane %v4886, %v4890
    %v4909 = vunpack.c.l.b16 %v4870
    %v4910 = vunpack.c.l.b16 %v4871
    %v4911 = vunpack.c.l.b16 %v4872
    %v4912 = vunpack.c.l.b16 %v4873
    %v4913 = vunpack.c.l.b16 %v4874
    %v4914 = vunpack.c.l.b16 %v4875
    %v4915 = vunpack.c.l.b16 %v4876
    %v4916 = vunpack.c.l.b16 %v4877
    %v4917 = vunpack.c.l.b16 %v4878
    %v4918 = vunpack.c.l.b16 %v4879
    %v4919 = vunpack.c.l.b16 %v4880
    %v4920 = vunpack.c.l.b16 %v4881
    %v4921 = vunpack.c.l.b16 %v4882
    %v4922 = vunpack.c.l.b16 %v4883
    %v4923 = vunpack.c.l.b16 %v4884
    %v4924 = vunpack.c.l.b16 %v4885
    %v4925 = vpack.c.b16 %v4910, %v4909
    %v4926 = vpack.c.b16 %v4912, %v4911
    %v4927 = vpack.c.b16 %v4914, %v4913
    %v4928 = vpack.c.b16 %v4916, %v4915
    %v4929 = vpack.c.b16 %v4918, %v4917
    %v4930 = vpack.c.b16 %v4920, %v4919
    %v4931 = vpack.c.b16 %v4922, %v4921
    %v4932 = vpack.c.b16 %v4924, %v4923
    %4941 = vmatprep.subr.bf16.mxu0 0
    %4942 = vmatpush1.bf16.msra.mxu0 %v4925
    %4943 = vmatprep.subr.bf16.mxu0 0
    %4944 = vmatpush1.bf16.msra.mxu0 %v4926
    %4945 = vmatprep.subr.bf16.mxu0 0
    %4946 = vmatpush1.bf16.msra.mxu0 %v4927
    %4947 = vmatprep.subr.bf16.mxu0 0
    %4948 = vmatpush1.bf16.msra.mxu0 %v4928
    %4949 = vmatprep.subr.bf16.mxu0 0
    %4950 = vmatpush1.bf16.msra.mxu0 %v4929
    %4951 = vmatprep.subr.bf16.mxu0 0
    %4952 = vmatpush1.bf16.msra.mxu0 %v4930
    %4953 = vmatprep.subr.bf16.mxu0 0
    %4954 = vmatpush1.bf16.msra.mxu0 %v4931
    %4955 = vmatprep.subr.bf16.mxu0 0
    %4956 = vmatpush1.bf16.msra.mxu0 %v4932
    %4957 = vmatprep.subr.bf16.mxu0 0
    %4958 = vmatpush1.bf16.msra.mxu0 0
    %4959 = vmatprep.subr.bf16.mxu0 0
    %4960 = vmatpush1.bf16.msra.mxu0 0
    %4961 = vmatprep.subr.bf16.mxu0 0
    %4962 = vmatpush1.bf16.msra.mxu0 0
    %4963 = vmatprep.subr.bf16.mxu0 0
    %4964 = vmatpush1.bf16.msra.mxu0 0
    %4965 = vmatprep.subr.bf16.mxu0 0
    %4966 = vmatpush1.bf16.msra.mxu0 0
    %4967 = vmatprep.subr.bf16.mxu0 0
    %4968 = vmatpush1.bf16.msra.mxu0 0
    %4969 = vmatprep.subr.bf16.mxu0 0
    %4970 = vmatpush1.bf16.msra.mxu0 0
    %4971 = vmatprep.subr.bf16.mxu0 0
    %4972 = vmatpush1.bf16.msra.mxu0 0
    %4973 = vmatprep.mubr.bf16.mxu0 0
    %4974 = vmatmul.mubr.bf16.gmra.mrb[0].mxu0 %v4868
    %v4975 = vpop.f32.mrb[0].mxu0
    %v4976 = vadd.f32 %v4891, %v4975
    %v4977 = vpop.f32.mrb[0].mxu0
    %v4978 = vpop.f32.mrb[0].mxu0
    %v4979 = vadd.f32 %v4891, %v4978
    %v4980 = vpop.f32.mrb[0].mxu0
    %4981 = vmatprep.mubr.bf16.mxu0 0
    %4982 = vmatmul.mubr.bf16.gmra.mrb[0].mxu0 %v4869
    %v4983 = vpop.f32.mrb[0].mxu0
    %v4984 = vadd.f32 %v4891, %v4983
    %v4985 = vpop.f32.mrb[0].mxu0
    %v4986 = vpop.f32.mrb[0].mxu0
    %v4987 = vadd.f32 %v4891, %v4986
    %v4988 = vpop.f32.mrb[0].mxu0
    %4989 = vdwg.mxu0
    %v4990 = vadd.f32 %v4764, %v4976
    %v4991 = vadd.f32 %v4765, %v4979
    %v4992 = vadd.f32 %v4766, %v4984
    %v4993 = vadd.f32 %v4767, %v4987
    %v4994 = vld [vmem:[#allocation25] sm:$0x1]
    %v4995 = vld [vmem:[#allocation26] sm:$0x1]
    %v4996 = vsel %vm671, %v4990, 0.0
    %4997 = vadd.xlane.f32.xlu0 %v4996
    %v4998 = vpop.xlane.xlu0 %4997
    %v4999 = vsel %vm671, %v4991, 0.0
    %5000 = vadd.xlane.f32.xlu0 %v4999
    %v5001 = vpop.xlane.xlu0 %5000
    %v5002 = vsel %vm671, %v4992, 0.0
    %5003 = vadd.xlane.f32.xlu0 %v5002
    %v5004 = vpop.xlane.xlu0 %5003
    %v5005 = vsel %vm671, %v4993, 0.0
    %5006 = vadd.xlane.f32.xlu0 %v5005
    %v5007 = vpop.xlane.xlu0 %5006
    %v5008 = vmul.f32 %v4998, %v2581
    %v5009 = vmul.f32 %v5001, %v2581
    %v5010 = vmul.f32 %v5004, %v2581
    %v5011 = vmul.f32 %v5007, %v2581
    %v5012 = vsub.f32 %v4990, %v5008
    %v5013 = vsub.f32 %v4991, %v5009
    %v5014 = vsub.f32 %v4992, %v5010
    %v5015 = vsub.f32 %v4993, %v5011
    %v5016 = vmul.f32 %v5012, %v5012
    %v5017 = vmul.f32 %v5013, %v5013
    %v5018 = vmul.f32 %v5014, %v5014
    %v5019 = vmul.f32 %v5015, %v5015
    %v5020 = vsel %vm671, %v5016, 0.0
    %5021 = vadd.xlane.f32.xlu0 %v5020
    %v5022 = vpop.xlane.xlu0 %5021
    %v5023 = vsel %vm671, %v5017, 0.0
    %5024 = vadd.xlane.f32.xlu0 %v5023
    %v5025 = vpop.xlane.xlu0 %5024
    %v5026 = vsel %vm671, %v5018, 0.0
    %5027 = vadd.xlane.f32.xlu0 %v5026
    %v5028 = vpop.xlane.xlu0 %5027
    %v5029 = vsel %vm671, %v5019, 0.0
    %5030 = vadd.xlane.f32.xlu0 %v5029
    %v5031 = vpop.xlane.xlu0 %5030
    %v5032 = vmul.f32 %v5022, %v2581
    %v5033 = vmul.f32 %v5025, %v2581
    %v5034 = vmul.f32 %v5028, %v2581
    %v5035 = vmul.f32 %v5031, %v2581
    %v5036 = vadd.f32 %v5032, 1e-05
    %v5037 = vadd.f32 %v5033, 1e-05
    %v5038 = vadd.f32 %v5034, 1e-05
    %v5039 = vadd.f32 %v5035, 1e-05
    %v5040 = vrsqrt.pop %v5036
    %v5041 = vrsqrt.pop %v5037
    %v5042 = vrsqrt.pop %v5038
    %v5043 = vrsqrt.pop %v5039
    %v5044 = vmul.f32 %v5012, %v5040
    %v5045 = vmul.f32 %v5013, %v5041
    %v5046 = vmul.f32 %v5014, %v5042
    %v5047 = vmul.f32 %v5015, %v5043
    %v5049 = vlaneseq
    %v5050 = vshrl.u32 %v5049, 7
    %v5051 = vsub.s32 0, %v5050
    %v5052 = vrot.slane %v4994, %v5051
    %v5054 = vmul.f32 %v5044, %v5052
    %v5055 = vmul.f32 %v5045, %v5052
    %v5056 = vmul.f32 %v5046, %v5052
    %v5057 = vmul.f32 %v5047, %v5052
    %v5059 = vlaneseq
    %v5060 = vshrl.u32 %v5059, 7
    %v5061 = vsub.s32 0, %v5060
    %v5062 = vrot.slane %v4995, %v5061
    %v5064 = vadd.f32 %v5054, %v5062
    %v5065 = vadd.f32 %v5055, %v5062
    %v5066 = vadd.f32 %v5056, %v5062
    %v5067 = vadd.f32 %v5057, %v5062
    %v5068 = vpack.c.bf16 %v5065, %v5064
    %v5069 = vpack.c.bf16 %v5067, %v5066
    %v5070 = vld [vmem:[%s43] sm:$0xff]
    %v5071 = vld [vmem:[%s43 + $0x8] sm:$0xff]
    %v5072 = vld [vmem:[%s43 + $0x10] sm:$0xff]
    %v5073 = vld [vmem:[%s43 + $0x18] sm:$0xff]
    %v5074 = vld [vmem:[%s43 + $0x20] sm:$0xff]
    %v5075 = vld [vmem:[%s43 + $0x28] sm:$0xff]
    %v5076 = vld [vmem:[%s43 + $0x30] sm:$0xff]
    %v5077 = vld [vmem:[%s43 + $0x38] sm:$0xff]
    %v5078 = vld [vmem:[#allocation32] sm:$0x3]
    %v5080 = vlaneseq
    %v5081 = vshrl.u32 %v5080, 7
    %v5082 = vsub.s32 0, %v5081
    %v5083 = vrot.slane %v5078, %v5082
    %v5084 = vlaneseq
    %v5085 = vshrl.u32 %v5084, 7
    %v5086 = vsub.s32 1, %v5085
    %v5087 = vrot.slane %v5078, %v5086
    %v5098 = vunpack.c.l.b16 %v5070
    %v5099 = vunpack.c.h.b16 %v5070
    %v5100 = vunpack.c.l.b16 %v5071
    %v5101 = vunpack.c.h.b16 %v5071
    %v5102 = vunpack.c.l.b16 %v5072
    %v5103 = vunpack.c.h.b16 %v5072
    %v5104 = vunpack.c.l.b16 %v5073
    %v5105 = vunpack.c.h.b16 %v5073
    %v5106 = vunpack.c.l.b16 %v5074
    %v5107 = vunpack.c.h.b16 %v5074
    %v5108 = vunpack.c.l.b16 %v5075
    %v5109 = vunpack.c.h.b16 %v5075
    %v5110 = vunpack.c.l.b16 %v5076
    %v5111 = vunpack.c.h.b16 %v5076
    %v5112 = vunpack.c.l.b16 %v5077
    %v5113 = vunpack.c.h.b16 %v5077
    %v5114 = vpack.c.b16 %v5100, %v5098
    %v5115 = vpack.c.b16 %v5101, %v5099
    %v5116 = vpack.c.b16 %v5104, %v5102
    %v5117 = vpack.c.b16 %v5105, %v5103
    %v5118 = vpack.c.b16 %v5108, %v5106
    %v5119 = vpack.c.b16 %v5109, %v5107
    %v5120 = vpack.c.b16 %v5112, %v5110
    %v5121 = vpack.c.b16 %v5113, %v5111
    %v5131 = vsel %vm671, %v5068, 0
    %v5134 = vsel %vm671, %v5069, 0
    %5136 = vmatprep.subr.bf16.mxu0 %v5115
    %5137 = vmatpush1.bf16.msra.mxu0 %v5114
    %5138 = vmatprep.subr.bf16.mxu0 %v5117
    %5139 = vmatpush1.bf16.msra.mxu0 %v5116
    %5140 = vmatprep.subr.bf16.mxu0 %v5119
    %5141 = vmatpush1.bf16.msra.mxu0 %v5118
    %5142 = vmatprep.subr.bf16.mxu0 %v5121
    %5143 = vmatpush1.bf16.msra.mxu0 %v5120
    %5144 = vmatprep.subr.bf16.mxu0 0
    %5145 = vmatpush1.bf16.msra.mxu0 0
    %5146 = vmatprep.subr.bf16.mxu0 0
    %5147 = vmatpush1.bf16.msra.mxu0 0
    %5148 = vmatprep.subr.bf16.mxu0 0
    %5149 = vmatpush1.bf16.msra.mxu0 0
    %5150 = vmatprep.subr.bf16.mxu0 0
    %5151 = vmatpush1.bf16.msra.mxu0 0
    %5152 = vmatprep.subr.bf16.mxu0 0
    %5153 = vmatpush1.bf16.msra.mxu0 0
    %5154 = vmatprep.subr.bf16.mxu0 0
    %5155 = vmatpush1.bf16.msra.mxu0 0
    %5156 = vmatprep.subr.bf16.mxu0 0
    %5157 = vmatpush1.bf16.msra.mxu0 0
    %5158 = vmatprep.subr.bf16.mxu0 0
    %5159 = vmatpush1.bf16.msra.mxu0 0
    %5160 = vmatprep.subr.bf16.mxu0 0
    %5161 = vmatpush1.bf16.msra.mxu0 0
    %5162 = vmatprep.subr.bf16.mxu0 0
    %5163 = vmatpush1.bf16.msra.mxu0 0
    %5164 = vmatprep.subr.bf16.mxu0 0
    %5165 = vmatpush1.bf16.msra.mxu0 0
    %5166 = vmatprep.subr.bf16.mxu0 0
    %5167 = vmatpush1.bf16.msra.mxu0 0
    %5168 = vmatprep.mubr.bf16.mxu0 0
    %5169 = vmatmul.mubr.bf16.gmra.mrb[0].mxu0 %v5131
    %v5170 = vpop.f32.mrb[0].mxu0
    %v5171 = vadd.f32 %v5083, %v5170
    %v5172 = vpop.f32.mrb[0].mxu0
    %v5173 = vadd.f32 %v5087, %v5172
    %v5174 = vpop.f32.mrb[0].mxu0
    %v5175 = vadd.f32 %v5083, %v5174
    %v5176 = vpop.f32.mrb[0].mxu0
    %v5177 = vadd.f32 %v5087, %v5176
    %5178 = vmatprep.mubr.bf16.mxu0 0
    %5179 = vmatmul.mubr.bf16.gmra.mrb[0].mxu0 %v5134
    %v5180 = vpop.f32.mrb[0].mxu0
    %v5181 = vadd.f32 %v5083, %v5180
    %v5182 = vpop.f32.mrb[0].mxu0
    %v5183 = vadd.f32 %v5087, %v5182
    %v5184 = vpop.f32.mrb[0].mxu0
    %v5185 = vadd.f32 %v5083, %v5184
    %v5186 = vpop.f32.mrb[0].mxu0
    %v5187 = vadd.f32 %v5087, %v5186
    %5188 = vdwg.mxu0
    %v5189 = vpack.c.bf16 %v5171, %v5171
    %v5190 = vpack.c.bf16 %v5175, %v5175
    %v5191 = vpack.c.bf16 %v5181, %v5181
    %v5192 = vpack.c.bf16 %v5185, %v5185
    %v5193 = vmul.f32 %v5171, %v592
    %v5194 = vmul.f32 %v5175, %v592
    %v5195 = vmul.f32 %v5181, %v592
    %v5196 = vmul.f32 %v5185, %v592
    %v5197 = vpack.c.bf16 %v5193, %v5193
    %v5198 = vpack.c.bf16 %v5194, %v5194
    %v5199 = vpack.c.bf16 %v5195, %v5195
    %v5200 = vpack.c.bf16 %v5196, %v5196
    %5202 = vrot.lane.b32.xlu0 %v5189, 64
    %v5203 = vpop.permute.xlu0 %5202
    %v5205 = vsel %vm671, %v5197, 0
    %v5208 = vsel %vm671, %v5203, 0
    %5210 = vmatprep.subr.bf16.mxu0 0
    %5211 = vmatpush1.bf16.xpose.msra.mxu0 %v5208
    %5212 = vmatprep.subr.bf16.mxu0 0
    %5213 = vmatpush1.bf16.xpose.msra.mxu0 0
    %5214 = vmatprep.subr.bf16.mxu0 0
    %5215 = vmatpush1.bf16.xpose.msra.mxu0 0
    %5216 = vmatprep.subr.bf16.mxu0 0
    %5217 = vmatpush1.bf16.xpose.msra.mxu0 0
    %5218 = vmatprep.subr.bf16.mxu0 0
    %5219 = vmatpush1.bf16.xpose.msra.mxu0 0
    %5220 = vmatprep.subr.bf16.mxu0 0
    %5221 = vmatpush1.bf16.xpose.msra.mxu0 0
    %5222 = vmatprep.subr.bf16.mxu0 0
    %5223 = vmatpush1.bf16.xpose.msra.mxu0 0
    %5224 = vmatprep.subr.bf16.mxu0 0
    %5225 = vmatpush1.bf16.xpose.msra.mxu0 0
    %5226 = vmatprep.subr.bf16.mxu0 0
    %5227 = vmatpush1.bf16.xpose.msra.mxu0 0
    %5228 = vmatprep.subr.bf16.mxu0 0
    %5229 = vmatpush1.bf16.xpose.msra.mxu0 0
    %5230 = vmatprep.subr.bf16.mxu0 0
    %5231 = vmatpush1.bf16.xpose.msra.mxu0 0
    %5232 = vmatprep.subr.bf16.mxu0 0
    %5233 = vmatpush1.bf16.xpose.msra.mxu0 0
    %5234 = vmatprep.subr.bf16.mxu0 0
    %5235 = vmatpush1.bf16.xpose.msra.mxu0 0
    %5236 = vmatprep.subr.bf16.mxu0 0
    %5237 = vmatpush1.bf16.xpose.msra.mxu0 0
    %5238 = vmatprep.subr.bf16.mxu0 0
    %5239 = vmatpush1.bf16.xpose.msra.mxu0 0
    %5240 = vmatprep.subr.bf16.mxu0 0
    %5241 = vmatpush1.bf16.xpose.msra.mxu0 0
    %5242 = vmatprep.mubr.bf16.mxu0 0
    %5243 = vmatmul.mubr.bf16.gmra.mrb[0].mxu0 %v5205
    %v5244 = vpop.f32.mrb[0].mxu0
    %v5245 = vadd.f32 0.0, %v5244
    %v5246 = vpop.f32.mrb[0].mxu0
    %v5247 = vpop.f32.mrb[0].mxu0
    %v5248 = vpop.f32.mrb[0].mxu0
    %5249 = vdwg.mxu0
    %5251 = vrot.lane.b32.xlu0 %v5190, 64
    %v5252 = vpop.permute.xlu0 %5251
    %v5254 = vsel %vm671, %v5198, 0
    %v5257 = vsel %vm671, %v5252, 0
    %5259 = vmatprep.subr.bf16.mxu0 0
    %5260 = vmatpush1.bf16.xpose.msra.mxu0 %v5257
    %5261 = vmatprep.subr.bf16.mxu0 0
    %5262 = vmatpush1.bf16.xpose.msra.mxu0 0
    %5263 = vmatprep.subr.bf16.mxu0 0
    %5264 = vmatpush1.bf16.xpose.msra.mxu0 0
    %5265 = vmatprep.subr.bf16.mxu0 0
    %5266 = vmatpush1.bf16.xpose.msra.mxu0 0
    %5267 = vmatprep.subr.bf16.mxu0 0
    %5268 = vmatpush1.bf16.xpose.msra.mxu0 0
    %5269 = vmatprep.subr.bf16.mxu0 0
    %5270 = vmatpush1.bf16.xpose.msra.mxu0 0
    %5271 = vmatprep.subr.bf16.mxu0 0
    %5272 = vmatpush1.bf16.xpose.msra.mxu0 0
    %5273 = vmatprep.subr.bf16.mxu0 0
    %5274 = vmatpush1.bf16.xpose.msra.mxu0 0
    %5275 = vmatprep.subr.bf16.mxu0 0
    %5276 = vmatpush1.bf16.xpose.msra.mxu0 0
    %5277 = vmatprep.subr.bf16.mxu0 0
    %5278 = vmatpush1.bf16.xpose.msra.mxu0 0
    %5279 = vmatprep.subr.bf16.mxu0 0
    %5280 = vmatpush1.bf16.xpose.msra.mxu0 0
    %5281 = vmatprep.subr.bf16.mxu0 0
    %5282 = vmatpush1.bf16.xpose.msra.mxu0 0
    %5283 = vmatprep.subr.bf16.mxu0 0
    %5284 = vmatpush1.bf16.xpose.msra.mxu0 0
    %5285 = vmatprep.subr.bf16.mxu0 0
    %5286 = vmatpush1.bf16.xpose.msra.mxu0 0
    %5287 = vmatprep.subr.bf16.mxu0 0
    %5288 = vmatpush1.bf16.xpose.msra.mxu0 0
    %5289 = vmatprep.subr.bf16.mxu0 0
    %5290 = vmatpush1.bf16.xpose.msra.mxu0 0
    %5291 = vmatprep.mubr.bf16.mxu0 0
    %5292 = vmatmul.mubr.bf16.gmra.mrb[0].mxu0 %v5254
    %v5293 = vpop.f32.mrb[0].mxu0
    %v5294 = vadd.f32 0.0, %v5293
    %v5295 = vpop.f32.mrb[0].mxu0
    %v5296 = vpop.f32.mrb[0].mxu0
    %v5297 = vpop.f32.mrb[0].mxu0
    %5298 = vdwg.mxu0
    %5300 = vrot.lane.b32.xlu0 %v5191, 64
    %v5301 = vpop.permute.xlu0 %5300
    %v5303 = vsel %vm671, %v5199, 0
    %v5306 = vsel %vm671, %v5301, 0
    %5308 = vmatprep.subr.bf16.mxu0 0
    %5309 = vmatpush1.bf16.xpose.msra.mxu0 %v5306
    %5310 = vmatprep.subr.bf16.mxu0 0
    %5311 = vmatpush1.bf16.xpose.msra.mxu0 0
    %5312 = vmatprep.subr.bf16.mxu0 0
    %5313 = vmatpush1.bf16.xpose.msra.mxu0 0
    %5314 = vmatprep.subr.bf16.mxu0 0
    %5315 = vmatpush1.bf16.xpose.msra.mxu0 0
    %5316 = vmatprep.subr.bf16.mxu0 0
    %5317 = vmatpush1.bf16.xpose.msra.mxu0 0
    %5318 = vmatprep.subr.bf16.mxu0 0
    %5319 = vmatpush1.bf16.xpose.msra.mxu0 0
    %5320 = vmatprep.subr.bf16.mxu0 0
    %5321 = vmatpush1.bf16.xpose.msra.mxu0 0
    %5322 = vmatprep.subr.bf16.mxu0 0
    %5323 = vmatpush1.bf16.xpose.msra.mxu0 0
    %5324 = vmatprep.subr.bf16.mxu0 0
    %5325 = vmatpush1.bf16.xpose.msra.mxu0 0
    %5326 = vmatprep.subr.bf16.mxu0 0
    %5327 = vmatpush1.bf16.xpose.msra.mxu0 0
    %5328 = vmatprep.subr.bf16.mxu0 0
    %5329 = vmatpush1.bf16.xpose.msra.mxu0 0
    %5330 = vmatprep.subr.bf16.mxu0 0
    %5331 = vmatpush1.bf16.xpose.msra.mxu0 0
    %5332 = vmatprep.subr.bf16.mxu0 0
    %5333 = vmatpush1.bf16.xpose.msra.mxu0 0
    %5334 = vmatprep.subr.bf16.mxu0 0
    %5335 = vmatpush1.bf16.xpose.msra.mxu0 0
    %5336 = vmatprep.subr.bf16.mxu0 0
    %5337 = vmatpush1.bf16.xpose.msra.mxu0 0
    %5338 = vmatprep.subr.bf16.mxu0 0
    %5339 = vmatpush1.bf16.xpose.msra.mxu0 0
    %5340 = vmatprep.mubr.bf16.mxu0 0
    %5341 = vmatmul.mubr.bf16.gmra.mrb[0].mxu0 %v5303
    %v5342 = vpop.f32.mrb[0].mxu0
    %v5343 = vadd.f32 0.0, %v5342
    %v5344 = vpop.f32.mrb[0].mxu0
    %v5345 = vpop.f32.mrb[0].mxu0
    %v5346 = vpop.f32.mrb[0].mxu0
    %5347 = vdwg.mxu0
    %5349 = vrot.lane.b32.xlu0 %v5192, 64
    %v5350 = vpop.permute.xlu0 %5349
    %v5352 = vsel %vm671, %v5200, 0
    %v5355 = vsel %vm671, %v5350, 0
    %5357 = vmatprep.subr.bf16.mxu0 0
    %5358 = vmatpush1.bf16.xpose.msra.mxu0 %v5355
    %5359 = vmatprep.subr.bf16.mxu0 0
    %5360 = vmatpush1.bf16.xpose.msra.mxu0 0
    %5361 = vmatprep.subr.bf16.mxu0 0
    %5362 = vmatpush1.bf16.xpose.msra.mxu0 0
    %5363 = vmatprep.subr.bf16.mxu0 0
    %5364 = vmatpush1.bf16.xpose.msra.mxu0 0
    %5365 = vmatprep.subr.bf16.mxu0 0
    %5366 = vmatpush1.bf16.xpose.msra.mxu0 0
    %5367 = vmatprep.subr.bf16.mxu0 0
    %5368 = vmatpush1.bf16.xpose.msra.mxu0 0
    %5369 = vmatprep.subr.bf16.mxu0 0
    %5370 = vmatpush1.bf16.xpose.msra.mxu0 0
    %5371 = vmatprep.subr.bf16.mxu0 0
    %5372 = vmatpush1.bf16.xpose.msra.mxu0 0
    %5373 = vmatprep.subr.bf16.mxu0 0
    %5374 = vmatpush1.bf16.xpose.msra.mxu0 0
    %5375 = vmatprep.subr.bf16.mxu0 0
    %5376 = vmatpush1.bf16.xpose.msra.mxu0 0
    %5377 = vmatprep.subr.bf16.mxu0 0
    %5378 = vmatpush1.bf16.xpose.msra.mxu0 0
    %5379 = vmatprep.subr.bf16.mxu0 0
    %5380 = vmatpush1.bf16.xpose.msra.mxu0 0
    %5381 = vmatprep.subr.bf16.mxu0 0
    %5382 = vmatpush1.bf16.xpose.msra.mxu0 0
    %5383 = vmatprep.subr.bf16.mxu0 0
    %5384 = vmatpush1.bf16.xpose.msra.mxu0 0
    %5385 = vmatprep.subr.bf16.mxu0 0
    %5386 = vmatpush1.bf16.xpose.msra.mxu0 0
    %5387 = vmatprep.subr.bf16.mxu0 0
    %5388 = vmatpush1.bf16.xpose.msra.mxu0 0
    %5389 = vmatprep.mubr.bf16.mxu0 0
    %5390 = vmatmul.mubr.bf16.gmra.mrb[0].mxu0 %v5352
    %v5391 = vpop.f32.mrb[0].mxu0
    %v5392 = vadd.f32 0.0, %v5391
    %v5393 = vpop.f32.mrb[0].mxu0
    %v5394 = vpop.f32.mrb[0].mxu0
    %v5395 = vpop.f32.mrb[0].mxu0
    %5396 = vdwg.mxu0
    %v5397 = vsel %vm940, -1e+30, %v5245
    %v5398 = vsel %vm940, -1e+30, %v5294
    %v5399 = vsel %vm940, -1e+30, %v5343
    %v5400 = vsel %vm940, -1e+30, %v5392
    %v5401 = vsel %vm945, %v5397, -inf
    %5402 = vmax.xlane.f32.xlu0 %v5401
    %v5403 = vpop.xlane.xlu0 %5402
    %v5404 = vsel %vm945, %v5398, -inf
    %5405 = vmax.xlane.f32.xlu0 %v5404
    %v5406 = vpop.xlane.xlu0 %5405
    %v5407 = vsel %vm945, %v5399, -inf
    %5408 = vmax.xlane.f32.xlu0 %v5407
    %v5409 = vpop.xlane.xlu0 %5408
    %v5410 = vsel %vm945, %v5400, -inf
    %5411 = vmax.xlane.f32.xlu0 %v5410
    %v5412 = vpop.xlane.xlu0 %5411
    %v5413 = vsub.f32 %v5397, %v5403
    %v5414 = vsub.f32 %v5398, %v5406
    %v5415 = vsub.f32 %v5399, %v5409
    %v5416 = vsub.f32 %v5400, %v5412
    %v5417 = vmul.f32 %v5413, 1.442695
    %v5418 = vpow.pop %v5417
    %v5419 = vmul.f32 %v5414, 1.442695
    %v5420 = vpow.pop %v5419
    %v5421 = vmul.f32 %v5415, 1.442695
    %v5422 = vpow.pop %v5421
    %v5423 = vmul.f32 %v5416, 1.442695
    %v5424 = vpow.pop %v5423
    %v5425 = vsel %vm945, %v5418, 0.0
    %5426 = vadd.xlane.f32.xlu0 %v5425
    %v5427 = vpop.xlane.xlu0 %5426
    %v5428 = vsel %vm945, %v5420, 0.0
    %5429 = vadd.xlane.f32.xlu0 %v5428
    %v5430 = vpop.xlane.xlu0 %5429
    %v5431 = vsel %vm945, %v5422, 0.0
    %5432 = vadd.xlane.f32.xlu0 %v5431
    %v5433 = vpop.xlane.xlu0 %5432
    %v5434 = vsel %vm945, %v5424, 0.0
    %5435 = vadd.xlane.f32.xlu0 %v5434
    %v5436 = vpop.xlane.xlu0 %5435
    %v5437 = vrcp.pop %v5427
    %v5438 = vrcp.pop %v5430
    %v5439 = vrcp.pop %v5433
    %v5440 = vrcp.pop %v5436
    %v5441 = vmul.f32 %v5418, %v5437
    %v5442 = vmul.f32 %v5420, %v5438
    %v5443 = vmul.f32 %v5422, %v5439
    %v5444 = vmul.f32 %v5424, %v5440
    %v5445 = vmul.f32 %v5173, %v592
    %v5446 = vmul.f32 %v5177, %v592
    %v5447 = vmul.f32 %v5183, %v592
    %v5448 = vmul.f32 %v5187, %v592
    %v5449 = vpack.c.bf16 %v5445, %v5445
    %v5450 = vpack.c.bf16 %v5446, %v5446
    %v5451 = vpack.c.bf16 %v5447, %v5447
    %v5452 = vpack.c.bf16 %v5448, %v5448
    %v5453 = vpack.c.bf16 %v5441, %v5441
    %v5454 = vpack.c.bf16 %v5442, %v5442
    %v5455 = vpack.c.bf16 %v5443, %v5443
    %v5456 = vpack.c.bf16 %v5444, %v5444
    %v5457 = vmul.f32 %v5171, %v597
    %v5458 = vmul.f32 %v5175, %v597
    %v5459 = vmul.f32 %v5181, %v597
    %v5460 = vmul.f32 %v5185, %v597
    %v5461 = vpack.c.bf16 %v5457, %v5457
    %v5462 = vpack.c.bf16 %v5458, %v5458
    %v5463 = vpack.c.bf16 %v5459, %v5459
    %v5464 = vpack.c.bf16 %v5460, %v5460
    %v5466 = vsel %vm671, %v5461, 0
    %5468 = vmatprep.subr.bf16.mxu0 0
    %5469 = vmatpush1.bf16.xpose.msra.mxu0 %v5208
    %5470 = vmatprep.subr.bf16.mxu0 0
    %5471 = vmatpush1.bf16.xpose.msra.mxu0 0
    %5472 = vmatprep.subr.bf16.mxu0 0
    %5473 = vmatpush1.bf16.xpose.msra.mxu0 0
    %5474 = vmatprep.subr.bf16.mxu0 0
    %5475 = vmatpush1.bf16.xpose.msra.mxu0 0
    %5476 = vmatprep.subr.bf16.mxu0 0
    %5477 = vmatpush1.bf16.xpose.msra.mxu0 0
    %5478 = vmatprep.subr.bf16.mxu0 0
    %5479 = vmatpush1.bf16.xpose.msra.mxu0 0
    %5480 = vmatprep.subr.bf16.mxu0 0
    %5481 = vmatpush1.bf16.xpose.msra.mxu0 0
    %5482 = vmatprep.subr.bf16.mxu0 0
    %5483 = vmatpush1.bf16.xpose.msra.mxu0 0
    %5484 = vmatprep.subr.bf16.mxu0 0
    %5485 = vmatpush1.bf16.xpose.msra.mxu0 0
    %5486 = vmatprep.subr.bf16.mxu0 0
    %5487 = vmatpush1.bf16.xpose.msra.mxu0 0
    %5488 = vmatprep.subr.bf16.mxu0 0
    %5489 = vmatpush1.bf16.xpose.msra.mxu0 0
    %5490 = vmatprep.subr.bf16.mxu0 0
    %5491 = vmatpush1.bf16.xpose.msra.mxu0 0
    %5492 = vmatprep.subr.bf16.mxu0 0
    %5493 = vmatpush1.bf16.xpose.msra.mxu0 0
    %5494 = vmatprep.subr.bf16.mxu0 0
    %5495 = vmatpush1.bf16.xpose.msra.mxu0 0
    %5496 = vmatprep.subr.bf16.mxu0 0
    %5497 = vmatpush1.bf16.xpose.msra.mxu0 0
    %5498 = vmatprep.subr.bf16.mxu0 0
    %5499 = vmatpush1.bf16.xpose.msra.mxu0 0
    %5500 = vmatprep.mubr.bf16.mxu0 0
    %5501 = vmatmul.mubr.bf16.gmra.mrb[0].mxu0 %v5466
    %v5502 = vpop.f32.mrb[0].mxu0
    %v5503 = vadd.f32 0.0, %v5502
    %v5504 = vpop.f32.mrb[0].mxu0
    %v5505 = vpop.f32.mrb[0].mxu0
    %v5506 = vpop.f32.mrb[0].mxu0
    %5507 = vdwg.mxu0
    %v5509 = vsel %vm671, %v5462, 0
    %5511 = vmatprep.subr.bf16.mxu0 0
    %5512 = vmatpush1.bf16.xpose.msra.mxu0 %v5257
    %5513 = vmatprep.subr.bf16.mxu0 0
    %5514 = vmatpush1.bf16.xpose.msra.mxu0 0
    %5515 = vmatprep.subr.bf16.mxu0 0
    %5516 = vmatpush1.bf16.xpose.msra.mxu0 0
    %5517 = vmatprep.subr.bf16.mxu0 0
    %5518 = vmatpush1.bf16.xpose.msra.mxu0 0
    %5519 = vmatprep.subr.bf16.mxu0 0
    %5520 = vmatpush1.bf16.xpose.msra.mxu0 0
    %5521 = vmatprep.subr.bf16.mxu0 0
    %5522 = vmatpush1.bf16.xpose.msra.mxu0 0
    %5523 = vmatprep.subr.bf16.mxu0 0
    %5524 = vmatpush1.bf16.xpose.msra.mxu0 0
    %5525 = vmatprep.subr.bf16.mxu0 0
    %5526 = vmatpush1.bf16.xpose.msra.mxu0 0
    %5527 = vmatprep.subr.bf16.mxu0 0
    %5528 = vmatpush1.bf16.xpose.msra.mxu0 0
    %5529 = vmatprep.subr.bf16.mxu0 0
    %5530 = vmatpush1.bf16.xpose.msra.mxu0 0
    %5531 = vmatprep.subr.bf16.mxu0 0
    %5532 = vmatpush1.bf16.xpose.msra.mxu0 0
    %5533 = vmatprep.subr.bf16.mxu0 0
    %5534 = vmatpush1.bf16.xpose.msra.mxu0 0
    %5535 = vmatprep.subr.bf16.mxu0 0
    %5536 = vmatpush1.bf16.xpose.msra.mxu0 0
    %5537 = vmatprep.subr.bf16.mxu0 0
    %5538 = vmatpush1.bf16.xpose.msra.mxu0 0
    %5539 = vmatprep.subr.bf16.mxu0 0
    %5540 = vmatpush1.bf16.xpose.msra.mxu0 0
    %5541 = vmatprep.subr.bf16.mxu0 0
    %5542 = vmatpush1.bf16.xpose.msra.mxu0 0
    %5543 = vmatprep.mubr.bf16.mxu0 0
    %5544 = vmatmul.mubr.bf16.gmra.mrb[0].mxu0 %v5509
    %v5545 = vpop.f32.mrb[0].mxu0
    %v5546 = vadd.f32 0.0, %v5545
    %v5547 = vpop.f32.mrb[0].mxu0
    %v5548 = vpop.f32.mrb[0].mxu0
    %v5549 = vpop.f32.mrb[0].mxu0
    %5550 = vdwg.mxu0
    %v5552 = vsel %vm671, %v5463, 0
    %5554 = vmatprep.subr.bf16.mxu0 0
    %5555 = vmatpush1.bf16.xpose.msra.mxu0 %v5306
    %5556 = vmatprep.subr.bf16.mxu0 0
    %5557 = vmatpush1.bf16.xpose.msra.mxu0 0
    %5558 = vmatprep.subr.bf16.mxu0 0
    %5559 = vmatpush1.bf16.xpose.msra.mxu0 0
    %5560 = vmatprep.subr.bf16.mxu0 0
    %5561 = vmatpush1.bf16.xpose.msra.mxu0 0
    %5562 = vmatprep.subr.bf16.mxu0 0
    %5563 = vmatpush1.bf16.xpose.msra.mxu0 0
    %5564 = vmatprep.subr.bf16.mxu0 0
    %5565 = vmatpush1.bf16.xpose.msra.mxu0 0
    %5566 = vmatprep.subr.bf16.mxu0 0
    %5567 = vmatpush1.bf16.xpose.msra.mxu0 0
    %5568 = vmatprep.subr.bf16.mxu0 0
    %5569 = vmatpush1.bf16.xpose.msra.mxu0 0
    %5570 = vmatprep.subr.bf16.mxu0 0
    %5571 = vmatpush1.bf16.xpose.msra.mxu0 0
    %5572 = vmatprep.subr.bf16.mxu0 0
    %5573 = vmatpush1.bf16.xpose.msra.mxu0 0
    %5574 = vmatprep.subr.bf16.mxu0 0
    %5575 = vmatpush1.bf16.xpose.msra.mxu0 0
    %5576 = vmatprep.subr.bf16.mxu0 0
    %5577 = vmatpush1.bf16.xpose.msra.mxu0 0
    %5578 = vmatprep.subr.bf16.mxu0 0
    %5579 = vmatpush1.bf16.xpose.msra.mxu0 0
    %5580 = vmatprep.subr.bf16.mxu0 0
    %5581 = vmatpush1.bf16.xpose.msra.mxu0 0
    %5582 = vmatprep.subr.bf16.mxu0 0
    %5583 = vmatpush1.bf16.xpose.msra.mxu0 0
    %5584 = vmatprep.subr.bf16.mxu0 0
    %5585 = vmatpush1.bf16.xpose.msra.mxu0 0
    %5586 = vmatprep.mubr.bf16.mxu0 0
    %5587 = vmatmul.mubr.bf16.gmra.mrb[0].mxu0 %v5552
    %v5588 = vpop.f32.mrb[0].mxu0
    %v5589 = vadd.f32 0.0, %v5588
    %v5590 = vpop.f32.mrb[0].mxu0
    %v5591 = vpop.f32.mrb[0].mxu0
    %v5592 = vpop.f32.mrb[0].mxu0
    %5593 = vdwg.mxu0
    %v5595 = vsel %vm671, %v5464, 0
    %5597 = vmatprep.subr.bf16.mxu0 0
    %5598 = vmatpush1.bf16.xpose.msra.mxu0 %v5355
    %5599 = vmatprep.subr.bf16.mxu0 0
    %5600 = vmatpush1.bf16.xpose.msra.mxu0 0
    %5601 = vmatprep.subr.bf16.mxu0 0
    %5602 = vmatpush1.bf16.xpose.msra.mxu0 0
    %5603 = vmatprep.subr.bf16.mxu0 0
    %5604 = vmatpush1.bf16.xpose.msra.mxu0 0
    %5605 = vmatprep.subr.bf16.mxu0 0
    %5606 = vmatpush1.bf16.xpose.msra.mxu0 0
    %5607 = vmatprep.subr.bf16.mxu0 0
    %5608 = vmatpush1.bf16.xpose.msra.mxu0 0
    %5609 = vmatprep.subr.bf16.mxu0 0
    %5610 = vmatpush1.bf16.xpose.msra.mxu0 0
    %5611 = vmatprep.subr.bf16.mxu0 0
    %5612 = vmatpush1.bf16.xpose.msra.mxu0 0
    %5613 = vmatprep.subr.bf16.mxu0 0
    %5614 = vmatpush1.bf16.xpose.msra.mxu0 0
    %5615 = vmatprep.subr.bf16.mxu0 0
    %5616 = vmatpush1.bf16.xpose.msra.mxu0 0
    %5617 = vmatprep.subr.bf16.mxu0 0
    %5618 = vmatpush1.bf16.xpose.msra.mxu0 0
    %5619 = vmatprep.subr.bf16.mxu0 0
    %5620 = vmatpush1.bf16.xpose.msra.mxu0 0
    %5621 = vmatprep.subr.bf16.mxu0 0
    %5622 = vmatpush1.bf16.xpose.msra.mxu0 0
    %5623 = vmatprep.subr.bf16.mxu0 0
    %5624 = vmatpush1.bf16.xpose.msra.mxu0 0
    %5625 = vmatprep.subr.bf16.mxu0 0
    %5626 = vmatpush1.bf16.xpose.msra.mxu0 0
    %5627 = vmatprep.subr.bf16.mxu0 0
    %5628 = vmatpush1.bf16.xpose.msra.mxu0 0
    %5629 = vmatprep.mubr.bf16.mxu0 0
    %5630 = vmatmul.mubr.bf16.gmra.mrb[0].mxu0 %v5595
    %v5631 = vpop.f32.mrb[0].mxu0
    %v5632 = vadd.f32 0.0, %v5631
    %v5633 = vpop.f32.mrb[0].mxu0
    %v5634 = vpop.f32.mrb[0].mxu0
    %v5635 = vpop.f32.mrb[0].mxu0
    %5636 = vdwg.mxu0
    %v5637 = vsel %vm940, -1e+30, %v5503
    %v5638 = vsel %vm940, -1e+30, %v5546
    %v5639 = vsel %vm940, -1e+30, %v5589
    %v5640 = vsel %vm940, -1e+30, %v5632
    %v5641 = vsel %vm945, %v5637, -inf
    %5642 = vmax.xlane.f32.xlu0 %v5641
    %v5643 = vpop.xlane.xlu0 %5642
    %v5644 = vsel %vm945, %v5638, -inf
    %5645 = vmax.xlane.f32.xlu0 %v5644
    %v5646 = vpop.xlane.xlu0 %5645
    %v5647 = vsel %vm945, %v5639, -inf
    %5648 = vmax.xlane.f32.xlu0 %v5647
    %v5649 = vpop.xlane.xlu0 %5648
    %v5650 = vsel %vm945, %v5640, -inf
    %5651 = vmax.xlane.f32.xlu0 %v5650
    %v5652 = vpop.xlane.xlu0 %5651
    %v5653 = vsub.f32 %v5637, %v5643
    %v5654 = vsub.f32 %v5638, %v5646
    %v5655 = vsub.f32 %v5639, %v5649
    %v5656 = vsub.f32 %v5640, %v5652
    %v5657 = vmul.f32 %v5653, 1.442695
    %v5658 = vpow.pop %v5657
    %v5659 = vmul.f32 %v5654, 1.442695
    %v5660 = vpow.pop %v5659
    %v5661 = vmul.f32 %v5655, 1.442695
    %v5662 = vpow.pop %v5661
    %v5663 = vmul.f32 %v5656, 1.442695
    %v5664 = vpow.pop %v5663
    %v5665 = vsel %vm945, %v5658, 0.0
    %5666 = vadd.xlane.f32.xlu0 %v5665
    %v5667 = vpop.xlane.xlu0 %5666
    %v5668 = vsel %vm945, %v5660, 0.0
    %5669 = vadd.xlane.f32.xlu0 %v5668
    %v5670 = vpop.xlane.xlu0 %5669
    %v5671 = vsel %vm945, %v5662, 0.0
    %5672 = vadd.xlane.f32.xlu0 %v5671
    %v5673 = vpop.xlane.xlu0 %5672
    %v5674 = vsel %vm945, %v5664, 0.0
    %5675 = vadd.xlane.f32.xlu0 %v5674
    %v5676 = vpop.xlane.xlu0 %5675
    %v5677 = vrcp.pop %v5667
    %v5678 = vrcp.pop %v5670
    %v5679 = vrcp.pop %v5673
    %v5680 = vrcp.pop %v5676
    %v5681 = vmul.f32 %v5658, %v5677
    %v5682 = vmul.f32 %v5660, %v5678
    %v5683 = vmul.f32 %v5662, %v5679
    %v5684 = vmul.f32 %v5664, %v5680
    %v5685 = vmul.f32 %v5173, %v597
    %v5686 = vmul.f32 %v5177, %v597
    %v5687 = vmul.f32 %v5183, %v597
    %v5688 = vmul.f32 %v5187, %v597
    %v5689 = vpack.c.bf16 %v5685, %v5685
    %v5690 = vpack.c.bf16 %v5686, %v5686
    %v5691 = vpack.c.bf16 %v5687, %v5687
    %v5692 = vpack.c.bf16 %v5688, %v5688
    %v5693 = vpack.c.bf16 %v5681, %v5681
    %v5694 = vpack.c.bf16 %v5682, %v5682
    %v5695 = vpack.c.bf16 %v5683, %v5683
    %v5696 = vpack.c.bf16 %v5684, %v5684
    %v5698 = vsel %vm945, %v5693, 0
    %v5701 = vsel %vm1245, %v5689, 0
    %5703 = vmatprep.subr.bf16.mxu0 0
    %5704 = vmatpush1.bf16.msra.mxu0 %v5701
    %5705 = vmatprep.subr.bf16.mxu0 0
    %5706 = vmatpush1.bf16.msra.mxu0 0
    %5707 = vmatprep.subr.bf16.mxu0 0
    %5708 = vmatpush1.bf16.msra.mxu0 0
    %5709 = vmatprep.subr.bf16.mxu0 0
    %5710 = vmatpush1.bf16.msra.mxu0 0
    %5711 = vmatprep.subr.bf16.mxu0 0
    %5712 = vmatpush1.bf16.msra.mxu0 0
    %5713 = vmatprep.subr.bf16.mxu0 0
    %5714 = vmatpush1.bf16.msra.mxu0 0
    %5715 = vmatprep.subr.bf16.mxu0 0
    %5716 = vmatpush1.bf16.msra.mxu0 0
    %5717 = vmatprep.subr.bf16.mxu0 0
    %5718 = vmatpush1.bf16.msra.mxu0 0
    %5719 = vmatprep.subr.bf16.mxu0 0
    %5720 = vmatpush1.bf16.msra.mxu0 0
    %5721 = vmatprep.subr.bf16.mxu0 0
    %5722 = vmatpush1.bf16.msra.mxu0 0
    %5723 = vmatprep.subr.bf16.mxu0 0
    %5724 = vmatpush1.bf16.msra.mxu0 0
    %5725 = vmatprep.subr.bf16.mxu0 0
    %5726 = vmatpush1.bf16.msra.mxu0 0
    %5727 = vmatprep.subr.bf16.mxu0 0
    %5728 = vmatpush1.bf16.msra.mxu0 0
    %5729 = vmatprep.subr.bf16.mxu0 0
    %5730 = vmatpush1.bf16.msra.mxu0 0
    %5731 = vmatprep.subr.bf16.mxu0 0
    %5732 = vmatpush1.bf16.msra.mxu0 0
    %5733 = vmatprep.subr.bf16.mxu0 0
    %5734 = vmatpush1.bf16.msra.mxu0 0
    %5735 = vmatprep.mubr.bf16.mxu0 0
    %5736 = vmatmul.mubr.bf16.gmra.mrb[0].mxu0 %v5698
    %v5737 = vpop.f32.mrb[0].mxu0
    %v5738 = vadd.f32 0.0, %v5737
    %v5739 = vpop.f32.mrb[0].mxu0
    %v5740 = vpop.f32.mrb[0].mxu0
    %v5741 = vpop.f32.mrb[0].mxu0
    %5742 = vdwg.mxu0
    %v5744 = vsel %vm945, %v5694, 0
    %v5747 = vsel %vm1245, %v5690, 0
    %5749 = vmatprep.subr.bf16.mxu0 0
    %5750 = vmatpush1.bf16.msra.mxu0 %v5747
    %5751 = vmatprep.subr.bf16.mxu0 0
    %5752 = vmatpush1.bf16.msra.mxu0 0
    %5753 = vmatprep.subr.bf16.mxu0 0
    %5754 = vmatpush1.bf16.msra.mxu0 0
    %5755 = vmatprep.subr.bf16.mxu0 0
    %5756 = vmatpush1.bf16.msra.mxu0 0
    %5757 = vmatprep.subr.bf16.mxu0 0
    %5758 = vmatpush1.bf16.msra.mxu0 0
    %5759 = vmatprep.subr.bf16.mxu0 0
    %5760 = vmatpush1.bf16.msra.mxu0 0
    %5761 = vmatprep.subr.bf16.mxu0 0
    %5762 = vmatpush1.bf16.msra.mxu0 0
    %5763 = vmatprep.subr.bf16.mxu0 0
    %5764 = vmatpush1.bf16.msra.mxu0 0
    %5765 = vmatprep.subr.bf16.mxu0 0
    %5766 = vmatpush1.bf16.msra.mxu0 0
    %5767 = vmatprep.subr.bf16.mxu0 0
    %5768 = vmatpush1.bf16.msra.mxu0 0
    %5769 = vmatprep.subr.bf16.mxu0 0
    %5770 = vmatpush1.bf16.msra.mxu0 0
    %5771 = vmatprep.subr.bf16.mxu0 0
    %5772 = vmatpush1.bf16.msra.mxu0 0
    %5773 = vmatprep.subr.bf16.mxu0 0
    %5774 = vmatpush1.bf16.msra.mxu0 0
    %5775 = vmatprep.subr.bf16.mxu0 0
    %5776 = vmatpush1.bf16.msra.mxu0 0
    %5777 = vmatprep.subr.bf16.mxu0 0
    %5778 = vmatpush1.bf16.msra.mxu0 0
    %5779 = vmatprep.subr.bf16.mxu0 0
    %5780 = vmatpush1.bf16.msra.mxu0 0
    %5781 = vmatprep.mubr.bf16.mxu0 0
    %5782 = vmatmul.mubr.bf16.gmra.mrb[0].mxu0 %v5744
    %v5783 = vpop.f32.mrb[0].mxu0
    %v5784 = vadd.f32 0.0, %v5783
    %v5785 = vpop.f32.mrb[0].mxu0
    %v5786 = vpop.f32.mrb[0].mxu0
    %v5787 = vpop.f32.mrb[0].mxu0
    %5788 = vdwg.mxu0
    %v5790 = vsel %vm945, %v5695, 0
    %v5793 = vsel %vm1245, %v5691, 0
    %5795 = vmatprep.subr.bf16.mxu0 0
    %5796 = vmatpush1.bf16.msra.mxu0 %v5793
    %5797 = vmatprep.subr.bf16.mxu0 0
    %5798 = vmatpush1.bf16.msra.mxu0 0
    %5799 = vmatprep.subr.bf16.mxu0 0
    %5800 = vmatpush1.bf16.msra.mxu0 0
    %5801 = vmatprep.subr.bf16.mxu0 0
    %5802 = vmatpush1.bf16.msra.mxu0 0
    %5803 = vmatprep.subr.bf16.mxu0 0
    %5804 = vmatpush1.bf16.msra.mxu0 0
    %5805 = vmatprep.subr.bf16.mxu0 0
    %5806 = vmatpush1.bf16.msra.mxu0 0
    %5807 = vmatprep.subr.bf16.mxu0 0
    %5808 = vmatpush1.bf16.msra.mxu0 0
    %5809 = vmatprep.subr.bf16.mxu0 0
    %5810 = vmatpush1.bf16.msra.mxu0 0
    %5811 = vmatprep.subr.bf16.mxu0 0
    %5812 = vmatpush1.bf16.msra.mxu0 0
    %5813 = vmatprep.subr.bf16.mxu0 0
    %5814 = vmatpush1.bf16.msra.mxu0 0
    %5815 = vmatprep.subr.bf16.mxu0 0
    %5816 = vmatpush1.bf16.msra.mxu0 0
    %5817 = vmatprep.subr.bf16.mxu0 0
    %5818 = vmatpush1.bf16.msra.mxu0 0
    %5819 = vmatprep.subr.bf16.mxu0 0
    %5820 = vmatpush1.bf16.msra.mxu0 0
    %5821 = vmatprep.subr.bf16.mxu0 0
    %5822 = vmatpush1.bf16.msra.mxu0 0
    %5823 = vmatprep.subr.bf16.mxu0 0
    %5824 = vmatpush1.bf16.msra.mxu0 0
    %5825 = vmatprep.subr.bf16.mxu0 0
    %5826 = vmatpush1.bf16.msra.mxu0 0
    %5827 = vmatprep.mubr.bf16.mxu0 0
    %5828 = vmatmul.mubr.bf16.gmra.mrb[0].mxu0 %v5790
    %v5829 = vpop.f32.mrb[0].mxu0
    %v5830 = vadd.f32 0.0, %v5829
    %v5831 = vpop.f32.mrb[0].mxu0
    %v5832 = vpop.f32.mrb[0].mxu0
    %v5833 = vpop.f32.mrb[0].mxu0
    %5834 = vdwg.mxu0
    %v5836 = vsel %vm945, %v5696, 0
    %v5839 = vsel %vm1245, %v5692, 0
    %5841 = vmatprep.subr.bf16.mxu0 0
    %5842 = vmatpush1.bf16.msra.mxu0 %v5839
    %5843 = vmatprep.subr.bf16.mxu0 0
    %5844 = vmatpush1.bf16.msra.mxu0 0
    %5845 = vmatprep.subr.bf16.mxu0 0
    %5846 = vmatpush1.bf16.msra.mxu0 0
    %5847 = vmatprep.subr.bf16.mxu0 0
    %5848 = vmatpush1.bf16.msra.mxu0 0
    %5849 = vmatprep.subr.bf16.mxu0 0
    %5850 = vmatpush1.bf16.msra.mxu0 0
    %5851 = vmatprep.subr.bf16.mxu0 0
    %5852 = vmatpush1.bf16.msra.mxu0 0
    %5853 = vmatprep.subr.bf16.mxu0 0
    %5854 = vmatpush1.bf16.msra.mxu0 0
    %5855 = vmatprep.subr.bf16.mxu0 0
    %5856 = vmatpush1.bf16.msra.mxu0 0
    %5857 = vmatprep.subr.bf16.mxu0 0
    %5858 = vmatpush1.bf16.msra.mxu0 0
    %5859 = vmatprep.subr.bf16.mxu0 0
    %5860 = vmatpush1.bf16.msra.mxu0 0
    %5861 = vmatprep.subr.bf16.mxu0 0
    %5862 = vmatpush1.bf16.msra.mxu0 0
    %5863 = vmatprep.subr.bf16.mxu0 0
    %5864 = vmatpush1.bf16.msra.mxu0 0
    %5865 = vmatprep.subr.bf16.mxu0 0
    %5866 = vmatpush1.bf16.msra.mxu0 0
    %5867 = vmatprep.subr.bf16.mxu0 0
    %5868 = vmatpush1.bf16.msra.mxu0 0
    %5869 = vmatprep.subr.bf16.mxu0 0
    %5870 = vmatpush1.bf16.msra.mxu0 0
    %5871 = vmatprep.subr.bf16.mxu0 0
    %5872 = vmatpush1.bf16.msra.mxu0 0
    %5873 = vmatprep.mubr.bf16.mxu0 0
    %5874 = vmatmul.mubr.bf16.gmra.mrb[0].mxu0 %v5836
    %v5875 = vpop.f32.mrb[0].mxu0
    %v5876 = vadd.f32 0.0, %v5875
    %v5877 = vpop.f32.mrb[0].mxu0
    %v5878 = vpop.f32.mrb[0].mxu0
    %v5879 = vpop.f32.mrb[0].mxu0
    %5880 = vdwg.mxu0
    %v5882 = vsel %vm945, %v5453, 0
    %v5885 = vsel %vm1245, %v5449, 0
    %5887 = vmatprep.subr.bf16.mxu0 0
    %5888 = vmatpush1.bf16.msra.mxu0 %v5885
    %5889 = vmatprep.subr.bf16.mxu0 0
    %5890 = vmatpush1.bf16.msra.mxu0 0
    %5891 = vmatprep.subr.bf16.mxu0 0
    %5892 = vmatpush1.bf16.msra.mxu0 0
    %5893 = vmatprep.subr.bf16.mxu0 0
    %5894 = vmatpush1.bf16.msra.mxu0 0
    %5895 = vmatprep.subr.bf16.mxu0 0
    %5896 = vmatpush1.bf16.msra.mxu0 0
    %5897 = vmatprep.subr.bf16.mxu0 0
    %5898 = vmatpush1.bf16.msra.mxu0 0
    %5899 = vmatprep.subr.bf16.mxu0 0
    %5900 = vmatpush1.bf16.msra.mxu0 0
    %5901 = vmatprep.subr.bf16.mxu0 0
    %5902 = vmatpush1.bf16.msra.mxu0 0
    %5903 = vmatprep.subr.bf16.mxu0 0
    %5904 = vmatpush1.bf16.msra.mxu0 0
    %5905 = vmatprep.subr.bf16.mxu0 0
    %5906 = vmatpush1.bf16.msra.mxu0 0
    %5907 = vmatprep.subr.bf16.mxu0 0
    %5908 = vmatpush1.bf16.msra.mxu0 0
    %5909 = vmatprep.subr.bf16.mxu0 0
    %5910 = vmatpush1.bf16.msra.mxu0 0
    %5911 = vmatprep.subr.bf16.mxu0 0
    %5912 = vmatpush1.bf16.msra.mxu0 0
    %5913 = vmatprep.subr.bf16.mxu0 0
    %5914 = vmatpush1.bf16.msra.mxu0 0
    %5915 = vmatprep.subr.bf16.mxu0 0
    %5916 = vmatpush1.bf16.msra.mxu0 0
    %5917 = vmatprep.subr.bf16.mxu0 0
    %5918 = vmatpush1.bf16.msra.mxu0 0
    %5919 = vmatprep.mubr.bf16.mxu0 0
    %5920 = vmatmul.mubr.bf16.gmra.mrb[0].mxu0 %v5882
    %v5921 = vpop.f32.mrb[0].mxu0
    %v5922 = vadd.f32 %v5738, %v5921
    %v5923 = vpop.f32.mrb[0].mxu0
    %v5924 = vpop.f32.mrb[0].mxu0
    %v5925 = vpop.f32.mrb[0].mxu0
    %5926 = vdwg.mxu0
    %v5928 = vsel %vm945, %v5454, 0
    %v5931 = vsel %vm1245, %v5450, 0
    %5933 = vmatprep.subr.bf16.mxu0 0
    %5934 = vmatpush1.bf16.msra.mxu0 %v5931
    %5935 = vmatprep.subr.bf16.mxu0 0
    %5936 = vmatpush1.bf16.msra.mxu0 0
    %5937 = vmatprep.subr.bf16.mxu0 0
    %5938 = vmatpush1.bf16.msra.mxu0 0
    %5939 = vmatprep.subr.bf16.mxu0 0
    %5940 = vmatpush1.bf16.msra.mxu0 0
    %5941 = vmatprep.subr.bf16.mxu0 0
    %5942 = vmatpush1.bf16.msra.mxu0 0
    %5943 = vmatprep.subr.bf16.mxu0 0
    %5944 = vmatpush1.bf16.msra.mxu0 0
    %5945 = vmatprep.subr.bf16.mxu0 0
    %5946 = vmatpush1.bf16.msra.mxu0 0
    %5947 = vmatprep.subr.bf16.mxu0 0
    %5948 = vmatpush1.bf16.msra.mxu0 0
    %5949 = vmatprep.subr.bf16.mxu0 0
    %5950 = vmatpush1.bf16.msra.mxu0 0
    %5951 = vmatprep.subr.bf16.mxu0 0
    %5952 = vmatpush1.bf16.msra.mxu0 0
    %5953 = vmatprep.subr.bf16.mxu0 0
    %5954 = vmatpush1.bf16.msra.mxu0 0
    %5955 = vmatprep.subr.bf16.mxu0 0
    %5956 = vmatpush1.bf16.msra.mxu0 0
    %5957 = vmatprep.subr.bf16.mxu0 0
    %5958 = vmatpush1.bf16.msra.mxu0 0
    %5959 = vmatprep.subr.bf16.mxu0 0
    %5960 = vmatpush1.bf16.msra.mxu0 0
    %5961 = vmatprep.subr.bf16.mxu0 0
    %5962 = vmatpush1.bf16.msra.mxu0 0
    %5963 = vmatprep.subr.bf16.mxu0 0
    %5964 = vmatpush1.bf16.msra.mxu0 0
    %5965 = vmatprep.mubr.bf16.mxu0 0
    %5966 = vmatmul.mubr.bf16.gmra.mrb[0].mxu0 %v5928
    %v5967 = vpop.f32.mrb[0].mxu0
    %v5968 = vadd.f32 %v5784, %v5967
    %v5969 = vpop.f32.mrb[0].mxu0
    %v5970 = vpop.f32.mrb[0].mxu0
    %v5971 = vpop.f32.mrb[0].mxu0
    %5972 = vdwg.mxu0
    %v5974 = vsel %vm945, %v5455, 0
    %v5977 = vsel %vm1245, %v5451, 0
    %5979 = vmatprep.subr.bf16.mxu0 0
    %5980 = vmatpush1.bf16.msra.mxu0 %v5977
    %5981 = vmatprep.subr.bf16.mxu0 0
    %5982 = vmatpush1.bf16.msra.mxu0 0
    %5983 = vmatprep.subr.bf16.mxu0 0
    %5984 = vmatpush1.bf16.msra.mxu0 0
    %5985 = vmatprep.subr.bf16.mxu0 0
    %5986 = vmatpush1.bf16.msra.mxu0 0
    %5987 = vmatprep.subr.bf16.mxu0 0
    %5988 = vmatpush1.bf16.msra.mxu0 0
    %5989 = vmatprep.subr.bf16.mxu0 0
    %5990 = vmatpush1.bf16.msra.mxu0 0
    %5991 = vmatprep.subr.bf16.mxu0 0
    %5992 = vmatpush1.bf16.msra.mxu0 0
    %5993 = vmatprep.subr.bf16.mxu0 0
    %5994 = vmatpush1.bf16.msra.mxu0 0
    %5995 = vmatprep.subr.bf16.mxu0 0
    %5996 = vmatpush1.bf16.msra.mxu0 0
    %5997 = vmatprep.subr.bf16.mxu0 0
    %5998 = vmatpush1.bf16.msra.mxu0 0
    %5999 = vmatprep.subr.bf16.mxu0 0
    %6000 = vmatpush1.bf16.msra.mxu0 0
    %6001 = vmatprep.subr.bf16.mxu0 0
    %6002 = vmatpush1.bf16.msra.mxu0 0
    %6003 = vmatprep.subr.bf16.mxu0 0
    %6004 = vmatpush1.bf16.msra.mxu0 0
    %6005 = vmatprep.subr.bf16.mxu0 0
    %6006 = vmatpush1.bf16.msra.mxu0 0
    %6007 = vmatprep.subr.bf16.mxu0 0
    %6008 = vmatpush1.bf16.msra.mxu0 0
    %6009 = vmatprep.subr.bf16.mxu0 0
    %6010 = vmatpush1.bf16.msra.mxu0 0
    %6011 = vmatprep.mubr.bf16.mxu0 0
    %6012 = vmatmul.mubr.bf16.gmra.mrb[0].mxu0 %v5974
    %v6013 = vpop.f32.mrb[0].mxu0
    %v6014 = vadd.f32 %v5830, %v6013
    %v6015 = vpop.f32.mrb[0].mxu0
    %v6016 = vpop.f32.mrb[0].mxu0
    %v6017 = vpop.f32.mrb[0].mxu0
    %6018 = vdwg.mxu0
    %v6020 = vsel %vm945, %v5456, 0
    %v6023 = vsel %vm1245, %v5452, 0
    %6025 = vmatprep.subr.bf16.mxu0 0
    %6026 = vmatpush1.bf16.msra.mxu0 %v6023
    %6027 = vmatprep.subr.bf16.mxu0 0
    %6028 = vmatpush1.bf16.msra.mxu0 0
    %6029 = vmatprep.subr.bf16.mxu0 0
    %6030 = vmatpush1.bf16.msra.mxu0 0
    %6031 = vmatprep.subr.bf16.mxu0 0
    %6032 = vmatpush1.bf16.msra.mxu0 0
    %6033 = vmatprep.subr.bf16.mxu0 0
    %6034 = vmatpush1.bf16.msra.mxu0 0
    %6035 = vmatprep.subr.bf16.mxu0 0
    %6036 = vmatpush1.bf16.msra.mxu0 0
    %6037 = vmatprep.subr.bf16.mxu0 0
    %6038 = vmatpush1.bf16.msra.mxu0 0
    %6039 = vmatprep.subr.bf16.mxu0 0
    %6040 = vmatpush1.bf16.msra.mxu0 0
    %6041 = vmatprep.subr.bf16.mxu0 0
    %6042 = vmatpush1.bf16.msra.mxu0 0
    %6043 = vmatprep.subr.bf16.mxu0 0
    %6044 = vmatpush1.bf16.msra.mxu0 0
    %6045 = vmatprep.subr.bf16.mxu0 0
    %6046 = vmatpush1.bf16.msra.mxu0 0
    %6047 = vmatprep.subr.bf16.mxu0 0
    %6048 = vmatpush1.bf16.msra.mxu0 0
    %6049 = vmatprep.subr.bf16.mxu0 0
    %6050 = vmatpush1.bf16.msra.mxu0 0
    %6051 = vmatprep.subr.bf16.mxu0 0
    %6052 = vmatpush1.bf16.msra.mxu0 0
    %6053 = vmatprep.subr.bf16.mxu0 0
    %6054 = vmatpush1.bf16.msra.mxu0 0
    %6055 = vmatprep.subr.bf16.mxu0 0
    %6056 = vmatpush1.bf16.msra.mxu0 0
    %6057 = vmatprep.mubr.bf16.mxu0 0
    %6058 = vmatmul.mubr.bf16.gmra.mrb[0].mxu0 %v6020
    %v6059 = vpop.f32.mrb[0].mxu0
    %v6060 = vadd.f32 %v5876, %v6059
    %v6061 = vpop.f32.mrb[0].mxu0
    %v6062 = vpop.f32.mrb[0].mxu0
    %v6063 = vpop.f32.mrb[0].mxu0
    %6064 = vdwg.mxu0
    %v6065 = vmul.f32 %v5171, %v602
    %v6066 = vmul.f32 %v5175, %v602
    %v6067 = vmul.f32 %v5181, %v602
    %v6068 = vmul.f32 %v5185, %v602
    %v6069 = vpack.c.bf16 %v6065, %v6065
    %v6070 = vpack.c.bf16 %v6066, %v6066
    %v6071 = vpack.c.bf16 %v6067, %v6067
    %v6072 = vpack.c.bf16 %v6068, %v6068
    %v6074 = vsel %vm671, %v6069, 0
    %6076 = vmatprep.subr.bf16.mxu0 0
    %6077 = vmatpush1.bf16.xpose.msra.mxu0 %v5208
    %6078 = vmatprep.subr.bf16.mxu0 0
    %6079 = vmatpush1.bf16.xpose.msra.mxu0 0
    %6080 = vmatprep.subr.bf16.mxu0 0
    %6081 = vmatpush1.bf16.xpose.msra.mxu0 0
    %6082 = vmatprep.subr.bf16.mxu0 0
    %6083 = vmatpush1.bf16.xpose.msra.mxu0 0
    %6084 = vmatprep.subr.bf16.mxu0 0
    %6085 = vmatpush1.bf16.xpose.msra.mxu0 0
    %6086 = vmatprep.subr.bf16.mxu0 0
    %6087 = vmatpush1.bf16.xpose.msra.mxu0 0
    %6088 = vmatprep.subr.bf16.mxu0 0
    %6089 = vmatpush1.bf16.xpose.msra.mxu0 0
    %6090 = vmatprep.subr.bf16.mxu0 0
    %6091 = vmatpush1.bf16.xpose.msra.mxu0 0
    %6092 = vmatprep.subr.bf16.mxu0 0
    %6093 = vmatpush1.bf16.xpose.msra.mxu0 0
    %6094 = vmatprep.subr.bf16.mxu0 0
    %6095 = vmatpush1.bf16.xpose.msra.mxu0 0
    %6096 = vmatprep.subr.bf16.mxu0 0
    %6097 = vmatpush1.bf16.xpose.msra.mxu0 0
    %6098 = vmatprep.subr.bf16.mxu0 0
    %6099 = vmatpush1.bf16.xpose.msra.mxu0 0
    %6100 = vmatprep.subr.bf16.mxu0 0
    %6101 = vmatpush1.bf16.xpose.msra.mxu0 0
    %6102 = vmatprep.subr.bf16.mxu0 0
    %6103 = vmatpush1.bf16.xpose.msra.mxu0 0
    %6104 = vmatprep.subr.bf16.mxu0 0
    %6105 = vmatpush1.bf16.xpose.msra.mxu0 0
    %6106 = vmatprep.subr.bf16.mxu0 0
    %6107 = vmatpush1.bf16.xpose.msra.mxu0 0
    %6108 = vmatprep.mubr.bf16.mxu0 0
    %6109 = vmatmul.mubr.bf16.gmra.mrb[0].mxu0 %v6074
    %v6110 = vpop.f32.mrb[0].mxu0
    %v6111 = vadd.f32 0.0, %v6110
    %v6112 = vpop.f32.mrb[0].mxu0
    %v6113 = vpop.f32.mrb[0].mxu0
    %v6114 = vpop.f32.mrb[0].mxu0
    %6115 = vdwg.mxu0
    %v6117 = vsel %vm671, %v6070, 0
    %6119 = vmatprep.subr.bf16.mxu0 0
    %6120 = vmatpush1.bf16.xpose.msra.mxu0 %v5257
    %6121 = vmatprep.subr.bf16.mxu0 0
    %6122 = vmatpush1.bf16.xpose.msra.mxu0 0
    %6123 = vmatprep.subr.bf16.mxu0 0
    %6124 = vmatpush1.bf16.xpose.msra.mxu0 0
    %6125 = vmatprep.subr.bf16.mxu0 0
    %6126 = vmatpush1.bf16.xpose.msra.mxu0 0
    %6127 = vmatprep.subr.bf16.mxu0 0
    %6128 = vmatpush1.bf16.xpose.msra.mxu0 0
    %6129 = vmatprep.subr.bf16.mxu0 0
    %6130 = vmatpush1.bf16.xpose.msra.mxu0 0
    %6131 = vmatprep.subr.bf16.mxu0 0
    %6132 = vmatpush1.bf16.xpose.msra.mxu0 0
    %6133 = vmatprep.subr.bf16.mxu0 0
    %6134 = vmatpush1.bf16.xpose.msra.mxu0 0
    %6135 = vmatprep.subr.bf16.mxu0 0
    %6136 = vmatpush1.bf16.xpose.msra.mxu0 0
    %6137 = vmatprep.subr.bf16.mxu0 0
    %6138 = vmatpush1.bf16.xpose.msra.mxu0 0
    %6139 = vmatprep.subr.bf16.mxu0 0
    %6140 = vmatpush1.bf16.xpose.msra.mxu0 0
    %6141 = vmatprep.subr.bf16.mxu0 0
    %6142 = vmatpush1.bf16.xpose.msra.mxu0 0
    %6143 = vmatprep.subr.bf16.mxu0 0
    %6144 = vmatpush1.bf16.xpose.msra.mxu0 0
    %6145 = vmatprep.subr.bf16.mxu0 0
    %6146 = vmatpush1.bf16.xpose.msra.mxu0 0
    %6147 = vmatprep.subr.bf16.mxu0 0
    %6148 = vmatpush1.bf16.xpose.msra.mxu0 0
    %6149 = vmatprep.subr.bf16.mxu0 0
    %6150 = vmatpush1.bf16.xpose.msra.mxu0 0
    %6151 = vmatprep.mubr.bf16.mxu0 0
    %6152 = vmatmul.mubr.bf16.gmra.mrb[0].mxu0 %v6117
    %v6153 = vpop.f32.mrb[0].mxu0
    %v6154 = vadd.f32 0.0, %v6153
    %v6155 = vpop.f32.mrb[0].mxu0
    %v6156 = vpop.f32.mrb[0].mxu0
    %v6157 = vpop.f32.mrb[0].mxu0
    %6158 = vdwg.mxu0
    %v6160 = vsel %vm671, %v6071, 0
    %6162 = vmatprep.subr.bf16.mxu0 0
    %6163 = vmatpush1.bf16.xpose.msra.mxu0 %v5306
    %6164 = vmatprep.subr.bf16.mxu0 0
    %6165 = vmatpush1.bf16.xpose.msra.mxu0 0
    %6166 = vmatprep.subr.bf16.mxu0 0
    %6167 = vmatpush1.bf16.xpose.msra.mxu0 0
    %6168 = vmatprep.subr.bf16.mxu0 0
    %6169 = vmatpush1.bf16.xpose.msra.mxu0 0
    %6170 = vmatprep.subr.bf16.mxu0 0
    %6171 = vmatpush1.bf16.xpose.msra.mxu0 0
    %6172 = vmatprep.subr.bf16.mxu0 0
    %6173 = vmatpush1.bf16.xpose.msra.mxu0 0
    %6174 = vmatprep.subr.bf16.mxu0 0
    %6175 = vmatpush1.bf16.xpose.msra.mxu0 0
    %6176 = vmatprep.subr.bf16.mxu0 0
    %6177 = vmatpush1.bf16.xpose.msra.mxu0 0
    %6178 = vmatprep.subr.bf16.mxu0 0
    %6179 = vmatpush1.bf16.xpose.msra.mxu0 0
    %6180 = vmatprep.subr.bf16.mxu0 0
    %6181 = vmatpush1.bf16.xpose.msra.mxu0 0
    %6182 = vmatprep.subr.bf16.mxu0 0
    %6183 = vmatpush1.bf16.xpose.msra.mxu0 0
    %6184 = vmatprep.subr.bf16.mxu0 0
    %6185 = vmatpush1.bf16.xpose.msra.mxu0 0
    %6186 = vmatprep.subr.bf16.mxu0 0
    %6187 = vmatpush1.bf16.xpose.msra.mxu0 0
    %6188 = vmatprep.subr.bf16.mxu0 0
    %6189 = vmatpush1.bf16.xpose.msra.mxu0 0
    %6190 = vmatprep.subr.bf16.mxu0 0
    %6191 = vmatpush1.bf16.xpose.msra.mxu0 0
    %6192 = vmatprep.subr.bf16.mxu0 0
    %6193 = vmatpush1.bf16.xpose.msra.mxu0 0
    %6194 = vmatprep.mubr.bf16.mxu0 0
    %6195 = vmatmul.mubr.bf16.gmra.mrb[0].mxu0 %v6160
    %v6196 = vpop.f32.mrb[0].mxu0
    %v6197 = vadd.f32 0.0, %v6196
    %v6198 = vpop.f32.mrb[0].mxu0
    %v6199 = vpop.f32.mrb[0].mxu0
    %v6200 = vpop.f32.mrb[0].mxu0
    %6201 = vdwg.mxu0
    %v6203 = vsel %vm671, %v6072, 0
    %6205 = vmatprep.subr.bf16.mxu0 0
    %6206 = vmatpush1.bf16.xpose.msra.mxu0 %v5355
    %6207 = vmatprep.subr.bf16.mxu0 0
    %6208 = vmatpush1.bf16.xpose.msra.mxu0 0
    %6209 = vmatprep.subr.bf16.mxu0 0
    %6210 = vmatpush1.bf16.xpose.msra.mxu0 0
    %6211 = vmatprep.subr.bf16.mxu0 0
    %6212 = vmatpush1.bf16.xpose.msra.mxu0 0
    %6213 = vmatprep.subr.bf16.mxu0 0
    %6214 = vmatpush1.bf16.xpose.msra.mxu0 0
    %6215 = vmatprep.subr.bf16.mxu0 0
    %6216 = vmatpush1.bf16.xpose.msra.mxu0 0
    %6217 = vmatprep.subr.bf16.mxu0 0
    %6218 = vmatpush1.bf16.xpose.msra.mxu0 0
    %6219 = vmatprep.subr.bf16.mxu0 0
    %6220 = vmatpush1.bf16.xpose.msra.mxu0 0
    %6221 = vmatprep.subr.bf16.mxu0 0
    %6222 = vmatpush1.bf16.xpose.msra.mxu0 0
    %6223 = vmatprep.subr.bf16.mxu0 0
    %6224 = vmatpush1.bf16.xpose.msra.mxu0 0
    %6225 = vmatprep.subr.bf16.mxu0 0
    %6226 = vmatpush1.bf16.xpose.msra.mxu0 0
    %6227 = vmatprep.subr.bf16.mxu0 0
    %6228 = vmatpush1.bf16.xpose.msra.mxu0 0
    %6229 = vmatprep.subr.bf16.mxu0 0
    %6230 = vmatpush1.bf16.xpose.msra.mxu0 0
    %6231 = vmatprep.subr.bf16.mxu0 0
    %6232 = vmatpush1.bf16.xpose.msra.mxu0 0
    %6233 = vmatprep.subr.bf16.mxu0 0
    %6234 = vmatpush1.bf16.xpose.msra.mxu0 0
    %6235 = vmatprep.subr.bf16.mxu0 0
    %6236 = vmatpush1.bf16.xpose.msra.mxu0 0
    %6237 = vmatprep.mubr.bf16.mxu0 0
    %6238 = vmatmul.mubr.bf16.gmra.mrb[0].mxu0 %v6203
    %v6239 = vpop.f32.mrb[0].mxu0
    %v6240 = vadd.f32 0.0, %v6239
    %v6241 = vpop.f32.mrb[0].mxu0
    %v6242 = vpop.f32.mrb[0].mxu0
    %v6243 = vpop.f32.mrb[0].mxu0
    %6244 = vdwg.mxu0
    %v6245 = vsel %vm940, -1e+30, %v6111
    %v6246 = vsel %vm940, -1e+30, %v6154
    %v6247 = vsel %vm940, -1e+30, %v6197
    %v6248 = vsel %vm940, -1e+30, %v6240
    %v6249 = vsel %vm945, %v6245, -inf
    %6250 = vmax.xlane.f32.xlu0 %v6249
    %v6251 = vpop.xlane.xlu0 %6250
    %v6252 = vsel %vm945, %v6246, -inf
    %6253 = vmax.xlane.f32.xlu0 %v6252
    %v6254 = vpop.xlane.xlu0 %6253
    %v6255 = vsel %vm945, %v6247, -inf
    %6256 = vmax.xlane.f32.xlu0 %v6255
    %v6257 = vpop.xlane.xlu0 %6256
    %v6258 = vsel %vm945, %v6248, -inf
    %6259 = vmax.xlane.f32.xlu0 %v6258
    %v6260 = vpop.xlane.xlu0 %6259
    %v6261 = vsub.f32 %v6245, %v6251
    %v6262 = vsub.f32 %v6246, %v6254
    %v6263 = vsub.f32 %v6247, %v6257
    %v6264 = vsub.f32 %v6248, %v6260
    %v6265 = vmul.f32 %v6261, 1.442695
    %v6266 = vpow.pop %v6265
    %v6267 = vmul.f32 %v6262, 1.442695
    %v6268 = vpow.pop %v6267
    %v6269 = vmul.f32 %v6263, 1.442695
    %v6270 = vpow.pop %v6269
    %v6271 = vmul.f32 %v6264, 1.442695
    %v6272 = vpow.pop %v6271
    %v6273 = vsel %vm945, %v6266, 0.0
    %6274 = vadd.xlane.f32.xlu0 %v6273
    %v6275 = vpop.xlane.xlu0 %6274
    %v6276 = vsel %vm945, %v6268, 0.0
    %6277 = vadd.xlane.f32.xlu0 %v6276
    %v6278 = vpop.xlane.xlu0 %6277
    %v6279 = vsel %vm945, %v6270, 0.0
    %6280 = vadd.xlane.f32.xlu0 %v6279
    %v6281 = vpop.xlane.xlu0 %6280
    %v6282 = vsel %vm945, %v6272, 0.0
    %6283 = vadd.xlane.f32.xlu0 %v6282
    %v6284 = vpop.xlane.xlu0 %6283
    %v6285 = vrcp.pop %v6275
    %v6286 = vrcp.pop %v6278
    %v6287 = vrcp.pop %v6281
    %v6288 = vrcp.pop %v6284
    %v6289 = vmul.f32 %v6266, %v6285
    %v6290 = vmul.f32 %v6268, %v6286
    %v6291 = vmul.f32 %v6270, %v6287
    %v6292 = vmul.f32 %v6272, %v6288
    %v6293 = vmul.f32 %v5173, %v602
    %v6294 = vmul.f32 %v5177, %v602
    %v6295 = vmul.f32 %v5183, %v602
    %v6296 = vmul.f32 %v5187, %v602
    %v6297 = vpack.c.bf16 %v6293, %v6293
    %v6298 = vpack.c.bf16 %v6294, %v6294
    %v6299 = vpack.c.bf16 %v6295, %v6295
    %v6300 = vpack.c.bf16 %v6296, %v6296
    %v6301 = vpack.c.bf16 %v6289, %v6289
    %v6302 = vpack.c.bf16 %v6290, %v6290
    %v6303 = vpack.c.bf16 %v6291, %v6291
    %v6304 = vpack.c.bf16 %v6292, %v6292
    %v6306 = vsel %vm945, %v6301, 0
    %v6309 = vsel %vm1245, %v6297, 0
    %6311 = vmatprep.subr.bf16.mxu0 0
    %6312 = vmatpush1.bf16.msra.mxu0 %v6309
    %6313 = vmatprep.subr.bf16.mxu0 0
    %6314 = vmatpush1.bf16.msra.mxu0 0
    %6315 = vmatprep.subr.bf16.mxu0 0
    %6316 = vmatpush1.bf16.msra.mxu0 0
    %6317 = vmatprep.subr.bf16.mxu0 0
    %6318 = vmatpush1.bf16.msra.mxu0 0
    %6319 = vmatprep.subr.bf16.mxu0 0
    %6320 = vmatpush1.bf16.msra.mxu0 0
    %6321 = vmatprep.subr.bf16.mxu0 0
    %6322 = vmatpush1.bf16.msra.mxu0 0
    %6323 = vmatprep.subr.bf16.mxu0 0
    %6324 = vmatpush1.bf16.msra.mxu0 0
    %6325 = vmatprep.subr.bf16.mxu0 0
    %6326 = vmatpush1.bf16.msra.mxu0 0
    %6327 = vmatprep.subr.bf16.mxu0 0
    %6328 = vmatpush1.bf16.msra.mxu0 0
    %6329 = vmatprep.subr.bf16.mxu0 0
    %6330 = vmatpush1.bf16.msra.mxu0 0
    %6331 = vmatprep.subr.bf16.mxu0 0
    %6332 = vmatpush1.bf16.msra.mxu0 0
    %6333 = vmatprep.subr.bf16.mxu0 0
    %6334 = vmatpush1.bf16.msra.mxu0 0
    %6335 = vmatprep.subr.bf16.mxu0 0
    %6336 = vmatpush1.bf16.msra.mxu0 0
    %6337 = vmatprep.subr.bf16.mxu0 0
    %6338 = vmatpush1.bf16.msra.mxu0 0
    %6339 = vmatprep.subr.bf16.mxu0 0
    %6340 = vmatpush1.bf16.msra.mxu0 0
    %6341 = vmatprep.subr.bf16.mxu0 0
    %6342 = vmatpush1.bf16.msra.mxu0 0
    %6343 = vmatprep.mubr.bf16.mxu0 0
    %6344 = vmatmul.mubr.bf16.gmra.mrb[0].mxu0 %v6306
    %v6345 = vpop.f32.mrb[0].mxu0
    %v6346 = vadd.f32 0.0, %v6345
    %v6347 = vpop.f32.mrb[0].mxu0
    %v6348 = vpop.f32.mrb[0].mxu0
    %v6349 = vpop.f32.mrb[0].mxu0
    %6350 = vdwg.mxu0
    %v6352 = vsel %vm945, %v6302, 0
    %v6355 = vsel %vm1245, %v6298, 0
    %6357 = vmatprep.subr.bf16.mxu0 0
    %6358 = vmatpush1.bf16.msra.mxu0 %v6355
    %6359 = vmatprep.subr.bf16.mxu0 0
    %6360 = vmatpush1.bf16.msra.mxu0 0
    %6361 = vmatprep.subr.bf16.mxu0 0
    %6362 = vmatpush1.bf16.msra.mxu0 0
    %6363 = vmatprep.subr.bf16.mxu0 0
    %6364 = vmatpush1.bf16.msra.mxu0 0
    %6365 = vmatprep.subr.bf16.mxu0 0
    %6366 = vmatpush1.bf16.msra.mxu0 0
    %6367 = vmatprep.subr.bf16.mxu0 0
    %6368 = vmatpush1.bf16.msra.mxu0 0
    %6369 = vmatprep.subr.bf16.mxu0 0
    %6370 = vmatpush1.bf16.msra.mxu0 0
    %6371 = vmatprep.subr.bf16.mxu0 0
    %6372 = vmatpush1.bf16.msra.mxu0 0
    %6373 = vmatprep.subr.bf16.mxu0 0
    %6374 = vmatpush1.bf16.msra.mxu0 0
    %6375 = vmatprep.subr.bf16.mxu0 0
    %6376 = vmatpush1.bf16.msra.mxu0 0
    %6377 = vmatprep.subr.bf16.mxu0 0
    %6378 = vmatpush1.bf16.msra.mxu0 0
    %6379 = vmatprep.subr.bf16.mxu0 0
    %6380 = vmatpush1.bf16.msra.mxu0 0
    %6381 = vmatprep.subr.bf16.mxu0 0
    %6382 = vmatpush1.bf16.msra.mxu0 0
    %6383 = vmatprep.subr.bf16.mxu0 0
    %6384 = vmatpush1.bf16.msra.mxu0 0
    %6385 = vmatprep.subr.bf16.mxu0 0
    %6386 = vmatpush1.bf16.msra.mxu0 0
    %6387 = vmatprep.subr.bf16.mxu0 0
    %6388 = vmatpush1.bf16.msra.mxu0 0
    %6389 = vmatprep.mubr.bf16.mxu0 0
    %6390 = vmatmul.mubr.bf16.gmra.mrb[0].mxu0 %v6352
    %v6391 = vpop.f32.mrb[0].mxu0
    %v6392 = vadd.f32 0.0, %v6391
    %v6393 = vpop.f32.mrb[0].mxu0
    %v6394 = vpop.f32.mrb[0].mxu0
    %v6395 = vpop.f32.mrb[0].mxu0
    %6396 = vdwg.mxu0
    %v6398 = vsel %vm945, %v6303, 0
    %v6401 = vsel %vm1245, %v6299, 0
    %6403 = vmatprep.subr.bf16.mxu0 0
    %6404 = vmatpush1.bf16.msra.mxu0 %v6401
    %6405 = vmatprep.subr.bf16.mxu0 0
    %6406 = vmatpush1.bf16.msra.mxu0 0
    %6407 = vmatprep.subr.bf16.mxu0 0
    %6408 = vmatpush1.bf16.msra.mxu0 0
    %6409 = vmatprep.subr.bf16.mxu0 0
    %6410 = vmatpush1.bf16.msra.mxu0 0
    %6411 = vmatprep.subr.bf16.mxu0 0
    %6412 = vmatpush1.bf16.msra.mxu0 0
    %6413 = vmatprep.subr.bf16.mxu0 0
    %6414 = vmatpush1.bf16.msra.mxu0 0
    %6415 = vmatprep.subr.bf16.mxu0 0
    %6416 = vmatpush1.bf16.msra.mxu0 0
    %6417 = vmatprep.subr.bf16.mxu0 0
    %6418 = vmatpush1.bf16.msra.mxu0 0
    %6419 = vmatprep.subr.bf16.mxu0 0
    %6420 = vmatpush1.bf16.msra.mxu0 0
    %6421 = vmatprep.subr.bf16.mxu0 0
    %6422 = vmatpush1.bf16.msra.mxu0 0
    %6423 = vmatprep.subr.bf16.mxu0 0
    %6424 = vmatpush1.bf16.msra.mxu0 0
    %6425 = vmatprep.subr.bf16.mxu0 0
    %6426 = vmatpush1.bf16.msra.mxu0 0
    %6427 = vmatprep.subr.bf16.mxu0 0
    %6428 = vmatpush1.bf16.msra.mxu0 0
    %6429 = vmatprep.subr.bf16.mxu0 0
    %6430 = vmatpush1.bf16.msra.mxu0 0
    %6431 = vmatprep.subr.bf16.mxu0 0
    %6432 = vmatpush1.bf16.msra.mxu0 0
    %6433 = vmatprep.subr.bf16.mxu0 0
    %6434 = vmatpush1.bf16.msra.mxu0 0
    %6435 = vmatprep.mubr.bf16.mxu0 0
    %6436 = vmatmul.mubr.bf16.gmra.mrb[0].mxu0 %v6398
    %v6437 = vpop.f32.mrb[0].mxu0
    %v6438 = vadd.f32 0.0, %v6437
    %v6439 = vpop.f32.mrb[0].mxu0
    %v6440 = vpop.f32.mrb[0].mxu0
    %v6441 = vpop.f32.mrb[0].mxu0
    %6442 = vdwg.mxu0
    %v6444 = vsel %vm945, %v6304, 0
    %v6447 = vsel %vm1245, %v6300, 0
    %6449 = vmatprep.subr.bf16.mxu0 0
    %6450 = vmatpush1.bf16.msra.mxu0 %v6447
    %6451 = vmatprep.subr.bf16.mxu0 0
    %6452 = vmatpush1.bf16.msra.mxu0 0
    %6453 = vmatprep.subr.bf16.mxu0 0
    %6454 = vmatpush1.bf16.msra.mxu0 0
    %6455 = vmatprep.subr.bf16.mxu0 0
    %6456 = vmatpush1.bf16.msra.mxu0 0
    %6457 = vmatprep.subr.bf16.mxu0 0
    %6458 = vmatpush1.bf16.msra.mxu0 0
    %6459 = vmatprep.subr.bf16.mxu0 0
    %6460 = vmatpush1.bf16.msra.mxu0 0
    %6461 = vmatprep.subr.bf16.mxu0 0
    %6462 = vmatpush1.bf16.msra.mxu0 0
    %6463 = vmatprep.subr.bf16.mxu0 0
    %6464 = vmatpush1.bf16.msra.mxu0 0
    %6465 = vmatprep.subr.bf16.mxu0 0
    %6466 = vmatpush1.bf16.msra.mxu0 0
    %6467 = vmatprep.subr.bf16.mxu0 0
    %6468 = vmatpush1.bf16.msra.mxu0 0
    %6469 = vmatprep.subr.bf16.mxu0 0
    %6470 = vmatpush1.bf16.msra.mxu0 0
    %6471 = vmatprep.subr.bf16.mxu0 0
    %6472 = vmatpush1.bf16.msra.mxu0 0
    %6473 = vmatprep.subr.bf16.mxu0 0
    %6474 = vmatpush1.bf16.msra.mxu0 0
    %6475 = vmatprep.subr.bf16.mxu0 0
    %6476 = vmatpush1.bf16.msra.mxu0 0
    %6477 = vmatprep.subr.bf16.mxu0 0
    %6478 = vmatpush1.bf16.msra.mxu0 0
    %6479 = vmatprep.subr.bf16.mxu0 0
    %6480 = vmatpush1.bf16.msra.mxu0 0
    %6481 = vmatprep.mubr.bf16.mxu0 0
    %6482 = vmatmul.mubr.bf16.gmra.mrb[0].mxu0 %v6444
    %v6483 = vpop.f32.mrb[0].mxu0
    %v6484 = vadd.f32 0.0, %v6483
    %v6485 = vpop.f32.mrb[0].mxu0
    %v6486 = vpop.f32.mrb[0].mxu0
    %v6487 = vpop.f32.mrb[0].mxu0
    %6488 = vdwg.mxu0
    %v6489 = vadd.f32 %v5922, %v6346
    %v6490 = vadd.f32 %v5968, %v6392
    %v6491 = vadd.f32 %v6014, %v6438
    %v6492 = vadd.f32 %v6060, %v6484
    %v6493 = vmul.f32 %v5171, %v607
    %v6494 = vmul.f32 %v5175, %v607
    %v6495 = vmul.f32 %v5181, %v607
    %v6496 = vmul.f32 %v5185, %v607
    %v6497 = vpack.c.bf16 %v6493, %v6493
    %v6498 = vpack.c.bf16 %v6494, %v6494
    %v6499 = vpack.c.bf16 %v6495, %v6495
    %v6500 = vpack.c.bf16 %v6496, %v6496
    %v6502 = vsel %vm671, %v6497, 0
    %6504 = vmatprep.subr.bf16.mxu0 0
    %6505 = vmatpush1.bf16.xpose.msra.mxu0 %v5208
    %6506 = vmatprep.subr.bf16.mxu0 0
    %6507 = vmatpush1.bf16.xpose.msra.mxu0 0
    %6508 = vmatprep.subr.bf16.mxu0 0
    %6509 = vmatpush1.bf16.xpose.msra.mxu0 0
    %6510 = vmatprep.subr.bf16.mxu0 0
    %6511 = vmatpush1.bf16.xpose.msra.mxu0 0
    %6512 = vmatprep.subr.bf16.mxu0 0
    %6513 = vmatpush1.bf16.xpose.msra.mxu0 0
    %6514 = vmatprep.subr.bf16.mxu0 0
    %6515 = vmatpush1.bf16.xpose.msra.mxu0 0
    %6516 = vmatprep.subr.bf16.mxu0 0
    %6517 = vmatpush1.bf16.xpose.msra.mxu0 0
    %6518 = vmatprep.subr.bf16.mxu0 0
    %6519 = vmatpush1.bf16.xpose.msra.mxu0 0
    %6520 = vmatprep.subr.bf16.mxu0 0
    %6521 = vmatpush1.bf16.xpose.msra.mxu0 0
    %6522 = vmatprep.subr.bf16.mxu0 0
    %6523 = vmatpush1.bf16.xpose.msra.mxu0 0
    %6524 = vmatprep.subr.bf16.mxu0 0
    %6525 = vmatpush1.bf16.xpose.msra.mxu0 0
    %6526 = vmatprep.subr.bf16.mxu0 0
    %6527 = vmatpush1.bf16.xpose.msra.mxu0 0
    %6528 = vmatprep.subr.bf16.mxu0 0
    %6529 = vmatpush1.bf16.xpose.msra.mxu0 0
    %6530 = vmatprep.subr.bf16.mxu0 0
    %6531 = vmatpush1.bf16.xpose.msra.mxu0 0
    %6532 = vmatprep.subr.bf16.mxu0 0
    %6533 = vmatpush1.bf16.xpose.msra.mxu0 0
    %6534 = vmatprep.subr.bf16.mxu0 0
    %6535 = vmatpush1.bf16.xpose.msra.mxu0 0
    %6536 = vmatprep.mubr.bf16.mxu0 0
    %6537 = vmatmul.mubr.bf16.gmra.mrb[0].mxu0 %v6502
    %v6538 = vpop.f32.mrb[0].mxu0
    %v6539 = vadd.f32 0.0, %v6538
    %v6540 = vpop.f32.mrb[0].mxu0
    %v6541 = vpop.f32.mrb[0].mxu0
    %v6542 = vpop.f32.mrb[0].mxu0
    %6543 = vdwg.mxu0
    %v6545 = vsel %vm671, %v6498, 0
    %6547 = vmatprep.subr.bf16.mxu0 0
    %6548 = vmatpush1.bf16.xpose.msra.mxu0 %v5257
    %6549 = vmatprep.subr.bf16.mxu0 0
    %6550 = vmatpush1.bf16.xpose.msra.mxu0 0
    %6551 = vmatprep.subr.bf16.mxu0 0
    %6552 = vmatpush1.bf16.xpose.msra.mxu0 0
    %6553 = vmatprep.subr.bf16.mxu0 0
    %6554 = vmatpush1.bf16.xpose.msra.mxu0 0
    %6555 = vmatprep.subr.bf16.mxu0 0
    %6556 = vmatpush1.bf16.xpose.msra.mxu0 0
    %6557 = vmatprep.subr.bf16.mxu0 0
    %6558 = vmatpush1.bf16.xpose.msra.mxu0 0
    %6559 = vmatprep.subr.bf16.mxu0 0
    %6560 = vmatpush1.bf16.xpose.msra.mxu0 0
    %6561 = vmatprep.subr.bf16.mxu0 0
    %6562 = vmatpush1.bf16.xpose.msra.mxu0 0
    %6563 = vmatprep.subr.bf16.mxu0 0
    %6564 = vmatpush1.bf16.xpose.msra.mxu0 0
    %6565 = vmatprep.subr.bf16.mxu0 0
    %6566 = vmatpush1.bf16.xpose.msra.mxu0 0
    %6567 = vmatprep.subr.bf16.mxu0 0
    %6568 = vmatpush1.bf16.xpose.msra.mxu0 0
    %6569 = vmatprep.subr.bf16.mxu0 0
    %6570 = vmatpush1.bf16.xpose.msra.mxu0 0
    %6571 = vmatprep.subr.bf16.mxu0 0
    %6572 = vmatpush1.bf16.xpose.msra.mxu0 0
    %6573 = vmatprep.subr.bf16.mxu0 0
    %6574 = vmatpush1.bf16.xpose.msra.mxu0 0
    %6575 = vmatprep.subr.bf16.mxu0 0
    %6576 = vmatpush1.bf16.xpose.msra.mxu0 0
    %6577 = vmatprep.subr.bf16.mxu0 0
    %6578 = vmatpush1.bf16.xpose.msra.mxu0 0
    %6579 = vmatprep.mubr.bf16.mxu0 0
    %6580 = vmatmul.mubr.bf16.gmra.mrb[0].mxu0 %v6545
    %v6581 = vpop.f32.mrb[0].mxu0
    %v6582 = vadd.f32 0.0, %v6581
    %v6583 = vpop.f32.mrb[0].mxu0
    %v6584 = vpop.f32.mrb[0].mxu0
    %v6585 = vpop.f32.mrb[0].mxu0
    %6586 = vdwg.mxu0
    %v6588 = vsel %vm671, %v6499, 0
    %6590 = vmatprep.subr.bf16.mxu0 0
    %6591 = vmatpush1.bf16.xpose.msra.mxu0 %v5306
    %6592 = vmatprep.subr.bf16.mxu0 0
    %6593 = vmatpush1.bf16.xpose.msra.mxu0 0
    %6594 = vmatprep.subr.bf16.mxu0 0
    %6595 = vmatpush1.bf16.xpose.msra.mxu0 0
    %6596 = vmatprep.subr.bf16.mxu0 0
    %6597 = vmatpush1.bf16.xpose.msra.mxu0 0
    %6598 = vmatprep.subr.bf16.mxu0 0
    %6599 = vmatpush1.bf16.xpose.msra.mxu0 0
    %6600 = vmatprep.subr.bf16.mxu0 0
    %6601 = vmatpush1.bf16.xpose.msra.mxu0 0
    %6602 = vmatprep.subr.bf16.mxu0 0
    %6603 = vmatpush1.bf16.xpose.msra.mxu0 0
    %6604 = vmatprep.subr.bf16.mxu0 0
    %6605 = vmatpush1.bf16.xpose.msra.mxu0 0
    %6606 = vmatprep.subr.bf16.mxu0 0
    %6607 = vmatpush1.bf16.xpose.msra.mxu0 0
    %6608 = vmatprep.subr.bf16.mxu0 0
    %6609 = vmatpush1.bf16.xpose.msra.mxu0 0
    %6610 = vmatprep.subr.bf16.mxu0 0
    %6611 = vmatpush1.bf16.xpose.msra.mxu0 0
    %6612 = vmatprep.subr.bf16.mxu0 0
    %6613 = vmatpush1.bf16.xpose.msra.mxu0 0
    %6614 = vmatprep.subr.bf16.mxu0 0
    %6615 = vmatpush1.bf16.xpose.msra.mxu0 0
    %6616 = vmatprep.subr.bf16.mxu0 0
    %6617 = vmatpush1.bf16.xpose.msra.mxu0 0
    %6618 = vmatprep.subr.bf16.mxu0 0
    %6619 = vmatpush1.bf16.xpose.msra.mxu0 0
    %6620 = vmatprep.subr.bf16.mxu0 0
    %6621 = vmatpush1.bf16.xpose.msra.mxu0 0
    %6622 = vmatprep.mubr.bf16.mxu0 0
    %6623 = vmatmul.mubr.bf16.gmra.mrb[0].mxu0 %v6588
    %v6624 = vpop.f32.mrb[0].mxu0
    %v6625 = vadd.f32 0.0, %v6624
    %v6626 = vpop.f32.mrb[0].mxu0
    %v6627 = vpop.f32.mrb[0].mxu0
    %v6628 = vpop.f32.mrb[0].mxu0
    %6629 = vdwg.mxu0
    %v6631 = vsel %vm671, %v6500, 0
    %6633 = vmatprep.subr.bf16.mxu0 0
    %6634 = vmatpush1.bf16.xpose.msra.mxu0 %v5355
    %6635 = vmatprep.subr.bf16.mxu0 0
    %6636 = vmatpush1.bf16.xpose.msra.mxu0 0
    %6637 = vmatprep.subr.bf16.mxu0 0
    %6638 = vmatpush1.bf16.xpose.msra.mxu0 0
    %6639 = vmatprep.subr.bf16.mxu0 0
    %6640 = vmatpush1.bf16.xpose.msra.mxu0 0
    %6641 = vmatprep.subr.bf16.mxu0 0
    %6642 = vmatpush1.bf16.xpose.msra.mxu0 0
    %6643 = vmatprep.subr.bf16.mxu0 0
    %6644 = vmatpush1.bf16.xpose.msra.mxu0 0
    %6645 = vmatprep.subr.bf16.mxu0 0
    %6646 = vmatpush1.bf16.xpose.msra.mxu0 0
    %6647 = vmatprep.subr.bf16.mxu0 0
    %6648 = vmatpush1.bf16.xpose.msra.mxu0 0
    %6649 = vmatprep.subr.bf16.mxu0 0
    %6650 = vmatpush1.bf16.xpose.msra.mxu0 0
    %6651 = vmatprep.subr.bf16.mxu0 0
    %6652 = vmatpush1.bf16.xpose.msra.mxu0 0
    %6653 = vmatprep.subr.bf16.mxu0 0
    %6654 = vmatpush1.bf16.xpose.msra.mxu0 0
    %6655 = vmatprep.subr.bf16.mxu0 0
    %6656 = vmatpush1.bf16.xpose.msra.mxu0 0
    %6657 = vmatprep.subr.bf16.mxu0 0
    %6658 = vmatpush1.bf16.xpose.msra.mxu0 0
    %6659 = vmatprep.subr.bf16.mxu0 0
    %6660 = vmatpush1.bf16.xpose.msra.mxu0 0
    %6661 = vmatprep.subr.bf16.mxu0 0
    %6662 = vmatpush1.bf16.xpose.msra.mxu0 0
    %6663 = vmatprep.subr.bf16.mxu0 0
    %6664 = vmatpush1.bf16.xpose.msra.mxu0 0
    %6665 = vmatprep.mubr.bf16.mxu0 0
    %6666 = vmatmul.mubr.bf16.gmra.mrb[0].mxu0 %v6631
    %v6667 = vpop.f32.mrb[0].mxu0
    %v6668 = vadd.f32 0.0, %v6667
    %v6669 = vpop.f32.mrb[0].mxu0
    %v6670 = vpop.f32.mrb[0].mxu0
    %v6671 = vpop.f32.mrb[0].mxu0
    %6672 = vdwg.mxu0
    %v6673 = vsel %vm940, -1e+30, %v6539
    %v6674 = vsel %vm940, -1e+30, %v6582
    %v6675 = vsel %vm940, -1e+30, %v6625
    %v6676 = vsel %vm940, -1e+30, %v6668
    %v6677 = vsel %vm945, %v6673, -inf
    %6678 = vmax.xlane.f32.xlu0 %v6677
    %v6679 = vpop.xlane.xlu0 %6678
    %v6680 = vsel %vm945, %v6674, -inf
    %6681 = vmax.xlane.f32.xlu0 %v6680
    %v6682 = vpop.xlane.xlu0 %6681
    %v6683 = vsel %vm945, %v6675, -inf
    %6684 = vmax.xlane.f32.xlu0 %v6683
    %v6685 = vpop.xlane.xlu0 %6684
    %v6686 = vsel %vm945, %v6676, -inf
    %6687 = vmax.xlane.f32.xlu0 %v6686
    %v6688 = vpop.xlane.xlu0 %6687
    %v6689 = vsub.f32 %v6673, %v6679
    %v6690 = vsub.f32 %v6674, %v6682
    %v6691 = vsub.f32 %v6675, %v6685
    %v6692 = vsub.f32 %v6676, %v6688
    %v6693 = vmul.f32 %v6689, 1.442695
    %v6694 = vpow.pop %v6693
    %v6695 = vmul.f32 %v6690, 1.442695
    %v6696 = vpow.pop %v6695
    %v6697 = vmul.f32 %v6691, 1.442695
    %v6698 = vpow.pop %v6697
    %v6699 = vmul.f32 %v6692, 1.442695
    %v6700 = vpow.pop %v6699
    %v6701 = vsel %vm945, %v6694, 0.0
    %6702 = vadd.xlane.f32.xlu0 %v6701
    %v6703 = vpop.xlane.xlu0 %6702
    %v6704 = vsel %vm945, %v6696, 0.0
    %6705 = vadd.xlane.f32.xlu0 %v6704
    %v6706 = vpop.xlane.xlu0 %6705
    %v6707 = vsel %vm945, %v6698, 0.0
    %6708 = vadd.xlane.f32.xlu0 %v6707
    %v6709 = vpop.xlane.xlu0 %6708
    %v6710 = vsel %vm945, %v6700, 0.0
    %6711 = vadd.xlane.f32.xlu0 %v6710
    %v6712 = vpop.xlane.xlu0 %6711
    %v6713 = vrcp.pop %v6703
    %v6714 = vrcp.pop %v6706
    %v6715 = vrcp.pop %v6709
    %v6716 = vrcp.pop %v6712
    %v6717 = vmul.f32 %v6694, %v6713
    %v6718 = vmul.f32 %v6696, %v6714
    %v6719 = vmul.f32 %v6698, %v6715
    %v6720 = vmul.f32 %v6700, %v6716
    %v6721 = vmul.f32 %v5173, %v607
    %v6722 = vmul.f32 %v5177, %v607
    %v6723 = vmul.f32 %v5183, %v607
    %v6724 = vmul.f32 %v5187, %v607
    %v6725 = vpack.c.bf16 %v6721, %v6721
    %v6726 = vpack.c.bf16 %v6722, %v6722
    %v6727 = vpack.c.bf16 %v6723, %v6723
    %v6728 = vpack.c.bf16 %v6724, %v6724
    %v6729 = vpack.c.bf16 %v6717, %v6717
    %v6730 = vpack.c.bf16 %v6718, %v6718
    %v6731 = vpack.c.bf16 %v6719, %v6719
    %v6732 = vpack.c.bf16 %v6720, %v6720
    %v6734 = vsel %vm945, %v6729, 0
    %v6737 = vsel %vm1245, %v6725, 0
    %6739 = vmatprep.subr.bf16.mxu0 0
    %6740 = vmatpush1.bf16.msra.mxu0 %v6737
    %6741 = vmatprep.subr.bf16.mxu0 0
    %6742 = vmatpush1.bf16.msra.mxu0 0
    %6743 = vmatprep.subr.bf16.mxu0 0
    %6744 = vmatpush1.bf16.msra.mxu0 0
    %6745 = vmatprep.subr.bf16.mxu0 0
    %6746 = vmatpush1.bf16.msra.mxu0 0
    %6747 = vmatprep.subr.bf16.mxu0 0
    %6748 = vmatpush1.bf16.msra.mxu0 0
    %6749 = vmatprep.subr.bf16.mxu0 0
    %6750 = vmatpush1.bf16.msra.mxu0 0
    %6751 = vmatprep.subr.bf16.mxu0 0
    %6752 = vmatpush1.bf16.msra.mxu0 0
    %6753 = vmatprep.subr.bf16.mxu0 0
    %6754 = vmatpush1.bf16.msra.mxu0 0
    %6755 = vmatprep.subr.bf16.mxu0 0
    %6756 = vmatpush1.bf16.msra.mxu0 0
    %6757 = vmatprep.subr.bf16.mxu0 0
    %6758 = vmatpush1.bf16.msra.mxu0 0
    %6759 = vmatprep.subr.bf16.mxu0 0
    %6760 = vmatpush1.bf16.msra.mxu0 0
    %6761 = vmatprep.subr.bf16.mxu0 0
    %6762 = vmatpush1.bf16.msra.mxu0 0
    %6763 = vmatprep.subr.bf16.mxu0 0
    %6764 = vmatpush1.bf16.msra.mxu0 0
    %6765 = vmatprep.subr.bf16.mxu0 0
    %6766 = vmatpush1.bf16.msra.mxu0 0
    %6767 = vmatprep.subr.bf16.mxu0 0
    %6768 = vmatpush1.bf16.msra.mxu0 0
    %6769 = vmatprep.subr.bf16.mxu0 0
    %6770 = vmatpush1.bf16.msra.mxu0 0
    %6771 = vmatprep.mubr.bf16.mxu0 0
    %6772 = vmatmul.mubr.bf16.gmra.mrb[0].mxu0 %v6734
    %v6773 = vpop.f32.mrb[0].mxu0
    %v6774 = vadd.f32 0.0, %v6773
    %v6775 = vpop.f32.mrb[0].mxu0
    %v6776 = vpop.f32.mrb[0].mxu0
    %v6777 = vpop.f32.mrb[0].mxu0
    %6778 = vdwg.mxu0
    %v6780 = vsel %vm945, %v6730, 0
    %v6783 = vsel %vm1245, %v6726, 0
    %6785 = vmatprep.subr.bf16.mxu0 0
    %6786 = vmatpush1.bf16.msra.mxu0 %v6783
    %6787 = vmatprep.subr.bf16.mxu0 0
    %6788 = vmatpush1.bf16.msra.mxu0 0
    %6789 = vmatprep.subr.bf16.mxu0 0
    %6790 = vmatpush1.bf16.msra.mxu0 0
    %6791 = vmatprep.subr.bf16.mxu0 0
    %6792 = vmatpush1.bf16.msra.mxu0 0
    %6793 = vmatprep.subr.bf16.mxu0 0
    %6794 = vmatpush1.bf16.msra.mxu0 0
    %6795 = vmatprep.subr.bf16.mxu0 0
    %6796 = vmatpush1.bf16.msra.mxu0 0
    %6797 = vmatprep.subr.bf16.mxu0 0
    %6798 = vmatpush1.bf16.msra.mxu0 0
    %6799 = vmatprep.subr.bf16.mxu0 0
    %6800 = vmatpush1.bf16.msra.mxu0 0
    %6801 = vmatprep.subr.bf16.mxu0 0
    %6802 = vmatpush1.bf16.msra.mxu0 0
    %6803 = vmatprep.subr.bf16.mxu0 0
    %6804 = vmatpush1.bf16.msra.mxu0 0
    %6805 = vmatprep.subr.bf16.mxu0 0
    %6806 = vmatpush1.bf16.msra.mxu0 0
    %6807 = vmatprep.subr.bf16.mxu0 0
    %6808 = vmatpush1.bf16.msra.mxu0 0
    %6809 = vmatprep.subr.bf16.mxu0 0
    %6810 = vmatpush1.bf16.msra.mxu0 0
    %6811 = vmatprep.subr.bf16.mxu0 0
    %6812 = vmatpush1.bf16.msra.mxu0 0
    %6813 = vmatprep.subr.bf16.mxu0 0
    %6814 = vmatpush1.bf16.msra.mxu0 0
    %6815 = vmatprep.subr.bf16.mxu0 0
    %6816 = vmatpush1.bf16.msra.mxu0 0
    %6817 = vmatprep.mubr.bf16.mxu0 0
    %6818 = vmatmul.mubr.bf16.gmra.mrb[0].mxu0 %v6780
    %v6819 = vpop.f32.mrb[0].mxu0
    %v6820 = vadd.f32 0.0, %v6819
    %v6821 = vpop.f32.mrb[0].mxu0
    %v6822 = vpop.f32.mrb[0].mxu0
    %v6823 = vpop.f32.mrb[0].mxu0
    %6824 = vdwg.mxu0
    %v6826 = vsel %vm945, %v6731, 0
    %v6829 = vsel %vm1245, %v6727, 0
    %6831 = vmatprep.subr.bf16.mxu0 0
    %6832 = vmatpush1.bf16.msra.mxu0 %v6829
    %6833 = vmatprep.subr.bf16.mxu0 0
    %6834 = vmatpush1.bf16.msra.mxu0 0
    %6835 = vmatprep.subr.bf16.mxu0 0
    %6836 = vmatpush1.bf16.msra.mxu0 0
    %6837 = vmatprep.subr.bf16.mxu0 0
    %6838 = vmatpush1.bf16.msra.mxu0 0
    %6839 = vmatprep.subr.bf16.mxu0 0
    %6840 = vmatpush1.bf16.msra.mxu0 0
    %6841 = vmatprep.subr.bf16.mxu0 0
    %6842 = vmatpush1.bf16.msra.mxu0 0
    %6843 = vmatprep.subr.bf16.mxu0 0
    %6844 = vmatpush1.bf16.msra.mxu0 0
    %6845 = vmatprep.subr.bf16.mxu0 0
    %6846 = vmatpush1.bf16.msra.mxu0 0
    %6847 = vmatprep.subr.bf16.mxu0 0
    %6848 = vmatpush1.bf16.msra.mxu0 0
    %6849 = vmatprep.subr.bf16.mxu0 0
    %6850 = vmatpush1.bf16.msra.mxu0 0
    %6851 = vmatprep.subr.bf16.mxu0 0
    %6852 = vmatpush1.bf16.msra.mxu0 0
    %6853 = vmatprep.subr.bf16.mxu0 0
    %6854 = vmatpush1.bf16.msra.mxu0 0
    %6855 = vmatprep.subr.bf16.mxu0 0
    %6856 = vmatpush1.bf16.msra.mxu0 0
    %6857 = vmatprep.subr.bf16.mxu0 0
    %6858 = vmatpush1.bf16.msra.mxu0 0
    %6859 = vmatprep.subr.bf16.mxu0 0
    %6860 = vmatpush1.bf16.msra.mxu0 0
    %6861 = vmatprep.subr.bf16.mxu0 0
    %6862 = vmatpush1.bf16.msra.mxu0 0
    %6863 = vmatprep.mubr.bf16.mxu0 0
    %6864 = vmatmul.mubr.bf16.gmra.mrb[0].mxu0 %v6826
    %v6865 = vpop.f32.mrb[0].mxu0
    %v6866 = vadd.f32 0.0, %v6865
    %v6867 = vpop.f32.mrb[0].mxu0
    %v6868 = vpop.f32.mrb[0].mxu0
    %v6869 = vpop.f32.mrb[0].mxu0
    %6870 = vdwg.mxu0
    %v6872 = vsel %vm945, %v6732, 0
    %v6875 = vsel %vm1245, %v6728, 0
    %6877 = vmatprep.subr.bf16.mxu0 0
    %6878 = vmatpush1.bf16.msra.mxu0 %v6875
    %6879 = vmatprep.subr.bf16.mxu0 0
    %6880 = vmatpush1.bf16.msra.mxu0 0
    %6881 = vmatprep.subr.bf16.mxu0 0
    %6882 = vmatpush1.bf16.msra.mxu0 0
    %6883 = vmatprep.subr.bf16.mxu0 0
    %6884 = vmatpush1.bf16.msra.mxu0 0
    %6885 = vmatprep.subr.bf16.mxu0 0
    %6886 = vmatpush1.bf16.msra.mxu0 0
    %6887 = vmatprep.subr.bf16.mxu0 0
    %6888 = vmatpush1.bf16.msra.mxu0 0
    %6889 = vmatprep.subr.bf16.mxu0 0
    %6890 = vmatpush1.bf16.msra.mxu0 0
    %6891 = vmatprep.subr.bf16.mxu0 0
    %6892 = vmatpush1.bf16.msra.mxu0 0
    %6893 = vmatprep.subr.bf16.mxu0 0
    %6894 = vmatpush1.bf16.msra.mxu0 0
    %6895 = vmatprep.subr.bf16.mxu0 0
    %6896 = vmatpush1.bf16.msra.mxu0 0
    %6897 = vmatprep.subr.bf16.mxu0 0
    %6898 = vmatpush1.bf16.msra.mxu0 0
    %6899 = vmatprep.subr.bf16.mxu0 0
    %6900 = vmatpush1.bf16.msra.mxu0 0
    %6901 = vmatprep.subr.bf16.mxu0 0
    %6902 = vmatpush1.bf16.msra.mxu0 0
    %6903 = vmatprep.subr.bf16.mxu0 0
    %6904 = vmatpush1.bf16.msra.mxu0 0
    %6905 = vmatprep.subr.bf16.mxu0 0
    %6906 = vmatpush1.bf16.msra.mxu0 0
    %6907 = vmatprep.subr.bf16.mxu0 0
    %6908 = vmatpush1.bf16.msra.mxu0 0
    %6909 = vmatprep.mubr.bf16.mxu0 0
    %6910 = vmatmul.mubr.bf16.gmra.mrb[0].mxu0 %v6872
    %v6911 = vpop.f32.mrb[0].mxu0
    %v6912 = vadd.f32 0.0, %v6911
    %v6913 = vpop.f32.mrb[0].mxu0
    %v6914 = vpop.f32.mrb[0].mxu0
    %v6915 = vpop.f32.mrb[0].mxu0
    %6916 = vdwg.mxu0
    %v6917 = vadd.f32 %v6489, %v6774
    %v6918 = vadd.f32 %v6490, %v6820
    %v6919 = vadd.f32 %v6491, %v6866
    %v6920 = vadd.f32 %v6492, %v6912
    %v6921 = vpack.c.bf16 %v6918, %v6917
    %v6922 = vpack.c.bf16 %v6920, %v6919
    %v6923 = vld [vmem:[#allocation34] sm:$0xf]
    %v6924 = vld [vmem:[#allocation34 + $0x4] sm:$0xf]
    %v6925 = vld [vmem:[#allocation34 + $0x8] sm:$0xf]
    %v6926 = vld [vmem:[#allocation34 + $0xc] sm:$0xf]
    %v6927 = vld [vmem:[#allocation34 + $0x10] sm:$0xf]
    %v6928 = vld [vmem:[#allocation34 + $0x14] sm:$0xf]
    %v6929 = vld [vmem:[#allocation34 + $0x18] sm:$0xf]
    %v6930 = vld [vmem:[#allocation34 + $0x1c] sm:$0xf]
    %v6931 = vld [vmem:[#allocation35] sm:$0x1]
    %v6933 = vlaneseq
    %v6934 = vshrl.u32 %v6933, 7
    %v6935 = vsub.s32 0, %v6934
    %v6936 = vrot.slane %v6931, %v6935
    %v6946 = vunpack.c.l.b16 %v6923
    %v6947 = vunpack.c.l.b16 %v6924
    %v6948 = vunpack.c.l.b16 %v6925
    %v6949 = vunpack.c.l.b16 %v6926
    %v6950 = vunpack.c.l.b16 %v6927
    %v6951 = vunpack.c.l.b16 %v6928
    %v6952 = vunpack.c.l.b16 %v6929
    %v6953 = vunpack.c.l.b16 %v6930
    %v6954 = vpack.c.b16 %v6947, %v6946
    %v6955 = vpack.c.b16 %v6949, %v6948
    %v6956 = vpack.c.b16 %v6951, %v6950
    %v6957 = vpack.c.b16 %v6953, %v6952
    %v6963 = vsel %vm671, %v6921, 0
    %v6966 = vsel %vm671, %v6922, 0
    %6968 = vmatprep.subr.bf16.mxu0 0
    %6969 = vmatpush1.bf16.msra.mxu0 %v6954
    %6970 = vmatprep.subr.bf16.mxu0 0
    %6971 = vmatpush1.bf16.msra.mxu0 %v6955
    %6972 = vmatprep.subr.bf16.mxu0 0
    %6973 = vmatpush1.bf16.msra.mxu0 %v6956
    %6974 = vmatprep.subr.bf16.mxu0 0
    %6975 = vmatpush1.bf16.msra.mxu0 %v6957
    %6976 = vmatprep.subr.bf16.mxu0 0
    %6977 = vmatpush1.bf16.msra.mxu0 0
    %6978 = vmatprep.subr.bf16.mxu0 0
    %6979 = vmatpush1.bf16.msra.mxu0 0
    %6980 = vmatprep.subr.bf16.mxu0 0
    %6981 = vmatpush1.bf16.msra.mxu0 0
    %6982 = vmatprep.subr.bf16.mxu0 0
    %6983 = vmatpush1.bf16.msra.mxu0 0
    %6984 = vmatprep.subr.bf16.mxu0 0
    %6985 = vmatpush1.bf16.msra.mxu0 0
    %6986 = vmatprep.subr.bf16.mxu0 0
    %6987 = vmatpush1.bf16.msra.mxu0 0
    %6988 = vmatprep.subr.bf16.mxu0 0
    %6989 = vmatpush1.bf16.msra.mxu0 0
    %6990 = vmatprep.subr.bf16.mxu0 0
    %6991 = vmatpush1.bf16.msra.mxu0 0
    %6992 = vmatprep.subr.bf16.mxu0 0
    %6993 = vmatpush1.bf16.msra.mxu0 0
    %6994 = vmatprep.subr.bf16.mxu0 0
    %6995 = vmatpush1.bf16.msra.mxu0 0
    %6996 = vmatprep.subr.bf16.mxu0 0
    %6997 = vmatpush1.bf16.msra.mxu0 0
    %6998 = vmatprep.subr.bf16.mxu0 0
    %6999 = vmatpush1.bf16.msra.mxu0 0
    %7000 = vmatprep.mubr.bf16.mxu0 0
    %7001 = vmatmul.mubr.bf16.gmra.mrb[0].mxu0 %v6963
    %v7002 = vpop.f32.mrb[0].mxu0
    %v7003 = vadd.f32 %v6936, %v7002
    %v7004 = vpop.f32.mrb[0].mxu0
    %v7005 = vpop.f32.mrb[0].mxu0
    %v7006 = vadd.f32 %v6936, %v7005
    %v7007 = vpop.f32.mrb[0].mxu0
    %7008 = vmatprep.mubr.bf16.mxu0 0
    %7009 = vmatmul.mubr.bf16.gmra.mrb[0].mxu0 %v6966
    %v7010 = vpop.f32.mrb[0].mxu0
    %v7011 = vadd.f32 %v6936, %v7010
    %v7012 = vpop.f32.mrb[0].mxu0
    %v7013 = vpop.f32.mrb[0].mxu0
    %v7014 = vadd.f32 %v6936, %v7013
    %v7015 = vpop.f32.mrb[0].mxu0
    %7016 = vdwg.mxu0
    %v7017 = vadd.f32 %v5064, %v7003
    %v7018 = vadd.f32 %v5065, %v7006
    %v7019 = vadd.f32 %v5066, %v7011
    %v7020 = vadd.f32 %v5067, %v7014
    %v7021 = vld [vmem:[#allocation46] sm:$0x1]
    %v7022 = vld [vmem:[#allocation47] sm:$0x1]
    %v7023 = vsel %vm671, %v7017, 0.0
    %7024 = vadd.xlane.f32.xlu0 %v7023
    %v7025 = vpop.xlane.xlu0 %7024
    %v7026 = vsel %vm671, %v7018, 0.0
    %7027 = vadd.xlane.f32.xlu0 %v7026
    %v7028 = vpop.xlane.xlu0 %7027
    %v7029 = vsel %vm671, %v7019, 0.0
    %7030 = vadd.xlane.f32.xlu0 %v7029
    %v7031 = vpop.xlane.xlu0 %7030
    %v7032 = vsel %vm671, %v7020, 0.0
    %7033 = vadd.xlane.f32.xlu0 %v7032
    %v7034 = vpop.xlane.xlu0 %7033
    %v7035 = vmul.f32 %v7025, %v2581
    %v7036 = vmul.f32 %v7028, %v2581
    %v7037 = vmul.f32 %v7031, %v2581
    %v7038 = vmul.f32 %v7034, %v2581
    %v7039 = vsub.f32 %v7017, %v7035
    %v7040 = vsub.f32 %v7018, %v7036
    %v7041 = vsub.f32 %v7019, %v7037
    %v7042 = vsub.f32 %v7020, %v7038
    %v7043 = vmul.f32 %v7039, %v7039
    %v7044 = vmul.f32 %v7040, %v7040
    %v7045 = vmul.f32 %v7041, %v7041
    %v7046 = vmul.f32 %v7042, %v7042
    %v7047 = vsel %vm671, %v7043, 0.0
    %7048 = vadd.xlane.f32.xlu0 %v7047
    %v7049 = vpop.xlane.xlu0 %7048
    %v7050 = vsel %vm671, %v7044, 0.0
    %7051 = vadd.xlane.f32.xlu0 %v7050
    %v7052 = vpop.xlane.xlu0 %7051
    %v7053 = vsel %vm671, %v7045, 0.0
    %7054 = vadd.xlane.f32.xlu0 %v7053
    %v7055 = vpop.xlane.xlu0 %7054
    %v7056 = vsel %vm671, %v7046, 0.0
    %7057 = vadd.xlane.f32.xlu0 %v7056
    %v7058 = vpop.xlane.xlu0 %7057
    %v7059 = vmul.f32 %v7049, %v2581
    %v7060 = vmul.f32 %v7052, %v2581
    %v7061 = vmul.f32 %v7055, %v2581
    %v7062 = vmul.f32 %v7058, %v2581
    %v7063 = vadd.f32 %v7059, 1e-05
    %v7064 = vadd.f32 %v7060, 1e-05
    %v7065 = vadd.f32 %v7061, 1e-05
    %v7066 = vadd.f32 %v7062, 1e-05
    %v7067 = vrsqrt.pop %v7063
    %v7068 = vrsqrt.pop %v7064
    %v7069 = vrsqrt.pop %v7065
    %v7070 = vrsqrt.pop %v7066
    %v7071 = vmul.f32 %v7039, %v7067
    %v7072 = vmul.f32 %v7040, %v7068
    %v7073 = vmul.f32 %v7041, %v7069
    %v7074 = vmul.f32 %v7042, %v7070
    %v7076 = vlaneseq
    %v7077 = vshrl.u32 %v7076, 7
    %v7078 = vsub.s32 0, %v7077
    %v7079 = vrot.slane %v7021, %v7078
    %v7081 = vmul.f32 %v7071, %v7079
    %v7082 = vmul.f32 %v7072, %v7079
    %v7083 = vmul.f32 %v7073, %v7079
    %v7084 = vmul.f32 %v7074, %v7079
    %v7086 = vlaneseq
    %v7087 = vshrl.u32 %v7086, 7
    %v7088 = vsub.s32 0, %v7087
    %v7089 = vrot.slane %v7022, %v7088
    %v7091 = vadd.f32 %v7081, %v7089
    %v7092 = vadd.f32 %v7082, %v7089
    %v7093 = vadd.f32 %v7083, %v7089
    %v7094 = vadd.f32 %v7084, %v7089
    %v7095 = vpack.c.bf16 %v7092, %v7091
    %v7096 = vpack.c.bf16 %v7094, %v7093
    %v7097 = vld [vmem:[#allocation37] sm:$0xf]
    %v7098 = vld [vmem:[#allocation37 + $0x4] sm:$0xf]
    %v7099 = vld [vmem:[#allocation37 + $0x8] sm:$0xf]
    %v7100 = vld [vmem:[#allocation37 + $0xc] sm:$0xf]
    %v7101 = vld [vmem:[#allocation37 + $0x10] sm:$0xf]
    %v7102 = vld [vmem:[#allocation37 + $0x14] sm:$0xf]
    %v7103 = vld [vmem:[#allocation37 + $0x18] sm:$0xf]
    %v7104 = vld [vmem:[#allocation37 + $0x1c] sm:$0xf]
    %v7105 = vld [vmem:[#allocation38] sm:$0x1]
    %v7107 = vlaneseq
    %v7108 = vshrl.u32 %v7107, 7
    %v7109 = vsub.s32 0, %v7108
    %v7110 = vrot.slane %v7105, %v7109
    %v7120 = vunpack.c.l.b16 %v7097
    %v7121 = vunpack.c.l.b16 %v7098
    %v7122 = vunpack.c.l.b16 %v7099
    %v7123 = vunpack.c.l.b16 %v7100
    %v7124 = vunpack.c.l.b16 %v7101
    %v7125 = vunpack.c.l.b16 %v7102
    %v7126 = vunpack.c.l.b16 %v7103
    %v7127 = vunpack.c.l.b16 %v7104
    %v7128 = vpack.c.b16 %v7121, %v7120
    %v7129 = vpack.c.b16 %v7123, %v7122
    %v7130 = vpack.c.b16 %v7125, %v7124
    %v7131 = vpack.c.b16 %v7127, %v7126
    %v7137 = vsel %vm671, %v7095, 0
    %v7140 = vsel %vm671, %v7096, 0
    %7142 = vmatprep.subr.bf16.mxu0 0
    %7143 = vmatpush1.bf16.msra.mxu0 %v7128
    %7144 = vmatprep.subr.bf16.mxu0 0
    %7145 = vmatpush1.bf16.msra.mxu0 %v7129
    %7146 = vmatprep.subr.bf16.mxu0 0
    %7147 = vmatpush1.bf16.msra.mxu0 %v7130
    %7148 = vmatprep.subr.bf16.mxu0 0
    %7149 = vmatpush1.bf16.msra.mxu0 %v7131
    %7150 = vmatprep.subr.bf16.mxu0 0
    %7151 = vmatpush1.bf16.msra.mxu0 0
    %7152 = vmatprep.subr.bf16.mxu0 0
    %7153 = vmatpush1.bf16.msra.mxu0 0
    %7154 = vmatprep.subr.bf16.mxu0 0
    %7155 = vmatpush1.bf16.msra.mxu0 0
    %7156 = vmatprep.subr.bf16.mxu0 0
    %7157 = vmatpush1.bf16.msra.mxu0 0
    %7158 = vmatprep.subr.bf16.mxu0 0
    %7159 = vmatpush1.bf16.msra.mxu0 0
    %7160 = vmatprep.subr.bf16.mxu0 0
    %7161 = vmatpush1.bf16.msra.mxu0 0
    %7162 = vmatprep.subr.bf16.mxu0 0
    %7163 = vmatpush1.bf16.msra.mxu0 0
    %7164 = vmatprep.subr.bf16.mxu0 0
    %7165 = vmatpush1.bf16.msra.mxu0 0
    %7166 = vmatprep.subr.bf16.mxu0 0
    %7167 = vmatpush1.bf16.msra.mxu0 0
    %7168 = vmatprep.subr.bf16.mxu0 0
    %7169 = vmatpush1.bf16.msra.mxu0 0
    %7170 = vmatprep.subr.bf16.mxu0 0
    %7171 = vmatpush1.bf16.msra.mxu0 0
    %7172 = vmatprep.subr.bf16.mxu0 0
    %7173 = vmatpush1.bf16.msra.mxu0 0
    %7174 = vmatprep.mubr.bf16.mxu0 0
    %7175 = vmatmul.mubr.bf16.gmra.mrb[0].mxu0 %v7137
    %v7176 = vpop.f32.mrb[0].mxu0
    %v7177 = vadd.f32 %v7110, %v7176
    %v7178 = vpop.f32.mrb[0].mxu0
    %v7179 = vpop.f32.mrb[0].mxu0
    %v7180 = vadd.f32 %v7110, %v7179
    %v7181 = vpop.f32.mrb[0].mxu0
    %7182 = vmatprep.mubr.bf16.mxu0 0
    %7183 = vmatmul.mubr.bf16.gmra.mrb[0].mxu0 %v7140
    %v7184 = vpop.f32.mrb[0].mxu0
    %v7185 = vadd.f32 %v7110, %v7184
    %v7186 = vpop.f32.mrb[0].mxu0
    %v7187 = vpop.f32.mrb[0].mxu0
    %v7188 = vadd.f32 %v7110, %v7187
    %v7189 = vpop.f32.mrb[0].mxu0
    %7190 = vdwg.mxu0
    %v7191 = vld [vmem:[#allocation40] sm:$0xf]
    %v7192 = vld [vmem:[#allocation40 + $0x4] sm:$0xf]
    %v7193 = vld [vmem:[#allocation40 + $0x8] sm:$0xf]
    %v7194 = vld [vmem:[#allocation40 + $0xc] sm:$0xf]
    %v7195 = vld [vmem:[#allocation40 + $0x10] sm:$0xf]
    %v7196 = vld [vmem:[#allocation40 + $0x14] sm:$0xf]
    %v7197 = vld [vmem:[#allocation40 + $0x18] sm:$0xf]
    %v7198 = vld [vmem:[#allocation40 + $0x1c] sm:$0xf]
    %v7199 = vld [vmem:[#allocation41] sm:$0x1]
    %v7201 = vlaneseq
    %v7202 = vshrl.u32 %v7201, 7
    %v7203 = vsub.s32 0, %v7202
    %v7204 = vrot.slane %v7199, %v7203
    %v7214 = vunpack.c.l.b16 %v7191
    %v7215 = vunpack.c.l.b16 %v7192
    %v7216 = vunpack.c.l.b16 %v7193
    %v7217 = vunpack.c.l.b16 %v7194
    %v7218 = vunpack.c.l.b16 %v7195
    %v7219 = vunpack.c.l.b16 %v7196
    %v7220 = vunpack.c.l.b16 %v7197
    %v7221 = vunpack.c.l.b16 %v7198
    %v7222 = vpack.c.b16 %v7215, %v7214
    %v7223 = vpack.c.b16 %v7217, %v7216
    %v7224 = vpack.c.b16 %v7219, %v7218
    %v7225 = vpack.c.b16 %v7221, %v7220
    %7230 = vmatprep.subr.bf16.mxu0 0
    %7231 = vmatpush1.bf16.msra.mxu0 %v7222
    %7232 = vmatprep.subr.bf16.mxu0 0
    %7233 = vmatpush1.bf16.msra.mxu0 %v7223
    %7234 = vmatprep.subr.bf16.mxu0 0
    %7235 = vmatpush1.bf16.msra.mxu0 %v7224
    %7236 = vmatprep.subr.bf16.mxu0 0
    %7237 = vmatpush1.bf16.msra.mxu0 %v7225
    %7238 = vmatprep.subr.bf16.mxu0 0
    %7239 = vmatpush1.bf16.msra.mxu0 0
    %7240 = vmatprep.subr.bf16.mxu0 0
    %7241 = vmatpush1.bf16.msra.mxu0 0
    %7242 = vmatprep.subr.bf16.mxu0 0
    %7243 = vmatpush1.bf16.msra.mxu0 0
    %7244 = vmatprep.subr.bf16.mxu0 0
    %7245 = vmatpush1.bf16.msra.mxu0 0
    %7246 = vmatprep.subr.bf16.mxu0 0
    %7247 = vmatpush1.bf16.msra.mxu0 0
    %7248 = vmatprep.subr.bf16.mxu0 0
    %7249 = vmatpush1.bf16.msra.mxu0 0
    %7250 = vmatprep.subr.bf16.mxu0 0
    %7251 = vmatpush1.bf16.msra.mxu0 0
    %7252 = vmatprep.subr.bf16.mxu0 0
    %7253 = vmatpush1.bf16.msra.mxu0 0
    %7254 = vmatprep.subr.bf16.mxu0 0
    %7255 = vmatpush1.bf16.msra.mxu0 0
    %7256 = vmatprep.subr.bf16.mxu0 0
    %7257 = vmatpush1.bf16.msra.mxu0 0
    %7258 = vmatprep.subr.bf16.mxu0 0
    %7259 = vmatpush1.bf16.msra.mxu0 0
    %7260 = vmatprep.subr.bf16.mxu0 0
    %7261 = vmatpush1.bf16.msra.mxu0 0
    %7262 = vmatprep.mubr.bf16.mxu0 0
    %7263 = vmatmul.mubr.bf16.gmra.mrb[0].mxu0 %v673
    %v7264 = vpop.f32.mrb[0].mxu0
    %v7265 = vadd.f32 %v7204, %v7264
    %v7266 = vpop.f32.mrb[0].mxu0
    %v7267 = vpop.f32.mrb[0].mxu0
    %v7268 = vadd.f32 %v7204, %v7267
    %v7269 = vpop.f32.mrb[0].mxu0
    %7270 = vmatprep.mubr.bf16.mxu0 0
    %7271 = vmatmul.mubr.bf16.gmra.mrb[0].mxu0 %v676
    %v7272 = vpop.f32.mrb[0].mxu0
    %v7273 = vadd.f32 %v7204, %v7272
    %v7274 = vpop.f32.mrb[0].mxu0
    %v7275 = vpop.f32.mrb[0].mxu0
    %v7276 = vadd.f32 %v7204, %v7275
    %v7277 = vpop.f32.mrb[0].mxu0
    %7278 = vdwg.mxu0
    %v7279 = vpack.c.bf16 %v7265, %v7265
    %v7280 = vpack.c.bf16 %v7268, %v7268
    %v7281 = vpack.c.bf16 %v7273, %v7273
    %v7282 = vpack.c.bf16 %v7276, %v7276
    %v7283 = vmul.f32 %v7177, %v592
    %v7284 = vmul.f32 %v7180, %v592
    %v7285 = vmul.f32 %v7185, %v592
    %v7286 = vmul.f32 %v7188, %v592
    %v7287 = vpack.c.bf16 %v7283, %v7283
    %v7288 = vpack.c.bf16 %v7284, %v7284
    %v7289 = vpack.c.bf16 %v7285, %v7285
    %v7290 = vpack.c.bf16 %v7286, %v7286
    %v7292 = vsel %vm671, %v7287, 0
    %v7295 = vsel %vm671, %v7279, 0
    %7297 = vmatprep.subr.bf16.mxu0 0
    %7298 = vmatpush1.bf16.xpose.msra.mxu0 %v7295
    %7299 = vmatprep.subr.bf16.mxu0 0
    %7300 = vmatpush1.bf16.xpose.msra.mxu0 0
    %7301 = vmatprep.subr.bf16.mxu0 0
    %7302 = vmatpush1.bf16.xpose.msra.mxu0 0
    %7303 = vmatprep.subr.bf16.mxu0 0
    %7304 = vmatpush1.bf16.xpose.msra.mxu0 0
    %7305 = vmatprep.subr.bf16.mxu0 0
    %7306 = vmatpush1.bf16.xpose.msra.mxu0 0
    %7307 = vmatprep.subr.bf16.mxu0 0
    %7308 = vmatpush1.bf16.xpose.msra.mxu0 0
    %7309 = vmatprep.subr.bf16.mxu0 0
    %7310 = vmatpush1.bf16.xpose.msra.mxu0 0
    %7311 = vmatprep.subr.bf16.mxu0 0
    %7312 = vmatpush1.bf16.xpose.msra.mxu0 0
    %7313 = vmatprep.subr.bf16.mxu0 0
    %7314 = vmatpush1.bf16.xpose.msra.mxu0 0
    %7315 = vmatprep.subr.bf16.mxu0 0
    %7316 = vmatpush1.bf16.xpose.msra.mxu0 0
    %7317 = vmatprep.subr.bf16.mxu0 0
    %7318 = vmatpush1.bf16.xpose.msra.mxu0 0
    %7319 = vmatprep.subr.bf16.mxu0 0
    %7320 = vmatpush1.bf16.xpose.msra.mxu0 0
    %7321 = vmatprep.subr.bf16.mxu0 0
    %7322 = vmatpush1.bf16.xpose.msra.mxu0 0
    %7323 = vmatprep.subr.bf16.mxu0 0
    %7324 = vmatpush1.bf16.xpose.msra.mxu0 0
    %7325 = vmatprep.subr.bf16.mxu0 0
    %7326 = vmatpush1.bf16.xpose.msra.mxu0 0
    %7327 = vmatprep.subr.bf16.mxu0 0
    %7328 = vmatpush1.bf16.xpose.msra.mxu0 0
    %7329 = vmatprep.mubr.bf16.mxu0 0
    %7330 = vmatmul.mubr.bf16.gmra.mrb[0].mxu0 %v7292
    %v7331 = vpop.f32.mrb[0].mxu0
    %v7332 = vadd.f32 0.0, %v7331
    %v7333 = vpop.f32.mrb[0].mxu0
    %v7334 = vpop.f32.mrb[0].mxu0
    %v7335 = vpop.f32.mrb[0].mxu0
    %7336 = vdwg.mxu0
    %v7338 = vsel %vm671, %v7288, 0
    %v7341 = vsel %vm671, %v7280, 0
    %7343 = vmatprep.subr.bf16.mxu0 0
    %7344 = vmatpush1.bf16.xpose.msra.mxu0 %v7341
    %7345 = vmatprep.subr.bf16.mxu0 0
    %7346 = vmatpush1.bf16.xpose.msra.mxu0 0
    %7347 = vmatprep.subr.bf16.mxu0 0
    %7348 = vmatpush1.bf16.xpose.msra.mxu0 0
    %7349 = vmatprep.subr.bf16.mxu0 0
    %7350 = vmatpush1.bf16.xpose.msra.mxu0 0
    %7351 = vmatprep.subr.bf16.mxu0 0
    %7352 = vmatpush1.bf16.xpose.msra.mxu0 0
    %7353 = vmatprep.subr.bf16.mxu0 0
    %7354 = vmatpush1.bf16.xpose.msra.mxu0 0
    %7355 = vmatprep.subr.bf16.mxu0 0
    %7356 = vmatpush1.bf16.xpose.msra.mxu0 0
    %7357 = vmatprep.subr.bf16.mxu0 0
    %7358 = vmatpush1.bf16.xpose.msra.mxu0 0
    %7359 = vmatprep.subr.bf16.mxu0 0
    %7360 = vmatpush1.bf16.xpose.msra.mxu0 0
    %7361 = vmatprep.subr.bf16.mxu0 0
    %7362 = vmatpush1.bf16.xpose.msra.mxu0 0
    %7363 = vmatprep.subr.bf16.mxu0 0
    %7364 = vmatpush1.bf16.xpose.msra.mxu0 0
    %7365 = vmatprep.subr.bf16.mxu0 0
    %7366 = vmatpush1.bf16.xpose.msra.mxu0 0
    %7367 = vmatprep.subr.bf16.mxu0 0
    %7368 = vmatpush1.bf16.xpose.msra.mxu0 0
    %7369 = vmatprep.subr.bf16.mxu0 0
    %7370 = vmatpush1.bf16.xpose.msra.mxu0 0
    %7371 = vmatprep.subr.bf16.mxu0 0
    %7372 = vmatpush1.bf16.xpose.msra.mxu0 0
    %7373 = vmatprep.subr.bf16.mxu0 0
    %7374 = vmatpush1.bf16.xpose.msra.mxu0 0
    %7375 = vmatprep.mubr.bf16.mxu0 0
    %7376 = vmatmul.mubr.bf16.gmra.mrb[0].mxu0 %v7338
    %v7377 = vpop.f32.mrb[0].mxu0
    %v7378 = vadd.f32 0.0, %v7377
    %v7379 = vpop.f32.mrb[0].mxu0
    %v7380 = vpop.f32.mrb[0].mxu0
    %v7381 = vpop.f32.mrb[0].mxu0
    %7382 = vdwg.mxu0
    %v7384 = vsel %vm671, %v7289, 0
    %v7387 = vsel %vm671, %v7281, 0
    %7389 = vmatprep.subr.bf16.mxu0 0
    %7390 = vmatpush1.bf16.xpose.msra.mxu0 %v7387
    %7391 = vmatprep.subr.bf16.mxu0 0
    %7392 = vmatpush1.bf16.xpose.msra.mxu0 0
    %7393 = vmatprep.subr.bf16.mxu0 0
    %7394 = vmatpush1.bf16.xpose.msra.mxu0 0
    %7395 = vmatprep.subr.bf16.mxu0 0
    %7396 = vmatpush1.bf16.xpose.msra.mxu0 0
    %7397 = vmatprep.subr.bf16.mxu0 0
    %7398 = vmatpush1.bf16.xpose.msra.mxu0 0
    %7399 = vmatprep.subr.bf16.mxu0 0
    %7400 = vmatpush1.bf16.xpose.msra.mxu0 0
    %7401 = vmatprep.subr.bf16.mxu0 0
    %7402 = vmatpush1.bf16.xpose.msra.mxu0 0
    %7403 = vmatprep.subr.bf16.mxu0 0
    %7404 = vmatpush1.bf16.xpose.msra.mxu0 0
    %7405 = vmatprep.subr.bf16.mxu0 0
    %7406 = vmatpush1.bf16.xpose.msra.mxu0 0
    %7407 = vmatprep.subr.bf16.mxu0 0
    %7408 = vmatpush1.bf16.xpose.msra.mxu0 0
    %7409 = vmatprep.subr.bf16.mxu0 0
    %7410 = vmatpush1.bf16.xpose.msra.mxu0 0
    %7411 = vmatprep.subr.bf16.mxu0 0
    %7412 = vmatpush1.bf16.xpose.msra.mxu0 0
    %7413 = vmatprep.subr.bf16.mxu0 0
    %7414 = vmatpush1.bf16.xpose.msra.mxu0 0
    %7415 = vmatprep.subr.bf16.mxu0 0
    %7416 = vmatpush1.bf16.xpose.msra.mxu0 0
    %7417 = vmatprep.subr.bf16.mxu0 0
    %7418 = vmatpush1.bf16.xpose.msra.mxu0 0
    %7419 = vmatprep.subr.bf16.mxu0 0
    %7420 = vmatpush1.bf16.xpose.msra.mxu0 0
    %7421 = vmatprep.mubr.bf16.mxu0 0
    %7422 = vmatmul.mubr.bf16.gmra.mrb[0].mxu0 %v7384
    %v7423 = vpop.f32.mrb[0].mxu0
    %v7424 = vadd.f32 0.0, %v7423
    %v7425 = vpop.f32.mrb[0].mxu0
    %v7426 = vpop.f32.mrb[0].mxu0
    %v7427 = vpop.f32.mrb[0].mxu0
    %7428 = vdwg.mxu0
    %v7430 = vsel %vm671, %v7290, 0
    %v7433 = vsel %vm671, %v7282, 0
    %7435 = vmatprep.subr.bf16.mxu0 0
    %7436 = vmatpush1.bf16.xpose.msra.mxu0 %v7433
    %7437 = vmatprep.subr.bf16.mxu0 0
    %7438 = vmatpush1.bf16.xpose.msra.mxu0 0
    %7439 = vmatprep.subr.bf16.mxu0 0
    %7440 = vmatpush1.bf16.xpose.msra.mxu0 0
    %7441 = vmatprep.subr.bf16.mxu0 0
    %7442 = vmatpush1.bf16.xpose.msra.mxu0 0
    %7443 = vmatprep.subr.bf16.mxu0 0
    %7444 = vmatpush1.bf16.xpose.msra.mxu0 0
    %7445 = vmatprep.subr.bf16.mxu0 0
    %7446 = vmatpush1.bf16.xpose.msra.mxu0 0
    %7447 = vmatprep.subr.bf16.mxu0 0
    %7448 = vmatpush1.bf16.xpose.msra.mxu0 0
    %7449 = vmatprep.subr.bf16.mxu0 0
    %7450 = vmatpush1.bf16.xpose.msra.mxu0 0
    %7451 = vmatprep.subr.bf16.mxu0 0
    %7452 = vmatpush1.bf16.xpose.msra.mxu0 0
    %7453 = vmatprep.subr.bf16.mxu0 0
    %7454 = vmatpush1.bf16.xpose.msra.mxu0 0
    %7455 = vmatprep.subr.bf16.mxu0 0
    %7456 = vmatpush1.bf16.xpose.msra.mxu0 0
    %7457 = vmatprep.subr.bf16.mxu0 0
    %7458 = vmatpush1.bf16.xpose.msra.mxu0 0
    %7459 = vmatprep.subr.bf16.mxu0 0
    %7460 = vmatpush1.bf16.xpose.msra.mxu0 0
    %7461 = vmatprep.subr.bf16.mxu0 0
    %7462 = vmatpush1.bf16.xpose.msra.mxu0 0
    %7463 = vmatprep.subr.bf16.mxu0 0
    %7464 = vmatpush1.bf16.xpose.msra.mxu0 0
    %7465 = vmatprep.subr.bf16.mxu0 0
    %7466 = vmatpush1.bf16.xpose.msra.mxu0 0
    %7467 = vmatprep.mubr.bf16.mxu0 0
    %7468 = vmatmul.mubr.bf16.gmra.mrb[0].mxu0 %v7430
    %v7469 = vpop.f32.mrb[0].mxu0
    %v7470 = vadd.f32 0.0, %v7469
    %v7471 = vpop.f32.mrb[0].mxu0
    %v7472 = vpop.f32.mrb[0].mxu0
    %v7473 = vpop.f32.mrb[0].mxu0
    %7474 = vdwg.mxu0
    %v7475 = vsel %vm945, %v7332, -inf
    %7476 = vmax.xlane.f32.xlu0 %v7475
    %v7477 = vpop.xlane.xlu0 %7476
    %v7478 = vsel %vm945, %v7378, -inf
    %7479 = vmax.xlane.f32.xlu0 %v7478
    %v7480 = vpop.xlane.xlu0 %7479
    %v7481 = vsel %vm945, %v7424, -inf
    %7482 = vmax.xlane.f32.xlu0 %v7481
    %v7483 = vpop.xlane.xlu0 %7482
    %v7484 = vsel %vm945, %v7470, -inf
    %7485 = vmax.xlane.f32.xlu0 %v7484
    %v7486 = vpop.xlane.xlu0 %7485
    %v7487 = vsub.f32 %v7332, %v7477
    %v7488 = vsub.f32 %v7378, %v7480
    %v7489 = vsub.f32 %v7424, %v7483
    %v7490 = vsub.f32 %v7470, %v7486
    %v7491 = vmul.f32 %v7487, 1.442695
    %v7492 = vpow.pop %v7491
    %v7493 = vmul.f32 %v7488, 1.442695
    %v7494 = vpow.pop %v7493
    %v7495 = vmul.f32 %v7489, 1.442695
    %v7496 = vpow.pop %v7495
    %v7497 = vmul.f32 %v7490, 1.442695
    %v7498 = vpow.pop %v7497
    %v7499 = vsel %vm945, %v7492, 0.0
    %7500 = vadd.xlane.f32.xlu0 %v7499
    %v7501 = vpop.xlane.xlu0 %7500
    %v7502 = vsel %vm945, %v7494, 0.0
    %7503 = vadd.xlane.f32.xlu0 %v7502
    %v7504 = vpop.xlane.xlu0 %7503
    %v7505 = vsel %vm945, %v7496, 0.0
    %7506 = vadd.xlane.f32.xlu0 %v7505
    %v7507 = vpop.xlane.xlu0 %7506
    %v7508 = vsel %vm945, %v7498, 0.0
    %7509 = vadd.xlane.f32.xlu0 %v7508
    %v7510 = vpop.xlane.xlu0 %7509
    %v7511 = vrcp.pop %v7501
    %v7512 = vrcp.pop %v7504
    %v7513 = vrcp.pop %v7507
    %v7514 = vrcp.pop %v7510
    %v7515 = vmul.f32 %v7492, %v7511
    %v7516 = vmul.f32 %v7494, %v7512
    %v7517 = vmul.f32 %v7496, %v7513
    %v7518 = vmul.f32 %v7498, %v7514
    %v7519 = vmul.f32 %v7265, %v3068
    %v7520 = vmul.f32 %v7268, %v3068
    %v7521 = vmul.f32 %v7273, %v3068
    %v7522 = vmul.f32 %v7276, %v3068
    %v7523 = vpack.c.bf16 %v7519, %v7519
    %v7524 = vpack.c.bf16 %v7520, %v7520
    %v7525 = vpack.c.bf16 %v7521, %v7521
    %v7526 = vpack.c.bf16 %v7522, %v7522
    %v7527 = vpack.c.bf16 %v7515, %v7515
    %v7528 = vpack.c.bf16 %v7516, %v7516
    %v7529 = vpack.c.bf16 %v7517, %v7517
    %v7530 = vpack.c.bf16 %v7518, %v7518
    %v7531 = vmul.f32 %v7177, %v597
    %v7532 = vmul.f32 %v7180, %v597
    %v7533 = vmul.f32 %v7185, %v597
    %v7534 = vmul.f32 %v7188, %v597
    %v7535 = vpack.c.bf16 %v7531, %v7531
    %v7536 = vpack.c.bf16 %v7532, %v7532
    %v7537 = vpack.c.bf16 %v7533, %v7533
    %v7538 = vpack.c.bf16 %v7534, %v7534
    %v7540 = vsel %vm671, %v7535, 0
    %7542 = vmatprep.subr.bf16.mxu0 0
    %7543 = vmatpush1.bf16.xpose.msra.mxu0 %v7295
    %7544 = vmatprep.subr.bf16.mxu0 0
    %7545 = vmatpush1.bf16.xpose.msra.mxu0 0
    %7546 = vmatprep.subr.bf16.mxu0 0
    %7547 = vmatpush1.bf16.xpose.msra.mxu0 0
    %7548 = vmatprep.subr.bf16.mxu0 0
    %7549 = vmatpush1.bf16.xpose.msra.mxu0 0
    %7550 = vmatprep.subr.bf16.mxu0 0
    %7551 = vmatpush1.bf16.xpose.msra.mxu0 0
    %7552 = vmatprep.subr.bf16.mxu0 0
    %7553 = vmatpush1.bf16.xpose.msra.mxu0 0
    %7554 = vmatprep.subr.bf16.mxu0 0
    %7555 = vmatpush1.bf16.xpose.msra.mxu0 0
    %7556 = vmatprep.subr.bf16.mxu0 0
    %7557 = vmatpush1.bf16.xpose.msra.mxu0 0
    %7558 = vmatprep.subr.bf16.mxu0 0
    %7559 = vmatpush1.bf16.xpose.msra.mxu0 0
    %7560 = vmatprep.subr.bf16.mxu0 0
    %7561 = vmatpush1.bf16.xpose.msra.mxu0 0
    %7562 = vmatprep.subr.bf16.mxu0 0
    %7563 = vmatpush1.bf16.xpose.msra.mxu0 0
    %7564 = vmatprep.subr.bf16.mxu0 0
    %7565 = vmatpush1.bf16.xpose.msra.mxu0 0
    %7566 = vmatprep.subr.bf16.mxu0 0
    %7567 = vmatpush1.bf16.xpose.msra.mxu0 0
    %7568 = vmatprep.subr.bf16.mxu0 0
    %7569 = vmatpush1.bf16.xpose.msra.mxu0 0
    %7570 = vmatprep.subr.bf16.mxu0 0
    %7571 = vmatpush1.bf16.xpose.msra.mxu0 0
    %7572 = vmatprep.subr.bf16.mxu0 0
    %7573 = vmatpush1.bf16.xpose.msra.mxu0 0
    %7574 = vmatprep.mubr.bf16.mxu0 0
    %7575 = vmatmul.mubr.bf16.gmra.mrb[0].mxu0 %v7540
    %v7576 = vpop.f32.mrb[0].mxu0
    %v7577 = vadd.f32 0.0, %v7576
    %v7578 = vpop.f32.mrb[0].mxu0
    %v7579 = vpop.f32.mrb[0].mxu0
    %v7580 = vpop.f32.mrb[0].mxu0
    %7581 = vdwg.mxu0
    %v7583 = vsel %vm671, %v7536, 0
    %7585 = vmatprep.subr.bf16.mxu0 0
    %7586 = vmatpush1.bf16.xpose.msra.mxu0 %v7341
    %7587 = vmatprep.subr.bf16.mxu0 0
    %7588 = vmatpush1.bf16.xpose.msra.mxu0 0
    %7589 = vmatprep.subr.bf16.mxu0 0
    %7590 = vmatpush1.bf16.xpose.msra.mxu0 0
    %7591 = vmatprep.subr.bf16.mxu0 0
    %7592 = vmatpush1.bf16.xpose.msra.mxu0 0
    %7593 = vmatprep.subr.bf16.mxu0 0
    %7594 = vmatpush1.bf16.xpose.msra.mxu0 0
    %7595 = vmatprep.subr.bf16.mxu0 0
    %7596 = vmatpush1.bf16.xpose.msra.mxu0 0
    %7597 = vmatprep.subr.bf16.mxu0 0
    %7598 = vmatpush1.bf16.xpose.msra.mxu0 0
    %7599 = vmatprep.subr.bf16.mxu0 0
    %7600 = vmatpush1.bf16.xpose.msra.mxu0 0
    %7601 = vmatprep.subr.bf16.mxu0 0
    %7602 = vmatpush1.bf16.xpose.msra.mxu0 0
    %7603 = vmatprep.subr.bf16.mxu0 0
    %7604 = vmatpush1.bf16.xpose.msra.mxu0 0
    %7605 = vmatprep.subr.bf16.mxu0 0
    %7606 = vmatpush1.bf16.xpose.msra.mxu0 0
    %7607 = vmatprep.subr.bf16.mxu0 0
    %7608 = vmatpush1.bf16.xpose.msra.mxu0 0
    %7609 = vmatprep.subr.bf16.mxu0 0
    %7610 = vmatpush1.bf16.xpose.msra.mxu0 0
    %7611 = vmatprep.subr.bf16.mxu0 0
    %7612 = vmatpush1.bf16.xpose.msra.mxu0 0
    %7613 = vmatprep.subr.bf16.mxu0 0
    %7614 = vmatpush1.bf16.xpose.msra.mxu0 0
    %7615 = vmatprep.subr.bf16.mxu0 0
    %7616 = vmatpush1.bf16.xpose.msra.mxu0 0
    %7617 = vmatprep.mubr.bf16.mxu0 0
    %7618 = vmatmul.mubr.bf16.gmra.mrb[0].mxu0 %v7583
    %v7619 = vpop.f32.mrb[0].mxu0
    %v7620 = vadd.f32 0.0, %v7619
    %v7621 = vpop.f32.mrb[0].mxu0
    %v7622 = vpop.f32.mrb[0].mxu0
    %v7623 = vpop.f32.mrb[0].mxu0
    %7624 = vdwg.mxu0
    %v7626 = vsel %vm671, %v7537, 0
    %7628 = vmatprep.subr.bf16.mxu0 0
    %7629 = vmatpush1.bf16.xpose.msra.mxu0 %v7387
    %7630 = vmatprep.subr.bf16.mxu0 0
    %7631 = vmatpush1.bf16.xpose.msra.mxu0 0
    %7632 = vmatprep.subr.bf16.mxu0 0
    %7633 = vmatpush1.bf16.xpose.msra.mxu0 0
    %7634 = vmatprep.subr.bf16.mxu0 0
    %7635 = vmatpush1.bf16.xpose.msra.mxu0 0
    %7636 = vmatprep.subr.bf16.mxu0 0
    %7637 = vmatpush1.bf16.xpose.msra.mxu0 0
    %7638 = vmatprep.subr.bf16.mxu0 0
    %7639 = vmatpush1.bf16.xpose.msra.mxu0 0
    %7640 = vmatprep.subr.bf16.mxu0 0
    %7641 = vmatpush1.bf16.xpose.msra.mxu0 0
    %7642 = vmatprep.subr.bf16.mxu0 0
    %7643 = vmatpush1.bf16.xpose.msra.mxu0 0
    %7644 = vmatprep.subr.bf16.mxu0 0
    %7645 = vmatpush1.bf16.xpose.msra.mxu0 0
    %7646 = vmatprep.subr.bf16.mxu0 0
    %7647 = vmatpush1.bf16.xpose.msra.mxu0 0
    %7648 = vmatprep.subr.bf16.mxu0 0
    %7649 = vmatpush1.bf16.xpose.msra.mxu0 0
    %7650 = vmatprep.subr.bf16.mxu0 0
    %7651 = vmatpush1.bf16.xpose.msra.mxu0 0
    %7652 = vmatprep.subr.bf16.mxu0 0
    %7653 = vmatpush1.bf16.xpose.msra.mxu0 0
    %7654 = vmatprep.subr.bf16.mxu0 0
    %7655 = vmatpush1.bf16.xpose.msra.mxu0 0
    %7656 = vmatprep.subr.bf16.mxu0 0
    %7657 = vmatpush1.bf16.xpose.msra.mxu0 0
    %7658 = vmatprep.subr.bf16.mxu0 0
    %7659 = vmatpush1.bf16.xpose.msra.mxu0 0
    %7660 = vmatprep.mubr.bf16.mxu0 0
    %7661 = vmatmul.mubr.bf16.gmra.mrb[0].mxu0 %v7626
    %v7662 = vpop.f32.mrb[0].mxu0
    %v7663 = vadd.f32 0.0, %v7662
    %v7664 = vpop.f32.mrb[0].mxu0
    %v7665 = vpop.f32.mrb[0].mxu0
    %v7666 = vpop.f32.mrb[0].mxu0
    %7667 = vdwg.mxu0
    %v7669 = vsel %vm671, %v7538, 0
    %7671 = vmatprep.subr.bf16.mxu0 0
    %7672 = vmatpush1.bf16.xpose.msra.mxu0 %v7433
    %7673 = vmatprep.subr.bf16.mxu0 0
    %7674 = vmatpush1.bf16.xpose.msra.mxu0 0
    %7675 = vmatprep.subr.bf16.mxu0 0
    %7676 = vmatpush1.bf16.xpose.msra.mxu0 0
    %7677 = vmatprep.subr.bf16.mxu0 0
    %7678 = vmatpush1.bf16.xpose.msra.mxu0 0
    %7679 = vmatprep.subr.bf16.mxu0 0
    %7680 = vmatpush1.bf16.xpose.msra.mxu0 0
    %7681 = vmatprep.subr.bf16.mxu0 0
    %7682 = vmatpush1.bf16.xpose.msra.mxu0 0
    %7683 = vmatprep.subr.bf16.mxu0 0
    %7684 = vmatpush1.bf16.xpose.msra.mxu0 0
    %7685 = vmatprep.subr.bf16.mxu0 0
    %7686 = vmatpush1.bf16.xpose.msra.mxu0 0
    %7687 = vmatprep.subr.bf16.mxu0 0
    %7688 = vmatpush1.bf16.xpose.msra.mxu0 0
    %7689 = vmatprep.subr.bf16.mxu0 0
    %7690 = vmatpush1.bf16.xpose.msra.mxu0 0
    %7691 = vmatprep.subr.bf16.mxu0 0
    %7692 = vmatpush1.bf16.xpose.msra.mxu0 0
    %7693 = vmatprep.subr.bf16.mxu0 0
    %7694 = vmatpush1.bf16.xpose.msra.mxu0 0
    %7695 = vmatprep.subr.bf16.mxu0 0
    %7696 = vmatpush1.bf16.xpose.msra.mxu0 0
    %7697 = vmatprep.subr.bf16.mxu0 0
    %7698 = vmatpush1.bf16.xpose.msra.mxu0 0
    %7699 = vmatprep.subr.bf16.mxu0 0
    %7700 = vmatpush1.bf16.xpose.msra.mxu0 0
    %7701 = vmatprep.subr.bf16.mxu0 0
    %7702 = vmatpush1.bf16.xpose.msra.mxu0 0
    %7703 = vmatprep.mubr.bf16.mxu0 0
    %7704 = vmatmul.mubr.bf16.gmra.mrb[0].mxu0 %v7669
    %v7705 = vpop.f32.mrb[0].mxu0
    %v7706 = vadd.f32 0.0, %v7705
    %v7707 = vpop.f32.mrb[0].mxu0
    %v7708 = vpop.f32.mrb[0].mxu0
    %v7709 = vpop.f32.mrb[0].mxu0
    %7710 = vdwg.mxu0
    %v7711 = vsel %vm945, %v7577, -inf
    %7712 = vmax.xlane.f32.xlu0 %v7711
    %v7713 = vpop.xlane.xlu0 %7712
    %v7714 = vsel %vm945, %v7620, -inf
    %7715 = vmax.xlane.f32.xlu0 %v7714
    %v7716 = vpop.xlane.xlu0 %7715
    %v7717 = vsel %vm945, %v7663, -inf
    %7718 = vmax.xlane.f32.xlu0 %v7717
    %v7719 = vpop.xlane.xlu0 %7718
    %v7720 = vsel %vm945, %v7706, -inf
    %7721 = vmax.xlane.f32.xlu0 %v7720
    %v7722 = vpop.xlane.xlu0 %7721
    %v7723 = vsub.f32 %v7577, %v7713
    %v7724 = vsub.f32 %v7620, %v7716
    %v7725 = vsub.f32 %v7663, %v7719
    %v7726 = vsub.f32 %v7706, %v7722
    %v7727 = vmul.f32 %v7723, 1.442695
    %v7728 = vpow.pop %v7727
    %v7729 = vmul.f32 %v7724, 1.442695
    %v7730 = vpow.pop %v7729
    %v7731 = vmul.f32 %v7725, 1.442695
    %v7732 = vpow.pop %v7731
    %v7733 = vmul.f32 %v7726, 1.442695
    %v7734 = vpow.pop %v7733
    %v7735 = vsel %vm945, %v7728, 0.0
    %7736 = vadd.xlane.f32.xlu0 %v7735
    %v7737 = vpop.xlane.xlu0 %7736
    %v7738 = vsel %vm945, %v7730, 0.0
    %7739 = vadd.xlane.f32.xlu0 %v7738
    %v7740 = vpop.xlane.xlu0 %7739
    %v7741 = vsel %vm945, %v7732, 0.0
    %7742 = vadd.xlane.f32.xlu0 %v7741
    %v7743 = vpop.xlane.xlu0 %7742
    %v7744 = vsel %vm945, %v7734, 0.0
    %7745 = vadd.xlane.f32.xlu0 %v7744
    %v7746 = vpop.xlane.xlu0 %7745
    %v7747 = vrcp.pop %v7737
    %v7748 = vrcp.pop %v7740
    %v7749 = vrcp.pop %v7743
    %v7750 = vrcp.pop %v7746
    %v7751 = vmul.f32 %v7728, %v7747
    %v7752 = vmul.f32 %v7730, %v7748
    %v7753 = vmul.f32 %v7732, %v7749
    %v7754 = vmul.f32 %v7734, %v7750
    %v7755 = vmul.f32 %v7265, %v3308
    %v7756 = vmul.f32 %v7268, %v3308
    %v7757 = vmul.f32 %v7273, %v3308
    %v7758 = vmul.f32 %v7276, %v3308
    %v7759 = vpack.c.bf16 %v7755, %v7755
    %v7760 = vpack.c.bf16 %v7756, %v7756
    %v7761 = vpack.c.bf16 %v7757, %v7757
    %v7762 = vpack.c.bf16 %v7758, %v7758
    %v7763 = vpack.c.bf16 %v7751, %v7751
    %v7764 = vpack.c.bf16 %v7752, %v7752
    %v7765 = vpack.c.bf16 %v7753, %v7753
    %v7766 = vpack.c.bf16 %v7754, %v7754
    %7768 = vrot.lane.b32.xlu0 %v7759, 64
    %v7769 = vpop.permute.xlu0 %7768
    %v7771 = vsel %vm945, %v7763, 0
    %v7774 = vsel %vm1245, %v7769, 0
    %7776 = vmatprep.subr.bf16.mxu0 0
    %7777 = vmatpush1.bf16.msra.mxu0 %v7774
    %7778 = vmatprep.subr.bf16.mxu0 0
    %7779 = vmatpush1.bf16.msra.mxu0 0
    %7780 = vmatprep.subr.bf16.mxu0 0
    %7781 = vmatpush1.bf16.msra.mxu0 0
    %7782 = vmatprep.subr.bf16.mxu0 0
    %7783 = vmatpush1.bf16.msra.mxu0 0
    %7784 = vmatprep.subr.bf16.mxu0 0
    %7785 = vmatpush1.bf16.msra.mxu0 0
    %7786 = vmatprep.subr.bf16.mxu0 0
    %7787 = vmatpush1.bf16.msra.mxu0 0
    %7788 = vmatprep.subr.bf16.mxu0 0
    %7789 = vmatpush1.bf16.msra.mxu0 0
    %7790 = vmatprep.subr.bf16.mxu0 0
    %7791 = vmatpush1.bf16.msra.mxu0 0
    %7792 = vmatprep.subr.bf16.mxu0 0
    %7793 = vmatpush1.bf16.msra.mxu0 0
    %7794 = vmatprep.subr.bf16.mxu0 0
    %7795 = vmatpush1.bf16.msra.mxu0 0
    %7796 = vmatprep.subr.bf16.mxu0 0
    %7797 = vmatpush1.bf16.msra.mxu0 0
    %7798 = vmatprep.subr.bf16.mxu0 0
    %7799 = vmatpush1.bf16.msra.mxu0 0
    %7800 = vmatprep.subr.bf16.mxu0 0
    %7801 = vmatpush1.bf16.msra.mxu0 0
    %7802 = vmatprep.subr.bf16.mxu0 0
    %7803 = vmatpush1.bf16.msra.mxu0 0
    %7804 = vmatprep.subr.bf16.mxu0 0
    %7805 = vmatpush1.bf16.msra.mxu0 0
    %7806 = vmatprep.subr.bf16.mxu0 0
    %7807 = vmatpush1.bf16.msra.mxu0 0
    %7808 = vmatprep.mubr.bf16.mxu0 0
    %7809 = vmatmul.mubr.bf16.gmra.mrb[0].mxu0 %v7771
    %v7810 = vpop.f32.mrb[0].mxu0
    %v7811 = vadd.f32 0.0, %v7810
    %v7812 = vpop.f32.mrb[0].mxu0
    %v7813 = vpop.f32.mrb[0].mxu0
    %v7814 = vpop.f32.mrb[0].mxu0
    %7815 = vdwg.mxu0
    %7817 = vrot.lane.b32.xlu0 %v7760, 64
    %v7818 = vpop.permute.xlu0 %7817
    %v7820 = vsel %vm945, %v7764, 0
    %v7823 = vsel %vm1245, %v7818, 0
    %7825 = vmatprep.subr.bf16.mxu0 0
    %7826 = vmatpush1.bf16.msra.mxu0 %v7823
    %7827 = vmatprep.subr.bf16.mxu0 0
    %7828 = vmatpush1.bf16.msra.mxu0 0
    %7829 = vmatprep.subr.bf16.mxu0 0
    %7830 = vmatpush1.bf16.msra.mxu0 0
    %7831 = vmatprep.subr.bf16.mxu0 0
    %7832 = vmatpush1.bf16.msra.mxu0 0
    %7833 = vmatprep.subr.bf16.mxu0 0
    %7834 = vmatpush1.bf16.msra.mxu0 0
    %7835 = vmatprep.subr.bf16.mxu0 0
    %7836 = vmatpush1.bf16.msra.mxu0 0
    %7837 = vmatprep.subr.bf16.mxu0 0
    %7838 = vmatpush1.bf16.msra.mxu0 0
    %7839 = vmatprep.subr.bf16.mxu0 0
    %7840 = vmatpush1.bf16.msra.mxu0 0
    %7841 = vmatprep.subr.bf16.mxu0 0
    %7842 = vmatpush1.bf16.msra.mxu0 0
    %7843 = vmatprep.subr.bf16.mxu0 0
    %7844 = vmatpush1.bf16.msra.mxu0 0
    %7845 = vmatprep.subr.bf16.mxu0 0
    %7846 = vmatpush1.bf16.msra.mxu0 0
    %7847 = vmatprep.subr.bf16.mxu0 0
    %7848 = vmatpush1.bf16.msra.mxu0 0
    %7849 = vmatprep.subr.bf16.mxu0 0
    %7850 = vmatpush1.bf16.msra.mxu0 0
    %7851 = vmatprep.subr.bf16.mxu0 0
    %7852 = vmatpush1.bf16.msra.mxu0 0
    %7853 = vmatprep.subr.bf16.mxu0 0
    %7854 = vmatpush1.bf16.msra.mxu0 0
    %7855 = vmatprep.subr.bf16.mxu0 0
    %7856 = vmatpush1.bf16.msra.mxu0 0
    %7857 = vmatprep.mubr.bf16.mxu0 0
    %7858 = vmatmul.mubr.bf16.gmra.mrb[0].mxu0 %v7820
    %v7859 = vpop.f32.mrb[0].mxu0
    %v7860 = vadd.f32 0.0, %v7859
    %v7861 = vpop.f32.mrb[0].mxu0
    %v7862 = vpop.f32.mrb[0].mxu0
    %v7863 = vpop.f32.mrb[0].mxu0
    %7864 = vdwg.mxu0
    %7866 = vrot.lane.b32.xlu0 %v7761, 64
    %v7867 = vpop.permute.xlu0 %7866
    %v7869 = vsel %vm945, %v7765, 0
    %v7872 = vsel %vm1245, %v7867, 0
    %7874 = vmatprep.subr.bf16.mxu0 0
    %7875 = vmatpush1.bf16.msra.mxu0 %v7872
    %7876 = vmatprep.subr.bf16.mxu0 0
    %7877 = vmatpush1.bf16.msra.mxu0 0
    %7878 = vmatprep.subr.bf16.mxu0 0
    %7879 = vmatpush1.bf16.msra.mxu0 0
    %7880 = vmatprep.subr.bf16.mxu0 0
    %7881 = vmatpush1.bf16.msra.mxu0 0
    %7882 = vmatprep.subr.bf16.mxu0 0
    %7883 = vmatpush1.bf16.msra.mxu0 0
    %7884 = vmatprep.subr.bf16.mxu0 0
    %7885 = vmatpush1.bf16.msra.mxu0 0
    %7886 = vmatprep.subr.bf16.mxu0 0
    %7887 = vmatpush1.bf16.msra.mxu0 0
    %7888 = vmatprep.subr.bf16.mxu0 0
    %7889 = vmatpush1.bf16.msra.mxu0 0
    %7890 = vmatprep.subr.bf16.mxu0 0
    %7891 = vmatpush1.bf16.msra.mxu0 0
    %7892 = vmatprep.subr.bf16.mxu0 0
    %7893 = vmatpush1.bf16.msra.mxu0 0
    %7894 = vmatprep.subr.bf16.mxu0 0
    %7895 = vmatpush1.bf16.msra.mxu0 0
    %7896 = vmatprep.subr.bf16.mxu0 0
    %7897 = vmatpush1.bf16.msra.mxu0 0
    %7898 = vmatprep.subr.bf16.mxu0 0
    %7899 = vmatpush1.bf16.msra.mxu0 0
    %7900 = vmatprep.subr.bf16.mxu0 0
    %7901 = vmatpush1.bf16.msra.mxu0 0
    %7902 = vmatprep.subr.bf16.mxu0 0
    %7903 = vmatpush1.bf16.msra.mxu0 0
    %7904 = vmatprep.subr.bf16.mxu0 0
    %7905 = vmatpush1.bf16.msra.mxu0 0
    %7906 = vmatprep.mubr.bf16.mxu0 0
    %7907 = vmatmul.mubr.bf16.gmra.mrb[0].mxu0 %v7869
    %v7908 = vpop.f32.mrb[0].mxu0
    %v7909 = vadd.f32 0.0, %v7908
    %v7910 = vpop.f32.mrb[0].mxu0
    %v7911 = vpop.f32.mrb[0].mxu0
    %v7912 = vpop.f32.mrb[0].mxu0
    %7913 = vdwg.mxu0
    %7915 = vrot.lane.b32.xlu0 %v7762, 64
    %v7916 = vpop.permute.xlu0 %7915
    %v7918 = vsel %vm945, %v7766, 0
    %v7921 = vsel %vm1245, %v7916, 0
    %7923 = vmatprep.subr.bf16.mxu0 0
    %7924 = vmatpush1.bf16.msra.mxu0 %v7921
    %7925 = vmatprep.subr.bf16.mxu0 0
    %7926 = vmatpush1.bf16.msra.mxu0 0
    %7927 = vmatprep.subr.bf16.mxu0 0
    %7928 = vmatpush1.bf16.msra.mxu0 0
    %7929 = vmatprep.subr.bf16.mxu0 0
    %7930 = vmatpush1.bf16.msra.mxu0 0
    %7931 = vmatprep.subr.bf16.mxu0 0
    %7932 = vmatpush1.bf16.msra.mxu0 0
    %7933 = vmatprep.subr.bf16.mxu0 0
    %7934 = vmatpush1.bf16.msra.mxu0 0
    %7935 = vmatprep.subr.bf16.mxu0 0
    %7936 = vmatpush1.bf16.msra.mxu0 0
    %7937 = vmatprep.subr.bf16.mxu0 0
    %7938 = vmatpush1.bf16.msra.mxu0 0
    %7939 = vmatprep.subr.bf16.mxu0 0
    %7940 = vmatpush1.bf16.msra.mxu0 0
    %7941 = vmatprep.subr.bf16.mxu0 0
    %7942 = vmatpush1.bf16.msra.mxu0 0
    %7943 = vmatprep.subr.bf16.mxu0 0
    %7944 = vmatpush1.bf16.msra.mxu0 0
    %7945 = vmatprep.subr.bf16.mxu0 0
    %7946 = vmatpush1.bf16.msra.mxu0 0
    %7947 = vmatprep.subr.bf16.mxu0 0
    %7948 = vmatpush1.bf16.msra.mxu0 0
    %7949 = vmatprep.subr.bf16.mxu0 0
    %7950 = vmatpush1.bf16.msra.mxu0 0
    %7951 = vmatprep.subr.bf16.mxu0 0
    %7952 = vmatpush1.bf16.msra.mxu0 0
    %7953 = vmatprep.subr.bf16.mxu0 0
    %7954 = vmatpush1.bf16.msra.mxu0 0
    %7955 = vmatprep.mubr.bf16.mxu0 0
    %7956 = vmatmul.mubr.bf16.gmra.mrb[0].mxu0 %v7918
    %v7957 = vpop.f32.mrb[0].mxu0
    %v7958 = vadd.f32 0.0, %v7957
    %v7959 = vpop.f32.mrb[0].mxu0
    %v7960 = vpop.f32.mrb[0].mxu0
    %v7961 = vpop.f32.mrb[0].mxu0
    %7962 = vdwg.mxu0
    %7964 = vrot.lane.b32.xlu0 %v7523, 64
    %v7965 = vpop.permute.xlu0 %7964
    %v7967 = vsel %vm945, %v7527, 0
    %v7970 = vsel %vm1245, %v7965, 0
    %7972 = vmatprep.subr.bf16.mxu0 0
    %7973 = vmatpush1.bf16.msra.mxu0 %v7970
    %7974 = vmatprep.subr.bf16.mxu0 0
    %7975 = vmatpush1.bf16.msra.mxu0 0
    %7976 = vmatprep.subr.bf16.mxu0 0
    %7977 = vmatpush1.bf16.msra.mxu0 0
    %7978 = vmatprep.subr.bf16.mxu0 0
    %7979 = vmatpush1.bf16.msra.mxu0 0
    %7980 = vmatprep.subr.bf16.mxu0 0
    %7981 = vmatpush1.bf16.msra.mxu0 0
    %7982 = vmatprep.subr.bf16.mxu0 0
    %7983 = vmatpush1.bf16.msra.mxu0 0
    %7984 = vmatprep.subr.bf16.mxu0 0
    %7985 = vmatpush1.bf16.msra.mxu0 0
    %7986 = vmatprep.subr.bf16.mxu0 0
    %7987 = vmatpush1.bf16.msra.mxu0 0
    %7988 = vmatprep.subr.bf16.mxu0 0
    %7989 = vmatpush1.bf16.msra.mxu0 0
    %7990 = vmatprep.subr.bf16.mxu0 0
    %7991 = vmatpush1.bf16.msra.mxu0 0
    %7992 = vmatprep.subr.bf16.mxu0 0
    %7993 = vmatpush1.bf16.msra.mxu0 0
    %7994 = vmatprep.subr.bf16.mxu0 0
    %7995 = vmatpush1.bf16.msra.mxu0 0
    %7996 = vmatprep.subr.bf16.mxu0 0
    %7997 = vmatpush1.bf16.msra.mxu0 0
    %7998 = vmatprep.subr.bf16.mxu0 0
    %7999 = vmatpush1.bf16.msra.mxu0 0
    %8000 = vmatprep.subr.bf16.mxu0 0
    %8001 = vmatpush1.bf16.msra.mxu0 0
    %8002 = vmatprep.subr.bf16.mxu0 0
    %8003 = vmatpush1.bf16.msra.mxu0 0
    %8004 = vmatprep.mubr.bf16.mxu0 0
    %8005 = vmatmul.mubr.bf16.gmra.mrb[0].mxu0 %v7967
    %v8006 = vpop.f32.mrb[0].mxu0
    %v8007 = vadd.f32 %v7811, %v8006
    %v8008 = vpop.f32.mrb[0].mxu0
    %v8009 = vpop.f32.mrb[0].mxu0
    %v8010 = vpop.f32.mrb[0].mxu0
    %8011 = vdwg.mxu0
    %8013 = vrot.lane.b32.xlu0 %v7524, 64
    %v8014 = vpop.permute.xlu0 %8013
    %v8016 = vsel %vm945, %v7528, 0
    %v8019 = vsel %vm1245, %v8014, 0
    %8021 = vmatprep.subr.bf16.mxu0 0
    %8022 = vmatpush1.bf16.msra.mxu0 %v8019
    %8023 = vmatprep.subr.bf16.mxu0 0
    %8024 = vmatpush1.bf16.msra.mxu0 0
    %8025 = vmatprep.subr.bf16.mxu0 0
    %8026 = vmatpush1.bf16.msra.mxu0 0
    %8027 = vmatprep.subr.bf16.mxu0 0
    %8028 = vmatpush1.bf16.msra.mxu0 0
    %8029 = vmatprep.subr.bf16.mxu0 0
    %8030 = vmatpush1.bf16.msra.mxu0 0
    %8031 = vmatprep.subr.bf16.mxu0 0
    %8032 = vmatpush1.bf16.msra.mxu0 0
    %8033 = vmatprep.subr.bf16.mxu0 0
    %8034 = vmatpush1.bf16.msra.mxu0 0
    %8035 = vmatprep.subr.bf16.mxu0 0
    %8036 = vmatpush1.bf16.msra.mxu0 0
    %8037 = vmatprep.subr.bf16.mxu0 0
    %8038 = vmatpush1.bf16.msra.mxu0 0
    %8039 = vmatprep.subr.bf16.mxu0 0
    %8040 = vmatpush1.bf16.msra.mxu0 0
    %8041 = vmatprep.subr.bf16.mxu0 0
    %8042 = vmatpush1.bf16.msra.mxu0 0
    %8043 = vmatprep.subr.bf16.mxu0 0
    %8044 = vmatpush1.bf16.msra.mxu0 0
    %8045 = vmatprep.subr.bf16.mxu0 0
    %8046 = vmatpush1.bf16.msra.mxu0 0
    %8047 = vmatprep.subr.bf16.mxu0 0
    %8048 = vmatpush1.bf16.msra.mxu0 0
    %8049 = vmatprep.subr.bf16.mxu0 0
    %8050 = vmatpush1.bf16.msra.mxu0 0
    %8051 = vmatprep.subr.bf16.mxu0 0
    %8052 = vmatpush1.bf16.msra.mxu0 0
    %8053 = vmatprep.mubr.bf16.mxu0 0
    %8054 = vmatmul.mubr.bf16.gmra.mrb[0].mxu0 %v8016
    %v8055 = vpop.f32.mrb[0].mxu0
    %v8056 = vadd.f32 %v7860, %v8055
    %v8057 = vpop.f32.mrb[0].mxu0
    %v8058 = vpop.f32.mrb[0].mxu0
    %v8059 = vpop.f32.mrb[0].mxu0
    %8060 = vdwg.mxu0
    %8062 = vrot.lane.b32.xlu0 %v7525, 64
    %v8063 = vpop.permute.xlu0 %8062
    %v8065 = vsel %vm945, %v7529, 0
    %v8068 = vsel %vm1245, %v8063, 0
    %8070 = vmatprep.subr.bf16.mxu0 0
    %8071 = vmatpush1.bf16.msra.mxu0 %v8068
    %8072 = vmatprep.subr.bf16.mxu0 0
    %8073 = vmatpush1.bf16.msra.mxu0 0
    %8074 = vmatprep.subr.bf16.mxu0 0
    %8075 = vmatpush1.bf16.msra.mxu0 0
    %8076 = vmatprep.subr.bf16.mxu0 0
    %8077 = vmatpush1.bf16.msra.mxu0 0
    %8078 = vmatprep.subr.bf16.mxu0 0
    %8079 = vmatpush1.bf16.msra.mxu0 0
    %8080 = vmatprep.subr.bf16.mxu0 0
    %8081 = vmatpush1.bf16.msra.mxu0 0
    %8082 = vmatprep.subr.bf16.mxu0 0
    %8083 = vmatpush1.bf16.msra.mxu0 0
    %8084 = vmatprep.subr.bf16.mxu0 0
    %8085 = vmatpush1.bf16.msra.mxu0 0
    %8086 = vmatprep.subr.bf16.mxu0 0
    %8087 = vmatpush1.bf16.msra.mxu0 0
    %8088 = vmatprep.subr.bf16.mxu0 0
    %8089 = vmatpush1.bf16.msra.mxu0 0
    %8090 = vmatprep.subr.bf16.mxu0 0
    %8091 = vmatpush1.bf16.msra.mxu0 0
    %8092 = vmatprep.subr.bf16.mxu0 0
    %8093 = vmatpush1.bf16.msra.mxu0 0
    %8094 = vmatprep.subr.bf16.mxu0 0
    %8095 = vmatpush1.bf16.msra.mxu0 0
    %8096 = vmatprep.subr.bf16.mxu0 0
    %8097 = vmatpush1.bf16.msra.mxu0 0
    %8098 = vmatprep.subr.bf16.mxu0 0
    %8099 = vmatpush1.bf16.msra.mxu0 0
    %8100 = vmatprep.subr.bf16.mxu0 0
    %8101 = vmatpush1.bf16.msra.mxu0 0
    %8102 = vmatprep.mubr.bf16.mxu0 0
    %8103 = vmatmul.mubr.bf16.gmra.mrb[0].mxu0 %v8065
    %v8104 = vpop.f32.mrb[0].mxu0
    %v8105 = vadd.f32 %v7909, %v8104
    %v8106 = vpop.f32.mrb[0].mxu0
    %v8107 = vpop.f32.mrb[0].mxu0
    %v8108 = vpop.f32.mrb[0].mxu0
    %8109 = vdwg.mxu0
    %8111 = vrot.lane.b32.xlu0 %v7526, 64
    %v8112 = vpop.permute.xlu0 %8111
    %v8114 = vsel %vm945, %v7530, 0
    %v8117 = vsel %vm1245, %v8112, 0
    %8119 = vmatprep.subr.bf16.mxu0 0
    %8120 = vmatpush1.bf16.msra.mxu0 %v8117
    %8121 = vmatprep.subr.bf16.mxu0 0
    %8122 = vmatpush1.bf16.msra.mxu0 0
    %8123 = vmatprep.subr.bf16.mxu0 0
    %8124 = vmatpush1.bf16.msra.mxu0 0
    %8125 = vmatprep.subr.bf16.mxu0 0
    %8126 = vmatpush1.bf16.msra.mxu0 0
    %8127 = vmatprep.subr.bf16.mxu0 0
    %8128 = vmatpush1.bf16.msra.mxu0 0
    %8129 = vmatprep.subr.bf16.mxu0 0
    %8130 = vmatpush1.bf16.msra.mxu0 0
    %8131 = vmatprep.subr.bf16.mxu0 0
    %8132 = vmatpush1.bf16.msra.mxu0 0
    %8133 = vmatprep.subr.bf16.mxu0 0
    %8134 = vmatpush1.bf16.msra.mxu0 0
    %8135 = vmatprep.subr.bf16.mxu0 0
    %8136 = vmatpush1.bf16.msra.mxu0 0
    %8137 = vmatprep.subr.bf16.mxu0 0
    %8138 = vmatpush1.bf16.msra.mxu0 0
    %8139 = vmatprep.subr.bf16.mxu0 0
    %8140 = vmatpush1.bf16.msra.mxu0 0
    %8141 = vmatprep.subr.bf16.mxu0 0
    %8142 = vmatpush1.bf16.msra.mxu0 0
    %8143 = vmatprep.subr.bf16.mxu0 0
    %8144 = vmatpush1.bf16.msra.mxu0 0
    %8145 = vmatprep.subr.bf16.mxu0 0
    %8146 = vmatpush1.bf16.msra.mxu0 0
    %8147 = vmatprep.subr.bf16.mxu0 0
    %8148 = vmatpush1.bf16.msra.mxu0 0
    %8149 = vmatprep.subr.bf16.mxu0 0
    %8150 = vmatpush1.bf16.msra.mxu0 0
    %8151 = vmatprep.mubr.bf16.mxu0 0
    %8152 = vmatmul.mubr.bf16.gmra.mrb[0].mxu0 %v8114
    %v8153 = vpop.f32.mrb[0].mxu0
    %v8154 = vadd.f32 %v7958, %v8153
    %v8155 = vpop.f32.mrb[0].mxu0
    %v8156 = vpop.f32.mrb[0].mxu0
    %v8157 = vpop.f32.mrb[0].mxu0
    %8158 = vdwg.mxu0
    %v8159 = vmul.f32 %v7177, %v602
    %v8160 = vmul.f32 %v7180, %v602
    %v8161 = vmul.f32 %v7185, %v602
    %v8162 = vmul.f32 %v7188, %v602
    %v8163 = vpack.c.bf16 %v8159, %v8159
    %v8164 = vpack.c.bf16 %v8160, %v8160
    %v8165 = vpack.c.bf16 %v8161, %v8161
    %v8166 = vpack.c.bf16 %v8162, %v8162
    %v8168 = vsel %vm671, %v8163, 0
    %8170 = vmatprep.subr.bf16.mxu0 0
    %8171 = vmatpush1.bf16.xpose.msra.mxu0 %v7295
    %8172 = vmatprep.subr.bf16.mxu0 0
    %8173 = vmatpush1.bf16.xpose.msra.mxu0 0
    %8174 = vmatprep.subr.bf16.mxu0 0
    %8175 = vmatpush1.bf16.xpose.msra.mxu0 0
    %8176 = vmatprep.subr.bf16.mxu0 0
    %8177 = vmatpush1.bf16.xpose.msra.mxu0 0
    %8178 = vmatprep.subr.bf16.mxu0 0
    %8179 = vmatpush1.bf16.xpose.msra.mxu0 0
    %8180 = vmatprep.subr.bf16.mxu0 0
    %8181 = vmatpush1.bf16.xpose.msra.mxu0 0
    %8182 = vmatprep.subr.bf16.mxu0 0
    %8183 = vmatpush1.bf16.xpose.msra.mxu0 0
    %8184 = vmatprep.subr.bf16.mxu0 0
    %8185 = vmatpush1.bf16.xpose.msra.mxu0 0
    %8186 = vmatprep.subr.bf16.mxu0 0
    %8187 = vmatpush1.bf16.xpose.msra.mxu0 0
    %8188 = vmatprep.subr.bf16.mxu0 0
    %8189 = vmatpush1.bf16.xpose.msra.mxu0 0
    %8190 = vmatprep.subr.bf16.mxu0 0
    %8191 = vmatpush1.bf16.xpose.msra.mxu0 0
    %8192 = vmatprep.subr.bf16.mxu0 0
    %8193 = vmatpush1.bf16.xpose.msra.mxu0 0
    %8194 = vmatprep.subr.bf16.mxu0 0
    %8195 = vmatpush1.bf16.xpose.msra.mxu0 0
    %8196 = vmatprep.subr.bf16.mxu0 0
    %8197 = vmatpush1.bf16.xpose.msra.mxu0 0
    %8198 = vmatprep.subr.bf16.mxu0 0
    %8199 = vmatpush1.bf16.xpose.msra.mxu0 0
    %8200 = vmatprep.subr.bf16.mxu0 0
    %8201 = vmatpush1.bf16.xpose.msra.mxu0 0
    %8202 = vmatprep.mubr.bf16.mxu0 0
    %8203 = vmatmul.mubr.bf16.gmra.mrb[0].mxu0 %v8168
    %v8204 = vpop.f32.mrb[0].mxu0
    %v8205 = vadd.f32 0.0, %v8204
    %v8206 = vpop.f32.mrb[0].mxu0
    %v8207 = vpop.f32.mrb[0].mxu0
    %v8208 = vpop.f32.mrb[0].mxu0
    %8209 = vdwg.mxu0
    %v8211 = vsel %vm671, %v8164, 0
    %8213 = vmatprep.subr.bf16.mxu0 0
    %8214 = vmatpush1.bf16.xpose.msra.mxu0 %v7341
    %8215 = vmatprep.subr.bf16.mxu0 0
    %8216 = vmatpush1.bf16.xpose.msra.mxu0 0
    %8217 = vmatprep.subr.bf16.mxu0 0
    %8218 = vmatpush1.bf16.xpose.msra.mxu0 0
    %8219 = vmatprep.subr.bf16.mxu0 0
    %8220 = vmatpush1.bf16.xpose.msra.mxu0 0
    %8221 = vmatprep.subr.bf16.mxu0 0
    %8222 = vmatpush1.bf16.xpose.msra.mxu0 0
    %8223 = vmatprep.subr.bf16.mxu0 0
    %8224 = vmatpush1.bf16.xpose.msra.mxu0 0
    %8225 = vmatprep.subr.bf16.mxu0 0
    %8226 = vmatpush1.bf16.xpose.msra.mxu0 0
    %8227 = vmatprep.subr.bf16.mxu0 0
    %8228 = vmatpush1.bf16.xpose.msra.mxu0 0
    %8229 = vmatprep.subr.bf16.mxu0 0
    %8230 = vmatpush1.bf16.xpose.msra.mxu0 0
    %8231 = vmatprep.subr.bf16.mxu0 0
    %8232 = vmatpush1.bf16.xpose.msra.mxu0 0
    %8233 = vmatprep.subr.bf16.mxu0 0
    %8234 = vmatpush1.bf16.xpose.msra.mxu0 0
    %8235 = vmatprep.subr.bf16.mxu0 0
    %8236 = vmatpush1.bf16.xpose.msra.mxu0 0
    %8237 = vmatprep.subr.bf16.mxu0 0
    %8238 = vmatpush1.bf16.xpose.msra.mxu0 0
    %8239 = vmatprep.subr.bf16.mxu0 0
    %8240 = vmatpush1.bf16.xpose.msra.mxu0 0
    %8241 = vmatprep.subr.bf16.mxu0 0
    %8242 = vmatpush1.bf16.xpose.msra.mxu0 0
    %8243 = vmatprep.subr.bf16.mxu0 0
    %8244 = vmatpush1.bf16.xpose.msra.mxu0 0
    %8245 = vmatprep.mubr.bf16.mxu0 0
    %8246 = vmatmul.mubr.bf16.gmra.mrb[0].mxu0 %v8211
    %v8247 = vpop.f32.mrb[0].mxu0
    %v8248 = vadd.f32 0.0, %v8247
    %v8249 = vpop.f32.mrb[0].mxu0
    %v8250 = vpop.f32.mrb[0].mxu0
    %v8251 = vpop.f32.mrb[0].mxu0
    %8252 = vdwg.mxu0
    %v8254 = vsel %vm671, %v8165, 0
    %8256 = vmatprep.subr.bf16.mxu0 0
    %8257 = vmatpush1.bf16.xpose.msra.mxu0 %v7387
    %8258 = vmatprep.subr.bf16.mxu0 0
    %8259 = vmatpush1.bf16.xpose.msra.mxu0 0
    %8260 = vmatprep.subr.bf16.mxu0 0
    %8261 = vmatpush1.bf16.xpose.msra.mxu0 0
    %8262 = vmatprep.subr.bf16.mxu0 0
    %8263 = vmatpush1.bf16.xpose.msra.mxu0 0
    %8264 = vmatprep.subr.bf16.mxu0 0
    %8265 = vmatpush1.bf16.xpose.msra.mxu0 0
    %8266 = vmatprep.subr.bf16.mxu0 0
    %8267 = vmatpush1.bf16.xpose.msra.mxu0 0
    %8268 = vmatprep.subr.bf16.mxu0 0
    %8269 = vmatpush1.bf16.xpose.msra.mxu0 0
    %8270 = vmatprep.subr.bf16.mxu0 0
    %8271 = vmatpush1.bf16.xpose.msra.mxu0 0
    %8272 = vmatprep.subr.bf16.mxu0 0
    %8273 = vmatpush1.bf16.xpose.msra.mxu0 0
    %8274 = vmatprep.subr.bf16.mxu0 0
    %8275 = vmatpush1.bf16.xpose.msra.mxu0 0
    %8276 = vmatprep.subr.bf16.mxu0 0
    %8277 = vmatpush1.bf16.xpose.msra.mxu0 0
    %8278 = vmatprep.subr.bf16.mxu0 0
    %8279 = vmatpush1.bf16.xpose.msra.mxu0 0
    %8280 = vmatprep.subr.bf16.mxu0 0
    %8281 = vmatpush1.bf16.xpose.msra.mxu0 0
    %8282 = vmatprep.subr.bf16.mxu0 0
    %8283 = vmatpush1.bf16.xpose.msra.mxu0 0
    %8284 = vmatprep.subr.bf16.mxu0 0
    %8285 = vmatpush1.bf16.xpose.msra.mxu0 0
    %8286 = vmatprep.subr.bf16.mxu0 0
    %8287 = vmatpush1.bf16.xpose.msra.mxu0 0
    %8288 = vmatprep.mubr.bf16.mxu0 0
    %8289 = vmatmul.mubr.bf16.gmra.mrb[0].mxu0 %v8254
    %v8290 = vpop.f32.mrb[0].mxu0
    %v8291 = vadd.f32 0.0, %v8290
    %v8292 = vpop.f32.mrb[0].mxu0
    %v8293 = vpop.f32.mrb[0].mxu0
    %v8294 = vpop.f32.mrb[0].mxu0
    %8295 = vdwg.mxu0
    %v8297 = vsel %vm671, %v8166, 0
    %8299 = vmatprep.subr.bf16.mxu0 0
    %8300 = vmatpush1.bf16.xpose.msra.mxu0 %v7433
    %8301 = vmatprep.subr.bf16.mxu0 0
    %8302 = vmatpush1.bf16.xpose.msra.mxu0 0
    %8303 = vmatprep.subr.bf16.mxu0 0
    %8304 = vmatpush1.bf16.xpose.msra.mxu0 0
    %8305 = vmatprep.subr.bf16.mxu0 0
    %8306 = vmatpush1.bf16.xpose.msra.mxu0 0
    %8307 = vmatprep.subr.bf16.mxu0 0
    %8308 = vmatpush1.bf16.xpose.msra.mxu0 0
    %8309 = vmatprep.subr.bf16.mxu0 0
    %8310 = vmatpush1.bf16.xpose.msra.mxu0 0
    %8311 = vmatprep.subr.bf16.mxu0 0
    %8312 = vmatpush1.bf16.xpose.msra.mxu0 0
    %8313 = vmatprep.subr.bf16.mxu0 0
    %8314 = vmatpush1.bf16.xpose.msra.mxu0 0
    %8315 = vmatprep.subr.bf16.mxu0 0
    %8316 = vmatpush1.bf16.xpose.msra.mxu0 0
    %8317 = vmatprep.subr.bf16.mxu0 0
    %8318 = vmatpush1.bf16.xpose.msra.mxu0 0
    %8319 = vmatprep.subr.bf16.mxu0 0
    %8320 = vmatpush1.bf16.xpose.msra.mxu0 0
    %8321 = vmatprep.subr.bf16.mxu0 0
    %8322 = vmatpush1.bf16.xpose.msra.mxu0 0
    %8323 = vmatprep.subr.bf16.mxu0 0
    %8324 = vmatpush1.bf16.xpose.msra.mxu0 0
    %8325 = vmatprep.subr.bf16.mxu0 0
    %8326 = vmatpush1.bf16.xpose.msra.mxu0 0
    %8327 = vmatprep.subr.bf16.mxu0 0
    %8328 = vmatpush1.bf16.xpose.msra.mxu0 0
    %8329 = vmatprep.subr.bf16.mxu0 0
    %8330 = vmatpush1.bf16.xpose.msra.mxu0 0
    %8331 = vmatprep.mubr.bf16.mxu0 0
    %8332 = vmatmul.mubr.bf16.gmra.mrb[0].mxu0 %v8297
    %v8333 = vpop.f32.mrb[0].mxu0
    %v8334 = vadd.f32 0.0, %v8333
    %v8335 = vpop.f32.mrb[0].mxu0
    %v8336 = vpop.f32.mrb[0].mxu0
    %v8337 = vpop.f32.mrb[0].mxu0
    %8338 = vdwg.mxu0
    %v8339 = vsel %vm945, %v8205, -inf
    %8340 = vmax.xlane.f32.xlu0 %v8339
    %v8341 = vpop.xlane.xlu0 %8340
    %v8342 = vsel %vm945, %v8248, -inf
    %8343 = vmax.xlane.f32.xlu0 %v8342
    %v8344 = vpop.xlane.xlu0 %8343
    %v8345 = vsel %vm945, %v8291, -inf
    %8346 = vmax.xlane.f32.xlu0 %v8345
    %v8347 = vpop.xlane.xlu0 %8346
    %v8348 = vsel %vm945, %v8334, -inf
    %8349 = vmax.xlane.f32.xlu0 %v8348
    %v8350 = vpop.xlane.xlu0 %8349
    %v8351 = vsub.f32 %v8205, %v8341
    %v8352 = vsub.f32 %v8248, %v8344
    %v8353 = vsub.f32 %v8291, %v8347
    %v8354 = vsub.f32 %v8334, %v8350
    %v8355 = vmul.f32 %v8351, 1.442695
    %v8356 = vpow.pop %v8355
    %v8357 = vmul.f32 %v8352, 1.442695
    %v8358 = vpow.pop %v8357
    %v8359 = vmul.f32 %v8353, 1.442695
    %v8360 = vpow.pop %v8359
    %v8361 = vmul.f32 %v8354, 1.442695
    %v8362 = vpow.pop %v8361
    %v8363 = vsel %vm945, %v8356, 0.0
    %8364 = vadd.xlane.f32.xlu0 %v8363
    %v8365 = vpop.xlane.xlu0 %8364
    %v8366 = vsel %vm945, %v8358, 0.0
    %8367 = vadd.xlane.f32.xlu0 %v8366
    %v8368 = vpop.xlane.xlu0 %8367
    %v8369 = vsel %vm945, %v8360, 0.0
    %8370 = vadd.xlane.f32.xlu0 %v8369
    %v8371 = vpop.xlane.xlu0 %8370
    %v8372 = vsel %vm945, %v8362, 0.0
    %8373 = vadd.xlane.f32.xlu0 %v8372
    %v8374 = vpop.xlane.xlu0 %8373
    %v8375 = vrcp.pop %v8365
    %v8376 = vrcp.pop %v8368
    %v8377 = vrcp.pop %v8371
    %v8378 = vrcp.pop %v8374
    %v8379 = vmul.f32 %v8356, %v8375
    %v8380 = vmul.f32 %v8358, %v8376
    %v8381 = vmul.f32 %v8360, %v8377
    %v8382 = vmul.f32 %v8362, %v8378
    %v8383 = vmul.f32 %v7265, %v3940
    %v8384 = vmul.f32 %v7268, %v3940
    %v8385 = vmul.f32 %v7273, %v3940
    %v8386 = vmul.f32 %v7276, %v3940
    %v8387 = vpack.c.bf16 %v8383, %v8383
    %v8388 = vpack.c.bf16 %v8384, %v8384
    %v8389 = vpack.c.bf16 %v8385, %v8385
    %v8390 = vpack.c.bf16 %v8386, %v8386
    %v8391 = vpack.c.bf16 %v8379, %v8379
    %v8392 = vpack.c.bf16 %v8380, %v8380
    %v8393 = vpack.c.bf16 %v8381, %v8381
    %v8394 = vpack.c.bf16 %v8382, %v8382
    %8396 = vrot.lane.b32.xlu0 %v8387, 64
    %v8397 = vpop.permute.xlu0 %8396
    %v8399 = vsel %vm945, %v8391, 0
    %v8402 = vsel %vm1245, %v8397, 0
    %8404 = vmatprep.subr.bf16.mxu0 0
    %8405 = vmatpush1.bf16.msra.mxu0 %v8402
    %8406 = vmatprep.subr.bf16.mxu0 0
    %8407 = vmatpush1.bf16.msra.mxu0 0
    %8408 = vmatprep.subr.bf16.mxu0 0
    %8409 = vmatpush1.bf16.msra.mxu0 0
    %8410 = vmatprep.subr.bf16.mxu0 0
    %8411 = vmatpush1.bf16.msra.mxu0 0
    %8412 = vmatprep.subr.bf16.mxu0 0
    %8413 = vmatpush1.bf16.msra.mxu0 0
    %8414 = vmatprep.subr.bf16.mxu0 0
    %8415 = vmatpush1.bf16.msra.mxu0 0
    %8416 = vmatprep.subr.bf16.mxu0 0
    %8417 = vmatpush1.bf16.msra.mxu0 0
    %8418 = vmatprep.subr.bf16.mxu0 0
    %8419 = vmatpush1.bf16.msra.mxu0 0
    %8420 = vmatprep.subr.bf16.mxu0 0
    %8421 = vmatpush1.bf16.msra.mxu0 0
    %8422 = vmatprep.subr.bf16.mxu0 0
    %8423 = vmatpush1.bf16.msra.mxu0 0
    %8424 = vmatprep.subr.bf16.mxu0 0
    %8425 = vmatpush1.bf16.msra.mxu0 0
    %8426 = vmatprep.subr.bf16.mxu0 0
    %8427 = vmatpush1.bf16.msra.mxu0 0
    %8428 = vmatprep.subr.bf16.mxu0 0
    %8429 = vmatpush1.bf16.msra.mxu0 0
    %8430 = vmatprep.subr.bf16.mxu0 0
    %8431 = vmatpush1.bf16.msra.mxu0 0
    %8432 = vmatprep.subr.bf16.mxu0 0
    %8433 = vmatpush1.bf16.msra.mxu0 0
    %8434 = vmatprep.subr.bf16.mxu0 0
    %8435 = vmatpush1.bf16.msra.mxu0 0
    %8436 = vmatprep.mubr.bf16.mxu0 0
    %8437 = vmatmul.mubr.bf16.gmra.mrb[0].mxu0 %v8399
    %v8438 = vpop.f32.mrb[0].mxu0
    %v8439 = vadd.f32 0.0, %v8438
    %v8440 = vpop.f32.mrb[0].mxu0
    %v8441 = vpop.f32.mrb[0].mxu0
    %v8442 = vpop.f32.mrb[0].mxu0
    %8443 = vdwg.mxu0
    %8445 = vrot.lane.b32.xlu0 %v8388, 64
    %v8446 = vpop.permute.xlu0 %8445
    %v8448 = vsel %vm945, %v8392, 0
    %v8451 = vsel %vm1245, %v8446, 0
    %8453 = vmatprep.subr.bf16.mxu0 0
    %8454 = vmatpush1.bf16.msra.mxu0 %v8451
    %8455 = vmatprep.subr.bf16.mxu0 0
    %8456 = vmatpush1.bf16.msra.mxu0 0
    %8457 = vmatprep.subr.bf16.mxu0 0
    %8458 = vmatpush1.bf16.msra.mxu0 0
    %8459 = vmatprep.subr.bf16.mxu0 0
    %8460 = vmatpush1.bf16.msra.mxu0 0
    %8461 = vmatprep.subr.bf16.mxu0 0
    %8462 = vmatpush1.bf16.msra.mxu0 0
    %8463 = vmatprep.subr.bf16.mxu0 0
    %8464 = vmatpush1.bf16.msra.mxu0 0
    %8465 = vmatprep.subr.bf16.mxu0 0
    %8466 = vmatpush1.bf16.msra.mxu0 0
    %8467 = vmatprep.subr.bf16.mxu0 0
    %8468 = vmatpush1.bf16.msra.mxu0 0
    %8469 = vmatprep.subr.bf16.mxu0 0
    %8470 = vmatpush1.bf16.msra.mxu0 0
    %8471 = vmatprep.subr.bf16.mxu0 0
    %8472 = vmatpush1.bf16.msra.mxu0 0
    %8473 = vmatprep.subr.bf16.mxu0 0
    %8474 = vmatpush1.bf16.msra.mxu0 0
    %8475 = vmatprep.subr.bf16.mxu0 0
    %8476 = vmatpush1.bf16.msra.mxu0 0
    %8477 = vmatprep.subr.bf16.mxu0 0
    %8478 = vmatpush1.bf16.msra.mxu0 0
    %8479 = vmatprep.subr.bf16.mxu0 0
    %8480 = vmatpush1.bf16.msra.mxu0 0
    %8481 = vmatprep.subr.bf16.mxu0 0
    %8482 = vmatpush1.bf16.msra.mxu0 0
    %8483 = vmatprep.subr.bf16.mxu0 0
    %8484 = vmatpush1.bf16.msra.mxu0 0
    %8485 = vmatprep.mubr.bf16.mxu0 0
    %8486 = vmatmul.mubr.bf16.gmra.mrb[0].mxu0 %v8448
    %v8487 = vpop.f32.mrb[0].mxu0
    %v8488 = vadd.f32 0.0, %v8487
    %v8489 = vpop.f32.mrb[0].mxu0
    %v8490 = vpop.f32.mrb[0].mxu0
    %v8491 = vpop.f32.mrb[0].mxu0
    %8492 = vdwg.mxu0
    %8494 = vrot.lane.b32.xlu0 %v8389, 64
    %v8495 = vpop.permute.xlu0 %8494
    %v8497 = vsel %vm945, %v8393, 0
    %v8500 = vsel %vm1245, %v8495, 0
    %8502 = vmatprep.subr.bf16.mxu0 0
    %8503 = vmatpush1.bf16.msra.mxu0 %v8500
    %8504 = vmatprep.subr.bf16.mxu0 0
    %8505 = vmatpush1.bf16.msra.mxu0 0
    %8506 = vmatprep.subr.bf16.mxu0 0
    %8507 = vmatpush1.bf16.msra.mxu0 0
    %8508 = vmatprep.subr.bf16.mxu0 0
    %8509 = vmatpush1.bf16.msra.mxu0 0
    %8510 = vmatprep.subr.bf16.mxu0 0
    %8511 = vmatpush1.bf16.msra.mxu0 0
    %8512 = vmatprep.subr.bf16.mxu0 0
    %8513 = vmatpush1.bf16.msra.mxu0 0
    %8514 = vmatprep.subr.bf16.mxu0 0
    %8515 = vmatpush1.bf16.msra.mxu0 0
    %8516 = vmatprep.subr.bf16.mxu0 0
    %8517 = vmatpush1.bf16.msra.mxu0 0
    %8518 = vmatprep.subr.bf16.mxu0 0
    %8519 = vmatpush1.bf16.msra.mxu0 0
    %8520 = vmatprep.subr.bf16.mxu0 0
    %8521 = vmatpush1.bf16.msra.mxu0 0
    %8522 = vmatprep.subr.bf16.mxu0 0
    %8523 = vmatpush1.bf16.msra.mxu0 0
    %8524 = vmatprep.subr.bf16.mxu0 0
    %8525 = vmatpush1.bf16.msra.mxu0 0
    %8526 = vmatprep.subr.bf16.mxu0 0
    %8527 = vmatpush1.bf16.msra.mxu0 0
    %8528 = vmatprep.subr.bf16.mxu0 0
    %8529 = vmatpush1.bf16.msra.mxu0 0
    %8530 = vmatprep.subr.bf16.mxu0 0
    %8531 = vmatpush1.bf16.msra.mxu0 0
    %8532 = vmatprep.subr.bf16.mxu0 0
    %8533 = vmatpush1.bf16.msra.mxu0 0
    %8534 = vmatprep.mubr.bf16.mxu0 0
    %8535 = vmatmul.mubr.bf16.gmra.mrb[0].mxu0 %v8497
    %v8536 = vpop.f32.mrb[0].mxu0
    %v8537 = vadd.f32 0.0, %v8536
    %v8538 = vpop.f32.mrb[0].mxu0
    %v8539 = vpop.f32.mrb[0].mxu0
    %v8540 = vpop.f32.mrb[0].mxu0
    %8541 = vdwg.mxu0
    %8543 = vrot.lane.b32.xlu0 %v8390, 64
    %v8544 = vpop.permute.xlu0 %8543
    %v8546 = vsel %vm945, %v8394, 0
    %v8549 = vsel %vm1245, %v8544, 0
    %8551 = vmatprep.subr.bf16.mxu0 0
    %8552 = vmatpush1.bf16.msra.mxu0 %v8549
    %8553 = vmatprep.subr.bf16.mxu0 0
    %8554 = vmatpush1.bf16.msra.mxu0 0
    %8555 = vmatprep.subr.bf16.mxu0 0
    %8556 = vmatpush1.bf16.msra.mxu0 0
    %8557 = vmatprep.subr.bf16.mxu0 0
    %8558 = vmatpush1.bf16.msra.mxu0 0
    %8559 = vmatprep.subr.bf16.mxu0 0
    %8560 = vmatpush1.bf16.msra.mxu0 0
    %8561 = vmatprep.subr.bf16.mxu0 0
    %8562 = vmatpush1.bf16.msra.mxu0 0
    %8563 = vmatprep.subr.bf16.mxu0 0
    %8564 = vmatpush1.bf16.msra.mxu0 0
    %8565 = vmatprep.subr.bf16.mxu0 0
    %8566 = vmatpush1.bf16.msra.mxu0 0
    %8567 = vmatprep.subr.bf16.mxu0 0
    %8568 = vmatpush1.bf16.msra.mxu0 0
    %8569 = vmatprep.subr.bf16.mxu0 0
    %8570 = vmatpush1.bf16.msra.mxu0 0
    %8571 = vmatprep.subr.bf16.mxu0 0
    %8572 = vmatpush1.bf16.msra.mxu0 0
    %8573 = vmatprep.subr.bf16.mxu0 0
    %8574 = vmatpush1.bf16.msra.mxu0 0
    %8575 = vmatprep.subr.bf16.mxu0 0
    %8576 = vmatpush1.bf16.msra.mxu0 0
    %8577 = vmatprep.subr.bf16.mxu0 0
    %8578 = vmatpush1.bf16.msra.mxu0 0
    %8579 = vmatprep.subr.bf16.mxu0 0
    %8580 = vmatpush1.bf16.msra.mxu0 0
    %8581 = vmatprep.subr.bf16.mxu0 0
    %8582 = vmatpush1.bf16.msra.mxu0 0
    %8583 = vmatprep.mubr.bf16.mxu0 0
    %8584 = vmatmul.mubr.bf16.gmra.mrb[0].mxu0 %v8546
    %v8585 = vpop.f32.mrb[0].mxu0
    %v8586 = vadd.f32 0.0, %v8585
    %v8587 = vpop.f32.mrb[0].mxu0
    %v8588 = vpop.f32.mrb[0].mxu0
    %v8589 = vpop.f32.mrb[0].mxu0
    %8590 = vdwg.mxu0
    %v8591 = vadd.f32 %v8007, %v8439
    %v8592 = vadd.f32 %v8056, %v8488
    %v8593 = vadd.f32 %v8105, %v8537
    %v8594 = vadd.f32 %v8154, %v8586
    %v8595 = vmul.f32 %v7177, %v607
    %v8596 = vmul.f32 %v7180, %v607
    %v8597 = vmul.f32 %v7185, %v607
    %v8598 = vmul.f32 %v7188, %v607
    %v8599 = vpack.c.bf16 %v8595, %v8595
    %v8600 = vpack.c.bf16 %v8596, %v8596
    %v8601 = vpack.c.bf16 %v8597, %v8597
    %v8602 = vpack.c.bf16 %v8598, %v8598
    %v8604 = vsel %vm671, %v8599, 0
    %8606 = vmatprep.subr.bf16.mxu0 0
    %8607 = vmatpush1.bf16.xpose.msra.mxu0 %v7295
    %8608 = vmatprep.subr.bf16.mxu0 0
    %8609 = vmatpush1.bf16.xpose.msra.mxu0 0
    %8610 = vmatprep.subr.bf16.mxu0 0
    %8611 = vmatpush1.bf16.xpose.msra.mxu0 0
    %8612 = vmatprep.subr.bf16.mxu0 0
    %8613 = vmatpush1.bf16.xpose.msra.mxu0 0
    %8614 = vmatprep.subr.bf16.mxu0 0
    %8615 = vmatpush1.bf16.xpose.msra.mxu0 0
    %8616 = vmatprep.subr.bf16.mxu0 0
    %8617 = vmatpush1.bf16.xpose.msra.mxu0 0
    %8618 = vmatprep.subr.bf16.mxu0 0
    %8619 = vmatpush1.bf16.xpose.msra.mxu0 0
    %8620 = vmatprep.subr.bf16.mxu0 0
    %8621 = vmatpush1.bf16.xpose.msra.mxu0 0
    %8622 = vmatprep.subr.bf16.mxu0 0
    %8623 = vmatpush1.bf16.xpose.msra.mxu0 0
    %8624 = vmatprep.subr.bf16.mxu0 0
    %8625 = vmatpush1.bf16.xpose.msra.mxu0 0
    %8626 = vmatprep.subr.bf16.mxu0 0
    %8627 = vmatpush1.bf16.xpose.msra.mxu0 0
    %8628 = vmatprep.subr.bf16.mxu0 0
    %8629 = vmatpush1.bf16.xpose.msra.mxu0 0
    %8630 = vmatprep.subr.bf16.mxu0 0
    %8631 = vmatpush1.bf16.xpose.msra.mxu0 0
    %8632 = vmatprep.subr.bf16.mxu0 0
    %8633 = vmatpush1.bf16.xpose.msra.mxu0 0
    %8634 = vmatprep.subr.bf16.mxu0 0
    %8635 = vmatpush1.bf16.xpose.msra.mxu0 0
    %8636 = vmatprep.subr.bf16.mxu0 0
    %8637 = vmatpush1.bf16.xpose.msra.mxu0 0
    %8638 = vmatprep.mubr.bf16.mxu0 0
    %8639 = vmatmul.mubr.bf16.gmra.mrb[0].mxu0 %v8604
    %v8640 = vpop.f32.mrb[0].mxu0
    %v8641 = vadd.f32 0.0, %v8640
    %v8642 = vpop.f32.mrb[0].mxu0
    %v8643 = vpop.f32.mrb[0].mxu0
    %v8644 = vpop.f32.mrb[0].mxu0
    %8645 = vdwg.mxu0
    %v8647 = vsel %vm671, %v8600, 0
    %8649 = vmatprep.subr.bf16.mxu0 0
    %8650 = vmatpush1.bf16.xpose.msra.mxu0 %v7341
    %8651 = vmatprep.subr.bf16.mxu0 0
    %8652 = vmatpush1.bf16.xpose.msra.mxu0 0
    %8653 = vmatprep.subr.bf16.mxu0 0
    %8654 = vmatpush1.bf16.xpose.msra.mxu0 0
    %8655 = vmatprep.subr.bf16.mxu0 0
    %8656 = vmatpush1.bf16.xpose.msra.mxu0 0
    %8657 = vmatprep.subr.bf16.mxu0 0
    %8658 = vmatpush1.bf16.xpose.msra.mxu0 0
    %8659 = vmatprep.subr.bf16.mxu0 0
    %8660 = vmatpush1.bf16.xpose.msra.mxu0 0
    %8661 = vmatprep.subr.bf16.mxu0 0
    %8662 = vmatpush1.bf16.xpose.msra.mxu0 0
    %8663 = vmatprep.subr.bf16.mxu0 0
    %8664 = vmatpush1.bf16.xpose.msra.mxu0 0
    %8665 = vmatprep.subr.bf16.mxu0 0
    %8666 = vmatpush1.bf16.xpose.msra.mxu0 0
    %8667 = vmatprep.subr.bf16.mxu0 0
    %8668 = vmatpush1.bf16.xpose.msra.mxu0 0
    %8669 = vmatprep.subr.bf16.mxu0 0
    %8670 = vmatpush1.bf16.xpose.msra.mxu0 0
    %8671 = vmatprep.subr.bf16.mxu0 0
    %8672 = vmatpush1.bf16.xpose.msra.mxu0 0
    %8673 = vmatprep.subr.bf16.mxu0 0
    %8674 = vmatpush1.bf16.xpose.msra.mxu0 0
    %8675 = vmatprep.subr.bf16.mxu0 0
    %8676 = vmatpush1.bf16.xpose.msra.mxu0 0
    %8677 = vmatprep.subr.bf16.mxu0 0
    %8678 = vmatpush1.bf16.xpose.msra.mxu0 0
    %8679 = vmatprep.subr.bf16.mxu0 0
    %8680 = vmatpush1.bf16.xpose.msra.mxu0 0
    %8681 = vmatprep.mubr.bf16.mxu0 0
    %8682 = vmatmul.mubr.bf16.gmra.mrb[0].mxu0 %v8647
    %v8683 = vpop.f32.mrb[0].mxu0
    %v8684 = vadd.f32 0.0, %v8683
    %v8685 = vpop.f32.mrb[0].mxu0
    %v8686 = vpop.f32.mrb[0].mxu0
    %v8687 = vpop.f32.mrb[0].mxu0
    %8688 = vdwg.mxu0
    %v8690 = vsel %vm671, %v8601, 0
    %8692 = vmatprep.subr.bf16.mxu0 0
    %8693 = vmatpush1.bf16.xpose.msra.mxu0 %v7387
    %8694 = vmatprep.subr.bf16.mxu0 0
    %8695 = vmatpush1.bf16.xpose.msra.mxu0 0
    %8696 = vmatprep.subr.bf16.mxu0 0
    %8697 = vmatpush1.bf16.xpose.msra.mxu0 0
    %8698 = vmatprep.subr.bf16.mxu0 0
    %8699 = vmatpush1.bf16.xpose.msra.mxu0 0
    %8700 = vmatprep.subr.bf16.mxu0 0
    %8701 = vmatpush1.bf16.xpose.msra.mxu0 0
    %8702 = vmatprep.subr.bf16.mxu0 0
    %8703 = vmatpush1.bf16.xpose.msra.mxu0 0
    %8704 = vmatprep.subr.bf16.mxu0 0
    %8705 = vmatpush1.bf16.xpose.msra.mxu0 0
    %8706 = vmatprep.subr.bf16.mxu0 0
    %8707 = vmatpush1.bf16.xpose.msra.mxu0 0
    %8708 = vmatprep.subr.bf16.mxu0 0
    %8709 = vmatpush1.bf16.xpose.msra.mxu0 0
    %8710 = vmatprep.subr.bf16.mxu0 0
    %8711 = vmatpush1.bf16.xpose.msra.mxu0 0
    %8712 = vmatprep.subr.bf16.mxu0 0
    %8713 = vmatpush1.bf16.xpose.msra.mxu0 0
    %8714 = vmatprep.subr.bf16.mxu0 0
    %8715 = vmatpush1.bf16.xpose.msra.mxu0 0
    %8716 = vmatprep.subr.bf16.mxu0 0
    %8717 = vmatpush1.bf16.xpose.msra.mxu0 0
    %8718 = vmatprep.subr.bf16.mxu0 0
    %8719 = vmatpush1.bf16.xpose.msra.mxu0 0
    %8720 = vmatprep.subr.bf16.mxu0 0
    %8721 = vmatpush1.bf16.xpose.msra.mxu0 0
    %8722 = vmatprep.subr.bf16.mxu0 0
    %8723 = vmatpush1.bf16.xpose.msra.mxu0 0
    %8724 = vmatprep.mubr.bf16.mxu0 0
    %8725 = vmatmul.mubr.bf16.gmra.mrb[0].mxu0 %v8690
    %v8726 = vpop.f32.mrb[0].mxu0
    %v8727 = vadd.f32 0.0, %v8726
    %v8728 = vpop.f32.mrb[0].mxu0
    %v8729 = vpop.f32.mrb[0].mxu0
    %v8730 = vpop.f32.mrb[0].mxu0
    %8731 = vdwg.mxu0
    %v8733 = vsel %vm671, %v8602, 0
    %8735 = vmatprep.subr.bf16.mxu0 0
    %8736 = vmatpush1.bf16.xpose.msra.mxu0 %v7433
    %8737 = vmatprep.subr.bf16.mxu0 0
    %8738 = vmatpush1.bf16.xpose.msra.mxu0 0
    %8739 = vmatprep.subr.bf16.mxu0 0
    %8740 = vmatpush1.bf16.xpose.msra.mxu0 0
    %8741 = vmatprep.subr.bf16.mxu0 0
    %8742 = vmatpush1.bf16.xpose.msra.mxu0 0
    %8743 = vmatprep.subr.bf16.mxu0 0
    %8744 = vmatpush1.bf16.xpose.msra.mxu0 0
    %8745 = vmatprep.subr.bf16.mxu0 0
    %8746 = vmatpush1.bf16.xpose.msra.mxu0 0
    %8747 = vmatprep.subr.bf16.mxu0 0
    %8748 = vmatpush1.bf16.xpose.msra.mxu0 0
    %8749 = vmatprep.subr.bf16.mxu0 0
    %8750 = vmatpush1.bf16.xpose.msra.mxu0 0
    %8751 = vmatprep.subr.bf16.mxu0 0
    %8752 = vmatpush1.bf16.xpose.msra.mxu0 0
    %8753 = vmatprep.subr.bf16.mxu0 0
    %8754 = vmatpush1.bf16.xpose.msra.mxu0 0
    %8755 = vmatprep.subr.bf16.mxu0 0
    %8756 = vmatpush1.bf16.xpose.msra.mxu0 0
    %8757 = vmatprep.subr.bf16.mxu0 0
    %8758 = vmatpush1.bf16.xpose.msra.mxu0 0
    %8759 = vmatprep.subr.bf16.mxu0 0
    %8760 = vmatpush1.bf16.xpose.msra.mxu0 0
    %8761 = vmatprep.subr.bf16.mxu0 0
    %8762 = vmatpush1.bf16.xpose.msra.mxu0 0
    %8763 = vmatprep.subr.bf16.mxu0 0
    %8764 = vmatpush1.bf16.xpose.msra.mxu0 0
    %8765 = vmatprep.subr.bf16.mxu0 0
    %8766 = vmatpush1.bf16.xpose.msra.mxu0 0
    %8767 = vmatprep.mubr.bf16.mxu0 0
    %8768 = vmatmul.mubr.bf16.gmra.mrb[0].mxu0 %v8733
    %v8769 = vpop.f32.mrb[0].mxu0
    %v8770 = vadd.f32 0.0, %v8769
    %v8771 = vpop.f32.mrb[0].mxu0
    %v8772 = vpop.f32.mrb[0].mxu0
    %v8773 = vpop.f32.mrb[0].mxu0
    %8774 = vdwg.mxu0
    %v8775 = vsel %vm945, %v8641, -inf
    %8776 = vmax.xlane.f32.xlu0 %v8775
    %v8777 = vpop.xlane.xlu0 %8776
    %v8778 = vsel %vm945, %v8684, -inf
    %8779 = vmax.xlane.f32.xlu0 %v8778
    %v8780 = vpop.xlane.xlu0 %8779
    %v8781 = vsel %vm945, %v8727, -inf
    %8782 = vmax.xlane.f32.xlu0 %v8781
    %v8783 = vpop.xlane.xlu0 %8782
    %v8784 = vsel %vm945, %v8770, -inf
    %8785 = vmax.xlane.f32.xlu0 %v8784
    %v8786 = vpop.xlane.xlu0 %8785
    %v8787 = vsub.f32 %v8641, %v8777
    %v8788 = vsub.f32 %v8684, %v8780
    %v8789 = vsub.f32 %v8727, %v8783
    %v8790 = vsub.f32 %v8770, %v8786
    %v8791 = vmul.f32 %v8787, 1.442695
    %v8792 = vpow.pop %v8791
    %v8793 = vmul.f32 %v8788, 1.442695
    %v8794 = vpow.pop %v8793
    %v8795 = vmul.f32 %v8789, 1.442695
    %v8796 = vpow.pop %v8795
    %v8797 = vmul.f32 %v8790, 1.442695
    %v8798 = vpow.pop %v8797
    %v8799 = vsel %vm945, %v8792, 0.0
    %8800 = vadd.xlane.f32.xlu0 %v8799
    %v8801 = vpop.xlane.xlu0 %8800
    %v8802 = vsel %vm945, %v8794, 0.0
    %8803 = vadd.xlane.f32.xlu0 %v8802
    %v8804 = vpop.xlane.xlu0 %8803
    %v8805 = vsel %vm945, %v8796, 0.0
    %8806 = vadd.xlane.f32.xlu0 %v8805
    %v8807 = vpop.xlane.xlu0 %8806
    %v8808 = vsel %vm945, %v8798, 0.0
    %8809 = vadd.xlane.f32.xlu0 %v8808
    %v8810 = vpop.xlane.xlu0 %8809
    %v8811 = vrcp.pop %v8801
    %v8812 = vrcp.pop %v8804
    %v8813 = vrcp.pop %v8807
    %v8814 = vrcp.pop %v8810
    %v8815 = vmul.f32 %v8792, %v8811
    %v8816 = vmul.f32 %v8794, %v8812
    %v8817 = vmul.f32 %v8796, %v8813
    %v8818 = vmul.f32 %v8798, %v8814
    %v8819 = vmul.f32 %v7265, %v4380
    %v8820 = vmul.f32 %v7268, %v4380
    %v8821 = vmul.f32 %v7273, %v4380
    %v8822 = vmul.f32 %v7276, %v4380
    %v8823 = vpack.c.bf16 %v8819, %v8819
    %v8824 = vpack.c.bf16 %v8820, %v8820
    %v8825 = vpack.c.bf16 %v8821, %v8821
    %v8826 = vpack.c.bf16 %v8822, %v8822
    %v8827 = vpack.c.bf16 %v8815, %v8815
    %v8828 = vpack.c.bf16 %v8816, %v8816
    %v8829 = vpack.c.bf16 %v8817, %v8817
    %v8830 = vpack.c.bf16 %v8818, %v8818
    %8832 = vrot.lane.b32.xlu0 %v8823, 64
    %v8833 = vpop.permute.xlu0 %8832
    %v8835 = vsel %vm945, %v8827, 0
    %v8838 = vsel %vm1245, %v8833, 0
    %8840 = vmatprep.subr.bf16.mxu0 0
    %8841 = vmatpush1.bf16.msra.mxu0 %v8838
    %8842 = vmatprep.subr.bf16.mxu0 0
    %8843 = vmatpush1.bf16.msra.mxu0 0
    %8844 = vmatprep.subr.bf16.mxu0 0
    %8845 = vmatpush1.bf16.msra.mxu0 0
    %8846 = vmatprep.subr.bf16.mxu0 0
    %8847 = vmatpush1.bf16.msra.mxu0 0
    %8848 = vmatprep.subr.bf16.mxu0 0
    %8849 = vmatpush1.bf16.msra.mxu0 0
    %8850 = vmatprep.subr.bf16.mxu0 0
    %8851 = vmatpush1.bf16.msra.mxu0 0
    %8852 = vmatprep.subr.bf16.mxu0 0
    %8853 = vmatpush1.bf16.msra.mxu0 0
    %8854 = vmatprep.subr.bf16.mxu0 0
    %8855 = vmatpush1.bf16.msra.mxu0 0
    %8856 = vmatprep.subr.bf16.mxu0 0
    %8857 = vmatpush1.bf16.msra.mxu0 0
    %8858 = vmatprep.subr.bf16.mxu0 0
    %8859 = vmatpush1.bf16.msra.mxu0 0
    %8860 = vmatprep.subr.bf16.mxu0 0
    %8861 = vmatpush1.bf16.msra.mxu0 0
    %8862 = vmatprep.subr.bf16.mxu0 0
    %8863 = vmatpush1.bf16.msra.mxu0 0
    %8864 = vmatprep.subr.bf16.mxu0 0
    %8865 = vmatpush1.bf16.msra.mxu0 0
    %8866 = vmatprep.subr.bf16.mxu0 0
    %8867 = vmatpush1.bf16.msra.mxu0 0
    %8868 = vmatprep.subr.bf16.mxu0 0
    %8869 = vmatpush1.bf16.msra.mxu0 0
    %8870 = vmatprep.subr.bf16.mxu0 0
    %8871 = vmatpush1.bf16.msra.mxu0 0
    %8872 = vmatprep.mubr.bf16.mxu0 0
    %8873 = vmatmul.mubr.bf16.gmra.mrb[0].mxu0 %v8835
    %v8874 = vpop.f32.mrb[0].mxu0
    %v8875 = vadd.f32 0.0, %v8874
    %v8876 = vpop.f32.mrb[0].mxu0
    %v8877 = vpop.f32.mrb[0].mxu0
    %v8878 = vpop.f32.mrb[0].mxu0
    %8879 = vdwg.mxu0
    %8881 = vrot.lane.b32.xlu0 %v8824, 64
    %v8882 = vpop.permute.xlu0 %8881
    %v8884 = vsel %vm945, %v8828, 0
    %v8887 = vsel %vm1245, %v8882, 0
    %8889 = vmatprep.subr.bf16.mxu0 0
    %8890 = vmatpush1.bf16.msra.mxu0 %v8887
    %8891 = vmatprep.subr.bf16.mxu0 0
    %8892 = vmatpush1.bf16.msra.mxu0 0
    %8893 = vmatprep.subr.bf16.mxu0 0
    %8894 = vmatpush1.bf16.msra.mxu0 0
    %8895 = vmatprep.subr.bf16.mxu0 0
    %8896 = vmatpush1.bf16.msra.mxu0 0
    %8897 = vmatprep.subr.bf16.mxu0 0
    %8898 = vmatpush1.bf16.msra.mxu0 0
    %8899 = vmatprep.subr.bf16.mxu0 0
    %8900 = vmatpush1.bf16.msra.mxu0 0
    %8901 = vmatprep.subr.bf16.mxu0 0
    %8902 = vmatpush1.bf16.msra.mxu0 0
    %8903 = vmatprep.subr.bf16.mxu0 0
    %8904 = vmatpush1.bf16.msra.mxu0 0
    %8905 = vmatprep.subr.bf16.mxu0 0
    %8906 = vmatpush1.bf16.msra.mxu0 0
    %8907 = vmatprep.subr.bf16.mxu0 0
    %8908 = vmatpush1.bf16.msra.mxu0 0
    %8909 = vmatprep.subr.bf16.mxu0 0
    %8910 = vmatpush1.bf16.msra.mxu0 0
    %8911 = vmatprep.subr.bf16.mxu0 0
    %8912 = vmatpush1.bf16.msra.mxu0 0
    %8913 = vmatprep.subr.bf16.mxu0 0
    %8914 = vmatpush1.bf16.msra.mxu0 0
    %8915 = vmatprep.subr.bf16.mxu0 0
    %8916 = vmatpush1.bf16.msra.mxu0 0
    %8917 = vmatprep.subr.bf16.mxu0 0
    %8918 = vmatpush1.bf16.msra.mxu0 0
    %8919 = vmatprep.subr.bf16.mxu0 0
    %8920 = vmatpush1.bf16.msra.mxu0 0
    %8921 = vmatprep.mubr.bf16.mxu0 0
    %8922 = vmatmul.mubr.bf16.gmra.mrb[0].mxu0 %v8884
    %v8923 = vpop.f32.mrb[0].mxu0
    %v8924 = vadd.f32 0.0, %v8923
    %v8925 = vpop.f32.mrb[0].mxu0
    %v8926 = vpop.f32.mrb[0].mxu0
    %v8927 = vpop.f32.mrb[0].mxu0
    %8928 = vdwg.mxu0
    %8930 = vrot.lane.b32.xlu0 %v8825, 64
    %v8931 = vpop.permute.xlu0 %8930
    %v8933 = vsel %vm945, %v8829, 0
    %v8936 = vsel %vm1245, %v8931, 0
    %8938 = vmatprep.subr.bf16.mxu0 0
    %8939 = vmatpush1.bf16.msra.mxu0 %v8936
    %8940 = vmatprep.subr.bf16.mxu0 0
    %8941 = vmatpush1.bf16.msra.mxu0 0
    %8942 = vmatprep.subr.bf16.mxu0 0
    %8943 = vmatpush1.bf16.msra.mxu0 0
    %8944 = vmatprep.subr.bf16.mxu0 0
    %8945 = vmatpush1.bf16.msra.mxu0 0
    %8946 = vmatprep.subr.bf16.mxu0 0
    %8947 = vmatpush1.bf16.msra.mxu0 0
    %8948 = vmatprep.subr.bf16.mxu0 0
    %8949 = vmatpush1.bf16.msra.mxu0 0
    %8950 = vmatprep.subr.bf16.mxu0 0
    %8951 = vmatpush1.bf16.msra.mxu0 0
    %8952 = vmatprep.subr.bf16.mxu0 0
    %8953 = vmatpush1.bf16.msra.mxu0 0
    %8954 = vmatprep.subr.bf16.mxu0 0
    %8955 = vmatpush1.bf16.msra.mxu0 0
    %8956 = vmatprep.subr.bf16.mxu0 0
    %8957 = vmatpush1.bf16.msra.mxu0 0
    %8958 = vmatprep.subr.bf16.mxu0 0
    %8959 = vmatpush1.bf16.msra.mxu0 0
    %8960 = vmatprep.subr.bf16.mxu0 0
    %8961 = vmatpush1.bf16.msra.mxu0 0
    %8962 = vmatprep.subr.bf16.mxu0 0
    %8963 = vmatpush1.bf16.msra.mxu0 0
    %8964 = vmatprep.subr.bf16.mxu0 0
    %8965 = vmatpush1.bf16.msra.mxu0 0
    %8966 = vmatprep.subr.bf16.mxu0 0
    %8967 = vmatpush1.bf16.msra.mxu0 0
    %8968 = vmatprep.subr.bf16.mxu0 0
    %8969 = vmatpush1.bf16.msra.mxu0 0
    %8970 = vmatprep.mubr.bf16.mxu0 0
    %8971 = vmatmul.mubr.bf16.gmra.mrb[0].mxu0 %v8933
    %v8972 = vpop.f32.mrb[0].mxu0
    %v8973 = vadd.f32 0.0, %v8972
    %v8974 = vpop.f32.mrb[0].mxu0
    %v8975 = vpop.f32.mrb[0].mxu0
    %v8976 = vpop.f32.mrb[0].mxu0
    %8977 = vdwg.mxu0
    %8979 = vrot.lane.b32.xlu0 %v8826, 64
    %v8980 = vpop.permute.xlu0 %8979
    %v8982 = vsel %vm945, %v8830, 0
    %v8985 = vsel %vm1245, %v8980, 0
    %8987 = vmatprep.subr.bf16.mxu0 0
    %8988 = vmatpush1.bf16.msra.mxu0 %v8985
    %8989 = vmatprep.subr.bf16.mxu0 0
    %8990 = vmatpush1.bf16.msra.mxu0 0
    %8991 = vmatprep.subr.bf16.mxu0 0
    %8992 = vmatpush1.bf16.msra.mxu0 0
    %8993 = vmatprep.subr.bf16.mxu0 0
    %8994 = vmatpush1.bf16.msra.mxu0 0
    %8995 = vmatprep.subr.bf16.mxu0 0
    %8996 = vmatpush1.bf16.msra.mxu0 0
    %8997 = vmatprep.subr.bf16.mxu0 0
    %8998 = vmatpush1.bf16.msra.mxu0 0
    %8999 = vmatprep.subr.bf16.mxu0 0
    %9000 = vmatpush1.bf16.msra.mxu0 0
    %9001 = vmatprep.subr.bf16.mxu0 0
    %9002 = vmatpush1.bf16.msra.mxu0 0
    %9003 = vmatprep.subr.bf16.mxu0 0
    %9004 = vmatpush1.bf16.msra.mxu0 0
    %9005 = vmatprep.subr.bf16.mxu0 0
    %9006 = vmatpush1.bf16.msra.mxu0 0
    %9007 = vmatprep.subr.bf16.mxu0 0
    %9008 = vmatpush1.bf16.msra.mxu0 0
    %9009 = vmatprep.subr.bf16.mxu0 0
    %9010 = vmatpush1.bf16.msra.mxu0 0
    %9011 = vmatprep.subr.bf16.mxu0 0
    %9012 = vmatpush1.bf16.msra.mxu0 0
    %9013 = vmatprep.subr.bf16.mxu0 0
    %9014 = vmatpush1.bf16.msra.mxu0 0
    %9015 = vmatprep.subr.bf16.mxu0 0
    %9016 = vmatpush1.bf16.msra.mxu0 0
    %9017 = vmatprep.subr.bf16.mxu0 0
    %9018 = vmatpush1.bf16.msra.mxu0 0
    %9019 = vmatprep.mubr.bf16.mxu0 0
    %9020 = vmatmul.mubr.bf16.gmra.mrb[0].mxu0 %v8982
    %v9021 = vpop.f32.mrb[0].mxu0
    %v9022 = vadd.f32 0.0, %v9021
    %v9023 = vpop.f32.mrb[0].mxu0
    %v9024 = vpop.f32.mrb[0].mxu0
    %v9025 = vpop.f32.mrb[0].mxu0
    %9026 = vdwg.mxu0
    %v9027 = vadd.f32 %v8591, %v8875
    %v9028 = vadd.f32 %v8592, %v8924
    %v9029 = vadd.f32 %v8593, %v8973
    %v9030 = vadd.f32 %v8594, %v9022
    %v9031 = vpack.c.bf16 %v9028, %v9027
    %v9032 = vpack.c.bf16 %v9030, %v9029
    %v9033 = vld [vmem:[#allocation43] sm:$0xf]
    %v9034 = vld [vmem:[#allocation43 + $0x4] sm:$0xf]
    %v9035 = vld [vmem:[#allocation43 + $0x8] sm:$0xf]
    %v9036 = vld [vmem:[#allocation43 + $0xc] sm:$0xf]
    %v9037 = vld [vmem:[#allocation43 + $0x10] sm:$0xf]
    %v9038 = vld [vmem:[#allocation43 + $0x14] sm:$0xf]
    %v9039 = vld [vmem:[#allocation43 + $0x18] sm:$0xf]
    %v9040 = vld [vmem:[#allocation43 + $0x1c] sm:$0xf]
    %v9041 = vld [vmem:[#allocation44] sm:$0x1]
    %v9043 = vlaneseq
    %v9044 = vshrl.u32 %v9043, 7
    %v9045 = vsub.s32 0, %v9044
    %v9046 = vrot.slane %v9041, %v9045
    %v9056 = vunpack.c.l.b16 %v9033
    %v9057 = vunpack.c.l.b16 %v9034
    %v9058 = vunpack.c.l.b16 %v9035
    %v9059 = vunpack.c.l.b16 %v9036
    %v9060 = vunpack.c.l.b16 %v9037
    %v9061 = vunpack.c.l.b16 %v9038
    %v9062 = vunpack.c.l.b16 %v9039
    %v9063 = vunpack.c.l.b16 %v9040
    %v9064 = vpack.c.b16 %v9057, %v9056
    %v9065 = vpack.c.b16 %v9059, %v9058
    %v9066 = vpack.c.b16 %v9061, %v9060
    %v9067 = vpack.c.b16 %v9063, %v9062
    %v9073 = vsel %vm671, %v9031, 0
    %v9076 = vsel %vm671, %v9032, 0
    %9078 = vmatprep.subr.bf16.mxu0 0
    %9079 = vmatpush1.bf16.msra.mxu0 %v9064
    %9080 = vmatprep.subr.bf16.mxu0 0
    %9081 = vmatpush1.bf16.msra.mxu0 %v9065
    %9082 = vmatprep.subr.bf16.mxu0 0
    %9083 = vmatpush1.bf16.msra.mxu0 %v9066
    %9084 = vmatprep.subr.bf16.mxu0 0
    %9085 = vmatpush1.bf16.msra.mxu0 %v9067
    %9086 = vmatprep.subr.bf16.mxu0 0
    %9087 = vmatpush1.bf16.msra.mxu0 0
    %9088 = vmatprep.subr.bf16.mxu0 0
    %9089 = vmatpush1.bf16.msra.mxu0 0
    %9090 = vmatprep.subr.bf16.mxu0 0
    %9091 = vmatpush1.bf16.msra.mxu0 0
    %9092 = vmatprep.subr.bf16.mxu0 0
    %9093 = vmatpush1.bf16.msra.mxu0 0
    %9094 = vmatprep.subr.bf16.mxu0 0
    %9095 = vmatpush1.bf16.msra.mxu0 0
    %9096 = vmatprep.subr.bf16.mxu0 0
    %9097 = vmatpush1.bf16.msra.mxu0 0
    %9098 = vmatprep.subr.bf16.mxu0 0
    %9099 = vmatpush1.bf16.msra.mxu0 0
    %9100 = vmatprep.subr.bf16.mxu0 0
    %9101 = vmatpush1.bf16.msra.mxu0 0
    %9102 = vmatprep.subr.bf16.mxu0 0
    %9103 = vmatpush1.bf16.msra.mxu0 0
    %9104 = vmatprep.subr.bf16.mxu0 0
    %9105 = vmatpush1.bf16.msra.mxu0 0
    %9106 = vmatprep.subr.bf16.mxu0 0
    %9107 = vmatpush1.bf16.msra.mxu0 0
    %9108 = vmatprep.subr.bf16.mxu0 0
    %9109 = vmatpush1.bf16.msra.mxu0 0
    %9110 = vmatprep.mubr.bf16.mxu0 0
    %9111 = vmatmul.mubr.bf16.gmra.mrb[0].mxu0 %v9073
    %v9112 = vpop.f32.mrb[0].mxu0
    %v9113 = vadd.f32 %v9046, %v9112
    %v9114 = vpop.f32.mrb[0].mxu0
    %v9115 = vpop.f32.mrb[0].mxu0
    %v9116 = vadd.f32 %v9046, %v9115
    %v9117 = vpop.f32.mrb[0].mxu0
    %9118 = vmatprep.mubr.bf16.mxu0 0
    %9119 = vmatmul.mubr.bf16.gmra.mrb[0].mxu0 %v9076
    %v9120 = vpop.f32.mrb[0].mxu0
    %v9121 = vadd.f32 %v9046, %v9120
    %v9122 = vpop.f32.mrb[0].mxu0
    %v9123 = vpop.f32.mrb[0].mxu0
    %v9124 = vadd.f32 %v9046, %v9123
    %v9125 = vpop.f32.mrb[0].mxu0
    %9126 = vdwg.mxu0
    %v9127 = vadd.f32 %v7091, %v9113
    %v9128 = vadd.f32 %v7092, %v9116
    %v9129 = vadd.f32 %v7093, %v9121
    %v9130 = vadd.f32 %v7094, %v9124
    %v9131 = vld [vmem:[#allocation49] sm:$0x1]
    %v9132 = vld [vmem:[#allocation50] sm:$0x1]
    %v9133 = vsel %vm671, %v9127, 0.0
    %9134 = vadd.xlane.f32.xlu0 %v9133
    %v9135 = vpop.xlane.xlu0 %9134
    %v9136 = vsel %vm671, %v9128, 0.0
    %9137 = vadd.xlane.f32.xlu0 %v9136
    %v9138 = vpop.xlane.xlu0 %9137
    %v9139 = vsel %vm671, %v9129, 0.0
    %9140 = vadd.xlane.f32.xlu0 %v9139
    %v9141 = vpop.xlane.xlu0 %9140
    %v9142 = vsel %vm671, %v9130, 0.0
    %9143 = vadd.xlane.f32.xlu0 %v9142
    %v9144 = vpop.xlane.xlu0 %9143
    %v9145 = vmul.f32 %v9135, %v2581
    %v9146 = vmul.f32 %v9138, %v2581
    %v9147 = vmul.f32 %v9141, %v2581
    %v9148 = vmul.f32 %v9144, %v2581
    %v9149 = vsub.f32 %v9127, %v9145
    %v9150 = vsub.f32 %v9128, %v9146
    %v9151 = vsub.f32 %v9129, %v9147
    %v9152 = vsub.f32 %v9130, %v9148
    %v9153 = vmul.f32 %v9149, %v9149
    %v9154 = vmul.f32 %v9150, %v9150
    %v9155 = vmul.f32 %v9151, %v9151
    %v9156 = vmul.f32 %v9152, %v9152
    %v9157 = vsel %vm671, %v9153, 0.0
    %9158 = vadd.xlane.f32.xlu0 %v9157
    %v9159 = vpop.xlane.xlu0 %9158
    %v9160 = vsel %vm671, %v9154, 0.0
    %9161 = vadd.xlane.f32.xlu0 %v9160
    %v9162 = vpop.xlane.xlu0 %9161
    %v9163 = vsel %vm671, %v9155, 0.0
    %9164 = vadd.xlane.f32.xlu0 %v9163
    %v9165 = vpop.xlane.xlu0 %9164
    %v9166 = vsel %vm671, %v9156, 0.0
    %9167 = vadd.xlane.f32.xlu0 %v9166
    %v9168 = vpop.xlane.xlu0 %9167
    %v9169 = vmul.f32 %v9159, %v2581
    %v9170 = vmul.f32 %v9162, %v2581
    %v9171 = vmul.f32 %v9165, %v2581
    %v9172 = vmul.f32 %v9168, %v2581
    %v9173 = vadd.f32 %v9169, 1e-05
    %v9174 = vadd.f32 %v9170, 1e-05
    %v9175 = vadd.f32 %v9171, 1e-05
    %v9176 = vadd.f32 %v9172, 1e-05
    %v9177 = vrsqrt.pop %v9173
    %v9178 = vrsqrt.pop %v9174
    %v9179 = vrsqrt.pop %v9175
    %v9180 = vrsqrt.pop %v9176
    %v9181 = vmul.f32 %v9149, %v9177
    %v9182 = vmul.f32 %v9150, %v9178
    %v9183 = vmul.f32 %v9151, %v9179
    %v9184 = vmul.f32 %v9152, %v9180
    %v9186 = vlaneseq
    %v9187 = vshrl.u32 %v9186, 7
    %v9188 = vsub.s32 0, %v9187
    %v9189 = vrot.slane %v9131, %v9188
    %v9191 = vmul.f32 %v9181, %v9189
    %v9192 = vmul.f32 %v9182, %v9189
    %v9193 = vmul.f32 %v9183, %v9189
    %v9194 = vmul.f32 %v9184, %v9189
    %v9196 = vlaneseq
    %v9197 = vshrl.u32 %v9196, 7
    %v9198 = vsub.s32 0, %v9197
    %v9199 = vrot.slane %v9132, %v9198
    %v9201 = vadd.f32 %v9191, %v9199
    %v9202 = vadd.f32 %v9192, %v9199
    %v9203 = vadd.f32 %v9193, %v9199
    %v9204 = vadd.f32 %v9194, %v9199
    %v9205 = vpack.c.bf16 %v9202, %v9201
    %v9206 = vpack.c.bf16 %v9204, %v9203
    %v9207 = vld [vmem:[%s75] sm:$0xf]
    %v9208 = vld [vmem:[%s75 + $0x4] sm:$0xf]
    %v9209 = vld [vmem:[%s75 + $0x8] sm:$0xf]
    %v9210 = vld [vmem:[%s75 + $0xc] sm:$0xf]
    %v9211 = vld [vmem:[%s75 + $0x10] sm:$0xf]
    %v9212 = vld [vmem:[%s75 + $0x14] sm:$0xf]
    %v9213 = vld [vmem:[%s75 + $0x18] sm:$0xf]
    %v9214 = vld [vmem:[%s75 + $0x1c] sm:$0xf]
    %v9215 = vld [vmem:[%s77] sm:$0x1]
    %v9217 = vlaneseq
    %v9218 = vshrl.u32 %v9217, 7
    %v9219 = vsub.s32 0, %v9218
    %v9220 = vrot.slane %v9215, %v9219
    %v9230 = vunpack.c.l.b16 %v9207
    %v9231 = vunpack.c.l.b16 %v9208
    %v9232 = vunpack.c.l.b16 %v9209
    %v9233 = vunpack.c.l.b16 %v9210
    %v9234 = vunpack.c.l.b16 %v9211
    %v9235 = vunpack.c.l.b16 %v9212
    %v9236 = vunpack.c.l.b16 %v9213
    %v9237 = vunpack.c.l.b16 %v9214
    %v9238 = vpack.c.b16 %v9231, %v9230
    %v9239 = vpack.c.b16 %v9233, %v9232
    %v9240 = vpack.c.b16 %v9235, %v9234
    %v9241 = vpack.c.b16 %v9237, %v9236
    %v9247 = vsel %vm671, %v9205, 0
    %v9250 = vsel %vm671, %v9206, 0
    %9252 = vmatprep.subr.bf16.mxu0 0
    %9253 = vmatpush1.bf16.msra.mxu0 %v9238
    %9254 = vmatprep.subr.bf16.mxu0 0
    %9255 = vmatpush1.bf16.msra.mxu0 %v9239
    %9256 = vmatprep.subr.bf16.mxu0 0
    %9257 = vmatpush1.bf16.msra.mxu0 %v9240
    %9258 = vmatprep.subr.bf16.mxu0 0
    %9259 = vmatpush1.bf16.msra.mxu0 %v9241
    %9260 = vmatprep.subr.bf16.mxu0 0
    %9261 = vmatpush1.bf16.msra.mxu0 0
    %9262 = vmatprep.subr.bf16.mxu0 0
    %9263 = vmatpush1.bf16.msra.mxu0 0
    %9264 = vmatprep.subr.bf16.mxu0 0
    %9265 = vmatpush1.bf16.msra.mxu0 0
    %9266 = vmatprep.subr.bf16.mxu0 0
    %9267 = vmatpush1.bf16.msra.mxu0 0
    %9268 = vmatprep.subr.bf16.mxu0 0
    %9269 = vmatpush1.bf16.msra.mxu0 0
    %9270 = vmatprep.subr.bf16.mxu0 0
    %9271 = vmatpush1.bf16.msra.mxu0 0
    %9272 = vmatprep.subr.bf16.mxu0 0
    %9273 = vmatpush1.bf16.msra.mxu0 0
    %9274 = vmatprep.subr.bf16.mxu0 0
    %9275 = vmatpush1.bf16.msra.mxu0 0
    %9276 = vmatprep.subr.bf16.mxu0 0
    %9277 = vmatpush1.bf16.msra.mxu0 0
    %9278 = vmatprep.subr.bf16.mxu0 0
    %9279 = vmatpush1.bf16.msra.mxu0 0
    %9280 = vmatprep.subr.bf16.mxu0 0
    %9281 = vmatpush1.bf16.msra.mxu0 0
    %9282 = vmatprep.subr.bf16.mxu0 0
    %9283 = vmatpush1.bf16.msra.mxu0 0
    %9284 = vmatprep.mubr.bf16.mxu0 0
    %9285 = vmatmul.mubr.bf16.gmra.mrb[0].mxu0 %v9247
    %v9286 = vpop.f32.mrb[0].mxu0
    %v9287 = vadd.f32 %v9220, %v9286
    %v9288 = vpop.f32.mrb[0].mxu0
    %v9289 = vpop.f32.mrb[0].mxu0
    %v9290 = vadd.f32 %v9220, %v9289
    %v9291 = vpop.f32.mrb[0].mxu0
    %9292 = vmatprep.mubr.bf16.mxu0 0
    %9293 = vmatmul.mubr.bf16.gmra.mrb[0].mxu0 %v9250
    %v9294 = vpop.f32.mrb[0].mxu0
    %v9295 = vadd.f32 %v9220, %v9294
    %v9296 = vpop.f32.mrb[0].mxu0
    %v9297 = vpop.f32.mrb[0].mxu0
    %v9298 = vadd.f32 %v9220, %v9297
    %v9299 = vpop.f32.mrb[0].mxu0
    %9300 = vdwg.mxu0
    %v9301 = vmax.f32 %v9287, 0.0
    %v9302 = vmax.f32 %v9290, 0.0
    %v9303 = vmax.f32 %v9295, 0.0
    %v9304 = vmax.f32 %v9298, 0.0
    %v9305 = vpack.c.bf16 %v9302, %v9301
    %v9306 = vpack.c.bf16 %v9304, %v9303
    %v9307 = vld [vmem:[%s79] sm:$0xf]
    %v9308 = vld [vmem:[%s79 + $0x4] sm:$0xf]
    %v9309 = vld [vmem:[%s79 + $0x8] sm:$0xf]
    %v9310 = vld [vmem:[%s79 + $0xc] sm:$0xf]
    %v9311 = vld [vmem:[%s79 + $0x10] sm:$0xf]
    %v9312 = vld [vmem:[%s79 + $0x14] sm:$0xf]
    %v9313 = vld [vmem:[%s79 + $0x18] sm:$0xf]
    %v9314 = vld [vmem:[%s79 + $0x1c] sm:$0xf]
    %v9315 = vld [vmem:[%s79 + $0x20] sm:$0xf]
    %v9316 = vld [vmem:[%s79 + $0x24] sm:$0xf]
    %v9317 = vld [vmem:[%s79 + $0x28] sm:$0xf]
    %v9318 = vld [vmem:[%s79 + $0x2c] sm:$0xf]
    %v9319 = vld [vmem:[%s79 + $0x30] sm:$0xf]
    %v9320 = vld [vmem:[%s79 + $0x34] sm:$0xf]
    %v9321 = vld [vmem:[%s79 + $0x38] sm:$0xf]
    %v9322 = vld [vmem:[%s79 + $0x3c] sm:$0xf]
    %v9323 = vld [vmem:[%s81] sm:$0x1]
    %v9325 = vlaneseq
    %v9326 = vshrl.u32 %v9325, 7
    %v9327 = vsub.s32 0, %v9326
    %v9328 = vrot.slane %v9323, %v9327
    %v9346 = vunpack.c.l.b16 %v9307
    %v9347 = vunpack.c.l.b16 %v9308
    %v9348 = vunpack.c.l.b16 %v9309
    %v9349 = vunpack.c.l.b16 %v9310
    %v9350 = vunpack.c.l.b16 %v9311
    %v9351 = vunpack.c.l.b16 %v9312
    %v9352 = vunpack.c.l.b16 %v9313
    %v9353 = vunpack.c.l.b16 %v9314
    %v9354 = vunpack.c.l.b16 %v9315
    %v9355 = vunpack.c.l.b16 %v9316
    %v9356 = vunpack.c.l.b16 %v9317
    %v9357 = vunpack.c.l.b16 %v9318
    %v9358 = vunpack.c.l.b16 %v9319
    %v9359 = vunpack.c.l.b16 %v9320
    %v9360 = vunpack.c.l.b16 %v9321
    %v9361 = vunpack.c.l.b16 %v9322
    %v9362 = vpack.c.b16 %v9347, %v9346
    %v9363 = vpack.c.b16 %v9349, %v9348
    %v9364 = vpack.c.b16 %v9351, %v9350
    %v9365 = vpack.c.b16 %v9353, %v9352
    %v9366 = vpack.c.b16 %v9355, %v9354
    %v9367 = vpack.c.b16 %v9357, %v9356
    %v9368 = vpack.c.b16 %v9359, %v9358
    %v9369 = vpack.c.b16 %v9361, %v9360
    %9378 = vmatprep.subr.bf16.mxu0 0
    %9379 = vmatpush1.bf16.msra.mxu0 %v9362
    %9380 = vmatprep.subr.bf16.mxu0 0
    %9381 = vmatpush1.bf16.msra.mxu0 %v9363
    %9382 = vmatprep.subr.bf16.mxu0 0
    %9383 = vmatpush1.bf16.msra.mxu0 %v9364
    %9384 = vmatprep.subr.bf16.mxu0 0
    %9385 = vmatpush1.bf16.msra.mxu0 %v9365
    %9386 = vmatprep.subr.bf16.mxu0 0
    %9387 = vmatpush1.bf16.msra.mxu0 %v9366
    %9388 = vmatprep.subr.bf16.mxu0 0
    %9389 = vmatpush1.bf16.msra.mxu0 %v9367
    %9390 = vmatprep.subr.bf16.mxu0 0
    %9391 = vmatpush1.bf16.msra.mxu0 %v9368
    %9392 = vmatprep.subr.bf16.mxu0 0
    %9393 = vmatpush1.bf16.msra.mxu0 %v9369
    %9394 = vmatprep.subr.bf16.mxu0 0
    %9395 = vmatpush1.bf16.msra.mxu0 0
    %9396 = vmatprep.subr.bf16.mxu0 0
    %9397 = vmatpush1.bf16.msra.mxu0 0
    %9398 = vmatprep.subr.bf16.mxu0 0
    %9399 = vmatpush1.bf16.msra.mxu0 0
    %9400 = vmatprep.subr.bf16.mxu0 0
    %9401 = vmatpush1.bf16.msra.mxu0 0
    %9402 = vmatprep.subr.bf16.mxu0 0
    %9403 = vmatpush1.bf16.msra.mxu0 0
    %9404 = vmatprep.subr.bf16.mxu0 0
    %9405 = vmatpush1.bf16.msra.mxu0 0
    %9406 = vmatprep.subr.bf16.mxu0 0
    %9407 = vmatpush1.bf16.msra.mxu0 0
    %9408 = vmatprep.subr.bf16.mxu0 0
    %9409 = vmatpush1.bf16.msra.mxu0 0
    %9410 = vmatprep.mubr.bf16.mxu0 0
    %9411 = vmatmul.mubr.bf16.gmra.mrb[0].mxu0 %v9305
    %v9412 = vpop.f32.mrb[0].mxu0
    %v9413 = vadd.f32 %v9328, %v9412
    %v9414 = vpop.f32.mrb[0].mxu0
    %v9415 = vpop.f32.mrb[0].mxu0
    %v9416 = vadd.f32 %v9328, %v9415
    %v9417 = vpop.f32.mrb[0].mxu0
    %9418 = vmatprep.mubr.bf16.mxu0 0
    %9419 = vmatmul.mubr.bf16.gmra.mrb[0].mxu0 %v9306
    %v9420 = vpop.f32.mrb[0].mxu0
    %v9421 = vadd.f32 %v9328, %v9420
    %v9422 = vpop.f32.mrb[0].mxu0
    %v9423 = vpop.f32.mrb[0].mxu0
    %v9424 = vadd.f32 %v9328, %v9423
    %v9425 = vpop.f32.mrb[0].mxu0
    %9426 = vdwg.mxu0
    %v9427 = vadd.f32 %v9201, %v9413
    %v9428 = vadd.f32 %v9202, %v9416
    %v9429 = vadd.f32 %v9203, %v9421
    %v9430 = vadd.f32 %v9204, %v9424
    %v9431 = vld [vmem:[#allocation52] sm:$0x1]
    %v9432 = vld [vmem:[%s73] sm:$0x1]
    %v9433 = vsel %vm671, %v9427, 0.0
    %9434 = vadd.xlane.f32.xlu0 %v9433
    %v9435 = vpop.xlane.xlu0 %9434
    %v9436 = vsel %vm671, %v9428, 0.0
    %9437 = vadd.xlane.f32.xlu0 %v9436
    %v9438 = vpop.xlane.xlu0 %9437
    %v9439 = vsel %vm671, %v9429, 0.0
    %9440 = vadd.xlane.f32.xlu0 %v9439
    %v9441 = vpop.xlane.xlu0 %9440
    %v9442 = vsel %vm671, %v9430, 0.0
    %9443 = vadd.xlane.f32.xlu0 %v9442
    %v9444 = vpop.xlane.xlu0 %9443
    %v9445 = vmul.f32 %v9435, %v2581
    %v9446 = vmul.f32 %v9438, %v2581
    %v9447 = vmul.f32 %v9441, %v2581
    %v9448 = vmul.f32 %v9444, %v2581
    %v9449 = vsub.f32 %v9427, %v9445
    %v9450 = vsub.f32 %v9428, %v9446
    %v9451 = vsub.f32 %v9429, %v9447
    %v9452 = vsub.f32 %v9430, %v9448
    %v9453 = vmul.f32 %v9449, %v9449
    %v9454 = vmul.f32 %v9450, %v9450
    %v9455 = vmul.f32 %v9451, %v9451
    %v9456 = vmul.f32 %v9452, %v9452
    %v9457 = vsel %vm671, %v9453, 0.0
    %9458 = vadd.xlane.f32.xlu0 %v9457
    %v9459 = vpop.xlane.xlu0 %9458
    %v9460 = vsel %vm671, %v9454, 0.0
    %9461 = vadd.xlane.f32.xlu0 %v9460
    %v9462 = vpop.xlane.xlu0 %9461
    %v9463 = vsel %vm671, %v9455, 0.0
    %9464 = vadd.xlane.f32.xlu0 %v9463
    %v9465 = vpop.xlane.xlu0 %9464
    %v9466 = vsel %vm671, %v9456, 0.0
    %9467 = vadd.xlane.f32.xlu0 %v9466
    %v9468 = vpop.xlane.xlu0 %9467
    %v9469 = vmul.f32 %v9459, %v2581
    %v9470 = vmul.f32 %v9462, %v2581
    %v9471 = vmul.f32 %v9465, %v2581
    %v9472 = vmul.f32 %v9468, %v2581
    %v9473 = vadd.f32 %v9469, 1e-05
    %v9474 = vadd.f32 %v9470, 1e-05
    %v9475 = vadd.f32 %v9471, 1e-05
    %v9476 = vadd.f32 %v9472, 1e-05
    %v9477 = vrsqrt.pop %v9473
    %v9478 = vrsqrt.pop %v9474
    %v9479 = vrsqrt.pop %v9475
    %v9480 = vrsqrt.pop %v9476
    %v9481 = vmul.f32 %v9449, %v9477
    %v9482 = vmul.f32 %v9450, %v9478
    %v9483 = vmul.f32 %v9451, %v9479
    %v9484 = vmul.f32 %v9452, %v9480
    %v9486 = vlaneseq
    %v9487 = vshrl.u32 %v9486, 7
    %v9488 = vsub.s32 0, %v9487
    %v9489 = vrot.slane %v9431, %v9488
    %v9491 = vmul.f32 %v9481, %v9489
    %v9492 = vmul.f32 %v9482, %v9489
    %v9493 = vmul.f32 %v9483, %v9489
    %v9494 = vmul.f32 %v9484, %v9489
    %v9496 = vlaneseq
    %v9497 = vshrl.u32 %v9496, 7
    %v9498 = vsub.s32 0, %v9497
    %v9499 = vrot.slane %v9432, %v9498
    %v9501 = vadd.f32 %v9491, %v9499
    %v9502 = vadd.f32 %v9492, %v9499
    %v9503 = vadd.f32 %v9493, %v9499
    %v9504 = vadd.f32 %v9494, %v9499
    %v9505 = vpack.c.bf16 %v9502, %v9501
    %v9506 = vpack.c.bf16 %v9504, %v9503
    %v9507 = vld [vmem:[%s83] sm:$0xff]
    %v9508 = vld [vmem:[%s83 + $0x8] sm:$0xff]
    %v9509 = vld [vmem:[%s83 + $0x10] sm:$0xff]
    %v9510 = vld [vmem:[%s83 + $0x18] sm:$0xff]
    %v9511 = vld [vmem:[%s83 + $0x20] sm:$0xff]
    %v9512 = vld [vmem:[%s83 + $0x28] sm:$0xff]
    %v9513 = vld [vmem:[%s83 + $0x30] sm:$0xff]
    %v9514 = vld [vmem:[%s83 + $0x38] sm:$0xff]
    %v9515 = vld [vmem:[%s83 + $0x40] sm:$0xff]
    %v9516 = vld [vmem:[%s83 + $0x48] sm:$0xff]
    %v9517 = vld [vmem:[%s83 + $0x50] sm:$0xff]
    %v9518 = vld [vmem:[%s83 + $0x58] sm:$0xff]
    %v9519 = vld [vmem:[%s83 + $0x60] sm:$0xff]
    %v9520 = vld [vmem:[%s83 + $0x68] sm:$0xff]
    %v9521 = vld [vmem:[%s83 + $0x70] sm:$0xff]
    %v9522 = vld [vmem:[%s83 + $0x78] sm:$0xff]
    %v9523 = vld [vmem:[%s85] sm:$0xf]
    %v9525 = vlaneseq
    %v9526 = vshrl.u32 %v9525, 7
    %v9527 = vsub.s32 0, %v9526
    %v9528 = vrot.slane %v9523, %v9527
    %v9529 = vlaneseq
    %v9530 = vshrl.u32 %v9529, 7
    %v9531 = vsub.s32 1, %v9530
    %v9532 = vrot.slane %v9523, %v9531
    %v9533 = vlaneseq
    %v9534 = vshrl.u32 %v9533, 7
    %v9535 = vsub.s32 2, %v9534
    %v9536 = vrot.slane %v9523, %v9535
    %v9537 = vlaneseq
    %v9538 = vshrl.u32 %v9537, 7
    %v9539 = vsub.s32 3, %v9538
    %v9540 = vrot.slane %v9523, %v9539
    %v9561 = vunpack.c.l.b16 %v9507
    %v9562 = vunpack.c.h.b16 %v9507
    %v9563 = vunpack.c.l.b16 %v9508
    %v9564 = vunpack.c.h.b16 %v9508
    %v9565 = vunpack.c.l.b16 %v9509
    %v9566 = vunpack.c.h.b16 %v9509
    %v9567 = vunpack.c.l.b16 %v9510
    %v9568 = vunpack.c.h.b16 %v9510
    %v9569 = vunpack.c.l.b16 %v9511
    %v9570 = vunpack.c.h.b16 %v9511
    %v9571 = vunpack.c.l.b16 %v9512
    %v9572 = vunpack.c.h.b16 %v9512
    %v9573 = vunpack.c.l.b16 %v9513
    %v9574 = vunpack.c.h.b16 %v9513
    %v9575 = vunpack.c.l.b16 %v9514
    %v9576 = vunpack.c.h.b16 %v9514
    %v9577 = vunpack.c.l.b16 %v9515
    %v9578 = vunpack.c.h.b16 %v9515
    %v9579 = vunpack.c.l.b16 %v9516
    %v9580 = vunpack.c.h.b16 %v9516
    %v9581 = vunpack.c.l.b16 %v9517
    %v9582 = vunpack.c.h.b16 %v9517
    %v9583 = vunpack.c.l.b16 %v9518
    %v9584 = vunpack.c.h.b16 %v9518
    %v9585 = vunpack.c.l.b16 %v9519
    %v9586 = vunpack.c.h.b16 %v9519
    %v9587 = vunpack.c.l.b16 %v9520
    %v9588 = vunpack.c.h.b16 %v9520
    %v9589 = vunpack.c.l.b16 %v9521
    %v9590 = vunpack.c.h.b16 %v9521
    %v9591 = vunpack.c.l.b16 %v9522
    %v9592 = vunpack.c.h.b16 %v9522
    %v9593 = vpack.c.b16 %v9565, %v9561
    %v9594 = vpack.c.b16 %v9566, %v9562
    %v9595 = vpack.c.b16 %v9567, %v9563
    %v9596 = vpack.c.b16 %v9568, %v9564
    %v9597 = vpack.c.b16 %v9573, %v9569
    %v9598 = vpack.c.b16 %v9574, %v9570
    %v9599 = vpack.c.b16 %v9575, %v9571
    %v9600 = vpack.c.b16 %v9576, %v9572
    %v9601 = vpack.c.b16 %v9581, %v9577
    %v9602 = vpack.c.b16 %v9582, %v9578
    %v9603 = vpack.c.b16 %v9583, %v9579
    %v9604 = vpack.c.b16 %v9584, %v9580
    %v9605 = vpack.c.b16 %v9589, %v9585
    %v9606 = vpack.c.b16 %v9590, %v9586
    %v9607 = vpack.c.b16 %v9591, %v9587
    %v9608 = vpack.c.b16 %v9592, %v9588
    %v9626 = vsel %vm671, %v9505, 0
    %v9629 = vsel %vm671, %v9506, 0
    %9631 = vmatprep.subr.bf16.mxu0 %v9594
    %9632 = vmatpush1.bf16.msra.mxu0 %v9593
    %9633 = vmatprep.subr.bf16.mxu0 %v9598
    %9634 = vmatpush1.bf16.msra.mxu0 %v9597
    %9635 = vmatprep.subr.bf16.mxu0 %v9602
    %9636 = vmatpush1.bf16.msra.mxu0 %v9601
    %9637 = vmatprep.subr.bf16.mxu0 %v9606
    %9638 = vmatpush1.bf16.msra.mxu0 %v9605
    %9639 = vmatprep.subr.bf16.mxu0 0
    %9640 = vmatpush1.bf16.msra.mxu0 0
    %9641 = vmatprep.subr.bf16.mxu0 0
    %9642 = vmatpush1.bf16.msra.mxu0 0
    %9643 = vmatprep.subr.bf16.mxu0 0
    %9644 = vmatpush1.bf16.msra.mxu0 0
    %9645 = vmatprep.subr.bf16.mxu0 0
    %9646 = vmatpush1.bf16.msra.mxu0 0
    %9647 = vmatprep.subr.bf16.mxu0 0
    %9648 = vmatpush1.bf16.msra.mxu0 0
    %9649 = vmatprep.subr.bf16.mxu0 0
    %9650 = vmatpush1.bf16.msra.mxu0 0
    %9651 = vmatprep.subr.bf16.mxu0 0
    %9652 = vmatpush1.bf16.msra.mxu0 0
    %9653 = vmatprep.subr.bf16.mxu0 0
    %9654 = vmatpush1.bf16.msra.mxu0 0
    %9655 = vmatprep.subr.bf16.mxu0 0
    %9656 = vmatpush1.bf16.msra.mxu0 0
    %9657 = vmatprep.subr.bf16.mxu0 0
    %9658 = vmatpush1.bf16.msra.mxu0 0
    %9659 = vmatprep.subr.bf16.mxu0 0
    %9660 = vmatpush1.bf16.msra.mxu0 0
    %9661 = vmatprep.subr.bf16.mxu0 0
    %9662 = vmatpush1.bf16.msra.mxu0 0
    %9663 = vmatprep.mubr.bf16.mxu0 0
    %9664 = vmatmul.mubr.bf16.gmra.mrb[0].mxu0 %v9626
    %v9665 = vpop.f32.mrb[0].mxu0
    %v9666 = vadd.f32 %v9528, %v9665
    %v9667 = vpop.f32.mrb[0].mxu0
    %v9668 = vadd.f32 %v9532, %v9667
    %v9669 = vpop.f32.mrb[0].mxu0
    %v9670 = vadd.f32 %v9528, %v9669
    %v9671 = vpop.f32.mrb[0].mxu0
    %v9672 = vadd.f32 %v9532, %v9671
    %9673 = vmatprep.mubr.bf16.mxu0 0
    %9674 = vmatmul.mubr.bf16.gmra.mrb[0].mxu0 %v9629
    %v9675 = vpop.f32.mrb[0].mxu0
    %v9676 = vadd.f32 %v9528, %v9675
    %v9677 = vpop.f32.mrb[0].mxu0
    %v9678 = vadd.f32 %v9532, %v9677
    %v9679 = vpop.f32.mrb[0].mxu0
    %v9680 = vadd.f32 %v9528, %v9679
    %v9681 = vpop.f32.mrb[0].mxu0
    %v9682 = vadd.f32 %v9532, %v9681
    %9683 = vdwg.mxu0
    %9684 = vmatprep.subr.bf16.mxu0 %v9596
    %9685 = vmatpush1.bf16.msra.mxu0 %v9595
    %9686 = vmatprep.subr.bf16.mxu0 %v9600
    %9687 = vmatpush1.bf16.msra.mxu0 %v9599
    %9688 = vmatprep.subr.bf16.mxu0 %v9604
    %9689 = vmatpush1.bf16.msra.mxu0 %v9603
    %9690 = vmatprep.subr.bf16.mxu0 %v9608
    %9691 = vmatpush1.bf16.msra.mxu0 %v9607
    %9692 = vmatprep.subr.bf16.mxu0 0
    %9693 = vmatpush1.bf16.msra.mxu0 0
    %9694 = vmatprep.subr.bf16.mxu0 0
    %9695 = vmatpush1.bf16.msra.mxu0 0
    %9696 = vmatprep.subr.bf16.mxu0 0
    %9697 = vmatpush1.bf16.msra.mxu0 0
    %9698 = vmatprep.subr.bf16.mxu0 0
    %9699 = vmatpush1.bf16.msra.mxu0 0
    %9700 = vmatprep.subr.bf16.mxu0 0
    %9701 = vmatpush1.bf16.msra.mxu0 0
    %9702 = vmatprep.subr.bf16.mxu0 0
    %9703 = vmatpush1.bf16.msra.mxu0 0
    %9704 = vmatprep.subr.bf16.mxu0 0
    %9705 = vmatpush1.bf16.msra.mxu0 0
    %9706 = vmatprep.subr.bf16.mxu0 0
    %9707 = vmatpush1.bf16.msra.mxu0 0
    %9708 = vmatprep.subr.bf16.mxu0 0
    %9709 = vmatpush1.bf16.msra.mxu0 0
    %9710 = vmatprep.subr.bf16.mxu0 0
    %9711 = vmatpush1.bf16.msra.mxu0 0
    %9712 = vmatprep.subr.bf16.mxu0 0
    %9713 = vmatpush1.bf16.msra.mxu0 0
    %9714 = vmatprep.subr.bf16.mxu0 0
    %9715 = vmatpush1.bf16.msra.mxu0 0
    %9716 = vmatprep.mubr.bf16.mxu0 0
    %9717 = vmatmul.mubr.bf16.gmra.mrb[0].mxu0 %v9626
    %v9718 = vpop.f32.mrb[0].mxu0
    %v9719 = vadd.f32 %v9536, %v9718
    %v9720 = vpop.f32.mrb[0].mxu0
    %v9721 = vadd.f32 %v9540, %v9720
    %v9722 = vpop.f32.mrb[0].mxu0
    %v9723 = vadd.f32 %v9536, %v9722
    %v9724 = vpop.f32.mrb[0].mxu0
    %v9725 = vadd.f32 %v9540, %v9724
    %9726 = vmatprep.mubr.bf16.mxu0 0
    %9727 = vmatmul.mubr.bf16.gmra.mrb[0].mxu0 %v9629
    %v9728 = vpop.f32.mrb[0].mxu0
    %v9729 = vadd.f32 %v9536, %v9728
    %v9730 = vpop.f32.mrb[0].mxu0
    %v9731 = vadd.f32 %v9540, %v9730
    %v9732 = vpop.f32.mrb[0].mxu0
    %v9733 = vadd.f32 %v9536, %v9732
    %v9734 = vpop.f32.mrb[0].mxu0
    %v9735 = vadd.f32 %v9540, %v9734
    %9736 = vdwg.mxu0
    %9737 = vst [vmem:[#allocation53] sm:$0xff] %v9666
    %9738 = vst [vmem:[#allocation53 + $0x8] sm:$0xff] %v9668
    %9739 = vst [vmem:[#allocation53 + $0x10] sm:$0xff] %v9719
    %9740 = vst [vmem:[#allocation53 + $0x18] sm:$0xff] %v9721
    %9741 = vst [vmem:[#allocation53 + $0x20] sm:$0xff] %v9670
    %9742 = vst [vmem:[#allocation53 + $0x28] sm:$0xff] %v9672
    %9743 = vst [vmem:[#allocation53 + $0x30] sm:$0xff] %v9723
    %9744 = vst [vmem:[#allocation53 + $0x38] sm:$0xff] %v9725
    %9745 = vst [vmem:[#allocation53 + $0x40] sm:$0xff] %v9676
    %9746 = vst [vmem:[#allocation53 + $0x48] sm:$0xff] %v9678
    %9747 = vst [vmem:[#allocation53 + $0x50] sm:$0xff] %v9729
    %9748 = vst [vmem:[#allocation53 + $0x58] sm:$0xff] %v9731
    %9749 = vst [vmem:[#allocation53 + $0x60] sm:$0xff] %v9680
    %9750 = vst [vmem:[#allocation53 + $0x68] sm:$0xff] %v9682
    %9751 = vst [vmem:[#allocation53 + $0x70] sm:$0xff] %v9733
    %9752 = vst [vmem:[#allocation53 + $0x78] sm:$0xff] %v9735
    // Predicated region
    $region306: #{tpu_custom_call.1} parent=1 // pred_check
      _
    $region307: #{tpu_custom_call.1} parent=1 // pred_check_branch
      %9754 = sbr.rel (0) target = $region309
    $region308: #{tpu_custom_call.1} parent=1 // pred_region
      %s9756 = ssub.s32 2048, 2048
      %9757 = vsyncadd [#allocation4], %s9756
      %s9758 = sshll.u32 [#allocation53], 4
      %s9759 = int_to_ptr.vmem [resolvable:$true] %s9758
      %9764 = dma.vmem_to_hbm [thread:$0]  %s9759, 2048, %s87, [#allocation4], 512, 512, 32
    $region309: #{tpu_custom_call.1} parent=1 // pred_fallthru
      _
    // Predicated region
    $region310: #{tpu_custom_call.1} parent=1 // pred_check
      _
    $region311: #{tpu_custom_call.1} parent=1 // pred_check_branch
      %9766 = sbr.rel (0) target = $region313
    $region312: #{tpu_custom_call.1} parent=1 // pred_region
      %9767 = dma.done [#allocation4], 2048
    $region313: #{tpu_custom_call.1} parent=1 // pred_fallthru
      _
    %9768 = vsyncpa [#allocation3], 1
    %9769 = vsyncpa [#allocation6], 1
    %9770 = vsyncpa [#allocation9], 1
    %9771 = vsyncpa [#allocation12], 1
    %9772 = vsyncpa [#allocation15], 1
    %9773 = vsyncpa [#allocation18], 1
    %9774 = vsyncpa [#allocation21], 1
    %9775 = vsyncpa [#allocation24], 1
    %9776 = vsyncpa [#allocation27], 1
    %9777 = vsyncpa [#allocation30], 1
    %9778 = vsyncpa [#allocation33], 1
    %9779 = vsyncpa [#allocation36], 1
    %9780 = vsyncpa [#allocation39], 1
    %9781 = vsyncpa [#allocation42], 1
    %9782 = vsyncpa [#allocation45], 1
    %9783 = vsyncpa [#allocation48], 1
    %9784 = vsyncpa [#allocation51], 1
    %9785 = vsyncpa [#allocation4], 1

</llo_original>
